<compile_context>
chip_gen: v5e
topology: v5e:2x2
jax: 0.10.0
libtpu: 0.0.40
codegen_flags: <defaults>
</compile_context>

<pallas_src>
import math
import functools

import jax
import jax.numpy as jnp
from jax.experimental import pallas as pl
from jax.experimental.pallas import tpu as pltpu


# ----------------------------- model hyperparams -----------------------------
D_MODEL = 32          # d_a = d_v = per-modality embed dim
N_HEADS = 4
HEAD_DIM = D_MODEL // N_HEADS
FFN_DIM = 64
N_CROSS_LAYERS = 2    # crossmodal transformer depth
N_MEM_LAYERS = 2      # self-attention "memory" transformer depth
LN_EPS = 1e-5

# ----------------------------- packed parameter layout ------------------------
LANES = 128           # lane width of the packed parameter sheets
F_PAD = 8             # input feature dims (4 / 6) zero-padded to 8 rows

# Per encoder layer, rows within the sheet (all offsets multiples of 8):
#   [  0, 32)  wqkv  (D, 3D)   cols [0, 96)
#   [ 32, 64)  wo    (D, D)    cols [0, 32)
#   [ 64, 96)  w1    (D, F)    cols [0, 64)
#   [ 96,160)  w2    (F, D)    cols [0, 32)
#   [160,168)  vector block: ln0_g, ln0_b, bqkv, bo, ln1_g, ln1_b, b1, b2 (one row each)
LAYER_ROWS = 168


def _enc_rows(n_layers):
    return n_layers * LAYER_ROWS + 8      # + final-LN vector block


ROW_PROJ_Q = 0                            # (F_PAD, D) conv1d weight, query stream
ROW_PROJ_KV = ROW_PROJ_Q + F_PAD          # (F_PAD, D) conv1d weight, cross-modal KV stream
ROW_CROSS = ROW_PROJ_KV + F_PAD           # crossmodal encoder parameters
ROW_MEM = ROW_CROSS + _enc_rows(N_CROSS_LAYERS)   # memory encoder parameters
PATH_ROWS = ROW_MEM + _enc_rows(N_MEM_LAYERS)     # = 704 rows -> 360 KiB/path

HEAD_ROWS = 200       # proj1_w[0:64] proj2_w[64:128] out_w[128:192] biases[192:195]

_MXU_DTYPE = jnp.bfloat16          # MXU operand dtype on every TPU generation
_EXACT_SOFTMAX = False             # True -> exact divide (strict parity validation)


def _pick_act_dtype():
    """bf16-resident activations where the VPU/EUP has a bf16 path (v6e/v7x)."""
    try:
        kind = jax.devices()[0].device_kind.lower()
    except Exception:
        return jnp.float32
    if any(t in kind for t in ("v6", "v7", "tpu6", "tpu7")):
        return jnp.bfloat16
    return jnp.float32             # v5e and older: keep elementwise math in f32


_ACT_DTYPE = _pick_act_dtype()


# ----------------------------- in-kernel math helpers --------------------------
def _mm(a, w):
    """MXU matmul: bf16 operands, f32 accumulation."""
    return jnp.dot(a.astype(_MXU_DTYPE), w.astype(_MXU_DTYPE),
                   preferred_element_type=jnp.float32)


def _ln(x, g, b):
    """LayerNorm: statistics in f32, result in the activation dtype."""
    x32 = x.astype(jnp.float32)
    mu = jnp.mean(x32, axis=-1, keepdims=True)
    var = jnp.mean(jnp.square(x32 - mu), axis=-1, keepdims=True)
    y = (x32 - mu) * jax.lax.rsqrt(var + LN_EPS) * g + b
    return y.astype(_ACT_DTYPE)


def _mha(q, q_rows, k, v, kv_rows, kmask, B, T_pad):
    """Multi-head attention over all batches.  q/k/v: (B*T_pad, D) f32.
    kmask (1,1,T_pad) masks padded key positions.  Per-head outputs are concatenated
    and returned as a lane-dense (B*T_pad, D) matrix so the caller can do ONE K=32
    output projection (review item: no per-head K=8 matmuls / accumulator adds)."""
    scale = 1.0 / math.sqrt(HEAD_DIM)
    q3 = q.reshape(B, T_pad, D_MODEL).astype(_MXU_DTYPE)
    k3 = k.reshape(B, T_pad, D_MODEL).astype(_MXU_DTYPE)
    v3 = v.reshape(B, T_pad, D_MODEL).astype(_MXU_DTYPE)
    heads = []
    for h in range(N_HEADS):                                  # static unroll, H=4
        sl = slice(h * HEAD_DIM, (h + 1) * HEAD_DIM)
        s = jnp.einsum("bqd,bkd->bqk", q3[..., sl], k3[..., sl],
                       preferred_element_type=jnp.float32) * scale
        s = jnp.where(kmask, s, -1e30)                        # mask padded keys
        p = jnp.exp(s - jnp.max(s, axis=-1, keepdims=True))
        denom = jnp.sum(p, axis=-1, keepdims=True)
        if _EXACT_SOFTMAX:
            p = p / denom
        else:
            p = p * pl.reciprocal(denom, approx=True)         # EUP slot, not VALU
        heads.append(jnp.einsum("bqk,bkd->bqd", p.astype(_MXU_DTYPE), v3[..., sl],
                                preferred_element_type=jnp.float32))
    return jnp.concatenate(heads, axis=-1).reshape(B * T_pad, D_MODEL)


def _encoder(p_ref, base, n_layers, h, hk, kmask, B, T_pad):
    """MulT TransformerEncoder: n_layers pre-LN blocks + final LN, parameters read from
    the packed sheet at static, 8-row-aligned offsets.  hk (if given) is the fixed
    cross-modal source stream (MulT attends to the SAME source at every layer)."""
    D = D_MODEL
    M = B * T_pad
    for l in range(n_layers):                                 # static unroll (2 layers)
        lb = base + l * LAYER_ROWS
        wqkv = p_ref[lb:lb + D, 0:3 * D]
        wo = p_ref[lb + 32:lb + 32 + D, 0:D]
        w1 = p_ref[lb + 64:lb + 64 + D, 0:FFN_DIM]
        w2 = p_ref[lb + 96:lb + 96 + FFN_DIM, 0:D]
        vb = lb + 160
        ln0_g, ln0_b = p_ref[vb:vb + 1, 0:D], p_ref[vb + 1:vb + 2, 0:D]
        bqkv = p_ref[vb + 2:vb + 3, 0:3 * D]
        bo = p_ref[vb + 3:vb + 4, 0:D]
        ln1_g, ln1_b = p_ref[vb + 4:vb + 5, 0:D], p_ref[vb + 5:vb + 6, 0:D]
        b1 = p_ref[vb + 6:vb + 7, 0:FFN_DIM]
        b2 = p_ref[vb + 7:vb + 8, 0:D]

        # ---- pre-LN multi-head attention ----
        xn = _ln(h, ln0_g, ln0_b)
        if hk is not None:
            # x_k is x_v in MulT -> one shared LN of the source; one fused QKV matmul
            # over the concatenated query + KV rows (M = B*(Tq+Tk)) instead of two.
            kn = _ln(hk, ln0_g, ln0_b)
            qkv = _mm(jnp.concatenate([xn, kn], axis=0), wqkv) + bqkv
            q = qkv[:M, :D]
            k = qkv[M:, D:2 * D]
            v = qkv[M:, 2 * D:]
        else:
            qkv = _mm(xn, wqkv) + bqkv
            q, k, v = qkv[:, :D], qkv[:, D:2 * D], qkv[:, 2 * D:]
        attn = _mha(q, M, k, v, M, kmask, B, T_pad)
        h = h + (_mm(attn, wo) + bo).astype(_ACT_DTYPE)       # residual, stays in VMEM

        # ---- pre-LN position-wise feed-forward ----
        xn = _ln(h, ln1_g, ln1_b)
        ff = jnp.maximum(_mm(xn, w1) + b1, 0.0)
        ff = _mm(ff, w2) + b2
        h = h + ff.astype(_ACT_DTYPE)

    fb = base + n_layers * LAYER_ROWS
    return _ln(h, p_ref[fb:fb + 1, 0:D], p_ref[fb + 1:fb + 2, 0:D])


# ----------------------------- fused kernels -----------------------------------
def _modality_kernel(xq_ref, xkv_ref, pe_ref, p_ref, out_ref, *, B, T_pad, t_a, t_v):
    """One full MulT modality path (stem proj -> crossmodal encoder -> memory encoder
    -> last-timestep read).  program_id(0)==0: audio-queries path; ==1: video-queries."""
    m = pl.program_id(0)
    D = D_MODEL
    f32 = jnp.float32
    M = B * T_pad

    # valid (unpadded) lengths for this path
    tq = jnp.where(m == 0, t_a, t_v)          # query-stream length
    tk = jnp.where(m == 0, t_v, t_a)          # cross-modal KV-stream length

    kpos = jax.lax.broadcasted_iota(jnp.int32, (1, 1, T_pad), 2)
    kmask_cross = kpos < tk                   # mask padded keys of the other modality
    kmask_self = kpos < tq                    # mask padded keys of own stream
    qpos = jax.lax.broadcasted_iota(jnp.int32, (1, T_pad, 1), 1)
    last_sel = (qpos == (tq - 1)).astype(f32)  # one-hot of last valid timestep

    # ---- stem: 1x1 Conv1d (bias-free) == per-timestep linear projection (kept f32) ----
    wq = p_ref[ROW_PROJ_Q:ROW_PROJ_Q + F_PAD, 0:D]
    wkv = p_ref[ROW_PROJ_KV:ROW_PROJ_KV + F_PAD, 0:D]
    proj_q = jnp.dot(xq_ref[...].reshape(M, F_PAD), wq, preferred_element_type=f32)
    proj_kv = jnp.dot(xkv_ref[...].reshape(M, F_PAD), wkv, preferred_element_type=f32)

    pe = pe_ref[...]                          # (T_pad, D) sinusoidal table
    embed_scale = math.sqrt(D)

    def prologue(x2d):                        # MulT: sqrt(D)*x + positional embedding
        h3 = embed_scale * x2d.astype(f32).reshape(B, T_pad, D) + pe[None]
        return h3.reshape(M, D).astype(_ACT_DTYPE)

    # ---- crossmodal transformer: queries attend to the (fixed) other-modality stream ----
    h = prologue(proj_q)
    hk = prologue(proj_kv)
    h = _encoder(p_ref, ROW_CROSS, N_CROSS_LAYERS, h, hk, kmask_cross, B, T_pad)

    # ---- self-attention "memory" transformer (scale + pos-emb applied again, as in MulT) ----
    h = prologue(h)
    h = _encoder(p_ref, ROW_MEM, N_MEM_LAYERS, h, None, kmask_self, B, T_pad)

    # ---- last valid timestep of this path (dynamic per modality) ----
    h3 = h.astype(f32).reshape(B, T_pad, D)
    out_ref[...] = jnp.sum(h3 * last_sel, axis=1)             # (B, D)


def _head_kernel(lh_ref, hp_ref, o_ref, *, out_scale):
    """concat(last_h_a, last_h_v) + residual MLP + out_layer + sigmoid + dataset scale."""
    lh = lh_ref[...]                                          # (2, B, D) f32
    x = jnp.concatenate([lh[0], lh[1]], axis=-1)              # (B, 2D)
    w1, b1 = hp_ref[0:64, 0:64], hp_ref[192:193, 0:64]
    w2, b2 = hp_ref[64:128, 0:64], hp_ref[193:194, 0:64]
    wo, bo = hp_ref[128:192, 0:1], hp_ref[194:195, 0:1]
    h = jnp.maximum(_mm(x, w1) + b1, 0.0)
    h = _mm(h, w2) + b2
    hp = h + x                                                # residual projection block
    y = jnp.dot(hp, wo, preferred_element_type=jnp.float32) + bo
    o_ref[...] = jax.nn.sigmoid(y) * out_scale


# ----------------------------- pallas_call wrappers ----------------------------
def sinusoidal_pos_emb(T, d):
    # TODO(synk): fairseq's SinusoidalPositionalEmbedding offsets positions by
    # padding_idx+1; positions here start at 0 (parity-only difference vs. torch MulT).
    half = d // 2
    inv = jnp.exp(jnp.arange(half, dtype=jnp.float32) * -(math.log(10000.0) / (half - 1)))
    pos = jnp.arange(T, dtype=jnp.float32)[:, None] * inv[None, :]
    return jnp.concatenate([jnp.sin(pos), jnp.cos(pos)], axis=-1)   # (T, d)


@functools.partial(jax.jit, static_argnames=("dataset",))
def unaligned_transformer_forward(packed, x_a, x_v, dataset="avec14"):
    B, t_a, f_a = x_a.shape
    _, t_v, f_v = x_v.shape
    T_pad = max(t_a, t_v)

    def pad(x):
        _, T, F = x.shape
        return jnp.pad(x, ((0, 0), (0, T_pad - T), (0, F_PAD - F)))

    # stack the two (padded) raw inputs along a modality axis; per-path key masks in the
    # kernel make the padded rows inert.
    x_stack = jnp.stack([pad(x_a), pad(x_v)], axis=0)          # (2, B, T_pad, F_PAD)
    pe = sinusoidal_pos_emb(T_pad, D_MODEL)                    # constant-folded by jit

    kernel = functools.partial(_modality_kernel, B=B, T_pad=T_pad, t_a=t_a, t_v=t_v)
    last_h = pl.pallas_call(
        kernel,
        out_shape=jax.ShapeDtypeStruct((2, B, D_MODEL), jnp.float32),
        grid=(2,),
        in_specs=[
            # query stream of this path
            pl.BlockSpec((None, B, T_pad, F_PAD), lambda m: (m, 0, 0, 0)),
            # cross-modal KV stream = the OTHER modality
            pl.BlockSpec((None, B, T_pad, F_PAD), lambda m: (1 - m, 0, 0, 0)),
            # shared sinusoidal table
            pl.BlockSpec((T_pad, D_MODEL), lambda m: (0, 0)),
            # one consolidated parameter sheet per path (single DMA)
            pl.BlockSpec((None, PATH_ROWS, LANES), lambda m: (m, 0, 0)),
        ],
        out_specs=pl.BlockSpec((None, B, D_MODEL), lambda m: (m, 0, 0)),
        compiler_params=pltpu.CompilerParams(
            dimension_semantics=("parallel",)),                # v7x: shard paths across TCs
    )(x_stack, x_stack, pe, packed["paths"])

    out_scale = 23.0 if dataset == "avec17" else 63.0
    out = pl.pallas_call(
        functools.partial(_head_kernel, out_scale=out_scale),
        out_shape=jax.ShapeDtypeStruct((B, 1), jnp.float32),
        grid=(1,),
        in_specs=[pl.BlockSpec((2, B, D_MODEL), lambda i: (0, 0, 0)),
                  pl.BlockSpec((HEAD_ROWS, LANES), lambda i: (0, 0))],
        out_specs=pl.BlockSpec((B, 1), lambda i: (0, 0)),
        compiler_params=pltpu.CompilerParams(dimension_semantics=("arbitrary",)),
    )(last_h, packed["head"])
    return jnp.squeeze(out)                                    # matches torch .squeeze()


# ----------------------------- parameter init & packing ------------------------
def init_params(key, feat_a, feat_v):
    def w(k, shape, std=0.02):
        return std * jax.random.normal(k, shape, jnp.float32)

    def encoder_params(k, n_layers):
        ks = jax.random.split(k, 4)
        L, D, F = n_layers, D_MODEL, FFN_DIM
        return {
            "ln0_g": jnp.ones((L, 1, D)), "ln0_b": jnp.zeros((L, 1, D)),
            "wqkv": w(ks[0], (L, D, 3 * D)), "bqkv": jnp.zeros((L, 1, 3 * D)),
            "wo": w(ks[1], (L, D, D)), "bo": jnp.zeros((L, 1, D)),
            "ln1_g": jnp.ones((L, 1, D)), "ln1_b": jnp.zeros((L, 1, D)),
            "w1": w(ks[2], (L, D, F)), "b1": jnp.zeros((L, 1, F)),
            "w2": w(ks[3], (L, F, D)), "b2": jnp.zeros((L, 1, D)),
            "lnf_g": jnp.ones((1, D)), "lnf_b": jnp.zeros((1, D)),
        }

    keys = jax.random.split(key, 10)
    combined = 2 * D_MODEL
    return {
        "w_proj_a": w(keys[0], (feat_a, D_MODEL)),
        "w_proj_v": w(keys[1], (feat_v, D_MODEL)),
        "trans_a_with_v": encoder_params(keys[2], N_CROSS_LAYERS),
        "trans_v_with_a": encoder_params(keys[3], N_CROSS_LAYERS),
        "trans_a_mem": encoder_params(keys[4], N_MEM_LAYERS),
        "trans_v_mem": encoder_params(keys[5], N_MEM_LAYERS),
        "proj1_w": w(keys[6], (combined, combined)), "proj1_b": jnp.zeros((1, combined)),
        "proj2_w": w(keys[7], (combined, combined)), "proj2_b": jnp.zeros((1, combined)),
        "out_w": w(keys[8], (combined, 1)), "out_b": jnp.zeros((1, 1)),
    }


def _put(sheet, row, arr2d):
    r, c = arr2d.shape
    return sheet.at[row:row + r, 0:c].set(arr2d)


def _pack_encoder(sheet, base, enc):
    L = enc["wqkv"].shape[0]
    for l in range(L):
        lb = base + l * LAYER_ROWS
        sheet = _put(sheet, lb, enc["wqkv"][l])
        sheet = _put(sheet, lb + 32, enc["wo"][l])
        sheet = _put(sheet, lb + 64, enc["w1"][l])
        sheet = _put(sheet, lb + 96, enc["w2"][l])
        vb = lb + 160
        for off, name in enumerate(("ln0_g", "ln0_b", "bqkv", "bo",
                                    "ln1_g", "ln1_b", "b1", "b2")):
            sheet = _put(sheet, vb + off, enc[name][l])
    fb = base + L * LAYER_ROWS
    sheet = _put(sheet, fb, enc["lnf_g"])
    sheet = _put(sheet, fb + 1, enc["lnf_b"])
    return sheet


def pack_params(params):
    """Pack all parameters of each modality path into a single (PATH_ROWS, 128) sheet
    (one DMA per kernel launch instead of dozens of tiny ones)."""
    assert params["w_proj_a"].shape[0] <= F_PAD and params["w_proj_v"].shape[0] <= F_PAD

    def path_sheet(w_proj_q, w_proj_kv, cross, mem):
        sheet = jnp.zeros((PATH_ROWS, LANES), jnp.float32)
        sheet = _put(sheet, ROW_PROJ_Q,
                     jnp.pad(w_proj_q, ((0, F_PAD - w_proj_q.shape[0]), (0, 0))))
        sheet = _put(sheet, ROW_PROJ_KV,
                     jnp.pad(w_proj_kv, ((0, F_PAD - w_proj_kv.shape[0]), (0, 0))))
        sheet = _pack_encoder(sheet, ROW_CROSS, cross)
        sheet = _pack_encoder(sheet, ROW_MEM, mem)
        return sheet

    path_a = path_sheet(params["w_proj_a"], params["w_proj_v"],
                        params["trans_a_with_v"], params["trans_a_mem"])
    path_v = path_sheet(params["w_proj_v"], params["w_proj_a"],
                        params["trans_v_with_a"], params["trans_v_mem"])

    head = jnp.zeros((HEAD_ROWS, LANES), jnp.float32)
    head = _put(head, 0, params["proj1_w"])
    head = _put(head, 64, params["proj2_w"])
    head = _put(head, 128, params["out_w"])
    head = _put(head, 192, params["proj1_b"])
    head = _put(head, 193, params["proj2_b"])
    head = _put(head, 194, params["out_b"])
    return {"paths": jnp.stack([path_a, path_v], axis=0), "head": head}


# ----------------------------- main --------------------------------------------
if __name__ == "__main__":
    key = jax.random.PRNGKey(0)
    kp, ka, kv = jax.random.split(key, 3)

    FEAT_A, FEAT_V = 4, 6          # feature_size_a, feature_size_v
    B, T_A, T_V = 2, 8, 12         # unaligned sequence lengths

    params = init_params(kp, FEAT_A, FEAT_V)
    packed = pack_params(params)   # one-time packing, outside jit
    x_a = jax.random.normal(ka, (B, T_A, FEAT_A), jnp.float32)
    x_v = jax.random.normal(kv, (B, T_V, FEAT_V), jnp.float32)

    out = unaligned_transformer_forward(packed, x_a, x_v, dataset="avec14")
    out = jax.block_until_ready(out)
    assert out.shape == (B,)
    assert bool(jnp.all(jnp.isfinite(out)))
    print("KERNEL_OK")
</pallas_src>

<mosaic_0001>
module attributes {stable_mosaic.version = 11 : i64} {
  func.func @_head_kernel(%arg0: i32, %arg1: memref<2x2x32xf32, #tpu.memory_space<vmem>>, %arg2: memref<200x128xf32, #tpu.memory_space<vmem>>, %arg3: memref<2x1xf32, #tpu.memory_space<vmem>>) attributes {dimension_semantics = [#tpu.dimension_semantics<arbitrary>], iteration_bounds = array<i64: 1>, scalar_prefetch = 0 : i64, scratch_operands = 0 : i64, tpu.core_type = #tpu.core_type<tc>, window_params = [{pipeline_mode = #tpu.pipeline_mode<synchronous>, transform_indices = @transform_0, window_bounds = array<i64: 2, 2, 32>}, {pipeline_mode = #tpu.pipeline_mode<synchronous>, transform_indices = @transform_1, window_bounds = array<i64: 200, 128>}, {pipeline_mode = #tpu.pipeline_mode<synchronous>, transform_indices = @transform_2, window_bounds = array<i64: 2, 1>}]} {
    %c0 = arith.constant 0 : index
    %c0_0 = arith.constant 0 : index
    %c0_1 = arith.constant 0 : index
    %0 = vector.load %arg1[%c0, %c0_0, %c0_1] : memref<2x2x32xf32, #tpu.memory_space<vmem>>, vector<2x2x32xf32>
    %1 = vector.extract_strided_slice %0 {offsets = [0, 0, 0], sizes = [1, 2, 32], strides = [1, 1, 1]} : vector<2x2x32xf32> to vector<1x2x32xf32>
    %2 = vector.shape_cast %1 : vector<1x2x32xf32> to vector<2x32xf32>
    %3 = vector.extract_strided_slice %0 {offsets = [1, 0, 0], sizes = [1, 2, 32], strides = [1, 1, 1]} : vector<2x2x32xf32> to vector<1x2x32xf32>
    %4 = vector.shape_cast %3 : vector<1x2x32xf32> to vector<2x32xf32>
    %5 = tpu.concatenate %2, %4 in 1 : vector<2x32xf32>, vector<2x32xf32> -> vector<2x64xf32>
    %c0_2 = arith.constant 0 : index
    %c0_3 = arith.constant 0 : index
    %6 = vector.load %arg2[%c0_2, %c0_3] : memref<200x128xf32, #tpu.memory_space<vmem>>, vector<64x64xf32>
    %c192 = arith.constant 192 : index
    %c0_4 = arith.constant 0 : index
    %7 = vector.load %arg2[%c192, %c0_4] : memref<200x128xf32, #tpu.memory_space<vmem>>, vector<1x64xf32>
    %c64 = arith.constant 64 : index
    %c0_5 = arith.constant 0 : index
    %8 = vector.load %arg2[%c64, %c0_5] : memref<200x128xf32, #tpu.memory_space<vmem>>, vector<64x64xf32>
    %c193 = arith.constant 193 : index
    %c0_6 = arith.constant 0 : index
    %9 = vector.load %arg2[%c193, %c0_6] : memref<200x128xf32, #tpu.memory_space<vmem>>, vector<1x64xf32>
    %c128 = arith.constant 128 : index
    %c0_7 = arith.constant 0 : index
    %10 = vector.load %arg2[%c128, %c0_7] : memref<200x128xf32, #tpu.memory_space<vmem>>, vector<64x1xf32>
    %c194 = arith.constant 194 : index
    %c0_8 = arith.constant 0 : index
    %11 = vector.load %arg2[%c194, %c0_8] : memref<200x128xf32, #tpu.memory_space<vmem>>, vector<1x1xf32>
    %12 = arith.truncf %5 : vector<2x64xf32> to vector<2x64xbf16>
    %13 = arith.truncf %6 : vector<64x64xf32> to vector<64x64xbf16>
    %cst = arith.constant dense<0.000000e+00> : vector<2x64xf32>
    %14 = tpu.matmul %12, %13, %cst {dimension_numbers = #tpu.dot_dimension_numbers<[1], [0], [0], [1], [0, 0, 1, 1], [], []>} : vector<2x64xbf16>, vector<64x64xbf16>, vector<2x64xf32> -> vector<2x64xf32>
    %15 = vector.broadcast %7 : vector<1x64xf32> to vector<2x64xf32>
    %16 = arith.addf %14, %15 : vector<2x64xf32>
    %cst_9 = arith.constant 0.000000e+00 : f32
    %17 = vector.broadcast %cst_9 : f32 to vector<2x64xf32>
    %18 = arith.maximumf %16, %17 : vector<2x64xf32>
    %19 = arith.truncf %18 : vector<2x64xf32> to vector<2x64xbf16>
    %20 = arith.truncf %8 : vector<64x64xf32> to vector<64x64xbf16>
    %cst_10 = arith.constant dense<0.000000e+00> : vector<2x64xf32>
    %21 = tpu.matmul %19, %20, %cst_10 {dimension_numbers = #tpu.dot_dimension_numbers<[1], [0], [0], [1], [0, 0, 1, 1], [], []>} : vector<2x64xbf16>, vector<64x64xbf16>, vector<2x64xf32> -> vector<2x64xf32>
    %22 = vector.broadcast %9 : vector<1x64xf32> to vector<2x64xf32>
    %23 = arith.addf %21, %22 : vector<2x64xf32>
    %24 = arith.addf %23, %5 : vector<2x64xf32>
    %cst_11 = arith.constant dense<0.000000e+00> : vector<2x1xf32>
    %25 = tpu.matmul %24, %10, %cst_11 {dimension_numbers = #tpu.dot_dimension_numbers<[1], [0], [0], [1], [0, 0, 1, 1], [], []>} : vector<2x64xf32>, vector<64x1xf32>, vector<2x1xf32> -> vector<2x1xf32>
    %26 = vector.broadcast %11 : vector<1x1xf32> to vector<2x1xf32>
    %27 = arith.addf %25, %26 : vector<2x1xf32>
    %28 = arith.negf %27 : vector<2x1xf32>
    %29 = math.exp %28 : vector<2x1xf32>
    %cst_12 = arith.constant 1.000000e+00 : f32
    %30 = vector.broadcast %cst_12 : f32 to vector<2x1xf32>
    %31 = arith.addf %30, %29 : vector<2x1xf32>
    %32 = arith.divf %30, %31 : vector<2x1xf32>
    %cst_13 = arith.constant 6.300000e+01 : f32
    %33 = vector.broadcast %cst_13 : f32 to vector<2x1xf32>
    %34 = arith.mulf %32, %33 : vector<2x1xf32>
    %c0_14 = arith.constant 0 : index
    %c0_15 = arith.constant 0 : index
    %35 = vector.load %arg3[%c0_14, %c0_15] : memref<2x1xf32, #tpu.memory_space<vmem>>, vector<2x1xf32>
    tpu.vector_store %arg3[%c0_14, %c0_15], %34 {strides = array<i32>} : memref<2x1xf32, #tpu.memory_space<vmem>>, vector<2x1xf32>,
    return
  }
  func.func @transform_0(%arg0: i32) -> (i32, i32, i32) {
    %c0_i32 = arith.constant 0 : i32
    %c0_i32_0 = arith.constant 0 : i32
    %c0_i32_1 = arith.constant 0 : i32
    %c0_i32_2 = arith.constant 0 : i32
    return %c0_i32, %c0_i32_0, %c0_i32_1 : i32, i32, i32
  }
  func.func @transform_1(%arg0: i32) -> (i32, i32) {
    %c0_i32 = arith.constant 0 : i32
    %c0_i32_0 = arith.constant 0 : i32
    %c0_i32_1 = arith.constant 0 : i32
    return %c0_i32, %c0_i32_0 : i32, i32
  }
  func.func @transform_2(%arg0: i32) -> (i32, i32) {
    %c0_i32 = arith.constant 0 : i32
    %c0_i32_0 = arith.constant 0 : i32
    %c0_i32_1 = arith.constant 0 : i32
    return %c0_i32, %c0_i32_0 : i32, i32
  }
}

module attributes {stable_mosaic.version = 11 : i64} {
  func.func @_modality_kernel(%arg0: i32, %arg1: memref<1x2x12x8xf32, #tpu.memory_space<vmem>>, %arg2: memref<1x2x12x8xf32, #tpu.memory_space<vmem>>, %arg3: memref<12x32xf32, #tpu.memory_space<vmem>>, %arg4: memref<1x704x128xf32, #tpu.memory_space<vmem>>, %arg5: memref<1x2x32xf32, #tpu.memory_space<vmem>>) attributes {dimension_semantics = [#tpu.dimension_semantics<parallel>], iteration_bounds = array<i64: 2>, scalar_prefetch = 0 : i64, scratch_operands = 0 : i64, tpu.core_type = #tpu.core_type<tc>, window_params = [{transform_indices = @transform_0, window_bounds = array<i64: 1, 2, 12, 8>}, {transform_indices = @transform_1, window_bounds = array<i64: 1, 2, 12, 8>}, {pipeline_mode = #tpu.pipeline_mode<synchronous>, transform_indices = @transform_2, window_bounds = array<i64: 12, 32>}, {transform_indices = @transform_3, window_bounds = array<i64: 1, 704, 128>}, {transform_indices = @transform_4, window_bounds = array<i64: 1, 2, 32>}]} {
    %c0_i32 = arith.constant 0 : i32
    %0 = arith.cmpi eq, %arg0, %c0_i32 : i32
    %c8_i32 = arith.constant 8 : i32
    %c12_i32 = arith.constant 12 : i32
    %1 = arith.select %0, %c8_i32, %c12_i32 : i32
    %c0_i32_0 = arith.constant 0 : i32
    %2 = arith.cmpi eq, %arg0, %c0_i32_0 : i32
    %c12_i32_1 = arith.constant 12 : i32
    %c8_i32_2 = arith.constant 8 : i32
    %3 = arith.select %2, %c12_i32_1, %c8_i32_2 : i32
    %4 = tpu.iota {dimensions = array<i32: 2>} : vector<1x1x12xi32>
    %5 = vector.broadcast %3 : i32 to vector<1x1x12xi32>
    %6 = arith.cmpi slt, %4, %5 : vector<1x1x12xi32>
    %7 = vector.broadcast %1 : i32 to vector<1x1x12xi32>
    %8 = arith.cmpi slt, %4, %7 : vector<1x1x12xi32>
    %9 = tpu.iota {dimensions = array<i32: 1>} : vector<1x12x1xi32>
    %c1_i32 = arith.constant 1 : i32
    %10 = arith.subi %1, %c1_i32 : i32
    %11 = vector.broadcast %10 : i32 to vector<1x12x1xi32>
    %12 = arith.cmpi eq, %9, %11 : vector<1x12x1xi32>
    %13 = arith.extui %12 : vector<1x12x1xi1> to vector<1x12x1xi32>
    %14 = arith.sitofp %13 : vector<1x12x1xi32> to vector<1x12x1xf32>
    %c0 = arith.constant 0 : index
    %c0_3 = arith.constant 0 : index
    %c0_4 = arith.constant 0 : index
    %15 = vector.load %arg4[%c0, %c0_3, %c0_4] : memref<1x704x128xf32, #tpu.memory_space<vmem>>, vector<1x8x32xf32>
    %16 = vector.shape_cast %15 : vector<1x8x32xf32> to vector<8x32xf32>
    %c0_5 = arith.constant 0 : index
    %c8 = arith.constant 8 : index
    %c0_6 = arith.constant 0 : index
    %17 = vector.load %arg4[%c0_5, %c8, %c0_6] : memref<1x704x128xf32, #tpu.memory_space<vmem>>, vector<1x8x32xf32>
    %18 = vector.shape_cast %17 : vector<1x8x32xf32> to vector<8x32xf32>
    %c0_7 = arith.constant 0 : index
    %c0_8 = arith.constant 0 : index
    %c0_9 = arith.constant 0 : index
    %c0_10 = arith.constant 0 : index
    %19 = vector.load %arg1[%c0_7, %c0_8, %c0_9, %c0_10] : memref<1x2x12x8xf32, #tpu.memory_space<vmem>>, vector<1x2x12x8xf32>
    %20 = vector.shape_cast %19 : vector<1x2x12x8xf32> to vector<2x12x8xf32>
    %21 = vector.shape_cast %20 : vector<2x12x8xf32> to vector<24x8xf32>
    %cst = arith.constant dense<0.000000e+00> : vector<24x32xf32>
    %22 = tpu.matmul %21, %16, %cst {dimension_numbers = #tpu.dot_dimension_numbers<[1], [0], [0], [1], [0, 0, 1, 1], [], []>} : vector<24x8xf32>, vector<8x32xf32>, vector<24x32xf32> -> vector<24x32xf32>
    %c0_11 = arith.constant 0 : index
    %c0_12 = arith.constant 0 : index
    %c0_13 = arith.constant 0 : index
    %c0_14 = arith.constant 0 : index
    %23 = vector.load %arg2[%c0_11, %c0_12, %c0_13, %c0_14] : memref<1x2x12x8xf32, #tpu.memory_space<vmem>>, vector<1x2x12x8xf32>
    %24 = vector.shape_cast %23 : vector<1x2x12x8xf32> to vector<2x12x8xf32>
    %25 = vector.shape_cast %24 : vector<2x12x8xf32> to vector<24x8xf32>
    %cst_15 = arith.constant dense<0.000000e+00> : vector<24x32xf32>
    %26 = tpu.matmul %25, %18, %cst_15 {dimension_numbers = #tpu.dot_dimension_numbers<[1], [0], [0], [1], [0, 0, 1, 1], [], []>} : vector<24x8xf32>, vector<8x32xf32>, vector<24x32xf32> -> vector<24x32xf32>
    %c0_16 = arith.constant 0 : index
    %c0_17 = arith.constant 0 : index
    %27 = vector.load %arg3[%c0_16, %c0_17] : memref<12x32xf32, #tpu.memory_space<vmem>>, vector<12x32xf32>
    %28 = vector.shape_cast %22 : vector<24x32xf32> to vector<2x12x32xf32>
    %cst_18 = arith.constant 5.65685415 : f32
    %29 = vector.broadcast %cst_18 : f32 to vector<2x12x32xf32>
    %30 = arith.mulf %29, %28 : vector<2x12x32xf32>
    %31 = vector.shape_cast %27 : vector<12x32xf32> to vector<1x12x32xf32>
    %32 = vector.broadcast %31 : vector<1x12x32xf32> to vector<2x12x32xf32>
    %33 = arith.addf %30, %32 : vector<2x12x32xf32>
    %34 = vector.shape_cast %33 : vector<2x12x32xf32> to vector<24x32xf32>
    %35 = vector.shape_cast %26 : vector<24x32xf32> to vector<2x12x32xf32>
    %cst_19 = arith.constant 5.65685415 : f32
    %36 = vector.broadcast %cst_19 : f32 to vector<2x12x32xf32>
    %37 = arith.mulf %36, %35 : vector<2x12x32xf32>
    %38 = vector.shape_cast %27 : vector<12x32xf32> to vector<1x12x32xf32>
    %39 = vector.broadcast %38 : vector<1x12x32xf32> to vector<2x12x32xf32>
    %40 = arith.addf %37, %39 : vector<2x12x32xf32>
    %41 = vector.shape_cast %40 : vector<2x12x32xf32> to vector<24x32xf32>
    %c0_20 = arith.constant 0 : index
    %c16 = arith.constant 16 : index
    %c0_21 = arith.constant 0 : index
    %42 = vector.load %arg4[%c0_20, %c16, %c0_21] : memref<1x704x128xf32, #tpu.memory_space<vmem>>, vector<1x32x96xf32>
    %43 = vector.shape_cast %42 : vector<1x32x96xf32> to vector<32x96xf32>
    %c0_22 = arith.constant 0 : index
    %c48 = arith.constant 48 : index
    %c0_23 = arith.constant 0 : index
    %44 = vector.load %arg4[%c0_22, %c48, %c0_23] : memref<1x704x128xf32, #tpu.memory_space<vmem>>, vector<1x32x32xf32>
    %45 = vector.shape_cast %44 : vector<1x32x32xf32> to vector<32x32xf32>
    %c0_24 = arith.constant 0 : index
    %c80 = arith.constant 80 : index
    %c0_25 = arith.constant 0 : index
    %46 = vector.load %arg4[%c0_24, %c80, %c0_25] : memref<1x704x128xf32, #tpu.memory_space<vmem>>, vector<1x32x64xf32>
    %47 = vector.shape_cast %46 : vector<1x32x64xf32> to vector<32x64xf32>
    %c0_26 = arith.constant 0 : index
    %c112 = arith.constant 112 : index
    %c0_27 = arith.constant 0 : index
    %48 = vector.load %arg4[%c0_26, %c112, %c0_27] : memref<1x704x128xf32, #tpu.memory_space<vmem>>, vector<1x64x32xf32>
    %49 = vector.shape_cast %48 : vector<1x64x32xf32> to vector<64x32xf32>
    %c0_28 = arith.constant 0 : index
    %c176 = arith.constant 176 : index
    %c0_29 = arith.constant 0 : index
    %50 = vector.load %arg4[%c0_28, %c176, %c0_29] : memref<1x704x128xf32, #tpu.memory_space<vmem>>, vector<1x1x32xf32>
    %51 = vector.shape_cast %50 : vector<1x1x32xf32> to vector<1x32xf32>
    %c0_30 = arith.constant 0 : index
    %c177 = arith.constant 177 : index
    %c0_31 = arith.constant 0 : index
    %52 = vector.load %arg4[%c0_30, %c177, %c0_31] : memref<1x704x128xf32, #tpu.memory_space<vmem>>, vector<1x1x32xf32>
    %53 = vector.shape_cast %52 : vector<1x1x32xf32> to vector<1x32xf32>
    %c0_32 = arith.constant 0 : index
    %c178 = arith.constant 178 : index
    %c0_33 = arith.constant 0 : index
    %54 = vector.load %arg4[%c0_32, %c178, %c0_33] : memref<1x704x128xf32, #tpu.memory_space<vmem>>, vector<1x1x96xf32>
    %55 = vector.shape_cast %54 : vector<1x1x96xf32> to vector<1x96xf32>
    %c0_34 = arith.constant 0 : index
    %c179 = arith.constant 179 : index
    %c0_35 = arith.constant 0 : index
    %56 = vector.load %arg4[%c0_34, %c179, %c0_35] : memref<1x704x128xf32, #tpu.memory_space<vmem>>, vector<1x1x32xf32>
    %57 = vector.shape_cast %56 : vector<1x1x32xf32> to vector<1x32xf32>
    %c0_36 = arith.constant 0 : index
    %c180 = arith.constant 180 : index
    %c0_37 = arith.constant 0 : index
    %58 = vector.load %arg4[%c0_36, %c180, %c0_37] : memref<1x704x128xf32, #tpu.memory_space<vmem>>, vector<1x1x32xf32>
    %59 = vector.shape_cast %58 : vector<1x1x32xf32> to vector<1x32xf32>
    %c0_38 = arith.constant 0 : index
    %c181 = arith.constant 181 : index
    %c0_39 = arith.constant 0 : index
    %60 = vector.load %arg4[%c0_38, %c181, %c0_39] : memref<1x704x128xf32, #tpu.memory_space<vmem>>, vector<1x1x32xf32>
    %61 = vector.shape_cast %60 : vector<1x1x32xf32> to vector<1x32xf32>
    %c0_40 = arith.constant 0 : index
    %c182 = arith.constant 182 : index
    %c0_41 = arith.constant 0 : index
    %62 = vector.load %arg4[%c0_40, %c182, %c0_41] : memref<1x704x128xf32, #tpu.memory_space<vmem>>, vector<1x1x64xf32>
    %63 = vector.shape_cast %62 : vector<1x1x64xf32> to vector<1x64xf32>
    %c0_42 = arith.constant 0 : index
    %c183 = arith.constant 183 : index
    %c0_43 = arith.constant 0 : index
    %64 = vector.load %arg4[%c0_42, %c183, %c0_43] : memref<1x704x128xf32, #tpu.memory_space<vmem>>, vector<1x1x32xf32>
    %65 = vector.shape_cast %64 : vector<1x1x32xf32> to vector<1x32xf32>
    %cst_44 = arith.constant dense<0.000000e+00> : vector<24xf32>
    %66 = vector.multi_reduction <add>, %34, %cst_44 [1] : vector<24x32xf32> to vector<24xf32>
    %67 = vector.shape_cast %66 : vector<24xf32> to vector<24x1xf32>
    %cst_45 = arith.constant 3.200000e+01 : f32
    %68 = vector.broadcast %cst_45 : f32 to vector<24x1xf32>
    %69 = arith.divf %67, %68 : vector<24x1xf32>
    %70 = vector.broadcast %69 : vector<24x1xf32> to vector<24x32xf32>
    %71 = arith.subf %34, %70 : vector<24x32xf32>
    %72 = arith.mulf %71, %71 : vector<24x32xf32>
    %cst_46 = arith.constant dense<0.000000e+00> : vector<24xf32>
    %73 = vector.multi_reduction <add>, %72, %cst_46 [1] : vector<24x32xf32> to vector<24xf32>
    %74 = vector.shape_cast %73 : vector<24xf32> to vector<24x1xf32>
    %cst_47 = arith.constant 3.200000e+01 : f32
    %75 = vector.broadcast %cst_47 : f32 to vector<24x1xf32>
    %76 = arith.divf %74, %75 : vector<24x1xf32>
    %77 = vector.broadcast %69 : vector<24x1xf32> to vector<24x32xf32>
    %78 = arith.subf %34, %77 : vector<24x32xf32>
    %cst_48 = arith.constant 9.99999974E-6 : f32
    %79 = vector.broadcast %cst_48 : f32 to vector<24x1xf32>
    %80 = arith.addf %76, %79 : vector<24x1xf32>
    %81 = math.rsqrt %80 : vector<24x1xf32>
    %82 = vector.broadcast %81 : vector<24x1xf32> to vector<24x32xf32>
    %83 = arith.mulf %78, %82 : vector<24x32xf32>
    %84 = vector.broadcast %51 : vector<1x32xf32> to vector<24x32xf32>
    %85 = arith.mulf %83, %84 : vector<24x32xf32>
    %86 = vector.broadcast %53 : vector<1x32xf32> to vector<24x32xf32>
    %87 = arith.addf %85, %86 : vector<24x32xf32>
    %cst_49 = arith.constant dense<0.000000e+00> : vector<24xf32>
    %88 = vector.multi_reduction <add>, %41, %cst_49 [1] : vector<24x32xf32> to vector<24xf32>
    %89 = vector.shape_cast %88 : vector<24xf32> to vector<24x1xf32>
    %cst_50 = arith.constant 3.200000e+01 : f32
    %90 = vector.broadcast %cst_50 : f32 to vector<24x1xf32>
    %91 = arith.divf %89, %90 : vector<24x1xf32>
    %92 = vector.broadcast %91 : vector<24x1xf32> to vector<24x32xf32>
    %93 = arith.subf %41, %92 : vector<24x32xf32>
    %94 = arith.mulf %93, %93 : vector<24x32xf32>
    %cst_51 = arith.constant dense<0.000000e+00> : vector<24xf32>
    %95 = vector.multi_reduction <add>, %94, %cst_51 [1] : vector<24x32xf32> to vector<24xf32>
    %96 = vector.shape_cast %95 : vector<24xf32> to vector<24x1xf32>
    %cst_52 = arith.constant 3.200000e+01 : f32
    %97 = vector.broadcast %cst_52 : f32 to vector<24x1xf32>
    %98 = arith.divf %96, %97 : vector<24x1xf32>
    %99 = vector.broadcast %91 : vector<24x1xf32> to vector<24x32xf32>
    %100 = arith.subf %41, %99 : vector<24x32xf32>
    %cst_53 = arith.constant 9.99999974E-6 : f32
    %101 = vector.broadcast %cst_53 : f32 to vector<24x1xf32>
    %102 = arith.addf %98, %101 : vector<24x1xf32>
    %103 = math.rsqrt %102 : vector<24x1xf32>
    %104 = vector.broadcast %103 : vector<24x1xf32> to vector<24x32xf32>
    %105 = arith.mulf %100, %104 : vector<24x32xf32>
    %106 = vector.broadcast %51 : vector<1x32xf32> to vector<24x32xf32>
    %107 = arith.mulf %105, %106 : vector<24x32xf32>
    %108 = vector.broadcast %53 : vector<1x32xf32> to vector<24x32xf32>
    %109 = arith.addf %107, %108 : vector<24x32xf32>
    %110 = tpu.concatenate %87, %109 in 0 : vector<24x32xf32>, vector<24x32xf32> -> vector<48x32xf32>
    %111 = arith.truncf %110 : vector<48x32xf32> to vector<48x32xbf16>
    %112 = arith.truncf %43 : vector<32x96xf32> to vector<32x96xbf16>
    %cst_54 = arith.constant dense<0.000000e+00> : vector<48x96xf32>
    %113 = tpu.matmul %111, %112, %cst_54 {dimension_numbers = #tpu.dot_dimension_numbers<[1], [0], [0], [1], [0, 0, 1, 1], [], []>} : vector<48x32xbf16>, vector<32x96xbf16>, vector<48x96xf32> -> vector<48x96xf32>
    %114 = vector.broadcast %55 : vector<1x96xf32> to vector<48x96xf32>
    %115 = arith.addf %113, %114 : vector<48x96xf32>
    %116 = vector.extract_strided_slice %115 {offsets = [0, 0], sizes = [24, 32], strides = [1, 1]} : vector<48x96xf32> to vector<24x32xf32>
    %117 = vector.extract_strided_slice %115 {offsets = [24, 32], sizes = [24, 32], strides = [1, 1]} : vector<48x96xf32> to vector<24x32xf32>
    %118 = vector.extract_strided_slice %115 {offsets = [24, 64], sizes = [24, 32], strides = [1, 1]} : vector<48x96xf32> to vector<24x32xf32>
    %119 = vector.shape_cast %116 : vector<24x32xf32> to vector<2x12x32xf32>
    %120 = arith.truncf %119 : vector<2x12x32xf32> to vector<2x12x32xbf16>
    %121 = vector.shape_cast %117 : vector<24x32xf32> to vector<2x12x32xf32>
    %122 = arith.truncf %121 : vector<2x12x32xf32> to vector<2x12x32xbf16>
    %123 = vector.shape_cast %118 : vector<24x32xf32> to vector<2x12x32xf32>
    %124 = arith.truncf %123 : vector<2x12x32xf32> to vector<2x12x32xbf16>
    %125 = vector.extract_strided_slice %120 {offsets = [0, 0, 0], sizes = [2, 12, 8], strides = [1, 1, 1]} : vector<2x12x32xbf16> to vector<2x12x8xbf16>
    %126 = vector.extract_strided_slice %122 {offsets = [0, 0, 0], sizes = [2, 12, 8], strides = [1, 1, 1]} : vector<2x12x32xbf16> to vector<2x12x8xbf16>
    "tpu.trace_start"() <{level = 10 : i32, message = "bqd,bkd->bqk"}> : () -> ()
    %cst_55 = arith.constant dense<0.000000e+00> : vector<2x12x12xf32>
    %127 = tpu.matmul %125, %126, %cst_55 {dimension_numbers = #tpu.dot_dimension_numbers<[2], [2], [1], [1], [0, 0, 0, 1, 1, 1], [0], [0]>} : vector<2x12x8xbf16>, vector<2x12x8xbf16>, vector<2x12x12xf32> -> vector<2x12x12xf32>
    "tpu.trace_stop"() : () -> ()
    %cst_56 = arith.constant 0.353553385 : f32
    %128 = vector.broadcast %cst_56 : f32 to vector<2x12x12xf32>
    %129 = arith.mulf %127, %128 : vector<2x12x12xf32>
    %cst_57 = arith.constant -1.000000e+30 : f32
    %130 = vector.shape_cast %6 : vector<1x1x12xi1> to vector<1x1x12xi1>
    %131 = vector.broadcast %130 : vector<1x1x12xi1> to vector<2x12x12xi1>
    %132 = vector.broadcast %cst_57 : f32 to vector<2x12x12xf32>
    %133 = arith.select %131, %129, %132 : vector<2x12x12xi1>, vector<2x12x12xf32>
    %cst_58 = arith.constant dense<0xFF800000> : vector<2x12xf32>
    %134 = vector.multi_reduction <maximumf>, %133, %cst_58 [2] : vector<2x12x12xf32> to vector<2x12xf32>
    %135 = vector.shape_cast %134 : vector<2x12xf32> to vector<2x12x1xf32>
    %136 = vector.broadcast %135 : vector<2x12x1xf32> to vector<2x12x12xf32>
    %137 = arith.subf %133, %136 : vector<2x12x12xf32>
    %138 = math.exp %137 : vector<2x12x12xf32>
    %cst_59 = arith.constant dense<0.000000e+00> : vector<2x12xf32>
    %139 = vector.multi_reduction <add>, %138, %cst_59 [2] : vector<2x12x12xf32> to vector<2x12xf32>
    %140 = vector.shape_cast %139 : vector<2x12xf32> to vector<2x12x1xf32>
    %141 = tpu.reciprocal %140 {approx = true} : vector<2x12x1xf32> -> vector<2x12x1xf32>
    %142 = vector.broadcast %141 : vector<2x12x1xf32> to vector<2x12x12xf32>
    %143 = arith.mulf %138, %142 : vector<2x12x12xf32>
    %144 = arith.truncf %143 : vector<2x12x12xf32> to vector<2x12x12xbf16>
    %145 = vector.extract_strided_slice %124 {offsets = [0, 0, 0], sizes = [2, 12, 8], strides = [1, 1, 1]} : vector<2x12x32xbf16> to vector<2x12x8xbf16>
    "tpu.trace_start"() <{level = 10 : i32, message = "bqk,bkd->bqd"}> : () -> ()
    %cst_60 = arith.constant dense<0.000000e+00> : vector<2x12x8xf32>
    %146 = tpu.matmul %144, %145, %cst_60 {dimension_numbers = #tpu.dot_dimension_numbers<[2], [1], [1], [2], [0, 0, 0, 1, 1, 2], [0], [0]>} : vector<2x12x12xbf16>, vector<2x12x8xbf16>, vector<2x12x8xf32> -> vector<2x12x8xf32>
    "tpu.trace_stop"() : () -> ()
    %147 = vector.extract_strided_slice %120 {offsets = [0, 0, 8], sizes = [2, 12, 8], strides = [1, 1, 1]} : vector<2x12x32xbf16> to vector<2x12x8xbf16>
    %148 = vector.extract_strided_slice %122 {offsets = [0, 0, 8], sizes = [2, 12, 8], strides = [1, 1, 1]} : vector<2x12x32xbf16> to vector<2x12x8xbf16>
    "tpu.trace_start"() <{level = 10 : i32, message = "bqd,bkd->bqk"}> : () -> ()
    %cst_61 = arith.constant dense<0.000000e+00> : vector<2x12x12xf32>
    %149 = tpu.matmul %147, %148, %cst_61 {dimension_numbers = #tpu.dot_dimension_numbers<[2], [2], [1], [1], [0, 0, 0, 1, 1, 1], [0], [0]>} : vector<2x12x8xbf16>, vector<2x12x8xbf16>, vector<2x12x12xf32> -> vector<2x12x12xf32>
    "tpu.trace_stop"() : () -> ()
    %cst_62 = arith.constant 0.353553385 : f32
    %150 = vector.broadcast %cst_62 : f32 to vector<2x12x12xf32>
    %151 = arith.mulf %149, %150 : vector<2x12x12xf32>
    %cst_63 = arith.constant -1.000000e+30 : f32
    %152 = vector.shape_cast %6 : vector<1x1x12xi1> to vector<1x1x12xi1>
    %153 = vector.broadcast %152 : vector<1x1x12xi1> to vector<2x12x12xi1>
    %154 = vector.broadcast %cst_63 : f32 to vector<2x12x12xf32>
    %155 = arith.select %153, %151, %154 : vector<2x12x12xi1>, vector<2x12x12xf32>
    %cst_64 = arith.constant dense<0xFF800000> : vector<2x12xf32>
    %156 = vector.multi_reduction <maximumf>, %155, %cst_64 [2] : vector<2x12x12xf32> to vector<2x12xf32>
    %157 = vector.shape_cast %156 : vector<2x12xf32> to vector<2x12x1xf32>
    %158 = vector.broadcast %157 : vector<2x12x1xf32> to vector<2x12x12xf32>
    %159 = arith.subf %155, %158 : vector<2x12x12xf32>
    %160 = math.exp %159 : vector<2x12x12xf32>
    %cst_65 = arith.constant dense<0.000000e+00> : vector<2x12xf32>
    %161 = vector.multi_reduction <add>, %160, %cst_65 [2] : vector<2x12x12xf32> to vector<2x12xf32>
    %162 = vector.shape_cast %161 : vector<2x12xf32> to vector<2x12x1xf32>
    %163 = tpu.reciprocal %162 {approx = true} : vector<2x12x1xf32> -> vector<2x12x1xf32>
    %164 = vector.broadcast %163 : vector<2x12x1xf32> to vector<2x12x12xf32>
    %165 = arith.mulf %160, %164 : vector<2x12x12xf32>
    %166 = arith.truncf %165 : vector<2x12x12xf32> to vector<2x12x12xbf16>
    %167 = vector.extract_strided_slice %124 {offsets = [0, 0, 8], sizes = [2, 12, 8], strides = [1, 1, 1]} : vector<2x12x32xbf16> to vector<2x12x8xbf16>
    "tpu.trace_start"() <{level = 10 : i32, message = "bqk,bkd->bqd"}> : () -> ()
    %cst_66 = arith.constant dense<0.000000e+00> : vector<2x12x8xf32>
    %168 = tpu.matmul %166, %167, %cst_66 {dimension_numbers = #tpu.dot_dimension_numbers<[2], [1], [1], [2], [0, 0, 0, 1, 1, 2], [0], [0]>} : vector<2x12x12xbf16>, vector<2x12x8xbf16>, vector<2x12x8xf32> -> vector<2x12x8xf32>
    "tpu.trace_stop"() : () -> ()
    %169 = vector.extract_strided_slice %120 {offsets = [0, 0, 16], sizes = [2, 12, 8], strides = [1, 1, 1]} : vector<2x12x32xbf16> to vector<2x12x8xbf16>
    %170 = vector.extract_strided_slice %122 {offsets = [0, 0, 16], sizes = [2, 12, 8], strides = [1, 1, 1]} : vector<2x12x32xbf16> to vector<2x12x8xbf16>
    "tpu.trace_start"() <{level = 10 : i32, message = "bqd,bkd->bqk"}> : () -> ()
    %cst_67 = arith.constant dense<0.000000e+00> : vector<2x12x12xf32>
    %171 = tpu.matmul %169, %170, %cst_67 {dimension_numbers = #tpu.dot_dimension_numbers<[2], [2], [1], [1], [0, 0, 0, 1, 1, 1], [0], [0]>} : vector<2x12x8xbf16>, vector<2x12x8xbf16>, vector<2x12x12xf32> -> vector<2x12x12xf32>
    "tpu.trace_stop"() : () -> ()
    %cst_68 = arith.constant 0.353553385 : f32
    %172 = vector.broadcast %cst_68 : f32 to vector<2x12x12xf32>
    %173 = arith.mulf %171, %172 : vector<2x12x12xf32>
    %cst_69 = arith.constant -1.000000e+30 : f32
    %174 = vector.shape_cast %6 : vector<1x1x12xi1> to vector<1x1x12xi1>
    %175 = vector.broadcast %174 : vector<1x1x12xi1> to vector<2x12x12xi1>
    %176 = vector.broadcast %cst_69 : f32 to vector<2x12x12xf32>
    %177 = arith.select %175, %173, %176 : vector<2x12x12xi1>, vector<2x12x12xf32>
    %cst_70 = arith.constant dense<0xFF800000> : vector<2x12xf32>
    %178 = vector.multi_reduction <maximumf>, %177, %cst_70 [2] : vector<2x12x12xf32> to vector<2x12xf32>
    %179 = vector.shape_cast %178 : vector<2x12xf32> to vector<2x12x1xf32>
    %180 = vector.broadcast %179 : vector<2x12x1xf32> to vector<2x12x12xf32>
    %181 = arith.subf %177, %180 : vector<2x12x12xf32>
    %182 = math.exp %181 : vector<2x12x12xf32>
    %cst_71 = arith.constant dense<0.000000e+00> : vector<2x12xf32>
    %183 = vector.multi_reduction <add>, %182, %cst_71 [2] : vector<2x12x12xf32> to vector<2x12xf32>
    %184 = vector.shape_cast %183 : vector<2x12xf32> to vector<2x12x1xf32>
    %185 = tpu.reciprocal %184 {approx = true} : vector<2x12x1xf32> -> vector<2x12x1xf32>
    %186 = vector.broadcast %185 : vector<2x12x1xf32> to vector<2x12x12xf32>
    %187 = arith.mulf %182, %186 : vector<2x12x12xf32>
    %188 = arith.truncf %187 : vector<2x12x12xf32> to vector<2x12x12xbf16>
    %189 = vector.extract_strided_slice %124 {offsets = [0, 0, 16], sizes = [2, 12, 8], strides = [1, 1, 1]} : vector<2x12x32xbf16> to vector<2x12x8xbf16>
    "tpu.trace_start"() <{level = 10 : i32, message = "bqk,bkd->bqd"}> : () -> ()
    %cst_72 = arith.constant dense<0.000000e+00> : vector<2x12x8xf32>
    %190 = tpu.matmul %188, %189, %cst_72 {dimension_numbers = #tpu.dot_dimension_numbers<[2], [1], [1], [2], [0, 0, 0, 1, 1, 2], [0], [0]>} : vector<2x12x12xbf16>, vector<2x12x8xbf16>, vector<2x12x8xf32> -> vector<2x12x8xf32>
    "tpu.trace_stop"() : () -> ()
    %191 = vector.extract_strided_slice %120 {offsets = [0, 0, 24], sizes = [2, 12, 8], strides = [1, 1, 1]} : vector<2x12x32xbf16> to vector<2x12x8xbf16>
    %192 = vector.extract_strided_slice %122 {offsets = [0, 0, 24], sizes = [2, 12, 8], strides = [1, 1, 1]} : vector<2x12x32xbf16> to vector<2x12x8xbf16>
    "tpu.trace_start"() <{level = 10 : i32, message = "bqd,bkd->bqk"}> : () -> ()
    %cst_73 = arith.constant dense<0.000000e+00> : vector<2x12x12xf32>
    %193 = tpu.matmul %191, %192, %cst_73 {dimension_numbers = #tpu.dot_dimension_numbers<[2], [2], [1], [1], [0, 0, 0, 1, 1, 1], [0], [0]>} : vector<2x12x8xbf16>, vector<2x12x8xbf16>, vector<2x12x12xf32> -> vector<2x12x12xf32>
    "tpu.trace_stop"() : () -> ()
    %cst_74 = arith.constant 0.353553385 : f32
    %194 = vector.broadcast %cst_74 : f32 to vector<2x12x12xf32>
    %195 = arith.mulf %193, %194 : vector<2x12x12xf32>
    %cst_75 = arith.constant -1.000000e+30 : f32
    %196 = vector.shape_cast %6 : vector<1x1x12xi1> to vector<1x1x12xi1>
    %197 = vector.broadcast %196 : vector<1x1x12xi1> to vector<2x12x12xi1>
    %198 = vector.broadcast %cst_75 : f32 to vector<2x12x12xf32>
    %199 = arith.select %197, %195, %198 : vector<2x12x12xi1>, vector<2x12x12xf32>
    %cst_76 = arith.constant dense<0xFF800000> : vector<2x12xf32>
    %200 = vector.multi_reduction <maximumf>, %199, %cst_76 [2] : vector<2x12x12xf32> to vector<2x12xf32>
    %201 = vector.shape_cast %200 : vector<2x12xf32> to vector<2x12x1xf32>
    %202 = vector.broadcast %201 : vector<2x12x1xf32> to vector<2x12x12xf32>
    %203 = arith.subf %199, %202 : vector<2x12x12xf32>
    %204 = math.exp %203 : vector<2x12x12xf32>
    %cst_77 = arith.constant dense<0.000000e+00> : vector<2x12xf32>
    %205 = vector.multi_reduction <add>, %204, %cst_77 [2] : vector<2x12x12xf32> to vector<2x12xf32>
    %206 = vector.shape_cast %205 : vector<2x12xf32> to vector<2x12x1xf32>
    %207 = tpu.reciprocal %206 {approx = true} : vector<2x12x1xf32> -> vector<2x12x1xf32>
    %208 = vector.broadcast %207 : vector<2x12x1xf32> to vector<2x12x12xf32>
    %209 = arith.mulf %204, %208 : vector<2x12x12xf32>
    %210 = arith.truncf %209 : vector<2x12x12xf32> to vector<2x12x12xbf16>
    %211 = vector.extract_strided_slice %124 {offsets = [0, 0, 24], sizes = [2, 12, 8], strides = [1, 1, 1]} : vector<2x12x32xbf16> to vector<2x12x8xbf16>
    "tpu.trace_start"() <{level = 10 : i32, message = "bqk,bkd->bqd"}> : () -> ()
    %cst_78 = arith.constant dense<0.000000e+00> : vector<2x12x8xf32>
    %212 = tpu.matmul %210, %211, %cst_78 {dimension_numbers = #tpu.dot_dimension_numbers<[2], [1], [1], [2], [0, 0, 0, 1, 1, 2], [0], [0]>} : vector<2x12x12xbf16>, vector<2x12x8xbf16>, vector<2x12x8xf32> -> vector<2x12x8xf32>
    "tpu.trace_stop"() : () -> ()
    %213 = tpu.concatenate %146, %168, %190, %212 in 2 : vector<2x12x8xf32>, vector<2x12x8xf32>, vector<2x12x8xf32>, vector<2x12x8xf32> -> vector<2x12x32xf32>
    %214 = vector.shape_cast %213 : vector<2x12x32xf32> to vector<24x32xf32>
    %215 = arith.truncf %214 : vector<24x32xf32> to vector<24x32xbf16>
    %216 = arith.truncf %45 : vector<32x32xf32> to vector<32x32xbf16>
    %cst_79 = arith.constant dense<0.000000e+00> : vector<24x32xf32>
    %217 = tpu.matmul %215, %216, %cst_79 {dimension_numbers = #tpu.dot_dimension_numbers<[1], [0], [0], [1], [0, 0, 1, 1], [], []>} : vector<24x32xbf16>, vector<32x32xbf16>, vector<24x32xf32> -> vector<24x32xf32>
    %218 = vector.broadcast %57 : vector<1x32xf32> to vector<24x32xf32>
    %219 = arith.addf %217, %218 : vector<24x32xf32>
    %220 = arith.addf %34, %219 : vector<24x32xf32>
    %cst_80 = arith.constant dense<0.000000e+00> : vector<24xf32>
    %221 = vector.multi_reduction <add>, %220, %cst_80 [1] : vector<24x32xf32> to vector<24xf32>
    %222 = vector.shape_cast %221 : vector<24xf32> to vector<24x1xf32>
    %cst_81 = arith.constant 3.200000e+01 : f32
    %223 = vector.broadcast %cst_81 : f32 to vector<24x1xf32>
    %224 = arith.divf %222, %223 : vector<24x1xf32>
    %225 = vector.broadcast %224 : vector<24x1xf32> to vector<24x32xf32>
    %226 = arith.subf %220, %225 : vector<24x32xf32>
    %227 = arith.mulf %226, %226 : vector<24x32xf32>
    %cst_82 = arith.constant dense<0.000000e+00> : vector<24xf32>
    %228 = vector.multi_reduction <add>, %227, %cst_82 [1] : vector<24x32xf32> to vector<24xf32>
    %229 = vector.shape_cast %228 : vector<24xf32> to vector<24x1xf32>
    %cst_83 = arith.constant 3.200000e+01 : f32
    %230 = vector.broadcast %cst_83 : f32 to vector<24x1xf32>
    %231 = arith.divf %229, %230 : vector<24x1xf32>
    %232 = vector.broadcast %224 : vector<24x1xf32> to vector<24x32xf32>
    %233 = arith.subf %220, %232 : vector<24x32xf32>
    %cst_84 = arith.constant 9.99999974E-6 : f32
    %234 = vector.broadcast %cst_84 : f32 to vector<24x1xf32>
    %235 = arith.addf %231, %234 : vector<24x1xf32>
    %236 = math.rsqrt %235 : vector<24x1xf32>
    %237 = vector.broadcast %236 : vector<24x1xf32> to vector<24x32xf32>
    %238 = arith.mulf %233, %237 : vector<24x32xf32>
    %239 = vector.broadcast %59 : vector<1x32xf32> to vector<24x32xf32>
    %240 = arith.mulf %238, %239 : vector<24x32xf32>
    %241 = vector.broadcast %61 : vector<1x32xf32> to vector<24x32xf32>
    %242 = arith.addf %240, %241 : vector<24x32xf32>
    %243 = arith.truncf %242 : vector<24x32xf32> to vector<24x32xbf16>
    %244 = arith.truncf %47 : vector<32x64xf32> to vector<32x64xbf16>
    %cst_85 = arith.constant dense<0.000000e+00> : vector<24x64xf32>
    %245 = tpu.matmul %243, %244, %cst_85 {dimension_numbers = #tpu.dot_dimension_numbers<[1], [0], [0], [1], [0, 0, 1, 1], [], []>} : vector<24x32xbf16>, vector<32x64xbf16>, vector<24x64xf32> -> vector<24x64xf32>
    %246 = vector.broadcast %63 : vector<1x64xf32> to vector<24x64xf32>
    %247 = arith.addf %245, %246 : vector<24x64xf32>
    %cst_86 = arith.constant 0.000000e+00 : f32
    %248 = vector.broadcast %cst_86 : f32 to vector<24x64xf32>
    %249 = arith.maximumf %247, %248 : vector<24x64xf32>
    %250 = arith.truncf %249 : vector<24x64xf32> to vector<24x64xbf16>
    %251 = arith.truncf %49 : vector<64x32xf32> to vector<64x32xbf16>
    %cst_87 = arith.constant dense<0.000000e+00> : vector<24x32xf32>
    %252 = tpu.matmul %250, %251, %cst_87 {dimension_numbers = #tpu.dot_dimension_numbers<[1], [0], [0], [1], [0, 0, 1, 1], [], []>} : vector<24x64xbf16>, vector<64x32xbf16>, vector<24x32xf32> -> vector<24x32xf32>
    %253 = vector.broadcast %65 : vector<1x32xf32> to vector<24x32xf32>
    %254 = arith.addf %252, %253 : vector<24x32xf32>
    %255 = arith.addf %220, %254 : vector<24x32xf32>
    %c0_88 = arith.constant 0 : index
    %c184 = arith.constant 184 : index
    %c0_89 = arith.constant 0 : index
    %256 = vector.load %arg4[%c0_88, %c184, %c0_89] : memref<1x704x128xf32, #tpu.memory_space<vmem>>, vector<1x32x96xf32>
    %257 = vector.shape_cast %256 : vector<1x32x96xf32> to vector<32x96xf32>
    %c0_90 = arith.constant 0 : index
    %c216 = arith.constant 216 : index
    %c0_91 = arith.constant 0 : index
    %258 = vector.load %arg4[%c0_90, %c216, %c0_91] : memref<1x704x128xf32, #tpu.memory_space<vmem>>, vector<1x32x32xf32>
    %259 = vector.shape_cast %258 : vector<1x32x32xf32> to vector<32x32xf32>
    %c0_92 = arith.constant 0 : index
    %c248 = arith.constant 248 : index
    %c0_93 = arith.constant 0 : index
    %260 = vector.load %arg4[%c0_92, %c248, %c0_93] : memref<1x704x128xf32, #tpu.memory_space<vmem>>, vector<1x32x64xf32>
    %261 = vector.shape_cast %260 : vector<1x32x64xf32> to vector<32x64xf32>
    %c0_94 = arith.constant 0 : index
    %c280 = arith.constant 280 : index
    %c0_95 = arith.constant 0 : index
    %262 = vector.load %arg4[%c0_94, %c280, %c0_95] : memref<1x704x128xf32, #tpu.memory_space<vmem>>, vector<1x64x32xf32>
    %263 = vector.shape_cast %262 : vector<1x64x32xf32> to vector<64x32xf32>
    %c0_96 = arith.constant 0 : index
    %c344 = arith.constant 344 : index
    %c0_97 = arith.constant 0 : index
    %264 = vector.load %arg4[%c0_96, %c344, %c0_97] : memref<1x704x128xf32, #tpu.memory_space<vmem>>, vector<1x1x32xf32>
    %265 = vector.shape_cast %264 : vector<1x1x32xf32> to vector<1x32xf32>
    %c0_98 = arith.constant 0 : index
    %c345 = arith.constant 345 : index
    %c0_99 = arith.constant 0 : index
    %266 = vector.load %arg4[%c0_98, %c345, %c0_99] : memref<1x704x128xf32, #tpu.memory_space<vmem>>, vector<1x1x32xf32>
    %267 = vector.shape_cast %266 : vector<1x1x32xf32> to vector<1x32xf32>
    %c0_100 = arith.constant 0 : index
    %c346 = arith.constant 346 : index
    %c0_101 = arith.constant 0 : index
    %268 = vector.load %arg4[%c0_100, %c346, %c0_101] : memref<1x704x128xf32, #tpu.memory_space<vmem>>, vector<1x1x96xf32>
    %269 = vector.shape_cast %268 : vector<1x1x96xf32> to vector<1x96xf32>
    %c0_102 = arith.constant 0 : index
    %c347 = arith.constant 347 : index
    %c0_103 = arith.constant 0 : index
    %270 = vector.load %arg4[%c0_102, %c347, %c0_103] : memref<1x704x128xf32, #tpu.memory_space<vmem>>, vector<1x1x32xf32>
    %271 = vector.shape_cast %270 : vector<1x1x32xf32> to vector<1x32xf32>
    %c0_104 = arith.constant 0 : index
    %c348 = arith.constant 348 : index
    %c0_105 = arith.constant 0 : index
    %272 = vector.load %arg4[%c0_104, %c348, %c0_105] : memref<1x704x128xf32, #tpu.memory_space<vmem>>, vector<1x1x32xf32>
    %273 = vector.shape_cast %272 : vector<1x1x32xf32> to vector<1x32xf32>
    %c0_106 = arith.constant 0 : index
    %c349 = arith.constant 349 : index
    %c0_107 = arith.constant 0 : index
    %274 = vector.load %arg4[%c0_106, %c349, %c0_107] : memref<1x704x128xf32, #tpu.memory_space<vmem>>, vector<1x1x32xf32>
    %275 = vector.shape_cast %274 : vector<1x1x32xf32> to vector<1x32xf32>
    %c0_108 = arith.constant 0 : index
    %c350 = arith.constant 350 : index
    %c0_109 = arith.constant 0 : index
    %276 = vector.load %arg4[%c0_108, %c350, %c0_109] : memref<1x704x128xf32, #tpu.memory_space<vmem>>, vector<1x1x64xf32>
    %277 = vector.shape_cast %276 : vector<1x1x64xf32> to vector<1x64xf32>
    %c0_110 = arith.constant 0 : index
    %c351 = arith.constant 351 : index
    %c0_111 = arith.constant 0 : index
    %278 = vector.load %arg4[%c0_110, %c351, %c0_111] : memref<1x704x128xf32, #tpu.memory_space<vmem>>, vector<1x1x32xf32>
    %279 = vector.shape_cast %278 : vector<1x1x32xf32> to vector<1x32xf32>
    %cst_112 = arith.constant dense<0.000000e+00> : vector<24xf32>
    %280 = vector.multi_reduction <add>, %255, %cst_112 [1] : vector<24x32xf32> to vector<24xf32>
    %281 = vector.shape_cast %280 : vector<24xf32> to vector<24x1xf32>
    %cst_113 = arith.constant 3.200000e+01 : f32
    %282 = vector.broadcast %cst_113 : f32 to vector<24x1xf32>
    %283 = arith.divf %281, %282 : vector<24x1xf32>
    %284 = vector.broadcast %283 : vector<24x1xf32> to vector<24x32xf32>
    %285 = arith.subf %255, %284 : vector<24x32xf32>
    %286 = arith.mulf %285, %285 : vector<24x32xf32>
    %cst_114 = arith.constant dense<0.000000e+00> : vector<24xf32>
    %287 = vector.multi_reduction <add>, %286, %cst_114 [1] : vector<24x32xf32> to vector<24xf32>
    %288 = vector.shape_cast %287 : vector<24xf32> to vector<24x1xf32>
    %cst_115 = arith.constant 3.200000e+01 : f32
    %289 = vector.broadcast %cst_115 : f32 to vector<24x1xf32>
    %290 = arith.divf %288, %289 : vector<24x1xf32>
    %291 = vector.broadcast %283 : vector<24x1xf32> to vector<24x32xf32>
    %292 = arith.subf %255, %291 : vector<24x32xf32>
    %cst_116 = arith.constant 9.99999974E-6 : f32
    %293 = vector.broadcast %cst_116 : f32 to vector<24x1xf32>
    %294 = arith.addf %290, %293 : vector<24x1xf32>
    %295 = math.rsqrt %294 : vector<24x1xf32>
    %296 = vector.broadcast %295 : vector<24x1xf32> to vector<24x32xf32>
    %297 = arith.mulf %292, %296 : vector<24x32xf32>
    %298 = vector.broadcast %265 : vector<1x32xf32> to vector<24x32xf32>
    %299 = arith.mulf %297, %298 : vector<24x32xf32>
    %300 = vector.broadcast %267 : vector<1x32xf32> to vector<24x32xf32>
    %301 = arith.addf %299, %300 : vector<24x32xf32>
    %cst_117 = arith.constant dense<0.000000e+00> : vector<24xf32>
    %302 = vector.multi_reduction <add>, %41, %cst_117 [1] : vector<24x32xf32> to vector<24xf32>
    %303 = vector.shape_cast %302 : vector<24xf32> to vector<24x1xf32>
    %cst_118 = arith.constant 3.200000e+01 : f32
    %304 = vector.broadcast %cst_118 : f32 to vector<24x1xf32>
    %305 = arith.divf %303, %304 : vector<24x1xf32>
    %306 = vector.broadcast %305 : vector<24x1xf32> to vector<24x32xf32>
    %307 = arith.subf %41, %306 : vector<24x32xf32>
    %308 = arith.mulf %307, %307 : vector<24x32xf32>
    %cst_119 = arith.constant dense<0.000000e+00> : vector<24xf32>
    %309 = vector.multi_reduction <add>, %308, %cst_119 [1] : vector<24x32xf32> to vector<24xf32>
    %310 = vector.shape_cast %309 : vector<24xf32> to vector<24x1xf32>
    %cst_120 = arith.constant 3.200000e+01 : f32
    %311 = vector.broadcast %cst_120 : f32 to vector<24x1xf32>
    %312 = arith.divf %310, %311 : vector<24x1xf32>
    %313 = vector.broadcast %305 : vector<24x1xf32> to vector<24x32xf32>
    %314 = arith.subf %41, %313 : vector<24x32xf32>
    %cst_121 = arith.constant 9.99999974E-6 : f32
    %315 = vector.broadcast %cst_121 : f32 to vector<24x1xf32>
    %316 = arith.addf %312, %315 : vector<24x1xf32>
    %317 = math.rsqrt %316 : vector<24x1xf32>
    %318 = vector.broadcast %317 : vector<24x1xf32> to vector<24x32xf32>
    %319 = arith.mulf %314, %318 : vector<24x32xf32>
    %320 = vector.broadcast %265 : vector<1x32xf32> to vector<24x32xf32>
    %321 = arith.mulf %319, %320 : vector<24x32xf32>
    %322 = vector.broadcast %267 : vector<1x32xf32> to vector<24x32xf32>
    %323 = arith.addf %321, %322 : vector<24x32xf32>
    %324 = tpu.concatenate %301, %323 in 0 : vector<24x32xf32>, vector<24x32xf32> -> vector<48x32xf32>
    %325 = arith.truncf %324 : vector<48x32xf32> to vector<48x32xbf16>
    %326 = arith.truncf %257 : vector<32x96xf32> to vector<32x96xbf16>
    %cst_122 = arith.constant dense<0.000000e+00> : vector<48x96xf32>
    %327 = tpu.matmul %325, %326, %cst_122 {dimension_numbers = #tpu.dot_dimension_numbers<[1], [0], [0], [1], [0, 0, 1, 1], [], []>} : vector<48x32xbf16>, vector<32x96xbf16>, vector<48x96xf32> -> vector<48x96xf32>
    %328 = vector.broadcast %269 : vector<1x96xf32> to vector<48x96xf32>
    %329 = arith.addf %327, %328 : vector<48x96xf32>
    %330 = vector.extract_strided_slice %329 {offsets = [0, 0], sizes = [24, 32], strides = [1, 1]} : vector<48x96xf32> to vector<24x32xf32>
    %331 = vector.extract_strided_slice %329 {offsets = [24, 32], sizes = [24, 32], strides = [1, 1]} : vector<48x96xf32> to vector<24x32xf32>
    %332 = vector.extract_strided_slice %329 {offsets = [24, 64], sizes = [24, 32], strides = [1, 1]} : vector<48x96xf32> to vector<24x32xf32>
    %333 = vector.shape_cast %330 : vector<24x32xf32> to vector<2x12x32xf32>
    %334 = arith.truncf %333 : vector<2x12x32xf32> to vector<2x12x32xbf16>
    %335 = vector.shape_cast %331 : vector<24x32xf32> to vector<2x12x32xf32>
    %336 = arith.truncf %335 : vector<2x12x32xf32> to vector<2x12x32xbf16>
    %337 = vector.shape_cast %332 : vector<24x32xf32> to vector<2x12x32xf32>
    %338 = arith.truncf %337 : vector<2x12x32xf32> to vector<2x12x32xbf16>
    %339 = vector.extract_strided_slice %334 {offsets = [0, 0, 0], sizes = [2, 12, 8], strides = [1, 1, 1]} : vector<2x12x32xbf16> to vector<2x12x8xbf16>
    %340 = vector.extract_strided_slice %336 {offsets = [0, 0, 0], sizes = [2, 12, 8], strides = [1, 1, 1]} : vector<2x12x32xbf16> to vector<2x12x8xbf16>
    "tpu.trace_start"() <{level = 10 : i32, message = "bqd,bkd->bqk"}> : () -> ()
    %cst_123 = arith.constant dense<0.000000e+00> : vector<2x12x12xf32>
    %341 = tpu.matmul %339, %340, %cst_123 {dimension_numbers = #tpu.dot_dimension_numbers<[2], [2], [1], [1], [0, 0, 0, 1, 1, 1], [0], [0]>} : vector<2x12x8xbf16>, vector<2x12x8xbf16>, vector<2x12x12xf32> -> vector<2x12x12xf32>
    "tpu.trace_stop"() : () -> ()
    %cst_124 = arith.constant 0.353553385 : f32
    %342 = vector.broadcast %cst_124 : f32 to vector<2x12x12xf32>
    %343 = arith.mulf %341, %342 : vector<2x12x12xf32>
    %cst_125 = arith.constant -1.000000e+30 : f32
    %344 = vector.shape_cast %6 : vector<1x1x12xi1> to vector<1x1x12xi1>
    %345 = vector.broadcast %344 : vector<1x1x12xi1> to vector<2x12x12xi1>
    %346 = vector.broadcast %cst_125 : f32 to vector<2x12x12xf32>
    %347 = arith.select %345, %343, %346 : vector<2x12x12xi1>, vector<2x12x12xf32>
    %cst_126 = arith.constant dense<0xFF800000> : vector<2x12xf32>
    %348 = vector.multi_reduction <maximumf>, %347, %cst_126 [2] : vector<2x12x12xf32> to vector<2x12xf32>
    %349 = vector.shape_cast %348 : vector<2x12xf32> to vector<2x12x1xf32>
    %350 = vector.broadcast %349 : vector<2x12x1xf32> to vector<2x12x12xf32>
    %351 = arith.subf %347, %350 : vector<2x12x12xf32>
    %352 = math.exp %351 : vector<2x12x12xf32>
    %cst_127 = arith.constant dense<0.000000e+00> : vector<2x12xf32>
    %353 = vector.multi_reduction <add>, %352, %cst_127 [2] : vector<2x12x12xf32> to vector<2x12xf32>
    %354 = vector.shape_cast %353 : vector<2x12xf32> to vector<2x12x1xf32>
    %355 = tpu.reciprocal %354 {approx = true} : vector<2x12x1xf32> -> vector<2x12x1xf32>
    %356 = vector.broadcast %355 : vector<2x12x1xf32> to vector<2x12x12xf32>
    %357 = arith.mulf %352, %356 : vector<2x12x12xf32>
    %358 = arith.truncf %357 : vector<2x12x12xf32> to vector<2x12x12xbf16>
    %359 = vector.extract_strided_slice %338 {offsets = [0, 0, 0], sizes = [2, 12, 8], strides = [1, 1, 1]} : vector<2x12x32xbf16> to vector<2x12x8xbf16>
    "tpu.trace_start"() <{level = 10 : i32, message = "bqk,bkd->bqd"}> : () -> ()
    %cst_128 = arith.constant dense<0.000000e+00> : vector<2x12x8xf32>
    %360 = tpu.matmul %358, %359, %cst_128 {dimension_numbers = #tpu.dot_dimension_numbers<[2], [1], [1], [2], [0, 0, 0, 1, 1, 2], [0], [0]>} : vector<2x12x12xbf16>, vector<2x12x8xbf16>, vector<2x12x8xf32> -> vector<2x12x8xf32>
    "tpu.trace_stop"() : () -> ()
    %361 = vector.extract_strided_slice %334 {offsets = [0, 0, 8], sizes = [2, 12, 8], strides = [1, 1, 1]} : vector<2x12x32xbf16> to vector<2x12x8xbf16>
    %362 = vector.extract_strided_slice %336 {offsets = [0, 0, 8], sizes = [2, 12, 8], strides = [1, 1, 1]} : vector<2x12x32xbf16> to vector<2x12x8xbf16>
    "tpu.trace_start"() <{level = 10 : i32, message = "bqd,bkd->bqk"}> : () -> ()
    %cst_129 = arith.constant dense<0.000000e+00> : vector<2x12x12xf32>
    %363 = tpu.matmul %361, %362, %cst_129 {dimension_numbers = #tpu.dot_dimension_numbers<[2], [2], [1], [1], [0, 0, 0, 1, 1, 1], [0], [0]>} : vector<2x12x8xbf16>, vector<2x12x8xbf16>, vector<2x12x12xf32> -> vector<2x12x12xf32>
    "tpu.trace_stop"() : () -> ()
    %cst_130 = arith.constant 0.353553385 : f32
    %364 = vector.broadcast %cst_130 : f32 to vector<2x12x12xf32>
    %365 = arith.mulf %363, %364 : vector<2x12x12xf32>
    %cst_131 = arith.constant -1.000000e+30 : f32
    %366 = vector.shape_cast %6 : vector<1x1x12xi1> to vector<1x1x12xi1>
    %367 = vector.broadcast %366 : vector<1x1x12xi1> to vector<2x12x12xi1>
    %368 = vector.broadcast %cst_131 : f32 to vector<2x12x12xf32>
    %369 = arith.select %367, %365, %368 : vector<2x12x12xi1>, vector<2x12x12xf32>
    %cst_132 = arith.constant dense<0xFF800000> : vector<2x12xf32>
    %370 = vector.multi_reduction <maximumf>, %369, %cst_132 [2] : vector<2x12x12xf32> to vector<2x12xf32>
    %371 = vector.shape_cast %370 : vector<2x12xf32> to vector<2x12x1xf32>
    %372 = vector.broadcast %371 : vector<2x12x1xf32> to vector<2x12x12xf32>
    %373 = arith.subf %369, %372 : vector<2x12x12xf32>
    %374 = math.exp %373 : vector<2x12x12xf32>
    %cst_133 = arith.constant dense<0.000000e+00> : vector<2x12xf32>
    %375 = vector.multi_reduction <add>, %374, %cst_133 [2] : vector<2x12x12xf32> to vector<2x12xf32>
    %376 = vector.shape_cast %375 : vector<2x12xf32> to vector<2x12x1xf32>
    %377 = tpu.reciprocal %376 {approx = true} : vector<2x12x1xf32> -> vector<2x12x1xf32>
    %378 = vector.broadcast %377 : vector<2x12x1xf32> to vector<2x12x12xf32>
    %379 = arith.mulf %374, %378 : vector<2x12x12xf32>
    %380 = arith.truncf %379 : vector<2x12x12xf32> to vector<2x12x12xbf16>
    %381 = vector.extract_strided_slice %338 {offsets = [0, 0, 8], sizes = [2, 12, 8], strides = [1, 1, 1]} : vector<2x12x32xbf16> to vector<2x12x8xbf16>
    "tpu.trace_start"() <{level = 10 : i32, message = "bqk,bkd->bqd"}> : () -> ()
    %cst_134 = arith.constant dense<0.000000e+00> : vector<2x12x8xf32>
    %382 = tpu.matmul %380, %381, %cst_134 {dimension_numbers = #tpu.dot_dimension_numbers<[2], [1], [1], [2], [0, 0, 0, 1, 1, 2], [0], [0]>} : vector<2x12x12xbf16>, vector<2x12x8xbf16>, vector<2x12x8xf32> -> vector<2x12x8xf32>
    "tpu.trace_stop"() : () -> ()
    %383 = vector.extract_strided_slice %334 {offsets = [0, 0, 16], sizes = [2, 12, 8], strides = [1, 1, 1]} : vector<2x12x32xbf16> to vector<2x12x8xbf16>
    %384 = vector.extract_strided_slice %336 {offsets = [0, 0, 16], sizes = [2, 12, 8], strides = [1, 1, 1]} : vector<2x12x32xbf16> to vector<2x12x8xbf16>
    "tpu.trace_start"() <{level = 10 : i32, message = "bqd,bkd->bqk"}> : () -> ()
    %cst_135 = arith.constant dense<0.000000e+00> : vector<2x12x12xf32>
    %385 = tpu.matmul %383, %384, %cst_135 {dimension_numbers = #tpu.dot_dimension_numbers<[2], [2], [1], [1], [0, 0, 0, 1, 1, 1], [0], [0]>} : vector<2x12x8xbf16>, vector<2x12x8xbf16>, vector<2x12x12xf32> -> vector<2x12x12xf32>
    "tpu.trace_stop"() : () -> ()
    %cst_136 = arith.constant 0.353553385 : f32
    %386 = vector.broadcast %cst_136 : f32 to vector<2x12x12xf32>
    %387 = arith.mulf %385, %386 : vector<2x12x12xf32>
    %cst_137 = arith.constant -1.000000e+30 : f32
    %388 = vector.shape_cast %6 : vector<1x1x12xi1> to vector<1x1x12xi1>
    %389 = vector.broadcast %388 : vector<1x1x12xi1> to vector<2x12x12xi1>
    %390 = vector.broadcast %cst_137 : f32 to vector<2x12x12xf32>
    %391 = arith.select %389, %387, %390 : vector<2x12x12xi1>, vector<2x12x12xf32>
    %cst_138 = arith.constant dense<0xFF800000> : vector<2x12xf32>
    %392 = vector.multi_reduction <maximumf>, %391, %cst_138 [2] : vector<2x12x12xf32> to vector<2x12xf32>
    %393 = vector.shape_cast %392 : vector<2x12xf32> to vector<2x12x1xf32>
    %394 = vector.broadcast %393 : vector<2x12x1xf32> to vector<2x12x12xf32>
    %395 = arith.subf %391, %394 : vector<2x12x12xf32>
    %396 = math.exp %395 : vector<2x12x12xf32>
    %cst_139 = arith.constant dense<0.000000e+00> : vector<2x12xf32>
    %397 = vector.multi_reduction <add>, %396, %cst_139 [2] : vector<2x12x12xf32> to vector<2x12xf32>
    %398 = vector.shape_cast %397 : vector<2x12xf32> to vector<2x12x1xf32>
    %399 = tpu.reciprocal %398 {approx = true} : vector<2x12x1xf32> -> vector<2x12x1xf32>
    %400 = vector.broadcast %399 : vector<2x12x1xf32> to vector<2x12x12xf32>
    %401 = arith.mulf %396, %400 : vector<2x12x12xf32>
    %402 = arith.truncf %401 : vector<2x12x12xf32> to vector<2x12x12xbf16>
    %403 = vector.extract_strided_slice %338 {offsets = [0, 0, 16], sizes = [2, 12, 8], strides = [1, 1, 1]} : vector<2x12x32xbf16> to vector<2x12x8xbf16>
    "tpu.trace_start"() <{level = 10 : i32, message = "bqk,bkd->bqd"}> : () -> ()
    %cst_140 = arith.constant dense<0.000000e+00> : vector<2x12x8xf32>
    %404 = tpu.matmul %402, %403, %cst_140 {dimension_numbers = #tpu.dot_dimension_numbers<[2], [1], [1], [2], [0, 0, 0, 1, 1, 2], [0], [0]>} : vector<2x12x12xbf16>, vector<2x12x8xbf16>, vector<2x12x8xf32> -> vector<2x12x8xf32>
    "tpu.trace_stop"() : () -> ()
    %405 = vector.extract_strided_slice %334 {offsets = [0, 0, 24], sizes = [2, 12, 8], strides = [1, 1, 1]} : vector<2x12x32xbf16> to vector<2x12x8xbf16>
    %406 = vector.extract_strided_slice %336 {offsets = [0, 0, 24], sizes = [2, 12, 8], strides = [1, 1, 1]} : vector<2x12x32xbf16> to vector<2x12x8xbf16>
    "tpu.trace_start"() <{level = 10 : i32, message = "bqd,bkd->bqk"}> : () -> ()
    %cst_141 = arith.constant dense<0.000000e+00> : vector<2x12x12xf32>
    %407 = tpu.matmul %405, %406, %cst_141 {dimension_numbers = #tpu.dot_dimension_numbers<[2], [2], [1], [1], [0, 0, 0, 1, 1, 1], [0], [0]>} : vector<2x12x8xbf16>, vector<2x12x8xbf16>, vector<2x12x12xf32> -> vector<2x12x12xf32>
    "tpu.trace_stop"() : () -> ()
    %cst_142 = arith.constant 0.353553385 : f32
    %408 = vector.broadcast %cst_142 : f32 to vector<2x12x12xf32>
    %409 = arith.mulf %407, %408 : vector<2x12x12xf32>
    %cst_143 = arith.constant -1.000000e+30 : f32
    %410 = vector.shape_cast %6 : vector<1x1x12xi1> to vector<1x1x12xi1>
    %411 = vector.broadcast %410 : vector<1x1x12xi1> to vector<2x12x12xi1>
    %412 = vector.broadcast %cst_143 : f32 to vector<2x12x12xf32>
    %413 = arith.select %411, %409, %412 : vector<2x12x12xi1>, vector<2x12x12xf32>
    %cst_144 = arith.constant dense<0xFF800000> : vector<2x12xf32>
    %414 = vector.multi_reduction <maximumf>, %413, %cst_144 [2] : vector<2x12x12xf32> to vector<2x12xf32>
    %415 = vector.shape_cast %414 : vector<2x12xf32> to vector<2x12x1xf32>
    %416 = vector.broadcast %415 : vector<2x12x1xf32> to vector<2x12x12xf32>
    %417 = arith.subf %413, %416 : vector<2x12x12xf32>
    %418 = math.exp %417 : vector<2x12x12xf32>
    %cst_145 = arith.constant dense<0.000000e+00> : vector<2x12xf32>
    %419 = vector.multi_reduction <add>, %418, %cst_145 [2] : vector<2x12x12xf32> to vector<2x12xf32>
    %420 = vector.shape_cast %419 : vector<2x12xf32> to vector<2x12x1xf32>
    %421 = tpu.reciprocal %420 {approx = true} : vector<2x12x1xf32> -> vector<2x12x1xf32>
    %422 = vector.broadcast %421 : vector<2x12x1xf32> to vector<2x12x12xf32>
    %423 = arith.mulf %418, %422 : vector<2x12x12xf32>
    %424 = arith.truncf %423 : vector<2x12x12xf32> to vector<2x12x12xbf16>
    %425 = vector.extract_strided_slice %338 {offsets = [0, 0, 24], sizes = [2, 12, 8], strides = [1, 1, 1]} : vector<2x12x32xbf16> to vector<2x12x8xbf16>
    "tpu.trace_start"() <{level = 10 : i32, message = "bqk,bkd->bqd"}> : () -> ()
    %cst_146 = arith.constant dense<0.000000e+00> : vector<2x12x8xf32>
    %426 = tpu.matmul %424, %425, %cst_146 {dimension_numbers = #tpu.dot_dimension_numbers<[2], [1], [1], [2], [0, 0, 0, 1, 1, 2], [0], [0]>} : vector<2x12x12xbf16>, vector<2x12x8xbf16>, vector<2x12x8xf32> -> vector<2x12x8xf32>
    "tpu.trace_stop"() : () -> ()
    %427 = tpu.concatenate %360, %382, %404, %426 in 2 : vector<2x12x8xf32>, vector<2x12x8xf32>, vector<2x12x8xf32>, vector<2x12x8xf32> -> vector<2x12x32xf32>
    %428 = vector.shape_cast %427 : vector<2x12x32xf32> to vector<24x32xf32>
    %429 = arith.truncf %428 : vector<24x32xf32> to vector<24x32xbf16>
    %430 = arith.truncf %259 : vector<32x32xf32> to vector<32x32xbf16>
    %cst_147 = arith.constant dense<0.000000e+00> : vector<24x32xf32>
    %431 = tpu.matmul %429, %430, %cst_147 {dimension_numbers = #tpu.dot_dimension_numbers<[1], [0], [0], [1], [0, 0, 1, 1], [], []>} : vector<24x32xbf16>, vector<32x32xbf16>, vector<24x32xf32> -> vector<24x32xf32>
    %432 = vector.broadcast %271 : vector<1x32xf32> to vector<24x32xf32>
    %433 = arith.addf %431, %432 : vector<24x32xf32>
    %434 = arith.addf %255, %433 : vector<24x32xf32>
    %cst_148 = arith.constant dense<0.000000e+00> : vector<24xf32>
    %435 = vector.multi_reduction <add>, %434, %cst_148 [1] : vector<24x32xf32> to vector<24xf32>
    %436 = vector.shape_cast %435 : vector<24xf32> to vector<24x1xf32>
    %cst_149 = arith.constant 3.200000e+01 : f32
    %437 = vector.broadcast %cst_149 : f32 to vector<24x1xf32>
    %438 = arith.divf %436, %437 : vector<24x1xf32>
    %439 = vector.broadcast %438 : vector<24x1xf32> to vector<24x32xf32>
    %440 = arith.subf %434, %439 : vector<24x32xf32>
    %441 = arith.mulf %440, %440 : vector<24x32xf32>
    %cst_150 = arith.constant dense<0.000000e+00> : vector<24xf32>
    %442 = vector.multi_reduction <add>, %441, %cst_150 [1] : vector<24x32xf32> to vector<24xf32>
    %443 = vector.shape_cast %442 : vector<24xf32> to vector<24x1xf32>
    %cst_151 = arith.constant 3.200000e+01 : f32
    %444 = vector.broadcast %cst_151 : f32 to vector<24x1xf32>
    %445 = arith.divf %443, %444 : vector<24x1xf32>
    %446 = vector.broadcast %438 : vector<24x1xf32> to vector<24x32xf32>
    %447 = arith.subf %434, %446 : vector<24x32xf32>
    %cst_152 = arith.constant 9.99999974E-6 : f32
    %448 = vector.broadcast %cst_152 : f32 to vector<24x1xf32>
    %449 = arith.addf %445, %448 : vector<24x1xf32>
    %450 = math.rsqrt %449 : vector<24x1xf32>
    %451 = vector.broadcast %450 : vector<24x1xf32> to vector<24x32xf32>
    %452 = arith.mulf %447, %451 : vector<24x32xf32>
    %453 = vector.broadcast %273 : vector<1x32xf32> to vector<24x32xf32>
    %454 = arith.mulf %452, %453 : vector<24x32xf32>
    %455 = vector.broadcast %275 : vector<1x32xf32> to vector<24x32xf32>
    %456 = arith.addf %454, %455 : vector<24x32xf32>
    %457 = arith.truncf %456 : vector<24x32xf32> to vector<24x32xbf16>
    %458 = arith.truncf %261 : vector<32x64xf32> to vector<32x64xbf16>
    %cst_153 = arith.constant dense<0.000000e+00> : vector<24x64xf32>
    %459 = tpu.matmul %457, %458, %cst_153 {dimension_numbers = #tpu.dot_dimension_numbers<[1], [0], [0], [1], [0, 0, 1, 1], [], []>} : vector<24x32xbf16>, vector<32x64xbf16>, vector<24x64xf32> -> vector<24x64xf32>
    %460 = vector.broadcast %277 : vector<1x64xf32> to vector<24x64xf32>
    %461 = arith.addf %459, %460 : vector<24x64xf32>
    %cst_154 = arith.constant 0.000000e+00 : f32
    %462 = vector.broadcast %cst_154 : f32 to vector<24x64xf32>
    %463 = arith.maximumf %461, %462 : vector<24x64xf32>
    %464 = arith.truncf %463 : vector<24x64xf32> to vector<24x64xbf16>
    %465 = arith.truncf %263 : vector<64x32xf32> to vector<64x32xbf16>
    %cst_155 = arith.constant dense<0.000000e+00> : vector<24x32xf32>
    %466 = tpu.matmul %464, %465, %cst_155 {dimension_numbers = #tpu.dot_dimension_numbers<[1], [0], [0], [1], [0, 0, 1, 1], [], []>} : vector<24x64xbf16>, vector<64x32xbf16>, vector<24x32xf32> -> vector<24x32xf32>
    %467 = vector.broadcast %279 : vector<1x32xf32> to vector<24x32xf32>
    %468 = arith.addf %466, %467 : vector<24x32xf32>
    %469 = arith.addf %434, %468 : vector<24x32xf32>
    %c0_156 = arith.constant 0 : index
    %c352 = arith.constant 352 : index
    %c0_157 = arith.constant 0 : index
    %470 = vector.load %arg4[%c0_156, %c352, %c0_157] : memref<1x704x128xf32, #tpu.memory_space<vmem>>, vector<1x1x32xf32>
    %471 = vector.shape_cast %470 : vector<1x1x32xf32> to vector<1x32xf32>
    %c0_158 = arith.constant 0 : index
    %c353 = arith.constant 353 : index
    %c0_159 = arith.constant 0 : index
    %472 = vector.load %arg4[%c0_158, %c353, %c0_159] : memref<1x704x128xf32, #tpu.memory_space<vmem>>, vector<1x1x32xf32>
    %473 = vector.shape_cast %472 : vector<1x1x32xf32> to vector<1x32xf32>
    %cst_160 = arith.constant dense<0.000000e+00> : vector<24xf32>
    %474 = vector.multi_reduction <add>, %469, %cst_160 [1] : vector<24x32xf32> to vector<24xf32>
    %475 = vector.shape_cast %474 : vector<24xf32> to vector<24x1xf32>
    %cst_161 = arith.constant 3.200000e+01 : f32
    %476 = vector.broadcast %cst_161 : f32 to vector<24x1xf32>
    %477 = arith.divf %475, %476 : vector<24x1xf32>
    %478 = vector.broadcast %477 : vector<24x1xf32> to vector<24x32xf32>
    %479 = arith.subf %469, %478 : vector<24x32xf32>
    %480 = arith.mulf %479, %479 : vector<24x32xf32>
    %cst_162 = arith.constant dense<0.000000e+00> : vector<24xf32>
    %481 = vector.multi_reduction <add>, %480, %cst_162 [1] : vector<24x32xf32> to vector<24xf32>
    %482 = vector.shape_cast %481 : vector<24xf32> to vector<24x1xf32>
    %cst_163 = arith.constant 3.200000e+01 : f32
    %483 = vector.broadcast %cst_163 : f32 to vector<24x1xf32>
    %484 = arith.divf %482, %483 : vector<24x1xf32>
    %485 = vector.broadcast %477 : vector<24x1xf32> to vector<24x32xf32>
    %486 = arith.subf %469, %485 : vector<24x32xf32>
    %cst_164 = arith.constant 9.99999974E-6 : f32
    %487 = vector.broadcast %cst_164 : f32 to vector<24x1xf32>
    %488 = arith.addf %484, %487 : vector<24x1xf32>
    %489 = math.rsqrt %488 : vector<24x1xf32>
    %490 = vector.broadcast %489 : vector<24x1xf32> to vector<24x32xf32>
    %491 = arith.mulf %486, %490 : vector<24x32xf32>
    %492 = vector.broadcast %471 : vector<1x32xf32> to vector<24x32xf32>
    %493 = arith.mulf %491, %492 : vector<24x32xf32>
    %494 = vector.broadcast %473 : vector<1x32xf32> to vector<24x32xf32>
    %495 = arith.addf %493, %494 : vector<24x32xf32>
    %496 = vector.shape_cast %495 : vector<24x32xf32> to vector<2x12x32xf32>
    %cst_165 = arith.constant 5.65685415 : f32
    %497 = vector.broadcast %cst_165 : f32 to vector<2x12x32xf32>
    %498 = arith.mulf %497, %496 : vector<2x12x32xf32>
    %499 = vector.shape_cast %27 : vector<12x32xf32> to vector<1x12x32xf32>
    %500 = vector.broadcast %499 : vector<1x12x32xf32> to vector<2x12x32xf32>
    %501 = arith.addf %498, %500 : vector<2x12x32xf32>
    %502 = vector.shape_cast %501 : vector<2x12x32xf32> to vector<24x32xf32>
    %c0_166 = arith.constant 0 : index
    %c360 = arith.constant 360 : index
    %c0_167 = arith.constant 0 : index
    %503 = vector.load %arg4[%c0_166, %c360, %c0_167] : memref<1x704x128xf32, #tpu.memory_space<vmem>>, vector<1x32x96xf32>
    %504 = vector.shape_cast %503 : vector<1x32x96xf32> to vector<32x96xf32>
    %c0_168 = arith.constant 0 : index
    %c392 = arith.constant 392 : index
    %c0_169 = arith.constant 0 : index
    %505 = vector.load %arg4[%c0_168, %c392, %c0_169] : memref<1x704x128xf32, #tpu.memory_space<vmem>>, vector<1x32x32xf32>
    %506 = vector.shape_cast %505 : vector<1x32x32xf32> to vector<32x32xf32>
    %c0_170 = arith.constant 0 : index
    %c424 = arith.constant 424 : index
    %c0_171 = arith.constant 0 : index
    %507 = vector.load %arg4[%c0_170, %c424, %c0_171] : memref<1x704x128xf32, #tpu.memory_space<vmem>>, vector<1x32x64xf32>
    %508 = vector.shape_cast %507 : vector<1x32x64xf32> to vector<32x64xf32>
    %c0_172 = arith.constant 0 : index
    %c456 = arith.constant 456 : index
    %c0_173 = arith.constant 0 : index
    %509 = vector.load %arg4[%c0_172, %c456, %c0_173] : memref<1x704x128xf32, #tpu.memory_space<vmem>>, vector<1x64x32xf32>
    %510 = vector.shape_cast %509 : vector<1x64x32xf32> to vector<64x32xf32>
    %c0_174 = arith.constant 0 : index
    %c520 = arith.constant 520 : index
    %c0_175 = arith.constant 0 : index
    %511 = vector.load %arg4[%c0_174, %c520, %c0_175] : memref<1x704x128xf32, #tpu.memory_space<vmem>>, vector<1x1x32xf32>
    %512 = vector.shape_cast %511 : vector<1x1x32xf32> to vector<1x32xf32>
    %c0_176 = arith.constant 0 : index
    %c521 = arith.constant 521 : index
    %c0_177 = arith.constant 0 : index
    %513 = vector.load %arg4[%c0_176, %c521, %c0_177] : memref<1x704x128xf32, #tpu.memory_space<vmem>>, vector<1x1x32xf32>
    %514 = vector.shape_cast %513 : vector<1x1x32xf32> to vector<1x32xf32>
    %c0_178 = arith.constant 0 : index
    %c522 = arith.constant 522 : index
    %c0_179 = arith.constant 0 : index
    %515 = vector.load %arg4[%c0_178, %c522, %c0_179] : memref<1x704x128xf32, #tpu.memory_space<vmem>>, vector<1x1x96xf32>
    %516 = vector.shape_cast %515 : vector<1x1x96xf32> to vector<1x96xf32>
    %c0_180 = arith.constant 0 : index
    %c523 = arith.constant 523 : index
    %c0_181 = arith.constant 0 : index
    %517 = vector.load %arg4[%c0_180, %c523, %c0_181] : memref<1x704x128xf32, #tpu.memory_space<vmem>>, vector<1x1x32xf32>
    %518 = vector.shape_cast %517 : vector<1x1x32xf32> to vector<1x32xf32>
    %c0_182 = arith.constant 0 : index
    %c524 = arith.constant 524 : index
    %c0_183 = arith.constant 0 : index
    %519 = vector.load %arg4[%c0_182, %c524, %c0_183] : memref<1x704x128xf32, #tpu.memory_space<vmem>>, vector<1x1x32xf32>
    %520 = vector.shape_cast %519 : vector<1x1x32xf32> to vector<1x32xf32>
    %c0_184 = arith.constant 0 : index
    %c525 = arith.constant 525 : index
    %c0_185 = arith.constant 0 : index
    %521 = vector.load %arg4[%c0_184, %c525, %c0_185] : memref<1x704x128xf32, #tpu.memory_space<vmem>>, vector<1x1x32xf32>
    %522 = vector.shape_cast %521 : vector<1x1x32xf32> to vector<1x32xf32>
    %c0_186 = arith.constant 0 : index
    %c526 = arith.constant 526 : index
    %c0_187 = arith.constant 0 : index
    %523 = vector.load %arg4[%c0_186, %c526, %c0_187] : memref<1x704x128xf32, #tpu.memory_space<vmem>>, vector<1x1x64xf32>
    %524 = vector.shape_cast %523 : vector<1x1x64xf32> to vector<1x64xf32>
    %c0_188 = arith.constant 0 : index
    %c527 = arith.constant 527 : index
    %c0_189 = arith.constant 0 : index
    %525 = vector.load %arg4[%c0_188, %c527, %c0_189] : memref<1x704x128xf32, #tpu.memory_space<vmem>>, vector<1x1x32xf32>
    %526 = vector.shape_cast %525 : vector<1x1x32xf32> to vector<1x32xf32>
    %cst_190 = arith.constant dense<0.000000e+00> : vector<24xf32>
    %527 = vector.multi_reduction <add>, %502, %cst_190 [1] : vector<24x32xf32> to vector<24xf32>
    %528 = vector.shape_cast %527 : vector<24xf32> to vector<24x1xf32>
    %cst_191 = arith.constant 3.200000e+01 : f32
    %529 = vector.broadcast %cst_191 : f32 to vector<24x1xf32>
    %530 = arith.divf %528, %529 : vector<24x1xf32>
    %531 = vector.broadcast %530 : vector<24x1xf32> to vector<24x32xf32>
    %532 = arith.subf %502, %531 : vector<24x32xf32>
    %533 = arith.mulf %532, %532 : vector<24x32xf32>
    %cst_192 = arith.constant dense<0.000000e+00> : vector<24xf32>
    %534 = vector.multi_reduction <add>, %533, %cst_192 [1] : vector<24x32xf32> to vector<24xf32>
    %535 = vector.shape_cast %534 : vector<24xf32> to vector<24x1xf32>
    %cst_193 = arith.constant 3.200000e+01 : f32
    %536 = vector.broadcast %cst_193 : f32 to vector<24x1xf32>
    %537 = arith.divf %535, %536 : vector<24x1xf32>
    %538 = vector.broadcast %530 : vector<24x1xf32> to vector<24x32xf32>
    %539 = arith.subf %502, %538 : vector<24x32xf32>
    %cst_194 = arith.constant 9.99999974E-6 : f32
    %540 = vector.broadcast %cst_194 : f32 to vector<24x1xf32>
    %541 = arith.addf %537, %540 : vector<24x1xf32>
    %542 = math.rsqrt %541 : vector<24x1xf32>
    %543 = vector.broadcast %542 : vector<24x1xf32> to vector<24x32xf32>
    %544 = arith.mulf %539, %543 : vector<24x32xf32>
    %545 = vector.broadcast %512 : vector<1x32xf32> to vector<24x32xf32>
    %546 = arith.mulf %544, %545 : vector<24x32xf32>
    %547 = vector.broadcast %514 : vector<1x32xf32> to vector<24x32xf32>
    %548 = arith.addf %546, %547 : vector<24x32xf32>
    %549 = arith.truncf %548 : vector<24x32xf32> to vector<24x32xbf16>
    %550 = arith.truncf %504 : vector<32x96xf32> to vector<32x96xbf16>
    %cst_195 = arith.constant dense<0.000000e+00> : vector<24x96xf32>
    %551 = tpu.matmul %549, %550, %cst_195 {dimension_numbers = #tpu.dot_dimension_numbers<[1], [0], [0], [1], [0, 0, 1, 1], [], []>} : vector<24x32xbf16>, vector<32x96xbf16>, vector<24x96xf32> -> vector<24x96xf32>
    %552 = vector.broadcast %516 : vector<1x96xf32> to vector<24x96xf32>
    %553 = arith.addf %551, %552 : vector<24x96xf32>
    %554 = vector.extract_strided_slice %553 {offsets = [0, 0], sizes = [24, 32], strides = [1, 1]} : vector<24x96xf32> to vector<24x32xf32>
    %555 = vector.extract_strided_slice %553 {offsets = [0, 32], sizes = [24, 32], strides = [1, 1]} : vector<24x96xf32> to vector<24x32xf32>
    %556 = vector.extract_strided_slice %553 {offsets = [0, 64], sizes = [24, 32], strides = [1, 1]} : vector<24x96xf32> to vector<24x32xf32>
    %557 = vector.shape_cast %554 : vector<24x32xf32> to vector<2x12x32xf32>
    %558 = arith.truncf %557 : vector<2x12x32xf32> to vector<2x12x32xbf16>
    %559 = vector.shape_cast %555 : vector<24x32xf32> to vector<2x12x32xf32>
    %560 = arith.truncf %559 : vector<2x12x32xf32> to vector<2x12x32xbf16>
    %561 = vector.shape_cast %556 : vector<24x32xf32> to vector<2x12x32xf32>
    %562 = arith.truncf %561 : vector<2x12x32xf32> to vector<2x12x32xbf16>
    %563 = vector.extract_strided_slice %558 {offsets = [0, 0, 0], sizes = [2, 12, 8], strides = [1, 1, 1]} : vector<2x12x32xbf16> to vector<2x12x8xbf16>
    %564 = vector.extract_strided_slice %560 {offsets = [0, 0, 0], sizes = [2, 12, 8], strides = [1, 1, 1]} : vector<2x12x32xbf16> to vector<2x12x8xbf16>
    "tpu.trace_start"() <{level = 10 : i32, message = "bqd,bkd->bqk"}> : () -> ()
    %cst_196 = arith.constant dense<0.000000e+00> : vector<2x12x12xf32>
    %565 = tpu.matmul %563, %564, %cst_196 {dimension_numbers = #tpu.dot_dimension_numbers<[2], [2], [1], [1], [0, 0, 0, 1, 1, 1], [0], [0]>} : vector<2x12x8xbf16>, vector<2x12x8xbf16>, vector<2x12x12xf32> -> vector<2x12x12xf32>
    "tpu.trace_stop"() : () -> ()
    %cst_197 = arith.constant 0.353553385 : f32
    %566 = vector.broadcast %cst_197 : f32 to vector<2x12x12xf32>
    %567 = arith.mulf %565, %566 : vector<2x12x12xf32>
    %cst_198 = arith.constant -1.000000e+30 : f32
    %568 = vector.shape_cast %8 : vector<1x1x12xi1> to vector<1x1x12xi1>
    %569 = vector.broadcast %568 : vector<1x1x12xi1> to vector<2x12x12xi1>
    %570 = vector.broadcast %cst_198 : f32 to vector<2x12x12xf32>
    %571 = arith.select %569, %567, %570 : vector<2x12x12xi1>, vector<2x12x12xf32>
    %cst_199 = arith.constant dense<0xFF800000> : vector<2x12xf32>
    %572 = vector.multi_reduction <maximumf>, %571, %cst_199 [2] : vector<2x12x12xf32> to vector<2x12xf32>
    %573 = vector.shape_cast %572 : vector<2x12xf32> to vector<2x12x1xf32>
    %574 = vector.broadcast %573 : vector<2x12x1xf32> to vector<2x12x12xf32>
    %575 = arith.subf %571, %574 : vector<2x12x12xf32>
    %576 = math.exp %575 : vector<2x12x12xf32>
    %cst_200 = arith.constant dense<0.000000e+00> : vector<2x12xf32>
    %577 = vector.multi_reduction <add>, %576, %cst_200 [2] : vector<2x12x12xf32> to vector<2x12xf32>
    %578 = vector.shape_cast %577 : vector<2x12xf32> to vector<2x12x1xf32>
    %579 = tpu.reciprocal %578 {approx = true} : vector<2x12x1xf32> -> vector<2x12x1xf32>
    %580 = vector.broadcast %579 : vector<2x12x1xf32> to vector<2x12x12xf32>
    %581 = arith.mulf %576, %580 : vector<2x12x12xf32>
    %582 = arith.truncf %581 : vector<2x12x12xf32> to vector<2x12x12xbf16>
    %583 = vector.extract_strided_slice %562 {offsets = [0, 0, 0], sizes = [2, 12, 8], strides = [1, 1, 1]} : vector<2x12x32xbf16> to vector<2x12x8xbf16>
    "tpu.trace_start"() <{level = 10 : i32, message = "bqk,bkd->bqd"}> : () -> ()
    %cst_201 = arith.constant dense<0.000000e+00> : vector<2x12x8xf32>
    %584 = tpu.matmul %582, %583, %cst_201 {dimension_numbers = #tpu.dot_dimension_numbers<[2], [1], [1], [2], [0, 0, 0, 1, 1, 2], [0], [0]>} : vector<2x12x12xbf16>, vector<2x12x8xbf16>, vector<2x12x8xf32> -> vector<2x12x8xf32>
    "tpu.trace_stop"() : () -> ()
    %585 = vector.extract_strided_slice %558 {offsets = [0, 0, 8], sizes = [2, 12, 8], strides = [1, 1, 1]} : vector<2x12x32xbf16> to vector<2x12x8xbf16>
    %586 = vector.extract_strided_slice %560 {offsets = [0, 0, 8], sizes = [2, 12, 8], strides = [1, 1, 1]} : vector<2x12x32xbf16> to vector<2x12x8xbf16>
    "tpu.trace_start"() <{level = 10 : i32, message = "bqd,bkd->bqk"}> : () -> ()
    %cst_202 = arith.constant dense<0.000000e+00> : vector<2x12x12xf32>
    %587 = tpu.matmul %585, %586, %cst_202 {dimension_numbers = #tpu.dot_dimension_numbers<[2], [2], [1], [1], [0, 0, 0, 1, 1, 1], [0], [0]>} : vector<2x12x8xbf16>, vector<2x12x8xbf16>, vector<2x12x12xf32> -> vector<2x12x12xf32>
    "tpu.trace_stop"() : () -> ()
    %cst_203 = arith.constant 0.353553385 : f32
    %588 = vector.broadcast %cst_203 : f32 to vector<2x12x12xf32>
    %589 = arith.mulf %587, %588 : vector<2x12x12xf32>
    %cst_204 = arith.constant -1.000000e+30 : f32
    %590 = vector.shape_cast %8 : vector<1x1x12xi1> to vector<1x1x12xi1>
    %591 = vector.broadcast %590 : vector<1x1x12xi1> to vector<2x12x12xi1>
    %592 = vector.broadcast %cst_204 : f32 to vector<2x12x12xf32>
    %593 = arith.select %591, %589, %592 : vector<2x12x12xi1>, vector<2x12x12xf32>
    %cst_205 = arith.constant dense<0xFF800000> : vector<2x12xf32>
    %594 = vector.multi_reduction <maximumf>, %593, %cst_205 [2] : vector<2x12x12xf32> to vector<2x12xf32>
    %595 = vector.shape_cast %594 : vector<2x12xf32> to vector<2x12x1xf32>
    %596 = vector.broadcast %595 : vector<2x12x1xf32> to vector<2x12x12xf32>
    %597 = arith.subf %593, %596 : vector<2x12x12xf32>
    %598 = math.exp %597 : vector<2x12x12xf32>
    %cst_206 = arith.constant dense<0.000000e+00> : vector<2x12xf32>
    %599 = vector.multi_reduction <add>, %598, %cst_206 [2] : vector<2x12x12xf32> to vector<2x12xf32>
    %600 = vector.shape_cast %599 : vector<2x12xf32> to vector<2x12x1xf32>
    %601 = tpu.reciprocal %600 {approx = true} : vector<2x12x1xf32> -> vector<2x12x1xf32>
    %602 = vector.broadcast %601 : vector<2x12x1xf32> to vector<2x12x12xf32>
    %603 = arith.mulf %598, %602 : vector<2x12x12xf32>
    %604 = arith.truncf %603 : vector<2x12x12xf32> to vector<2x12x12xbf16>
    %605 = vector.extract_strided_slice %562 {offsets = [0, 0, 8], sizes = [2, 12, 8], strides = [1, 1, 1]} : vector<2x12x32xbf16> to vector<2x12x8xbf16>
    "tpu.trace_start"() <{level = 10 : i32, message = "bqk,bkd->bqd"}> : () -> ()
    %cst_207 = arith.constant dense<0.000000e+00> : vector<2x12x8xf32>
    %606 = tpu.matmul %604, %605, %cst_207 {dimension_numbers = #tpu.dot_dimension_numbers<[2], [1], [1], [2], [0, 0, 0, 1, 1, 2], [0], [0]>} : vector<2x12x12xbf16>, vector<2x12x8xbf16>, vector<2x12x8xf32> -> vector<2x12x8xf32>
    "tpu.trace_stop"() : () -> ()
    %607 = vector.extract_strided_slice %558 {offsets = [0, 0, 16], sizes = [2, 12, 8], strides = [1, 1, 1]} : vector<2x12x32xbf16> to vector<2x12x8xbf16>
    %608 = vector.extract_strided_slice %560 {offsets = [0, 0, 16], sizes = [2, 12, 8], strides = [1, 1, 1]} : vector<2x12x32xbf16> to vector<2x12x8xbf16>
    "tpu.trace_start"() <{level = 10 : i32, message = "bqd,bkd->bqk"}> : () -> ()
    %cst_208 = arith.constant dense<0.000000e+00> : vector<2x12x12xf32>
    %609 = tpu.matmul %607, %608, %cst_208 {dimension_numbers = #tpu.dot_dimension_numbers<[2], [2], [1], [1], [0, 0, 0, 1, 1, 1], [0], [0]>} : vector<2x12x8xbf16>, vector<2x12x8xbf16>, vector<2x12x12xf32> -> vector<2x12x12xf32>
    "tpu.trace_stop"() : () -> ()
    %cst_209 = arith.constant 0.353553385 : f32
    %610 = vector.broadcast %cst_209 : f32 to vector<2x12x12xf32>
    %611 = arith.mulf %609, %610 : vector<2x12x12xf32>
    %cst_210 = arith.constant -1.000000e+30 : f32
    %612 = vector.shape_cast %8 : vector<1x1x12xi1> to vector<1x1x12xi1>
    %613 = vector.broadcast %612 : vector<1x1x12xi1> to vector<2x12x12xi1>
    %614 = vector.broadcast %cst_210 : f32 to vector<2x12x12xf32>
    %615 = arith.select %613, %611, %614 : vector<2x12x12xi1>, vector<2x12x12xf32>
    %cst_211 = arith.constant dense<0xFF800000> : vector<2x12xf32>
    %616 = vector.multi_reduction <maximumf>, %615, %cst_211 [2] : vector<2x12x12xf32> to vector<2x12xf32>
    %617 = vector.shape_cast %616 : vector<2x12xf32> to vector<2x12x1xf32>
    %618 = vector.broadcast %617 : vector<2x12x1xf32> to vector<2x12x12xf32>
    %619 = arith.subf %615, %618 : vector<2x12x12xf32>
    %620 = math.exp %619 : vector<2x12x12xf32>
    %cst_212 = arith.constant dense<0.000000e+00> : vector<2x12xf32>
    %621 = vector.multi_reduction <add>, %620, %cst_212 [2] : vector<2x12x12xf32> to vector<2x12xf32>
    %622 = vector.shape_cast %621 : vector<2x12xf32> to vector<2x12x1xf32>
    %623 = tpu.reciprocal %622 {approx = true} : vector<2x12x1xf32> -> vector<2x12x1xf32>
    %624 = vector.broadcast %623 : vector<2x12x1xf32> to vector<2x12x12xf32>
    %625 = arith.mulf %620, %624 : vector<2x12x12xf32>
    %626 = arith.truncf %625 : vector<2x12x12xf32> to vector<2x12x12xbf16>
    %627 = vector.extract_strided_slice %562 {offsets = [0, 0, 16], sizes = [2, 12, 8], strides = [1, 1, 1]} : vector<2x12x32xbf16> to vector<2x12x8xbf16>
    "tpu.trace_start"() <{level = 10 : i32, message = "bqk,bkd->bqd"}> : () -> ()
    %cst_213 = arith.constant dense<0.000000e+00> : vector<2x12x8xf32>
    %628 = tpu.matmul %626, %627, %cst_213 {dimension_numbers = #tpu.dot_dimension_numbers<[2], [1], [1], [2], [0, 0, 0, 1, 1, 2], [0], [0]>} : vector<2x12x12xbf16>, vector<2x12x8xbf16>, vector<2x12x8xf32> -> vector<2x12x8xf32>
    "tpu.trace_stop"() : () -> ()
    %629 = vector.extract_strided_slice %558 {offsets = [0, 0, 24], sizes = [2, 12, 8], strides = [1, 1, 1]} : vector<2x12x32xbf16> to vector<2x12x8xbf16>
    %630 = vector.extract_strided_slice %560 {offsets = [0, 0, 24], sizes = [2, 12, 8], strides = [1, 1, 1]} : vector<2x12x32xbf16> to vector<2x12x8xbf16>
    "tpu.trace_start"() <{level = 10 : i32, message = "bqd,bkd->bqk"}> : () -> ()
    %cst_214 = arith.constant dense<0.000000e+00> : vector<2x12x12xf32>
    %631 = tpu.matmul %629, %630, %cst_214 {dimension_numbers = #tpu.dot_dimension_numbers<[2], [2], [1], [1], [0, 0, 0, 1, 1, 1], [0], [0]>} : vector<2x12x8xbf16>, vector<2x12x8xbf16>, vector<2x12x12xf32> -> vector<2x12x12xf32>
    "tpu.trace_stop"() : () -> ()
    %cst_215 = arith.constant 0.353553385 : f32
    %632 = vector.broadcast %cst_215 : f32 to vector<2x12x12xf32>
    %633 = arith.mulf %631, %632 : vector<2x12x12xf32>
    %cst_216 = arith.constant -1.000000e+30 : f32
    %634 = vector.shape_cast %8 : vector<1x1x12xi1> to vector<1x1x12xi1>
    %635 = vector.broadcast %634 : vector<1x1x12xi1> to vector<2x12x12xi1>
    %636 = vector.broadcast %cst_216 : f32 to vector<2x12x12xf32>
    %637 = arith.select %635, %633, %636 : vector<2x12x12xi1>, vector<2x12x12xf32>
    %cst_217 = arith.constant dense<0xFF800000> : vector<2x12xf32>
    %638 = vector.multi_reduction <maximumf>, %637, %cst_217 [2] : vector<2x12x12xf32> to vector<2x12xf32>
    %639 = vector.shape_cast %638 : vector<2x12xf32> to vector<2x12x1xf32>
    %640 = vector.broadcast %639 : vector<2x12x1xf32> to vector<2x12x12xf32>
    %641 = arith.subf %637, %640 : vector<2x12x12xf32>
    %642 = math.exp %641 : vector<2x12x12xf32>
    %cst_218 = arith.constant dense<0.000000e+00> : vector<2x12xf32>
    %643 = vector.multi_reduction <add>, %642, %cst_218 [2] : vector<2x12x12xf32> to vector<2x12xf32>
    %644 = vector.shape_cast %643 : vector<2x12xf32> to vector<2x12x1xf32>
    %645 = tpu.reciprocal %644 {approx = true} : vector<2x12x1xf32> -> vector<2x12x1xf32>
    %646 = vector.broadcast %645 : vector<2x12x1xf32> to vector<2x12x12xf32>
    %647 = arith.mulf %642, %646 : vector<2x12x12xf32>
    %648 = arith.truncf %647 : vector<2x12x12xf32> to vector<2x12x12xbf16>
    %649 = vector.extract_strided_slice %562 {offsets = [0, 0, 24], sizes = [2, 12, 8], strides = [1, 1, 1]} : vector<2x12x32xbf16> to vector<2x12x8xbf16>
    "tpu.trace_start"() <{level = 10 : i32, message = "bqk,bkd->bqd"}> : () -> ()
    %cst_219 = arith.constant dense<0.000000e+00> : vector<2x12x8xf32>
    %650 = tpu.matmul %648, %649, %cst_219 {dimension_numbers = #tpu.dot_dimension_numbers<[2], [1], [1], [2], [0, 0, 0, 1, 1, 2], [0], [0]>} : vector<2x12x12xbf16>, vector<2x12x8xbf16>, vector<2x12x8xf32> -> vector<2x12x8xf32>
    "tpu.trace_stop"() : () -> ()
    %651 = tpu.concatenate %584, %606, %628, %650 in 2 : vector<2x12x8xf32>, vector<2x12x8xf32>, vector<2x12x8xf32>, vector<2x12x8xf32> -> vector<2x12x32xf32>
    %652 = vector.shape_cast %651 : vector<2x12x32xf32> to vector<24x32xf32>
    %653 = arith.truncf %652 : vector<24x32xf32> to vector<24x32xbf16>
    %654 = arith.truncf %506 : vector<32x32xf32> to vector<32x32xbf16>
    %cst_220 = arith.constant dense<0.000000e+00> : vector<24x32xf32>
    %655 = tpu.matmul %653, %654, %cst_220 {dimension_numbers = #tpu.dot_dimension_numbers<[1], [0], [0], [1], [0, 0, 1, 1], [], []>} : vector<24x32xbf16>, vector<32x32xbf16>, vector<24x32xf32> -> vector<24x32xf32>
    %656 = vector.broadcast %518 : vector<1x32xf32> to vector<24x32xf32>
    %657 = arith.addf %655, %656 : vector<24x32xf32>
    %658 = arith.addf %502, %657 : vector<24x32xf32>
    %cst_221 = arith.constant dense<0.000000e+00> : vector<24xf32>
    %659 = vector.multi_reduction <add>, %658, %cst_221 [1] : vector<24x32xf32> to vector<24xf32>
    %660 = vector.shape_cast %659 : vector<24xf32> to vector<24x1xf32>
    %cst_222 = arith.constant 3.200000e+01 : f32
    %661 = vector.broadcast %cst_222 : f32 to vector<24x1xf32>
    %662 = arith.divf %660, %661 : vector<24x1xf32>
    %663 = vector.broadcast %662 : vector<24x1xf32> to vector<24x32xf32>
    %664 = arith.subf %658, %663 : vector<24x32xf32>
    %665 = arith.mulf %664, %664 : vector<24x32xf32>
    %cst_223 = arith.constant dense<0.000000e+00> : vector<24xf32>
    %666 = vector.multi_reduction <add>, %665, %cst_223 [1] : vector<24x32xf32> to vector<24xf32>
    %667 = vector.shape_cast %666 : vector<24xf32> to vector<24x1xf32>
    %cst_224 = arith.constant 3.200000e+01 : f32
    %668 = vector.broadcast %cst_224 : f32 to vector<24x1xf32>
    %669 = arith.divf %667, %668 : vector<24x1xf32>
    %670 = vector.broadcast %662 : vector<24x1xf32> to vector<24x32xf32>
    %671 = arith.subf %658, %670 : vector<24x32xf32>
    %cst_225 = arith.constant 9.99999974E-6 : f32
    %672 = vector.broadcast %cst_225 : f32 to vector<24x1xf32>
    %673 = arith.addf %669, %672 : vector<24x1xf32>
    %674 = math.rsqrt %673 : vector<24x1xf32>
    %675 = vector.broadcast %674 : vector<24x1xf32> to vector<24x32xf32>
    %676 = arith.mulf %671, %675 : vector<24x32xf32>
    %677 = vector.broadcast %520 : vector<1x32xf32> to vector<24x32xf32>
    %678 = arith.mulf %676, %677 : vector<24x32xf32>
    %679 = vector.broadcast %522 : vector<1x32xf32> to vector<24x32xf32>
    %680 = arith.addf %678, %679 : vector<24x32xf32>
    %681 = arith.truncf %680 : vector<24x32xf32> to vector<24x32xbf16>
    %682 = arith.truncf %508 : vector<32x64xf32> to vector<32x64xbf16>
    %cst_226 = arith.constant dense<0.000000e+00> : vector<24x64xf32>
    %683 = tpu.matmul %681, %682, %cst_226 {dimension_numbers = #tpu.dot_dimension_numbers<[1], [0], [0], [1], [0, 0, 1, 1], [], []>} : vector<24x32xbf16>, vector<32x64xbf16>, vector<24x64xf32> -> vector<24x64xf32>
    %684 = vector.broadcast %524 : vector<1x64xf32> to vector<24x64xf32>
    %685 = arith.addf %683, %684 : vector<24x64xf32>
    %cst_227 = arith.constant 0.000000e+00 : f32
    %686 = vector.broadcast %cst_227 : f32 to vector<24x64xf32>
    %687 = arith.maximumf %685, %686 : vector<24x64xf32>
    %688 = arith.truncf %687 : vector<24x64xf32> to vector<24x64xbf16>
    %689 = arith.truncf %510 : vector<64x32xf32> to vector<64x32xbf16>
    %cst_228 = arith.constant dense<0.000000e+00> : vector<24x32xf32>
    %690 = tpu.matmul %688, %689, %cst_228 {dimension_numbers = #tpu.dot_dimension_numbers<[1], [0], [0], [1], [0, 0, 1, 1], [], []>} : vector<24x64xbf16>, vector<64x32xbf16>, vector<24x32xf32> -> vector<24x32xf32>
    %691 = vector.broadcast %526 : vector<1x32xf32> to vector<24x32xf32>
    %692 = arith.addf %690, %691 : vector<24x32xf32>
    %693 = arith.addf %658, %692 : vector<24x32xf32>
    %c0_229 = arith.constant 0 : index
    %c528 = arith.constant 528 : index
    %c0_230 = arith.constant 0 : index
    %694 = vector.load %arg4[%c0_229, %c528, %c0_230] : memref<1x704x128xf32, #tpu.memory_space<vmem>>, vector<1x32x96xf32>
    %695 = vector.shape_cast %694 : vector<1x32x96xf32> to vector<32x96xf32>
    %c0_231 = arith.constant 0 : index
    %c560 = arith.constant 560 : index
    %c0_232 = arith.constant 0 : index
    %696 = vector.load %arg4[%c0_231, %c560, %c0_232] : memref<1x704x128xf32, #tpu.memory_space<vmem>>, vector<1x32x32xf32>
    %697 = vector.shape_cast %696 : vector<1x32x32xf32> to vector<32x32xf32>
    %c0_233 = arith.constant 0 : index
    %c592 = arith.constant 592 : index
    %c0_234 = arith.constant 0 : index
    %698 = vector.load %arg4[%c0_233, %c592, %c0_234] : memref<1x704x128xf32, #tpu.memory_space<vmem>>, vector<1x32x64xf32>
    %699 = vector.shape_cast %698 : vector<1x32x64xf32> to vector<32x64xf32>
    %c0_235 = arith.constant 0 : index
    %c624 = arith.constant 624 : index
    %c0_236 = arith.constant 0 : index
    %700 = vector.load %arg4[%c0_235, %c624, %c0_236] : memref<1x704x128xf32, #tpu.memory_space<vmem>>, vector<1x64x32xf32>
    %701 = vector.shape_cast %700 : vector<1x64x32xf32> to vector<64x32xf32>
    %c0_237 = arith.constant 0 : index
    %c688 = arith.constant 688 : index
    %c0_238 = arith.constant 0 : index
    %702 = vector.load %arg4[%c0_237, %c688, %c0_238] : memref<1x704x128xf32, #tpu.memory_space<vmem>>, vector<1x1x32xf32>
    %703 = vector.shape_cast %702 : vector<1x1x32xf32> to vector<1x32xf32>
    %c0_239 = arith.constant 0 : index
    %c689 = arith.constant 689 : index
    %c0_240 = arith.constant 0 : index
    %704 = vector.load %arg4[%c0_239, %c689, %c0_240] : memref<1x704x128xf32, #tpu.memory_space<vmem>>, vector<1x1x32xf32>
    %705 = vector.shape_cast %704 : vector<1x1x32xf32> to vector<1x32xf32>
    %c0_241 = arith.constant 0 : index
    %c690 = arith.constant 690 : index
    %c0_242 = arith.constant 0 : index
    %706 = vector.load %arg4[%c0_241, %c690, %c0_242] : memref<1x704x128xf32, #tpu.memory_space<vmem>>, vector<1x1x96xf32>
    %707 = vector.shape_cast %706 : vector<1x1x96xf32> to vector<1x96xf32>
    %c0_243 = arith.constant 0 : index
    %c691 = arith.constant 691 : index
    %c0_244 = arith.constant 0 : index
    %708 = vector.load %arg4[%c0_243, %c691, %c0_244] : memref<1x704x128xf32, #tpu.memory_space<vmem>>, vector<1x1x32xf32>
    %709 = vector.shape_cast %708 : vector<1x1x32xf32> to vector<1x32xf32>
    %c0_245 = arith.constant 0 : index
    %c692 = arith.constant 692 : index
    %c0_246 = arith.constant 0 : index
    %710 = vector.load %arg4[%c0_245, %c692, %c0_246] : memref<1x704x128xf32, #tpu.memory_space<vmem>>, vector<1x1x32xf32>
    %711 = vector.shape_cast %710 : vector<1x1x32xf32> to vector<1x32xf32>
    %c0_247 = arith.constant 0 : index
    %c693 = arith.constant 693 : index
    %c0_248 = arith.constant 0 : index
    %712 = vector.load %arg4[%c0_247, %c693, %c0_248] : memref<1x704x128xf32, #tpu.memory_space<vmem>>, vector<1x1x32xf32>
    %713 = vector.shape_cast %712 : vector<1x1x32xf32> to vector<1x32xf32>
    %c0_249 = arith.constant 0 : index
    %c694 = arith.constant 694 : index
    %c0_250 = arith.constant 0 : index
    %714 = vector.load %arg4[%c0_249, %c694, %c0_250] : memref<1x704x128xf32, #tpu.memory_space<vmem>>, vector<1x1x64xf32>
    %715 = vector.shape_cast %714 : vector<1x1x64xf32> to vector<1x64xf32>
    %c0_251 = arith.constant 0 : index
    %c695 = arith.constant 695 : index
    %c0_252 = arith.constant 0 : index
    %716 = vector.load %arg4[%c0_251, %c695, %c0_252] : memref<1x704x128xf32, #tpu.memory_space<vmem>>, vector<1x1x32xf32>
    %717 = vector.shape_cast %716 : vector<1x1x32xf32> to vector<1x32xf32>
    %cst_253 = arith.constant dense<0.000000e+00> : vector<24xf32>
    %718 = vector.multi_reduction <add>, %693, %cst_253 [1] : vector<24x32xf32> to vector<24xf32>
    %719 = vector.shape_cast %718 : vector<24xf32> to vector<24x1xf32>
    %cst_254 = arith.constant 3.200000e+01 : f32
    %720 = vector.broadcast %cst_254 : f32 to vector<24x1xf32>
    %721 = arith.divf %719, %720 : vector<24x1xf32>
    %722 = vector.broadcast %721 : vector<24x1xf32> to vector<24x32xf32>
    %723 = arith.subf %693, %722 : vector<24x32xf32>
    %724 = arith.mulf %723, %723 : vector<24x32xf32>
    %cst_255 = arith.constant dense<0.000000e+00> : vector<24xf32>
    %725 = vector.multi_reduction <add>, %724, %cst_255 [1] : vector<24x32xf32> to vector<24xf32>
    %726 = vector.shape_cast %725 : vector<24xf32> to vector<24x1xf32>
    %cst_256 = arith.constant 3.200000e+01 : f32
    %727 = vector.broadcast %cst_256 : f32 to vector<24x1xf32>
    %728 = arith.divf %726, %727 : vector<24x1xf32>
    %729 = vector.broadcast %721 : vector<24x1xf32> to vector<24x32xf32>
    %730 = arith.subf %693, %729 : vector<24x32xf32>
    %cst_257 = arith.constant 9.99999974E-6 : f32
    %731 = vector.broadcast %cst_257 : f32 to vector<24x1xf32>
    %732 = arith.addf %728, %731 : vector<24x1xf32>
    %733 = math.rsqrt %732 : vector<24x1xf32>
    %734 = vector.broadcast %733 : vector<24x1xf32> to vector<24x32xf32>
    %735 = arith.mulf %730, %734 : vector<24x32xf32>
    %736 = vector.broadcast %703 : vector<1x32xf32> to vector<24x32xf32>
    %737 = arith.mulf %735, %736 : vector<24x32xf32>
    %738 = vector.broadcast %705 : vector<1x32xf32> to vector<24x32xf32>
    %739 = arith.addf %737, %738 : vector<24x32xf32>
    %740 = arith.truncf %739 : vector<24x32xf32> to vector<24x32xbf16>
    %741 = arith.truncf %695 : vector<32x96xf32> to vector<32x96xbf16>
    %cst_258 = arith.constant dense<0.000000e+00> : vector<24x96xf32>
    %742 = tpu.matmul %740, %741, %cst_258 {dimension_numbers = #tpu.dot_dimension_numbers<[1], [0], [0], [1], [0, 0, 1, 1], [], []>} : vector<24x32xbf16>, vector<32x96xbf16>, vector<24x96xf32> -> vector<24x96xf32>
    %743 = vector.broadcast %707 : vector<1x96xf32> to vector<24x96xf32>
    %744 = arith.addf %742, %743 : vector<24x96xf32>
    %745 = vector.extract_strided_slice %744 {offsets = [0, 0], sizes = [24, 32], strides = [1, 1]} : vector<24x96xf32> to vector<24x32xf32>
    %746 = vector.extract_strided_slice %744 {offsets = [0, 32], sizes = [24, 32], strides = [1, 1]} : vector<24x96xf32> to vector<24x32xf32>
    %747 = vector.extract_strided_slice %744 {offsets = [0, 64], sizes = [24, 32], strides = [1, 1]} : vector<24x96xf32> to vector<24x32xf32>
    %748 = vector.shape_cast %745 : vector<24x32xf32> to vector<2x12x32xf32>
    %749 = arith.truncf %748 : vector<2x12x32xf32> to vector<2x12x32xbf16>
    %750 = vector.shape_cast %746 : vector<24x32xf32> to vector<2x12x32xf32>
    %751 = arith.truncf %750 : vector<2x12x32xf32> to vector<2x12x32xbf16>
    %752 = vector.shape_cast %747 : vector<24x32xf32> to vector<2x12x32xf32>
    %753 = arith.truncf %752 : vector<2x12x32xf32> to vector<2x12x32xbf16>
    %754 = vector.extract_strided_slice %749 {offsets = [0, 0, 0], sizes = [2, 12, 8], strides = [1, 1, 1]} : vector<2x12x32xbf16> to vector<2x12x8xbf16>
    %755 = vector.extract_strided_slice %751 {offsets = [0, 0, 0], sizes = [2, 12, 8], strides = [1, 1, 1]} : vector<2x12x32xbf16> to vector<2x12x8xbf16>
    "tpu.trace_start"() <{level = 10 : i32, message = "bqd,bkd->bqk"}> : () -> ()
    %cst_259 = arith.constant dense<0.000000e+00> : vector<2x12x12xf32>
    %756 = tpu.matmul %754, %755, %cst_259 {dimension_numbers = #tpu.dot_dimension_numbers<[2], [2], [1], [1], [0, 0, 0, 1, 1, 1], [0], [0]>} : vector<2x12x8xbf16>, vector<2x12x8xbf16>, vector<2x12x12xf32> -> vector<2x12x12xf32>
    "tpu.trace_stop"() : () -> ()
    %cst_260 = arith.constant 0.353553385 : f32
    %757 = vector.broadcast %cst_260 : f32 to vector<2x12x12xf32>
    %758 = arith.mulf %756, %757 : vector<2x12x12xf32>
    %cst_261 = arith.constant -1.000000e+30 : f32
    %759 = vector.shape_cast %8 : vector<1x1x12xi1> to vector<1x1x12xi1>
    %760 = vector.broadcast %759 : vector<1x1x12xi1> to vector<2x12x12xi1>
    %761 = vector.broadcast %cst_261 : f32 to vector<2x12x12xf32>
    %762 = arith.select %760, %758, %761 : vector<2x12x12xi1>, vector<2x12x12xf32>
    %cst_262 = arith.constant dense<0xFF800000> : vector<2x12xf32>
    %763 = vector.multi_reduction <maximumf>, %762, %cst_262 [2] : vector<2x12x12xf32> to vector<2x12xf32>
    %764 = vector.shape_cast %763 : vector<2x12xf32> to vector<2x12x1xf32>
    %765 = vector.broadcast %764 : vector<2x12x1xf32> to vector<2x12x12xf32>
    %766 = arith.subf %762, %765 : vector<2x12x12xf32>
    %767 = math.exp %766 : vector<2x12x12xf32>
    %cst_263 = arith.constant dense<0.000000e+00> : vector<2x12xf32>
    %768 = vector.multi_reduction <add>, %767, %cst_263 [2] : vector<2x12x12xf32> to vector<2x12xf32>
    %769 = vector.shape_cast %768 : vector<2x12xf32> to vector<2x12x1xf32>
    %770 = tpu.reciprocal %769 {approx = true} : vector<2x12x1xf32> -> vector<2x12x1xf32>
    %771 = vector.broadcast %770 : vector<2x12x1xf32> to vector<2x12x12xf32>
    %772 = arith.mulf %767, %771 : vector<2x12x12xf32>
    %773 = arith.truncf %772 : vector<2x12x12xf32> to vector<2x12x12xbf16>
    %774 = vector.extract_strided_slice %753 {offsets = [0, 0, 0], sizes = [2, 12, 8], strides = [1, 1, 1]} : vector<2x12x32xbf16> to vector<2x12x8xbf16>
    "tpu.trace_start"() <{level = 10 : i32, message = "bqk,bkd->bqd"}> : () -> ()
    %cst_264 = arith.constant dense<0.000000e+00> : vector<2x12x8xf32>
    %775 = tpu.matmul %773, %774, %cst_264 {dimension_numbers = #tpu.dot_dimension_numbers<[2], [1], [1], [2], [0, 0, 0, 1, 1, 2], [0], [0]>} : vector<2x12x12xbf16>, vector<2x12x8xbf16>, vector<2x12x8xf32> -> vector<2x12x8xf32>
    "tpu.trace_stop"() : () -> ()
    %776 = vector.extract_strided_slice %749 {offsets = [0, 0, 8], sizes = [2, 12, 8], strides = [1, 1, 1]} : vector<2x12x32xbf16> to vector<2x12x8xbf16>
    %777 = vector.extract_strided_slice %751 {offsets = [0, 0, 8], sizes = [2, 12, 8], strides = [1, 1, 1]} : vector<2x12x32xbf16> to vector<2x12x8xbf16>
    "tpu.trace_start"() <{level = 10 : i32, message = "bqd,bkd->bqk"}> : () -> ()
    %cst_265 = arith.constant dense<0.000000e+00> : vector<2x12x12xf32>
    %778 = tpu.matmul %776, %777, %cst_265 {dimension_numbers = #tpu.dot_dimension_numbers<[2], [2], [1], [1], [0, 0, 0, 1, 1, 1], [0], [0]>} : vector<2x12x8xbf16>, vector<2x12x8xbf16>, vector<2x12x12xf32> -> vector<2x12x12xf32>
    "tpu.trace_stop"() : () -> ()
    %cst_266 = arith.constant 0.353553385 : f32
    %779 = vector.broadcast %cst_266 : f32 to vector<2x12x12xf32>
    %780 = arith.mulf %778, %779 : vector<2x12x12xf32>
    %cst_267 = arith.constant -1.000000e+30 : f32
    %781 = vector.shape_cast %8 : vector<1x1x12xi1> to vector<1x1x12xi1>
    %782 = vector.broadcast %781 : vector<1x1x12xi1> to vector<2x12x12xi1>
    %783 = vector.broadcast %cst_267 : f32 to vector<2x12x12xf32>
    %784 = arith.select %782, %780, %783 : vector<2x12x12xi1>, vector<2x12x12xf32>
    %cst_268 = arith.constant dense<0xFF800000> : vector<2x12xf32>
    %785 = vector.multi_reduction <maximumf>, %784, %cst_268 [2] : vector<2x12x12xf32> to vector<2x12xf32>
    %786 = vector.shape_cast %785 : vector<2x12xf32> to vector<2x12x1xf32>
    %787 = vector.broadcast %786 : vector<2x12x1xf32> to vector<2x12x12xf32>
    %788 = arith.subf %784, %787 : vector<2x12x12xf32>
    %789 = math.exp %788 : vector<2x12x12xf32>
    %cst_269 = arith.constant dense<0.000000e+00> : vector<2x12xf32>
    %790 = vector.multi_reduction <add>, %789, %cst_269 [2] : vector<2x12x12xf32> to vector<2x12xf32>
    %791 = vector.shape_cast %790 : vector<2x12xf32> to vector<2x12x1xf32>
    %792 = tpu.reciprocal %791 {approx = true} : vector<2x12x1xf32> -> vector<2x12x1xf32>
    %793 = vector.broadcast %792 : vector<2x12x1xf32> to vector<2x12x12xf32>
    %794 = arith.mulf %789, %793 : vector<2x12x12xf32>
    %795 = arith.truncf %794 : vector<2x12x12xf32> to vector<2x12x12xbf16>
    %796 = vector.extract_strided_slice %753 {offsets = [0, 0, 8], sizes = [2, 12, 8], strides = [1, 1, 1]} : vector<2x12x32xbf16> to vector<2x12x8xbf16>
    "tpu.trace_start"() <{level = 10 : i32, message = "bqk,bkd->bqd"}> : () -> ()
    %cst_270 = arith.constant dense<0.000000e+00> : vector<2x12x8xf32>
    %797 = tpu.matmul %795, %796, %cst_270 {dimension_numbers = #tpu.dot_dimension_numbers<[2], [1], [1], [2], [0, 0, 0, 1, 1, 2], [0], [0]>} : vector<2x12x12xbf16>, vector<2x12x8xbf16>, vector<2x12x8xf32> -> vector<2x12x8xf32>
    "tpu.trace_stop"() : () -> ()
    %798 = vector.extract_strided_slice %749 {offsets = [0, 0, 16], sizes = [2, 12, 8], strides = [1, 1, 1]} : vector<2x12x32xbf16> to vector<2x12x8xbf16>
    %799 = vector.extract_strided_slice %751 {offsets = [0, 0, 16], sizes = [2, 12, 8], strides = [1, 1, 1]} : vector<2x12x32xbf16> to vector<2x12x8xbf16>
    "tpu.trace_start"() <{level = 10 : i32, message = "bqd,bkd->bqk"}> : () -> ()
    %cst_271 = arith.constant dense<0.000000e+00> : vector<2x12x12xf32>
    %800 = tpu.matmul %798, %799, %cst_271 {dimension_numbers = #tpu.dot_dimension_numbers<[2], [2], [1], [1], [0, 0, 0, 1, 1, 1], [0], [0]>} : vector<2x12x8xbf16>, vector<2x12x8xbf16>, vector<2x12x12xf32> -> vector<2x12x12xf32>
    "tpu.trace_stop"() : () -> ()
    %cst_272 = arith.constant 0.353553385 : f32
    %801 = vector.broadcast %cst_272 : f32 to vector<2x12x12xf32>
    %802 = arith.mulf %800, %801 : vector<2x12x12xf32>
    %cst_273 = arith.constant -1.000000e+30 : f32
    %803 = vector.shape_cast %8 : vector<1x1x12xi1> to vector<1x1x12xi1>
    %804 = vector.broadcast %803 : vector<1x1x12xi1> to vector<2x12x12xi1>
    %805 = vector.broadcast %cst_273 : f32 to vector<2x12x12xf32>
    %806 = arith.select %804, %802, %805 : vector<2x12x12xi1>, vector<2x12x12xf32>
    %cst_274 = arith.constant dense<0xFF800000> : vector<2x12xf32>
    %807 = vector.multi_reduction <maximumf>, %806, %cst_274 [2] : vector<2x12x12xf32> to vector<2x12xf32>
    %808 = vector.shape_cast %807 : vector<2x12xf32> to vector<2x12x1xf32>
    %809 = vector.broadcast %808 : vector<2x12x1xf32> to vector<2x12x12xf32>
    %810 = arith.subf %806, %809 : vector<2x12x12xf32>
    %811 = math.exp %810 : vector<2x12x12xf32>
    %cst_275 = arith.constant dense<0.000000e+00> : vector<2x12xf32>
    %812 = vector.multi_reduction <add>, %811, %cst_275 [2] : vector<2x12x12xf32> to vector<2x12xf32>
    %813 = vector.shape_cast %812 : vector<2x12xf32> to vector<2x12x1xf32>
    %814 = tpu.reciprocal %813 {approx = true} : vector<2x12x1xf32> -> vector<2x12x1xf32>
    %815 = vector.broadcast %814 : vector<2x12x1xf32> to vector<2x12x12xf32>
    %816 = arith.mulf %811, %815 : vector<2x12x12xf32>
    %817 = arith.truncf %816 : vector<2x12x12xf32> to vector<2x12x12xbf16>
    %818 = vector.extract_strided_slice %753 {offsets = [0, 0, 16], sizes = [2, 12, 8], strides = [1, 1, 1]} : vector<2x12x32xbf16> to vector<2x12x8xbf16>
    "tpu.trace_start"() <{level = 10 : i32, message = "bqk,bkd->bqd"}> : () -> ()
    %cst_276 = arith.constant dense<0.000000e+00> : vector<2x12x8xf32>
    %819 = tpu.matmul %817, %818, %cst_276 {dimension_numbers = #tpu.dot_dimension_numbers<[2], [1], [1], [2], [0, 0, 0, 1, 1, 2], [0], [0]>} : vector<2x12x12xbf16>, vector<2x12x8xbf16>, vector<2x12x8xf32> -> vector<2x12x8xf32>
    "tpu.trace_stop"() : () -> ()
    %820 = vector.extract_strided_slice %749 {offsets = [0, 0, 24], sizes = [2, 12, 8], strides = [1, 1, 1]} : vector<2x12x32xbf16> to vector<2x12x8xbf16>
    %821 = vector.extract_strided_slice %751 {offsets = [0, 0, 24], sizes = [2, 12, 8], strides = [1, 1, 1]} : vector<2x12x32xbf16> to vector<2x12x8xbf16>
    "tpu.trace_start"() <{level = 10 : i32, message = "bqd,bkd->bqk"}> : () -> ()
    %cst_277 = arith.constant dense<0.000000e+00> : vector<2x12x12xf32>
    %822 = tpu.matmul %820, %821, %cst_277 {dimension_numbers = #tpu.dot_dimension_numbers<[2], [2], [1], [1], [0, 0, 0, 1, 1, 1], [0], [0]>} : vector<2x12x8xbf16>, vector<2x12x8xbf16>, vector<2x12x12xf32> -> vector<2x12x12xf32>
    "tpu.trace_stop"() : () -> ()
    %cst_278 = arith.constant 0.353553385 : f32
    %823 = vector.broadcast %cst_278 : f32 to vector<2x12x12xf32>
    %824 = arith.mulf %822, %823 : vector<2x12x12xf32>
    %cst_279 = arith.constant -1.000000e+30 : f32
    %825 = vector.shape_cast %8 : vector<1x1x12xi1> to vector<1x1x12xi1>
    %826 = vector.broadcast %825 : vector<1x1x12xi1> to vector<2x12x12xi1>
    %827 = vector.broadcast %cst_279 : f32 to vector<2x12x12xf32>
    %828 = arith.select %826, %824, %827 : vector<2x12x12xi1>, vector<2x12x12xf32>
    %cst_280 = arith.constant dense<0xFF800000> : vector<2x12xf32>
    %829 = vector.multi_reduction <maximumf>, %828, %cst_280 [2] : vector<2x12x12xf32> to vector<2x12xf32>
    %830 = vector.shape_cast %829 : vector<2x12xf32> to vector<2x12x1xf32>
    %831 = vector.broadcast %830 : vector<2x12x1xf32> to vector<2x12x12xf32>
    %832 = arith.subf %828, %831 : vector<2x12x12xf32>
    %833 = math.exp %832 : vector<2x12x12xf32>
    %cst_281 = arith.constant dense<0.000000e+00> : vector<2x12xf32>
    %834 = vector.multi_reduction <add>, %833, %cst_281 [2] : vector<2x12x12xf32> to vector<2x12xf32>
    %835 = vector.shape_cast %834 : vector<2x12xf32> to vector<2x12x1xf32>
    %836 = tpu.reciprocal %835 {approx = true} : vector<2x12x1xf32> -> vector<2x12x1xf32>
    %837 = vector.broadcast %836 : vector<2x12x1xf32> to vector<2x12x12xf32>
    %838 = arith.mulf %833, %837 : vector<2x12x12xf32>
    %839 = arith.truncf %838 : vector<2x12x12xf32> to vector<2x12x12xbf16>
    %840 = vector.extract_strided_slice %753 {offsets = [0, 0, 24], sizes = [2, 12, 8], strides = [1, 1, 1]} : vector<2x12x32xbf16> to vector<2x12x8xbf16>
    "tpu.trace_start"() <{level = 10 : i32, message = "bqk,bkd->bqd"}> : () -> ()
    %cst_282 = arith.constant dense<0.000000e+00> : vector<2x12x8xf32>
    %841 = tpu.matmul %839, %840, %cst_282 {dimension_numbers = #tpu.dot_dimension_numbers<[2], [1], [1], [2], [0, 0, 0, 1, 1, 2], [0], [0]>} : vector<2x12x12xbf16>, vector<2x12x8xbf16>, vector<2x12x8xf32> -> vector<2x12x8xf32>
    "tpu.trace_stop"() : () -> ()
    %842 = tpu.concatenate %775, %797, %819, %841 in 2 : vector<2x12x8xf32>, vector<2x12x8xf32>, vector<2x12x8xf32>, vector<2x12x8xf32> -> vector<2x12x32xf32>
    %843 = vector.shape_cast %842 : vector<2x12x32xf32> to vector<24x32xf32>
    %844 = arith.truncf %843 : vector<24x32xf32> to vector<24x32xbf16>
    %845 = arith.truncf %697 : vector<32x32xf32> to vector<32x32xbf16>
    %cst_283 = arith.constant dense<0.000000e+00> : vector<24x32xf32>
    %846 = tpu.matmul %844, %845, %cst_283 {dimension_numbers = #tpu.dot_dimension_numbers<[1], [0], [0], [1], [0, 0, 1, 1], [], []>} : vector<24x32xbf16>, vector<32x32xbf16>, vector<24x32xf32> -> vector<24x32xf32>
    %847 = vector.broadcast %709 : vector<1x32xf32> to vector<24x32xf32>
    %848 = arith.addf %846, %847 : vector<24x32xf32>
    %849 = arith.addf %693, %848 : vector<24x32xf32>
    %cst_284 = arith.constant dense<0.000000e+00> : vector<24xf32>
    %850 = vector.multi_reduction <add>, %849, %cst_284 [1] : vector<24x32xf32> to vector<24xf32>
    %851 = vector.shape_cast %850 : vector<24xf32> to vector<24x1xf32>
    %cst_285 = arith.constant 3.200000e+01 : f32
    %852 = vector.broadcast %cst_285 : f32 to vector<24x1xf32>
    %853 = arith.divf %851, %852 : vector<24x1xf32>
    %854 = vector.broadcast %853 : vector<24x1xf32> to vector<24x32xf32>
    %855 = arith.subf %849, %854 : vector<24x32xf32>
    %856 = arith.mulf %855, %855 : vector<24x32xf32>
    %cst_286 = arith.constant dense<0.000000e+00> : vector<24xf32>
    %857 = vector.multi_reduction <add>, %856, %cst_286 [1] : vector<24x32xf32> to vector<24xf32>
    %858 = vector.shape_cast %857 : vector<24xf32> to vector<24x1xf32>
    %cst_287 = arith.constant 3.200000e+01 : f32
    %859 = vector.broadcast %cst_287 : f32 to vector<24x1xf32>
    %860 = arith.divf %858, %859 : vector<24x1xf32>
    %861 = vector.broadcast %853 : vector<24x1xf32> to vector<24x32xf32>
    %862 = arith.subf %849, %861 : vector<24x32xf32>
    %cst_288 = arith.constant 9.99999974E-6 : f32
    %863 = vector.broadcast %cst_288 : f32 to vector<24x1xf32>
    %864 = arith.addf %860, %863 : vector<24x1xf32>
    %865 = math.rsqrt %864 : vector<24x1xf32>
    %866 = vector.broadcast %865 : vector<24x1xf32> to vector<24x32xf32>
    %867 = arith.mulf %862, %866 : vector<24x32xf32>
    %868 = vector.broadcast %711 : vector<1x32xf32> to vector<24x32xf32>
    %869 = arith.mulf %867, %868 : vector<24x32xf32>
    %870 = vector.broadcast %713 : vector<1x32xf32> to vector<24x32xf32>
    %871 = arith.addf %869, %870 : vector<24x32xf32>
    %872 = arith.truncf %871 : vector<24x32xf32> to vector<24x32xbf16>
    %873 = arith.truncf %699 : vector<32x64xf32> to vector<32x64xbf16>
    %cst_289 = arith.constant dense<0.000000e+00> : vector<24x64xf32>
    %874 = tpu.matmul %872, %873, %cst_289 {dimension_numbers = #tpu.dot_dimension_numbers<[1], [0], [0], [1], [0, 0, 1, 1], [], []>} : vector<24x32xbf16>, vector<32x64xbf16>, vector<24x64xf32> -> vector<24x64xf32>
    %875 = vector.broadcast %715 : vector<1x64xf32> to vector<24x64xf32>
    %876 = arith.addf %874, %875 : vector<24x64xf32>
    %cst_290 = arith.constant 0.000000e+00 : f32
    %877 = vector.broadcast %cst_290 : f32 to vector<24x64xf32>
    %878 = arith.maximumf %876, %877 : vector<24x64xf32>
    %879 = arith.truncf %878 : vector<24x64xf32> to vector<24x64xbf16>
    %880 = arith.truncf %701 : vector<64x32xf32> to vector<64x32xbf16>
    %cst_291 = arith.constant dense<0.000000e+00> : vector<24x32xf32>
    %881 = tpu.matmul %879, %880, %cst_291 {dimension_numbers = #tpu.dot_dimension_numbers<[1], [0], [0], [1], [0, 0, 1, 1], [], []>} : vector<24x64xbf16>, vector<64x32xbf16>, vector<24x32xf32> -> vector<24x32xf32>
    %882 = vector.broadcast %717 : vector<1x32xf32> to vector<24x32xf32>
    %883 = arith.addf %881, %882 : vector<24x32xf32>
    %884 = arith.addf %849, %883 : vector<24x32xf32>
    %c0_292 = arith.constant 0 : index
    %c696 = arith.constant 696 : index
    %c0_293 = arith.constant 0 : index
    %885 = vector.load %arg4[%c0_292, %c696, %c0_293] : memref<1x704x128xf32, #tpu.memory_space<vmem>>, vector<1x1x32xf32>
    %886 = vector.shape_cast %885 : vector<1x1x32xf32> to vector<1x32xf32>
    %c0_294 = arith.constant 0 : index
    %c697 = arith.constant 697 : index
    %c0_295 = arith.constant 0 : index
    %887 = vector.load %arg4[%c0_294, %c697, %c0_295] : memref<1x704x128xf32, #tpu.memory_space<vmem>>, vector<1x1x32xf32>
    %888 = vector.shape_cast %887 : vector<1x1x32xf32> to vector<1x32xf32>
    %cst_296 = arith.constant dense<0.000000e+00> : vector<24xf32>
    %889 = vector.multi_reduction <add>, %884, %cst_296 [1] : vector<24x32xf32> to vector<24xf32>
    %890 = vector.shape_cast %889 : vector<24xf32> to vector<24x1xf32>
    %cst_297 = arith.constant 3.200000e+01 : f32
    %891 = vector.broadcast %cst_297 : f32 to vector<24x1xf32>
    %892 = arith.divf %890, %891 : vector<24x1xf32>
    %893 = vector.broadcast %892 : vector<24x1xf32> to vector<24x32xf32>
    %894 = arith.subf %884, %893 : vector<24x32xf32>
    %895 = arith.mulf %894, %894 : vector<24x32xf32>
    %cst_298 = arith.constant dense<0.000000e+00> : vector<24xf32>
    %896 = vector.multi_reduction <add>, %895, %cst_298 [1] : vector<24x32xf32> to vector<24xf32>
    %897 = vector.shape_cast %896 : vector<24xf32> to vector<24x1xf32>
    %cst_299 = arith.constant 3.200000e+01 : f32
    %898 = vector.broadcast %cst_299 : f32 to vector<24x1xf32>
    %899 = arith.divf %897, %898 : vector<24x1xf32>
    %900 = vector.broadcast %892 : vector<24x1xf32> to vector<24x32xf32>
    %901 = arith.subf %884, %900 : vector<24x32xf32>
    %cst_300 = arith.constant 9.99999974E-6 : f32
    %902 = vector.broadcast %cst_300 : f32 to vector<24x1xf32>
    %903 = arith.addf %899, %902 : vector<24x1xf32>
    %904 = math.rsqrt %903 : vector<24x1xf32>
    %905 = vector.broadcast %904 : vector<24x1xf32> to vector<24x32xf32>
    %906 = arith.mulf %901, %905 : vector<24x32xf32>
    %907 = vector.broadcast %886 : vector<1x32xf32> to vector<24x32xf32>
    %908 = arith.mulf %906, %907 : vector<24x32xf32>
    %909 = vector.broadcast %888 : vector<1x32xf32> to vector<24x32xf32>
    %910 = arith.addf %908, %909 : vector<24x32xf32>
    %911 = vector.shape_cast %910 : vector<24x32xf32> to vector<2x12x32xf32>
    %912 = vector.broadcast %14 : vector<1x12x1xf32> to vector<2x12x32xf32>
    %913 = arith.mulf %911, %912 : vector<2x12x32xf32>
    %cst_301 = arith.constant dense<0.000000e+00> : vector<2x32xf32>
    %914 = vector.multi_reduction <add>, %913, %cst_301 [1] : vector<2x12x32xf32> to vector<2x32xf32>
    %c0_302 = arith.constant 0 : index
    %c0_303 = arith.constant 0 : index
    %c0_304 = arith.constant 0 : index
    %915 = vector.load %arg5[%c0_302, %c0_303, %c0_304] : memref<1x2x32xf32, #tpu.memory_space<vmem>>, vector<1x2x32xf32>
    %916 = vector.shape_cast %915 : vector<1x2x32xf32> to vector<2x32xf32>
    %917 = vector.shape_cast %914 : vector<2x32xf32> to vector<1x2x32xf32>
    tpu.vector_store %arg5[%c0_302, %c0_303, %c0_304], %917 {strides = array<i32>} : memref<1x2x32xf32, #tpu.memory_space<vmem>>, vector<1x2x32xf32>,
    return
  }
  func.func @transform_0(%arg0: i32) -> (i32, i32, i32, i32) {
    %c0_i32 = arith.constant 0 : i32
    %c0_i32_0 = arith.constant 0 : i32
    %c0_i32_1 = arith.constant 0 : i32
    %c0_i32_2 = arith.constant 0 : i32
    return %arg0, %c0_i32, %c0_i32_0, %c0_i32_1 : i32, i32, i32, i32
  }
  func.func @transform_1(%arg0: i32) -> (i32, i32, i32, i32) {
    %c1_i32 = arith.constant 1 : i32
    %0 = arith.subi %c1_i32, %arg0 : i32
    %c0_i32 = arith.constant 0 : i32
    %c0_i32_0 = arith.constant 0 : i32
    %c0_i32_1 = arith.constant 0 : i32
    %c0_i32_2 = arith.constant 0 : i32
    return %0, %c0_i32, %c0_i32_0, %c0_i32_1 : i32, i32, i32, i32
  }
  func.func @transform_2(%arg0: i32) -> (i32, i32) {
    %c0_i32 = arith.constant 0 : i32
    %c0_i32_0 = arith.constant 0 : i32
    %c0_i32_1 = arith.constant 0 : i32
    return %c0_i32, %c0_i32_0 : i32, i32
  }
  func.func @transform_3(%arg0: i32) -> (i32, i32, i32) {
    %c0_i32 = arith.constant 0 : i32
    %c0_i32_0 = arith.constant 0 : i32
    %c0_i32_1 = arith.constant 0 : i32
    return %arg0, %c0_i32, %c0_i32_0 : i32, i32, i32
  }
  func.func @transform_4(%arg0: i32) -> (i32, i32, i32) {
    %c0_i32 = arith.constant 0 : i32
    %c0_i32_0 = arith.constant 0 : i32
    %c0_i32_1 = arith.constant 0 : i32
    return %arg0, %c0_i32, %c0_i32_0 : i32, i32, i32
  }
}

</mosaic_0001>

<llo_original>
// kernel: unaligned_transformer_forward.3
$region0: #{unaligned_transformer_forward.3}
  #allocation0 [shape = 'u32[]', space=smem, size = 0x4, offset = 0x4, fixed_abs, tag = 'smem constant byte address 0x4 - core index']
  #allocation1 [shape = 'u32[72,128]{1,0:T(1,128)}', space=vmem, size = 0x9000, scoped, tag = 'internal scratch']
  %s0 = inlined_call_operand.vmem [shape: f32[2,2,32], index: 0, kind: input, shape index: {}]
  %s1 = inlined_call_operand.vmem [shape: f32[200,128], index: 1, kind: input, shape index: {}]
  %s2 = inlined_call_operand.vmem [shape: f32[2,1], index: 2, kind: output, shape index: {}]
  %s3 = sld [smem:[#allocation0]]
  $region18: #{unaligned_transformer_forward.3} parent=0
    _
  %s5 = ssub.s32 1, %s3
  %s6 = scalar_select 0, %s5, %s3
  // Predicated region
  $region2: #{unaligned_transformer_forward.3} parent=0 // pred_check
    _
  $region3: #{unaligned_transformer_forward.3} parent=0 // pred_check_branch
    %8 = sbr.rel (0) target = $region5
  $region4: #{unaligned_transformer_forward.3} parent=0 // pred_region
    _
  $region5: #{unaligned_transformer_forward.3} parent=0 // pred_fallthru
    _
  // Predicated region
  $region6: #{unaligned_transformer_forward.3} parent=0 // pred_check
    _
  $region7: #{unaligned_transformer_forward.3} parent=0 // pred_check_branch
    %10 = sbr.rel (0) target = $region9
  $region8: #{unaligned_transformer_forward.3} parent=0 // pred_region
    _
  $region9: #{unaligned_transformer_forward.3} parent=0 // pred_fallthru
    _
  %v12 = vld [vmem:[%s0] sm:$0x3]
  %v13 = vld [vmem:[%s0 + $0x2] sm:$0x3]
  %15 = vrot.lane.b32.xlu0 %v13, 32
  %v16 = vpop.permute.xlu0 %15
  %vm18 = vcmask 261120
  %v19 = vsel %vm18, %v12, %v16
  %v20 = vld [vmem:[%s1] sm:$0xff]
  %v21 = vld [vmem:[%s1 + $0x8] sm:$0xff]
  %v22 = vld [vmem:[%s1 + $0x10] sm:$0xff]
  %v23 = vld [vmem:[%s1 + $0x18] sm:$0xff]
  %v24 = vld [vmem:[%s1 + $0x20] sm:$0xff]
  %v25 = vld [vmem:[%s1 + $0x28] sm:$0xff]
  %v26 = vld [vmem:[%s1 + $0x30] sm:$0xff]
  %v27 = vld [vmem:[%s1 + $0x38] sm:$0xff]
  %v28 = vld [vmem:[%s1 + $0xc0] sm:$0x1]
  %v29 = vld [vmem:[%s1 + $0x40] sm:$0xff]
  %v30 = vld [vmem:[%s1 + $0x48] sm:$0xff]
  %v31 = vld [vmem:[%s1 + $0x50] sm:$0xff]
  %v32 = vld [vmem:[%s1 + $0x58] sm:$0xff]
  %v33 = vld [vmem:[%s1 + $0x60] sm:$0xff]
  %v34 = vld [vmem:[%s1 + $0x68] sm:$0xff]
  %v35 = vld [vmem:[%s1 + $0x70] sm:$0xff]
  %v36 = vld [vmem:[%s1 + $0x78] sm:$0xff]
  %v37 = vld [vmem:[%s1 + $0xc1] sm:$0x1]
  %v38 = vld [vmem:[%s1 + $0x80] sm:$0xff]
  %v39 = vld [vmem:[%s1 + $0x88] sm:$0xff]
  %v40 = vld [vmem:[%s1 + $0x90] sm:$0xff]
  %v41 = vld [vmem:[%s1 + $0x98] sm:$0xff]
  %v42 = vld [vmem:[%s1 + $0xa0] sm:$0xff]
  %v43 = vld [vmem:[%s1 + $0xa8] sm:$0xff]
  %v44 = vld [vmem:[%s1 + $0xb0] sm:$0xff]
  %v45 = vld [vmem:[%s1 + $0xb8] sm:$0xff]
  %v46 = vld [vmem:[%s1 + $0xc2] sm:$0x1]
  %v47 = vpack.c.bf16 %v19, %v19
  %v48 = vpack.c.bf16 %v21, %v20
  %v49 = vpack.c.bf16 %v23, %v22
  %v50 = vpack.c.bf16 %v25, %v24
  %v51 = vpack.c.bf16 %v27, %v26
  %v52 = vperm.slane %v28, 0
  %vm53 = vcmask 523264
  %v55 = vsel %vm53, %v47, 0
  %57 = vmatpush.bf16.msra.mxu0 0
  %58 = vmatpush.bf16.msra.mxu0 0
  %59 = vmatpush.bf16.msra.mxu0 0
  %60 = vmatpush.bf16.msra.mxu0 0
  %61 = vmatpush.bf16.msra.mxu0 %v51
  %62 = vmatpush.bf16.msra.mxu0 %v50
  %63 = vmatpush.bf16.msra.mxu0 %v49
  %64 = vmatpush.bf16.msra.mxu0 %v48
  %65 = vmatmul.bf16.gmra.mxu0 %v55
  %v66 = vpop.f32.mrf.mxu0
  %v67 = vadd.f32 %v52, %v66
  %v68 = vpop.f32.mrf.mxu0
  %69 = vdwg.mxu0
  %v70 = vmax.f32 %v67, 0.0
  %v71 = vpack.c.bf16 %v70, %v70
  %v72 = vpack.c.bf16 %v30, %v29
  %v73 = vpack.c.bf16 %v32, %v31
  %v74 = vpack.c.bf16 %v34, %v33
  %v75 = vpack.c.bf16 %v36, %v35
  %v76 = vperm.slane %v37, 0
  %v78 = vsel %vm53, %v71, 0
  %80 = vmatpush.bf16.msra.mxu0 0
  %81 = vmatpush.bf16.msra.mxu0 0
  %82 = vmatpush.bf16.msra.mxu0 0
  %83 = vmatpush.bf16.msra.mxu0 0
  %84 = vmatpush.bf16.msra.mxu0 %v75
  %85 = vmatpush.bf16.msra.mxu0 %v74
  %86 = vmatpush.bf16.msra.mxu0 %v73
  %87 = vmatpush.bf16.msra.mxu0 %v72
  %88 = vmatmul.bf16.gmra.mxu0 %v78
  %v89 = vpop.f32.mrf.mxu0
  %v90 = vadd.f32 %v76, %v89
  %v91 = vpop.f32.mrf.mxu0
  %92 = vdwg.mxu0
  %v93 = vadd.f32 %v90, %v19
  %v94 = vperm.slane %v46, 0
  %v96 = vsel %vm53, %v93, 0
  %98 = vmatpush.msra.mxu0 0.0
  %99 = vmatpush.msra.mxu0 0.0
  %100 = vmatpush.msra.mxu0 0.0
  %101 = vmatpush.msra.mxu0 0.0
  %102 = vmatpush.msra.mxu0 0.0
  %103 = vmatpush.msra.mxu0 0.0
  %104 = vmatpush.msra.mxu0 0.0
  %105 = vmatpush.msra.mxu0 0.0
  %106 = vmatpush.msra.mxu0 %v45
  %107 = vmatpush.msra.mxu0 %v44
  %108 = vmatpush.msra.mxu0 %v43
  %109 = vmatpush.msra.mxu0 %v42
  %110 = vmatpush.msra.mxu0 %v41
  %111 = vmatpush.msra.mxu0 %v40
  %112 = vmatpush.msra.mxu0 %v39
  %113 = vmatpush.msra.mxu0 %v38
  %114 = vmatmul.f32.gmra.mxu0 %v96
  %v115 = vpop.f32.mrf.mxu0
  %v116 = vadd.f32 %v94, %v115
  %117 = vdwg.mxu0
  %v118 = vxor.u32 %v116, 2147483648
  %v119 = vmul.f32 %v118, 1.442695
  %v120 = vpow.pop %v119
  %v121 = vadd.f32 %v120, 1.0
  %v122 = vrcp.pop %v121
  %v123 = vmul.f32 %v121, %v122
  %v124 = vsub.f32 1.0, %v123
  %v125 = vmul.f32 %v122, %v124
  %v126 = vadd.f32 %v122, %v125
  %vm127 = vweird.f32 %v121
  %vm128 = vweird.f32 %v122
  %vm129 = vmor %vm127, %vm128
  %v130 = vsel %vm129, %v122, %v126
  %v131 = vand.u32 2147483647, %v121
  %vm132 = vcmp.eq.f32.partialorder %v131, 8.507059e+37
  %v133 = vand.u32 %v121, 2147483648
  %v134 = vor.u32 1.1754944e-38, %v133
  %v135 = vsel %vm132, %v134, %v130
  %v136 = vmul.f32 1.0, %v135
  %v137 = vmul.f32 %v136, 63.0
  %vm138 = vcmask 1024
  %139 = vst.msk [vmem:[%s2] sm:$0x3] %vm138, %v137
  // Predicated region
  $region10: #{unaligned_transformer_forward.3} parent=0 // pred_check
    _
  $region11: #{unaligned_transformer_forward.3} parent=0 // pred_check_branch
    %141 = sbr.rel (0) target = $region13
  $region12: #{unaligned_transformer_forward.3} parent=0 // pred_region
    _
  $region13: #{unaligned_transformer_forward.3} parent=0 // pred_fallthru
    _
  // Predicated region
  $region14: #{unaligned_transformer_forward.3} parent=0 // pred_check
    _
  $region15: #{unaligned_transformer_forward.3} parent=0 // pred_check_branch
    %143 = sbr.rel (0) target = $region17
  $region16: #{unaligned_transformer_forward.3} parent=0 // pred_region
    _
  $region17: #{unaligned_transformer_forward.3} parent=0 // pred_fallthru
    _

// kernel: unaligned_transformer_forward.2
$region0: #{unaligned_transformer_forward.2}
  #allocation0 [shape = 'u32[]', space=smem, size = 0x4, offset = 0x4, fixed_abs, tag = 'smem constant byte address 0x4 - core index']
  #allocation1 [shape = 'u32[72,128]{1,0:T(1,128)}', space=vmem, size = 0x9000, scoped, tag = 'internal scratch']
  %s0 = inlined_call_operand.vmem [shape: f32[2,2,12,8], index: 0, kind: input, shape index: {}, may-alias: {0,1}]
  %s1 = inlined_call_operand.vmem [shape: f32[2,2,12,8], index: 1, kind: input, shape index: {}, may-alias: {0,1}]
  %s2 = inlined_call_operand.vmem [shape: f32[12,32], index: 2, kind: input, shape index: {}]
  %s3 = inlined_call_operand.hbm [shape: f32[2,704,128], index: 3, kind: input, shape index: {}]
  %s4 = inlined_call_operand.vmem [shape: f32[2,2,32], index: 4, kind: output, shape index: {}]
  %s5 = sld [smem:[#allocation0]]
  $region53: #{unaligned_transformer_forward.2} parent=0
    _
  %s7 = ssub.s32 1, %s5
  %s8 = scalar_select 0, %s7, %s5
  $region1: #{unaligned_transformer_forward.2} parent=0
    #allocation2 [shape = 'u8[720896]{0}', space=vmem, size = 0xb0000, scoped, tag = 'input window, operand 3']
    #allocation3 [shape = 's32[2]{0}', space=sflag, size = 0x8, scoped, tag = 'scoped memory for unaligned_transformer_forward.2']
    %9 = vsyncpa [#allocation3], 0
    %s10 = scalar_lea.sflag [#allocation3], 1
    %11 = vsyncpa %s10, 0
    loop: start=0, step=1, limit=4
    $region2: #{unaligned_transformer_forward.2} parent=1 // loop_pre_header
      _
    $region3: #{unaligned_transformer_forward.2} parent=1 // loop_header
      %s13 = sphi 0, %s17
      %p14 = scmp.ge.s32.totalorder %s13, 4
      %s23 = sphi 0, %s25
      %s26 = sphi 0, %s23
      %s27 = sphi 0, %s26
      %s43 = sphi 0, %s27
      %s51 = sphi 0, %s53
      %s54 = sphi 0, %s51
      %s55 = sphi 0, %s54
      %s71 = sphi 0, %s55
      %s75 = sphi 0, %s75
      %s77 = sphi 0, %s75
      %s78 = sphi 0, %s77
      %s92 = sphi 0, %s78
      %s98 = sphi 0, %s100
      %s101 = sphi 0, %s98
      %s102 = sphi 0, %s101
      %s118 = sphi 0, %s102
      %s124 = sphi 0, %s126
      %s127 = sphi 0, %s124
      %s128 = sphi 0, %s127
      %s144 = sphi 0, %s128
    $region4: #{unaligned_transformer_forward.2} parent=1 // loop_header_branch
      %16 = sbr.rel (%p14) target = $region8
    $region5: #{unaligned_transformer_forward.2} parent=1 // loop_body
      %s18 = ssub.s32 %s13, 1
      %s19 = ssub.s32 %s13, 2
      %s20 = sadd.s32 %s13, 1
      %s21 = ssub.s32 %s13, %s20
      %p22 = scmp.eq.s32.totalorder %s21, 0
      %s24 = sadd.s32 %s23, 1
      %s25 = scalar_select %p22, %s23, %s24
      %p28 = pneg %p22
      %p29 = scmp.eq.s32.totalorder %s13, 1
      %p30 = por %p28, %p29
      %p31 = scmp.ne.s32.totalorder %s23, %s26
      %p32 = scmp.eq.s32.totalorder %s13, 0
      %p33 = por %p31, %p32
      %p34 = scmp.ne.s32.totalorder %s23, %s26
      %p35 = scmp.eq.s32.totalorder %s18, 1
      %p36 = por %p34, %p35
      %p37 = scmp.ne.s32.totalorder %s26, %s27
      %p38 = scmp.eq.s32.totalorder %s18, 0
      %p39 = por %p37, %p38
      %p40 = scmp.ne.s32.totalorder %s26, %s27
      %p41 = scmp.eq.s32.totalorder %s19, 1
      %p42 = por %p40, %p41
      %p44 = scmp.ne.s32.totalorder %s27, %s43
      %p45 = scmp.eq.s32.totalorder %s19, 0
      %p46 = por %p44, %p45
      %s47 = ssub.s32 1, %s13
      %s48 = ssub.s32 1, %s20
      %s49 = ssub.s32 %s47, %s48
      %p50 = scmp.eq.s32.totalorder %s49, 0
      %s52 = sadd.s32 %s51, 1
      %s53 = scalar_select %p50, %s51, %s52
      %p56 = pneg %p50
      %p57 = scmp.eq.s32.totalorder %s13, 1
      %p58 = por %p56, %p57
      %p59 = scmp.ne.s32.totalorder %s51, %s54
      %p60 = scmp.eq.s32.totalorder %s13, 0
      %p61 = por %p59, %p60
      %p62 = scmp.ne.s32.totalorder %s51, %s54
      %p63 = scmp.eq.s32.totalorder %s18, 1
      %p64 = por %p62, %p63
      %p65 = scmp.ne.s32.totalorder %s54, %s55
      %p66 = scmp.eq.s32.totalorder %s18, 0
      %p67 = por %p65, %p66
      %p68 = scmp.ne.s32.totalorder %s54, %s55
      %p69 = scmp.eq.s32.totalorder %s19, 1
      %p70 = por %p68, %p69
      %p72 = scmp.ne.s32.totalorder %s55, %s71
      %p73 = scmp.eq.s32.totalorder %s19, 0
      %p74 = por %p72, %p73
      %s76 = sadd.s32 %s75, 1
      %p79 = scmp.eq.s32.totalorder %s13, 1
      %p80 = scmp.ne.s32.totalorder %s75, %s77
      %p81 = scmp.eq.s32.totalorder %s13, 0
      %p82 = por %p80, %p81
      %p83 = scmp.ne.s32.totalorder %s75, %s77
      %p84 = scmp.eq.s32.totalorder %s18, 1
      %p85 = por %p83, %p84
      %p86 = scmp.ne.s32.totalorder %s77, %s78
      %p87 = scmp.eq.s32.totalorder %s18, 0
      %p88 = por %p86, %p87
      %p89 = scmp.ne.s32.totalorder %s77, %s78
      %p90 = scmp.eq.s32.totalorder %s19, 1
      %p91 = por %p89, %p90
      %p93 = scmp.ne.s32.totalorder %s78, %s92
      %p94 = scmp.eq.s32.totalorder %s19, 0
      %p95 = por %p93, %p94
      %s96 = ssub.s32 %s13, %s20
      %p97 = scmp.eq.s32.totalorder %s96, 0
      %s99 = sadd.s32 %s98, 1
      %s100 = scalar_select %p97, %s98, %s99
      %p103 = pneg %p97
      %p104 = scmp.eq.s32.totalorder %s13, 1
      %p105 = por %p103, %p104
      %p106 = scmp.ne.s32.totalorder %s98, %s101
      %p107 = scmp.eq.s32.totalorder %s13, 0
      %p108 = por %p106, %p107
      %p109 = scmp.ne.s32.totalorder %s98, %s101
      %p110 = scmp.eq.s32.totalorder %s18, 1
      %p111 = por %p109, %p110
      %p112 = scmp.ne.s32.totalorder %s101, %s102
      %p113 = scmp.eq.s32.totalorder %s18, 0
      %p114 = por %p112, %p113
      %p115 = scmp.ne.s32.totalorder %s101, %s102
      %p116 = scmp.eq.s32.totalorder %s19, 1
      %p117 = por %p115, %p116
      %p119 = scmp.ne.s32.totalorder %s102, %s118
      %p120 = scmp.eq.s32.totalorder %s19, 0
      %p121 = por %p119, %p120
      %s122 = ssub.s32 %s13, %s20
      %p123 = scmp.eq.s32.totalorder %s122, 0
      %s125 = sadd.s32 %s124, 1
      %s126 = scalar_select %p123, %s124, %s125
      %p129 = pneg %p123
      %p130 = scmp.eq.s32.totalorder %s13, 1
      %p131 = por %p129, %p130
      %p132 = scmp.ne.s32.totalorder %s124, %s127
      %p133 = scmp.eq.s32.totalorder %s13, 0
      %p134 = por %p132, %p133
      %p135 = scmp.ne.s32.totalorder %s124, %s127
      %p136 = scmp.eq.s32.totalorder %s18, 1
      %p137 = por %p135, %p136
      %p138 = scmp.ne.s32.totalorder %s127, %s128
      %p139 = scmp.eq.s32.totalorder %s18, 0
      %p140 = por %p138, %p139
      %p141 = scmp.ne.s32.totalorder %s127, %s128
      %p142 = scmp.eq.s32.totalorder %s19, 1
      %p143 = por %p141, %p142
      %p145 = scmp.ne.s32.totalorder %s128, %s144
      %p146 = scmp.eq.s32.totalorder %s19, 0
      %p147 = por %p145, %p146
      %p148 = scmp.le.s32.totalorder 1, %s13
      %p149 = scmp.lt.s32.totalorder %s13, 3
      %p150 = pnand %p148, %p149
      %p151 = pneg %p150
      // Predicated region
      $region9: #{unaligned_transformer_forward.2} parent=5 // pred_check
        _
      $region10: #{unaligned_transformer_forward.2} parent=5 // pred_check_branch
        %153 = sbr.rel (%p150) target = $region12
      $region11: #{unaligned_transformer_forward.2} parent=5 // pred_region
        %s154 = ssub.s32 %s13, 1
        // Predicated region
        $region13: #{unaligned_transformer_forward.2} parent=11 // pred_check
          %p155 = pneg %p88
        $region14: #{unaligned_transformer_forward.2} parent=11 // pred_check_branch
          %157 = sbr.rel (%p155) target = $region16
        $region15: #{unaligned_transformer_forward.2} parent=11 // pred_region
          _
        $region16: #{unaligned_transformer_forward.2} parent=11 // pred_fallthru
          _
      $region12: #{unaligned_transformer_forward.2} parent=5 // pred_fallthru
        _
      %p158 = scmp.lt.s32.totalorder %s13, 2
      // Predicated region
      $region17: #{unaligned_transformer_forward.2} parent=5 // pred_check
        %p159 = pneg %p158
      $region18: #{unaligned_transformer_forward.2} parent=5 // pred_check_branch
        %161 = sbr.rel (%p159) target = $region20
      $region19: #{unaligned_transformer_forward.2} parent=5 // pred_region
        // Predicated region
        $region21: #{unaligned_transformer_forward.2} parent=19 // pred_check
          %p162 = pneg %p33
        $region22: #{unaligned_transformer_forward.2} parent=19 // pred_check_branch
          %164 = sbr.rel (%p162) target = $region24
        $region23: #{unaligned_transformer_forward.2} parent=19 // pred_region
          %p165 = scmp.lt.s32.totalorder %s13, 1
          %s166 = scalar_select %p165, %s13, 1
          %s167 = smul.addr %s166, 4
          %s168 = smul.addr %s167, 8
          %s169 = scalar_lea.vmem %s0, %s168
        $region24: #{unaligned_transformer_forward.2} parent=19 // pred_fallthru
          _
        // Predicated region
        $region25: #{unaligned_transformer_forward.2} parent=19 // pred_check
          %p170 = pneg %p61
        $region26: #{unaligned_transformer_forward.2} parent=19 // pred_check_branch
          %172 = sbr.rel (%p170) target = $region28
        $region27: #{unaligned_transformer_forward.2} parent=19 // pred_region
          %s173 = ssub.s32 1, %s13
          %p174 = scmp.lt.s32.totalorder %s173, 1
          %s175 = scalar_select %p174, %s173, 1
          %s176 = smul.addr %s175, 4
          %s177 = smul.addr %s176, 8
          %s178 = scalar_lea.vmem %s1, %s177
          %s179 = ssub.s32 1, %s13
        $region28: #{unaligned_transformer_forward.2} parent=19 // pred_fallthru
          _
        // Predicated region
        $region29: #{unaligned_transformer_forward.2} parent=19 // pred_check
          %p180 = pneg %p108
        $region30: #{unaligned_transformer_forward.2} parent=19 // pred_check_branch
          %182 = sbr.rel (%p180) target = $region32
        $region31: #{unaligned_transformer_forward.2} parent=19 // pred_region
          %s183 = sand.u32 %s98, 1
          %s184 = scalar_lea.sflag [#allocation3], %s183
          %s185 = sand.u32 %s98, 1
          %s186 = smul.addr %s185, 704
          %s187 = scalar_lea.vmem [#allocation2], %s186
          %189 = vsyncadd %s184, 0
          %s190 = smul.addr %s13, 88
          %s191 = smul.addr %s190, 8
          %s192 = scalar_lea.hbm %s3, %s191
          %s193 = sshll.u32 %s192, 4
          %s194 = int_to_ptr.hbm [resolvable:$true] %s193
          %s195 = sshll.u32 %s187, 4
          %s196 = int_to_ptr.vmem [resolvable:$true] %s195
          %201 = dma.hbm_to_vmem [thread:$0]  %s194, 11264, %s196, %s184, 128, 128, 8
        $region32: #{unaligned_transformer_forward.2} parent=19 // pred_fallthru
          _
      $region20: #{unaligned_transformer_forward.2} parent=5 // pred_fallthru
        _
      %p202 = scmp.le.s32.totalorder 1, %s13
      %p203 = scmp.lt.s32.totalorder %s13, 3
      %p204 = pnand %p202, %p203
      %p205 = pneg %p204
      // Predicated region
      $region33: #{unaligned_transformer_forward.2} parent=5 // pred_check
        _
      $region34: #{unaligned_transformer_forward.2} parent=5 // pred_check_branch
        %207 = sbr.rel (%p204) target = $region36
      $region35: #{unaligned_transformer_forward.2} parent=5 // pred_region
        %s208 = ssub.s32 %s13, 1
        %s209 = sand.u32 %s101, 1
        %s210 = scalar_lea.sflag [#allocation3], %s209
        %s211 = sand.u32 %s101, 1
        %s212 = smul.addr %s211, 704
        %s213 = scalar_lea.vmem [#allocation2], %s212
        // Predicated region
        $region37: #{unaligned_transformer_forward.2} parent=35 // pred_check
          %p214 = pneg %p114
        $region38: #{unaligned_transformer_forward.2} parent=35 // pred_check_branch
          %216 = sbr.rel (%p214) target = $region40
        $region39: #{unaligned_transformer_forward.2} parent=35 // pred_region
          %218 = dma.done %s210, 11264
        $region40: #{unaligned_transformer_forward.2} parent=35 // pred_fallthru
          _
        %p219 = scmp.lt.s32.totalorder %s18, 1
        %s220 = scalar_select %p219, %s18, 1
        %s221 = smul.addr %s220, 4
        %s222 = smul.addr %s221, 8
        %s223 = scalar_lea.vmem %s0, %s222
        %p224 = pneg %p39
        %p225 = pneg %p36
        %s226 = ssub.s32 1, %s18
        %p227 = scmp.lt.s32.totalorder %s226, 1
        %s228 = scalar_select %p227, %s226, 1
        %s229 = smul.addr %s228, 4
        %s230 = smul.addr %s229, 8
        %s231 = scalar_lea.vmem %s1, %s230
        %p232 = pneg %p67
        %p233 = pneg %p64
        %p234 = pneg %p88
        %p235 = pneg %p85
        %s236 = sand.u32 %s101, 1
        %s237 = scalar_lea.sflag [#allocation3], %s236
        %s238 = sand.u32 %s101, 1
        %s239 = smul.addr %s238, 704
        %s240 = scalar_lea.vmem [#allocation2], %s239
        %p241 = pneg %p114
        %p242 = pneg %p111
        %p243 = pneg %p140
        %p244 = pneg %p137
        %p245 = scmp.lt.s32.totalorder %s18, 1
        %s246 = scalar_select %p245, %s18, 1
        %s247 = smul.addr %s246, 2
        %s248 = scalar_lea.vmem %s4, %s247
        %p249 = scmp.lt.s32.totalorder %s18, 1
        %s250 = scalar_select %p249, %s18, 1
        %s251 = smul.addr %s250, 4
        %s252 = smul.addr %s251, 8
        %s253 = scalar_lea.vmem %s0, %s252
        %s254 = ssub.s32 1, %s18
        %p255 = scmp.lt.s32.totalorder %s254, 1
        %s256 = scalar_select %p255, %s254, 1
        %s257 = smul.addr %s256, 4
        %s258 = smul.addr %s257, 8
        %s259 = scalar_lea.vmem %s1, %s258
        %s260 = ssub.s32 1, %s18
        %p261 = scmp.lt.s32.totalorder %s18, 1
        %s262 = scalar_select %p261, %s18, 1
        %s263 = smul.addr %s262, 2
        %s264 = scalar_lea.vmem %s4, %s263
        %p266 = scmp.eq.s32.totalorder %s18, 0
        %s267 = scalar_select %p266, 8, 12
        %s268 = scalar_select %p266, 12, 8
        %v269 = vlaneseq
        %v270 = vand.u32 %v269, 127
        %v271 = vstv %s268
        %vm272 = vcmp.lt.s32.totalorder %v270, %v271
        %v273 = vstv %s267
        %vm274 = vcmp.lt.s32.totalorder %v270, %v273
        %v275 = vlaneseq
        %v276 = vshrl.u32 %v275, 7
        %v277 = vadd.s32 %v276, 8
        %s278 = ssub.s32 %s267, 1
        %v279 = vstv %s278
        %vm280 = vcmp.eq.s32.totalorder %v276, %v279
        %vm281 = vcmp.eq.s32.totalorder %v277, %v279
        %v282 = vsel %vm280, 1, 0
        %v283 = vsel %vm281, 1, 0
        %v284 = vcvt.s32.f32 %v282
        %v285 = vcvt.s32.f32 %v283
        %v286 = vld [vmem:[%s213] sm:$0xff]
        %v287 = vld [vmem:[%s213 + $0x8] sm:$0xff]
        %v288 = vld [vmem:[%s253] sm:$0xff]
        %v289 = vld [vmem:[%s253 + $0x8] sm:$0xf]
        %v290 = vld [vmem:[%s253 + $0x10] sm:$0xff]
        %v291 = vld [vmem:[%s253 + $0x18] sm:$0xf]
        %v296 = vrot.slane %v288, 4
        %v297 = vrot.slane %v290, 4
        %298 = vst [vmem:[#allocation1] ss:$2 sm:$0xff] %v288
        %s299 = scalar_lea.vmem [#allocation1], 1
        %300 = vst [vmem:[%s299] ss:$2 sm:$0xff] %v296
        %s301 = scalar_lea.vmem [#allocation1], 16
        %302 = vst [vmem:[%s301] ss:$2 sm:$0xff] %v289
        %s303 = scalar_lea.vmem [#allocation1], 17
        %304 = vst [vmem:[%s303] ss:$2 sm:$0xff] %v290
        %s305 = scalar_lea.vmem [#allocation1], 32
        %306 = vst [vmem:[%s305] ss:$2 sm:$0xff] %v297
        %s307 = scalar_lea.vmem [#allocation1], 33
        %308 = vst [vmem:[%s307] ss:$2 sm:$0xff] %v291
        %v309 = vld.sshfl [vmem:[#allocation1] sm:$0xff pattern:$0x75316420]
        %v310 = vld.sshfl [vmem:[#allocation1 + $0x10] sm:$0xff pattern:$0x75316420]
        %v311 = vld.sshfl [vmem:[#allocation1 + $0x20] sm:$0xff pattern:$0x75316420]
        %vm312 = vcmask 64512
        %v313 = vsel %vm312, %v309, 0
        %v315 = vsel %vm312, %v310, 0
        %v317 = vsel %vm312, %v311, 0
        %319 = vmatpush.msra.mxu0 0.0
        %320 = vmatpush.msra.mxu0 0.0
        %321 = vmatpush.msra.mxu0 0.0
        %322 = vmatpush.msra.mxu0 0.0
        %323 = vmatpush.msra.mxu0 0.0
        %324 = vmatpush.msra.mxu0 0.0
        %325 = vmatpush.msra.mxu0 0.0
        %326 = vmatpush.msra.mxu0 0.0
        %327 = vmatpush.msra.mxu0 0.0
        %328 = vmatpush.msra.mxu0 0.0
        %329 = vmatpush.msra.mxu0 0.0
        %330 = vmatpush.msra.mxu0 0.0
        %331 = vmatpush.msra.mxu0 0.0
        %332 = vmatpush.msra.mxu0 0.0
        %333 = vmatpush.msra.mxu0 0.0
        %334 = vmatpush.msra.mxu0 %v286
        %335 = vmatmul.f32.gmra.mxu0 %v313
        %v336 = vpop.f32.mrf.mxu0
        %v337 = vadd.f32 0.0, %v336
        %338 = vmatmul.f32.gmra.mxu0 %v315
        %v339 = vpop.f32.mrf.mxu0
        %v340 = vadd.f32 0.0, %v339
        %341 = vmatmul.f32.gmra.mxu0 %v317
        %v342 = vpop.f32.mrf.mxu0
        %v343 = vadd.f32 0.0, %v342
        %344 = vdwg.mxu0
        %v345 = vld [vmem:[%s259] sm:$0xff]
        %v346 = vld [vmem:[%s259 + $0x8] sm:$0xf]
        %v347 = vld [vmem:[%s259 + $0x10] sm:$0xff]
        %v348 = vld [vmem:[%s259 + $0x18] sm:$0xf]
        %v353 = vrot.slane %v345, 4
        %v354 = vrot.slane %v347, 4
        %355 = vst [vmem:[#allocation1] ss:$2 sm:$0xff] %v345
        %s356 = scalar_lea.vmem [#allocation1], 1
        %357 = vst [vmem:[%s356] ss:$2 sm:$0xff] %v353
        %s358 = scalar_lea.vmem [#allocation1], 16
        %359 = vst [vmem:[%s358] ss:$2 sm:$0xff] %v346
        %s360 = scalar_lea.vmem [#allocation1], 17
        %361 = vst [vmem:[%s360] ss:$2 sm:$0xff] %v347
        %s362 = scalar_lea.vmem [#allocation1], 32
        %363 = vst [vmem:[%s362] ss:$2 sm:$0xff] %v354
        %s364 = scalar_lea.vmem [#allocation1], 33
        %365 = vst [vmem:[%s364] ss:$2 sm:$0xff] %v348
        %v366 = vld.sshfl [vmem:[#allocation1] sm:$0xff pattern:$0x75316420]
        %v367 = vld.sshfl [vmem:[#allocation1 + $0x10] sm:$0xff pattern:$0x75316420]
        %v368 = vld.sshfl [vmem:[#allocation1 + $0x20] sm:$0xff pattern:$0x75316420]
        %v369 = vsel %vm312, %v366, 0
        %v371 = vsel %vm312, %v367, 0
        %v373 = vsel %vm312, %v368, 0
        %375 = vmatpush.msra.mxu0 0.0
        %376 = vmatpush.msra.mxu0 0.0
        %377 = vmatpush.msra.mxu0 0.0
        %378 = vmatpush.msra.mxu0 0.0
        %379 = vmatpush.msra.mxu0 0.0
        %380 = vmatpush.msra.mxu0 0.0
        %381 = vmatpush.msra.mxu0 0.0
        %382 = vmatpush.msra.mxu0 0.0
        %383 = vmatpush.msra.mxu0 0.0
        %384 = vmatpush.msra.mxu0 0.0
        %385 = vmatpush.msra.mxu0 0.0
        %386 = vmatpush.msra.mxu0 0.0
        %387 = vmatpush.msra.mxu0 0.0
        %388 = vmatpush.msra.mxu0 0.0
        %389 = vmatpush.msra.mxu0 0.0
        %390 = vmatpush.msra.mxu0 %v287
        %391 = vmatmul.f32.gmra.mxu0 %v369
        %v392 = vpop.f32.mrf.mxu0
        %v393 = vadd.f32 0.0, %v392
        %394 = vmatmul.f32.gmra.mxu0 %v371
        %v395 = vpop.f32.mrf.mxu0
        %v396 = vadd.f32 0.0, %v395
        %397 = vmatmul.f32.gmra.mxu0 %v373
        %v398 = vpop.f32.mrf.mxu0
        %v399 = vadd.f32 0.0, %v398
        %400 = vdwg.mxu0
        %v401 = vld [vmem:[%s2] sm:$0xff]
        %v402 = vld [vmem:[%s2 + $0x8] sm:$0xf]
        %v406 = vrot.slane %v337, 4
        %v407 = vrot.slane %v340, 4
        %v408 = vrot.slane %v343, 4
        %v412 = vmul.f32 %v337, 5.656854
        %v413 = vmul.f32 %v406, 5.656854
        %v414 = vmul.f32 %v340, 5.656854
        %v415 = vmul.f32 %v407, 5.656854
        %v416 = vmul.f32 %v343, 5.656854
        %v417 = vmul.f32 %v408, 5.656854
        %v419 = vrot.slane %v401, 4
        %v421 = vadd.f32 %v412, %v401
        %v422 = vadd.f32 %v413, %v419
        %v423 = vadd.f32 %v414, %v402
        %v424 = vadd.f32 %v415, %v401
        %v425 = vadd.f32 %v416, %v419
        %v426 = vadd.f32 %v417, %v402
        %v430 = vrot.slane %v393, 4
        %v431 = vrot.slane %v396, 4
        %v432 = vrot.slane %v399, 4
        %v436 = vmul.f32 %v393, 5.656854
        %v437 = vmul.f32 %v430, 5.656854
        %v438 = vmul.f32 %v396, 5.656854
        %v439 = vmul.f32 %v431, 5.656854
        %v440 = vmul.f32 %v399, 5.656854
        %v441 = vmul.f32 %v432, 5.656854
        %v442 = vadd.f32 %v436, %v401
        %v443 = vadd.f32 %v437, %v419
        %v444 = vadd.f32 %v438, %v402
        %v445 = vadd.f32 %v439, %v401
        %v446 = vadd.f32 %v440, %v419
        %v447 = vadd.f32 %v441, %v402
        %v448 = vld [vmem:[%s213 + $0x10] sm:$0xff]
        %v449 = vld [vmem:[%s213 + $0x18] sm:$0xff]
        %v450 = vld [vmem:[%s213 + $0x20] sm:$0xff]
        %v451 = vld [vmem:[%s213 + $0x28] sm:$0xff]
        %v452 = vld [vmem:[%s213 + $0x30] sm:$0xff]
        %v453 = vld [vmem:[%s213 + $0x38] sm:$0xff]
        %v454 = vld [vmem:[%s213 + $0x40] sm:$0xff]
        %v455 = vld [vmem:[%s213 + $0x48] sm:$0xff]
        %v456 = vld [vmem:[%s213 + $0x50] sm:$0xff]
        %v457 = vld [vmem:[%s213 + $0x58] sm:$0xff]
        %v458 = vld [vmem:[%s213 + $0x60] sm:$0xff]
        %v459 = vld [vmem:[%s213 + $0x68] sm:$0xff]
        %v460 = vld [vmem:[%s213 + $0x70] sm:$0xff]
        %v461 = vld [vmem:[%s213 + $0x78] sm:$0xff]
        %v462 = vld [vmem:[%s213 + $0x80] sm:$0xff]
        %v463 = vld [vmem:[%s213 + $0x88] sm:$0xff]
        %v464 = vld [vmem:[%s213 + $0x90] sm:$0xff]
        %v465 = vld [vmem:[%s213 + $0x98] sm:$0xff]
        %v466 = vld [vmem:[%s213 + $0xa0] sm:$0xff]
        %v467 = vld [vmem:[%s213 + $0xa8] sm:$0xff]
        %v468 = vld [vmem:[%s213 + $0xb0] sm:$0x1]
        %v469 = vld [vmem:[%s213 + $0xb1] sm:$0x1]
        %v470 = vld [vmem:[%s213 + $0xb2] sm:$0x1]
        %v471 = vld [vmem:[%s213 + $0xb3] sm:$0x1]
        %v472 = vld [vmem:[%s213 + $0xb4] sm:$0x1]
        %v473 = vld [vmem:[%s213 + $0xb5] sm:$0x1]
        %v474 = vld [vmem:[%s213 + $0xb6] sm:$0x1]
        %v475 = vld [vmem:[%s213 + $0xb7] sm:$0x1]
        %482 = vst [vmem:[#allocation1] ss:$2 sm:$0xff] %v421
        %s483 = scalar_lea.vmem [#allocation1], 1
        %484 = vst [vmem:[%s483] ss:$2 sm:$0xff] %v422
        %s485 = scalar_lea.vmem [#allocation1], 16
        %486 = vst [vmem:[%s485] ss:$2 sm:$0xff] %v423
        %s487 = scalar_lea.vmem [#allocation1], 17
        %488 = vst [vmem:[%s487] ss:$2 sm:$0xff] %v424
        %s489 = scalar_lea.vmem [#allocation1], 32
        %490 = vst [vmem:[%s489] ss:$2 sm:$0xff] %v425
        %s491 = scalar_lea.vmem [#allocation1], 33
        %492 = vst [vmem:[%s491] ss:$2 sm:$0xff] %v426
        %v493 = vld.sshfl [vmem:[#allocation1] sm:$0xff pattern:$0x75316420]
        %v494 = vld.sshfl [vmem:[#allocation1 + $0x10] sm:$0xff pattern:$0x75316420]
        %v495 = vld.sshfl [vmem:[#allocation1 + $0x20] sm:$0xff pattern:$0x75316420]
        %vm499 = vcmask 261120
        %v500 = vsel %vm499, %v493, 0.0
        %501 = vadd.xlane.f32.xlu0 %v500
        %v502 = vpop.xlane.xlu0 %501
        %v503 = vsel %vm499, %v494, 0.0
        %504 = vadd.xlane.f32.xlu0 %v503
        %v505 = vpop.xlane.xlu0 %504
        %v506 = vsel %vm499, %v495, 0.0
        %507 = vadd.xlane.f32.xlu0 %v506
        %v508 = vpop.xlane.xlu0 %507
        %v509 = vrcp.pop 32.0
        %v510 = vmul.f32 32.0, %v509
        %v511 = vsub.f32 1.0, %v510
        %v512 = vmul.f32 %v509, %v511
        %v513 = vadd.f32 %v509, %v512
        %vm514 = vweird.f32 %v509
        %v515 = vsel %vm514, %v509, %v513
        %v516 = vmul.f32 %v502, %v515
        %v517 = vmul.f32 %v505, %v515
        %v518 = vmul.f32 %v508, %v515
        %v523 = vunpack.c.l.s4 839922192
        %v524 = vunpack.c.0.s8 %v523
        %v525 = vperm.slane %v516, %v524
        %v527 = vunpack.c.l.s4 1985246804
        %v528 = vunpack.c.0.s8 %v527
        %v529 = vperm.slane %v516, %v528
        %v531 = vunpack.c.l.s4 839922192
        %v532 = vunpack.c.0.s8 %v531
        %v533 = vperm.slane %v517, %v532
        %v535 = vunpack.c.l.s4 1985246804
        %v536 = vunpack.c.0.s8 %v535
        %v537 = vperm.slane %v517, %v536
        %v539 = vunpack.c.l.s4 839922192
        %v540 = vunpack.c.0.s8 %v539
        %v541 = vperm.slane %v518, %v540
        %v543 = vunpack.c.l.s4 1985246804
        %v544 = vunpack.c.0.s8 %v543
        %v545 = vperm.slane %v518, %v544
        %v552 = vsub.f32 %v421, %v525
        %v553 = vsub.f32 %v422, %v529
        %v554 = vsub.f32 %v423, %v533
        %v555 = vsub.f32 %v424, %v537
        %v556 = vsub.f32 %v425, %v541
        %v557 = vsub.f32 %v426, %v545
        %v558 = vmul.f32 %v552, %v552
        %v559 = vmul.f32 %v553, %v553
        %v560 = vmul.f32 %v554, %v554
        %v561 = vmul.f32 %v555, %v555
        %v562 = vmul.f32 %v556, %v556
        %v563 = vmul.f32 %v557, %v557
        %570 = vst [vmem:[#allocation1] ss:$2 sm:$0xff] %v558
        %s571 = scalar_lea.vmem [#allocation1], 1
        %572 = vst [vmem:[%s571] ss:$2 sm:$0xff] %v559
        %s573 = scalar_lea.vmem [#allocation1], 16
        %574 = vst [vmem:[%s573] ss:$2 sm:$0xff] %v560
        %s575 = scalar_lea.vmem [#allocation1], 17
        %576 = vst [vmem:[%s575] ss:$2 sm:$0xff] %v561
        %s577 = scalar_lea.vmem [#allocation1], 32
        %578 = vst [vmem:[%s577] ss:$2 sm:$0xff] %v562
        %s579 = scalar_lea.vmem [#allocation1], 33
        %580 = vst [vmem:[%s579] ss:$2 sm:$0xff] %v563
        %v581 = vld.sshfl [vmem:[#allocation1] sm:$0xff pattern:$0x75316420]
        %v582 = vld.sshfl [vmem:[#allocation1 + $0x10] sm:$0xff pattern:$0x75316420]
        %v583 = vld.sshfl [vmem:[#allocation1 + $0x20] sm:$0xff pattern:$0x75316420]
        %v587 = vsel %vm499, %v581, 0.0
        %588 = vadd.xlane.f32.xlu0 %v587
        %v589 = vpop.xlane.xlu0 %588
        %v590 = vsel %vm499, %v582, 0.0
        %591 = vadd.xlane.f32.xlu0 %v590
        %v592 = vpop.xlane.xlu0 %591
        %v593 = vsel %vm499, %v583, 0.0
        %594 = vadd.xlane.f32.xlu0 %v593
        %v595 = vpop.xlane.xlu0 %594
        %v596 = vmul.f32 %v589, %v515
        %v597 = vmul.f32 %v592, %v515
        %v598 = vmul.f32 %v595, %v515
        %v599 = vadd.f32 %v596, 1e-05
        %v600 = vadd.f32 %v597, 1e-05
        %v601 = vadd.f32 %v598, 1e-05
        %v602 = vrsqrt.pop %v599
        %v603 = vmul.f32 %v602, %v599
        %v604 = vmul.f32 %v603, %v602
        %v605 = vmul.f32 0.5, %v604
        %v606 = vsub.f32 1.5, %v605
        %v607 = vmul.f32 %v602, %v606
        %vm608 = vweird.f32 %v599
        %vm609 = vweird.f32 %v602
        %vm610 = vmor %vm608, %vm609
        %v611 = vsel %vm610, %v602, %v607
        %v612 = vrsqrt.pop %v600
        %v613 = vmul.f32 %v612, %v600
        %v614 = vmul.f32 %v613, %v612
        %v615 = vmul.f32 0.5, %v614
        %v616 = vsub.f32 1.5, %v615
        %v617 = vmul.f32 %v612, %v616
        %vm618 = vweird.f32 %v600
        %vm619 = vweird.f32 %v612
        %vm620 = vmor %vm618, %vm619
        %v621 = vsel %vm620, %v612, %v617
        %v622 = vrsqrt.pop %v601
        %v623 = vmul.f32 %v622, %v601
        %v624 = vmul.f32 %v623, %v622
        %v625 = vmul.f32 0.5, %v624
        %v626 = vsub.f32 1.5, %v625
        %v627 = vmul.f32 %v622, %v626
        %vm628 = vweird.f32 %v601
        %vm629 = vweird.f32 %v622
        %vm630 = vmor %vm628, %vm629
        %v631 = vsel %vm630, %v622, %v627
        %v636 = vunpack.c.l.s4 839922192
        %v637 = vunpack.c.0.s8 %v636
        %v638 = vperm.slane %v611, %v637
        %v640 = vunpack.c.l.s4 1985246804
        %v641 = vunpack.c.0.s8 %v640
        %v642 = vperm.slane %v611, %v641
        %v644 = vunpack.c.l.s4 839922192
        %v645 = vunpack.c.0.s8 %v644
        %v646 = vperm.slane %v621, %v645
        %v648 = vunpack.c.l.s4 1985246804
        %v649 = vunpack.c.0.s8 %v648
        %v650 = vperm.slane %v621, %v649
        %v652 = vunpack.c.l.s4 839922192
        %v653 = vunpack.c.0.s8 %v652
        %v654 = vperm.slane %v631, %v653
        %v656 = vunpack.c.l.s4 1985246804
        %v657 = vunpack.c.0.s8 %v656
        %v658 = vperm.slane %v631, %v657
        %v665 = vmul.f32 %v552, %v638
        %v666 = vmul.f32 %v553, %v642
        %v667 = vmul.f32 %v554, %v646
        %v668 = vmul.f32 %v555, %v650
        %v669 = vmul.f32 %v556, %v654
        %v670 = vmul.f32 %v557, %v658
        %v671 = vperm.slane %v468, 0
        %v673 = vrot.slane %v671, 4
        %v675 = vmul.f32 %v665, %v671
        %v676 = vmul.f32 %v666, %v673
        %v677 = vmul.f32 %v667, %v671
        %v678 = vmul.f32 %v668, %v673
        %v679 = vmul.f32 %v669, %v671
        %v680 = vmul.f32 %v670, %v673
        %v681 = vperm.slane %v469, 0
        %v683 = vrot.slane %v681, 4
        %v685 = vadd.f32 %v675, %v681
        %v686 = vadd.f32 %v676, %v683
        %v687 = vadd.f32 %v677, %v681
        %v688 = vadd.f32 %v678, %v683
        %v689 = vadd.f32 %v679, %v681
        %v690 = vadd.f32 %v680, %v683
        %697 = vst [vmem:[#allocation1] ss:$2 sm:$0xff] %v442
        %s698 = scalar_lea.vmem [#allocation1], 1
        %699 = vst [vmem:[%s698] ss:$2 sm:$0xff] %v443
        %s700 = scalar_lea.vmem [#allocation1], 16
        %701 = vst [vmem:[%s700] ss:$2 sm:$0xff] %v444
        %s702 = scalar_lea.vmem [#allocation1], 17
        %703 = vst [vmem:[%s702] ss:$2 sm:$0xff] %v445
        %s704 = scalar_lea.vmem [#allocation1], 32
        %705 = vst [vmem:[%s704] ss:$2 sm:$0xff] %v446
        %s706 = scalar_lea.vmem [#allocation1], 33
        %707 = vst [vmem:[%s706] ss:$2 sm:$0xff] %v447
        %v708 = vld.sshfl [vmem:[#allocation1] sm:$0xff pattern:$0x75316420]
        %v709 = vld.sshfl [vmem:[#allocation1 + $0x10] sm:$0xff pattern:$0x75316420]
        %v710 = vld.sshfl [vmem:[#allocation1 + $0x20] sm:$0xff pattern:$0x75316420]
        %v714 = vsel %vm499, %v708, 0.0
        %715 = vadd.xlane.f32.xlu0 %v714
        %v716 = vpop.xlane.xlu0 %715
        %v717 = vsel %vm499, %v709, 0.0
        %718 = vadd.xlane.f32.xlu0 %v717
        %v719 = vpop.xlane.xlu0 %718
        %v720 = vsel %vm499, %v710, 0.0
        %721 = vadd.xlane.f32.xlu0 %v720
        %v722 = vpop.xlane.xlu0 %721
        %v723 = vmul.f32 %v716, %v515
        %v724 = vmul.f32 %v719, %v515
        %v725 = vmul.f32 %v722, %v515
        %v730 = vunpack.c.l.s4 839922192
        %v731 = vunpack.c.0.s8 %v730
        %v732 = vperm.slane %v723, %v731
        %v734 = vunpack.c.l.s4 1985246804
        %v735 = vunpack.c.0.s8 %v734
        %v736 = vperm.slane %v723, %v735
        %v738 = vunpack.c.l.s4 839922192
        %v739 = vunpack.c.0.s8 %v738
        %v740 = vperm.slane %v724, %v739
        %v742 = vunpack.c.l.s4 1985246804
        %v743 = vunpack.c.0.s8 %v742
        %v744 = vperm.slane %v724, %v743
        %v746 = vunpack.c.l.s4 839922192
        %v747 = vunpack.c.0.s8 %v746
        %v748 = vperm.slane %v725, %v747
        %v750 = vunpack.c.l.s4 1985246804
        %v751 = vunpack.c.0.s8 %v750
        %v752 = vperm.slane %v725, %v751
        %v759 = vsub.f32 %v442, %v732
        %v760 = vsub.f32 %v443, %v736
        %v761 = vsub.f32 %v444, %v740
        %v762 = vsub.f32 %v445, %v744
        %v763 = vsub.f32 %v446, %v748
        %v764 = vsub.f32 %v447, %v752
        %v765 = vmul.f32 %v759, %v759
        %v766 = vmul.f32 %v760, %v760
        %v767 = vmul.f32 %v761, %v761
        %v768 = vmul.f32 %v762, %v762
        %v769 = vmul.f32 %v763, %v763
        %v770 = vmul.f32 %v764, %v764
        %777 = vst [vmem:[#allocation1] ss:$2 sm:$0xff] %v765
        %s778 = scalar_lea.vmem [#allocation1], 1
        %779 = vst [vmem:[%s778] ss:$2 sm:$0xff] %v766
        %s780 = scalar_lea.vmem [#allocation1], 16
        %781 = vst [vmem:[%s780] ss:$2 sm:$0xff] %v767
        %s782 = scalar_lea.vmem [#allocation1], 17
        %783 = vst [vmem:[%s782] ss:$2 sm:$0xff] %v768
        %s784 = scalar_lea.vmem [#allocation1], 32
        %785 = vst [vmem:[%s784] ss:$2 sm:$0xff] %v769
        %s786 = scalar_lea.vmem [#allocation1], 33
        %787 = vst [vmem:[%s786] ss:$2 sm:$0xff] %v770
        %v788 = vld.sshfl [vmem:[#allocation1] sm:$0xff pattern:$0x75316420]
        %v789 = vld.sshfl [vmem:[#allocation1 + $0x10] sm:$0xff pattern:$0x75316420]
        %v790 = vld.sshfl [vmem:[#allocation1 + $0x20] sm:$0xff pattern:$0x75316420]
        %v794 = vsel %vm499, %v788, 0.0
        %795 = vadd.xlane.f32.xlu0 %v794
        %v796 = vpop.xlane.xlu0 %795
        %v797 = vsel %vm499, %v789, 0.0
        %798 = vadd.xlane.f32.xlu0 %v797
        %v799 = vpop.xlane.xlu0 %798
        %v800 = vsel %vm499, %v790, 0.0
        %801 = vadd.xlane.f32.xlu0 %v800
        %v802 = vpop.xlane.xlu0 %801
        %v803 = vmul.f32 %v796, %v515
        %v804 = vmul.f32 %v799, %v515
        %v805 = vmul.f32 %v802, %v515
        %v806 = vadd.f32 %v803, 1e-05
        %v807 = vadd.f32 %v804, 1e-05
        %v808 = vadd.f32 %v805, 1e-05
        %v809 = vrsqrt.pop %v806
        %v810 = vmul.f32 %v809, %v806
        %v811 = vmul.f32 %v810, %v809
        %v812 = vmul.f32 0.5, %v811
        %v813 = vsub.f32 1.5, %v812
        %v814 = vmul.f32 %v809, %v813
        %vm815 = vweird.f32 %v806
        %vm816 = vweird.f32 %v809
        %vm817 = vmor %vm815, %vm816
        %v818 = vsel %vm817, %v809, %v814
        %v819 = vrsqrt.pop %v807
        %v820 = vmul.f32 %v819, %v807
        %v821 = vmul.f32 %v820, %v819
        %v822 = vmul.f32 0.5, %v821
        %v823 = vsub.f32 1.5, %v822
        %v824 = vmul.f32 %v819, %v823
        %vm825 = vweird.f32 %v807
        %vm826 = vweird.f32 %v819
        %vm827 = vmor %vm825, %vm826
        %v828 = vsel %vm827, %v819, %v824
        %v829 = vrsqrt.pop %v808
        %v830 = vmul.f32 %v829, %v808
        %v831 = vmul.f32 %v830, %v829
        %v832 = vmul.f32 0.5, %v831
        %v833 = vsub.f32 1.5, %v832
        %v834 = vmul.f32 %v829, %v833
        %vm835 = vweird.f32 %v808
        %vm836 = vweird.f32 %v829
        %vm837 = vmor %vm835, %vm836
        %v838 = vsel %vm837, %v829, %v834
        %v843 = vunpack.c.l.s4 839922192
        %v844 = vunpack.c.0.s8 %v843
        %v845 = vperm.slane %v818, %v844
        %v847 = vunpack.c.l.s4 1985246804
        %v848 = vunpack.c.0.s8 %v847
        %v849 = vperm.slane %v818, %v848
        %v851 = vunpack.c.l.s4 839922192
        %v852 = vunpack.c.0.s8 %v851
        %v853 = vperm.slane %v828, %v852
        %v855 = vunpack.c.l.s4 1985246804
        %v856 = vunpack.c.0.s8 %v855
        %v857 = vperm.slane %v828, %v856
        %v859 = vunpack.c.l.s4 839922192
        %v860 = vunpack.c.0.s8 %v859
        %v861 = vperm.slane %v838, %v860
        %v863 = vunpack.c.l.s4 1985246804
        %v864 = vunpack.c.0.s8 %v863
        %v865 = vperm.slane %v838, %v864
        %v872 = vmul.f32 %v759, %v845
        %v873 = vmul.f32 %v760, %v849
        %v874 = vmul.f32 %v761, %v853
        %v875 = vmul.f32 %v762, %v857
        %v876 = vmul.f32 %v763, %v861
        %v877 = vmul.f32 %v764, %v865
        %v878 = vmul.f32 %v872, %v671
        %v879 = vmul.f32 %v873, %v673
        %v880 = vmul.f32 %v874, %v671
        %v881 = vmul.f32 %v875, %v673
        %v882 = vmul.f32 %v876, %v671
        %v883 = vmul.f32 %v877, %v673
        %v884 = vadd.f32 %v878, %v681
        %v885 = vadd.f32 %v879, %v683
        %v886 = vadd.f32 %v880, %v681
        %v887 = vadd.f32 %v881, %v683
        %v888 = vadd.f32 %v882, %v681
        %v889 = vadd.f32 %v883, %v683
        %896 = vst [vmem:[#allocation1] ss:$2 sm:$0xff] %v685
        %s897 = scalar_lea.vmem [#allocation1], 1
        %898 = vst [vmem:[%s897] ss:$2 sm:$0xff] %v686
        %s899 = scalar_lea.vmem [#allocation1], 16
        %900 = vst [vmem:[%s899] ss:$2 sm:$0xff] %v687
        %s901 = scalar_lea.vmem [#allocation1], 17
        %902 = vst [vmem:[%s901] ss:$2 sm:$0xff] %v688
        %s903 = scalar_lea.vmem [#allocation1], 32
        %904 = vst [vmem:[%s903] ss:$2 sm:$0xff] %v689
        %s905 = scalar_lea.vmem [#allocation1], 33
        %906 = vst [vmem:[%s905] ss:$2 sm:$0xff] %v690
        %v907 = vld.sshfl [vmem:[#allocation1] sm:$0xff pattern:$0x75316420]
        %v908 = vld.sshfl [vmem:[#allocation1 + $0x10] sm:$0xff pattern:$0x75316420]
        %v909 = vld.sshfl [vmem:[#allocation1 + $0x20] sm:$0xff pattern:$0x75316420]
        %919 = vst [vmem:[#allocation1] ss:$2 sm:$0xff] %v884
        %s920 = scalar_lea.vmem [#allocation1], 1
        %921 = vst [vmem:[%s920] ss:$2 sm:$0xff] %v885
        %s922 = scalar_lea.vmem [#allocation1], 16
        %923 = vst [vmem:[%s922] ss:$2 sm:$0xff] %v886
        %s924 = scalar_lea.vmem [#allocation1], 17
        %925 = vst [vmem:[%s924] ss:$2 sm:$0xff] %v887
        %s926 = scalar_lea.vmem [#allocation1], 32
        %927 = vst [vmem:[%s926] ss:$2 sm:$0xff] %v888
        %s928 = scalar_lea.vmem [#allocation1], 33
        %929 = vst [vmem:[%s928] ss:$2 sm:$0xff] %v889
        %v930 = vld.sshfl [vmem:[#allocation1] sm:$0xff pattern:$0x75316420]
        %v931 = vld.sshfl [vmem:[#allocation1 + $0x10] sm:$0xff pattern:$0x75316420]
        %v932 = vld.sshfl [vmem:[#allocation1 + $0x20] sm:$0xff pattern:$0x75316420]
        %v936 = vpack.c.bf16 %v908, %v907
        %v937 = vpack.c.bf16 %v930, %v909
        %v938 = vpack.c.bf16 %v932, %v931
        %v939 = vpack.c.bf16 %v449, %v448
        %v940 = vpack.c.bf16 %v451, %v450
        %v941 = vperm.slane %v470, 0
        %v943 = vsel %vm499, %v936, 0
        %v946 = vsel %vm499, %v937, 0
        %v949 = vsel %vm499, %v938, 0
        %951 = vmatpush.bf16.msra.mxu0 0
        %952 = vmatpush.bf16.msra.mxu0 0
        %953 = vmatpush.bf16.msra.mxu0 0
        %954 = vmatpush.bf16.msra.mxu0 0
        %955 = vmatpush.bf16.msra.mxu0 0
        %956 = vmatpush.bf16.msra.mxu0 0
        %957 = vmatpush.bf16.msra.mxu0 %v940
        %958 = vmatpush.bf16.msra.mxu0 %v939
        %959 = vmatmul.bf16.gmra.mxu0 %v943
        %v960 = vpop.f32.mrf.mxu0
        %v961 = vadd.f32 %v941, %v960
        %v962 = vpop.f32.mrf.mxu0
        %v963 = vadd.f32 %v941, %v962
        %964 = vmatmul.bf16.gmra.mxu0 %v946
        %v965 = vpop.f32.mrf.mxu0
        %v966 = vadd.f32 %v941, %v965
        %v967 = vpop.f32.mrf.mxu0
        %v968 = vadd.f32 %v941, %v967
        %969 = vmatmul.bf16.gmra.mxu0 %v949
        %v970 = vpop.f32.mrf.mxu0
        %v971 = vadd.f32 %v941, %v970
        %v972 = vpop.f32.mrf.mxu0
        %v973 = vadd.f32 %v941, %v972
        %974 = vdwg.mxu0
        %v978 = vrot.slane %v961, 4
        %v979 = vrot.slane %v963, 4
        %v980 = vrot.slane %v966, 4
        %981 = vst [vmem:[#allocation1] ss:$2 sm:$0xff] %v961
        %s982 = scalar_lea.vmem [#allocation1], 1
        %983 = vst [vmem:[%s982] ss:$2 sm:$0xff] %v978
        %s984 = scalar_lea.vmem [#allocation1], 16
        %985 = vst [vmem:[%s984] ss:$2 sm:$0xff] %v963
        %v986 = vld.sshfl [vmem:[#allocation1] sm:$0xff pattern:$0x75316420]
        %v987 = vld.sshfl [vmem:[#allocation1 + $0x10] sm:$0xff pattern:$0x75316420]
        %s988 = scalar_lea.vmem [#allocation1], 32
        %989 = vst [vmem:[%s988] ss:$2 sm:$0xff] %v979
        %s990 = scalar_lea.vmem [#allocation1], 33
        %991 = vst [vmem:[%s990] ss:$2 sm:$0xff] %v966
        %s992 = scalar_lea.vmem [#allocation1], 48
        %993 = vst [vmem:[%s992] ss:$2 sm:$0xff] %v980
        %v994 = vld.sshfl [vmem:[#allocation1 + $0x20] sm:$0xff pattern:$0x75316420]
        %v995 = vld.sshfl [vmem:[#allocation1 + $0x30] sm:$0xff pattern:$0x75316420]
        %v1000 = vpack.c.bf16 %v986, %v986
        %v1001 = vpack.c.bf16 %v987, %v987
        %v1002 = vpack.c.bf16 %v994, %v994
        %v1003 = vpack.c.bf16 %v995, %v995
        %v1007 = vrot.slane %v968, 4
        %v1008 = vrot.slane %v971, 4
        %v1009 = vrot.slane %v973, 4
        %1010 = vst [vmem:[#allocation1] ss:$2 sm:$0xff] %v968
        %s1011 = scalar_lea.vmem [#allocation1], 1
        %1012 = vst [vmem:[%s1011] ss:$2 sm:$0xff] %v1007
        %s1013 = scalar_lea.vmem [#allocation1], 16
        %1014 = vst [vmem:[%s1013] ss:$2 sm:$0xff] %v971
        %v1015 = vld.sshfl [vmem:[#allocation1] sm:$0xff pattern:$0x75316420]
        %v1016 = vld.sshfl [vmem:[#allocation1 + $0x10] sm:$0xff pattern:$0x75316420]
        %s1017 = scalar_lea.vmem [#allocation1], 32
        %1018 = vst [vmem:[%s1017] ss:$2 sm:$0xff] %v1008
        %s1019 = scalar_lea.vmem [#allocation1], 33
        %1020 = vst [vmem:[%s1019] ss:$2 sm:$0xff] %v973
        %s1021 = scalar_lea.vmem [#allocation1], 48
        %1022 = vst [vmem:[%s1021] ss:$2 sm:$0xff] %v1009
        %v1023 = vld.sshfl [vmem:[#allocation1 + $0x20] sm:$0xff pattern:$0x75316420]
        %v1024 = vld.sshfl [vmem:[#allocation1 + $0x30] sm:$0xff pattern:$0x75316420]
        %v1029 = vpack.c.bf16 %v1015, %v1015
        %v1030 = vpack.c.bf16 %v1016, %v1016
        %v1031 = vpack.c.bf16 %v1023, %v1023
        %v1032 = vpack.c.bf16 %v1024, %v1024
        %1033 = vst [vmem:[#allocation1] ss:$2 sm:$0xff] %v968
        %s1034 = scalar_lea.vmem [#allocation1], 1
        %1035 = vst [vmem:[%s1034] ss:$2 sm:$0xff] %v1007
        %s1036 = scalar_lea.vmem [#allocation1], 16
        %1037 = vst [vmem:[%s1036] ss:$2 sm:$0xff] %v971
        %v1038 = vld.sshfl [vmem:[#allocation1] sm:$0xff pattern:$0x75316420]
        %v1039 = vld.sshfl [vmem:[#allocation1 + $0x10] sm:$0xff pattern:$0x75316420]
        %s1040 = scalar_lea.vmem [#allocation1], 32
        %1041 = vst [vmem:[%s1040] ss:$2 sm:$0xff] %v1008
        %s1042 = scalar_lea.vmem [#allocation1], 33
        %1043 = vst [vmem:[%s1042] ss:$2 sm:$0xff] %v973
        %s1044 = scalar_lea.vmem [#allocation1], 48
        %1045 = vst [vmem:[%s1044] ss:$2 sm:$0xff] %v1009
        %v1046 = vld.sshfl [vmem:[#allocation1 + $0x20] sm:$0xff pattern:$0x75316420]
        %v1047 = vld.sshfl [vmem:[#allocation1 + $0x30] sm:$0xff pattern:$0x75316420]
        %v1052 = vpack.c.bf16 %v1038, %v1038
        %v1053 = vpack.c.bf16 %v1039, %v1039
        %v1054 = vpack.c.bf16 %v1046, %v1046
        %v1055 = vpack.c.bf16 %v1047, %v1047
        %v1058 = vunpack.c.l.b16 %v1000
        %v1059 = vunpack.c.l.b16 %v1001
        %v1060 = vpack.c.b16 %v1059, %v1058
        %v1063 = vunpack.c.l.b16 %v1029
        %v1064 = vunpack.c.l.b16 %v1030
        %v1065 = vpack.c.b16 %v1064, %v1063
        %1066 = vrot.lane.b32.xlu0 %v1065, 96
        %v1067 = vpop.permute.xlu0 %1066
        %v1069 = vsel %vm312, %v1060, 0
        %v1072 = vsel %vm312, %v1067, 0
        %1074 = vmatpush.bf16.xpose.msra.mxu0 0
        %1075 = vmatpush.bf16.xpose.msra.mxu0 0
        %1076 = vmatpush.bf16.xpose.msra.mxu0 0
        %1077 = vmatpush.bf16.xpose.msra.mxu0 0
        %1078 = vmatpush.bf16.xpose.msra.mxu0 0
        %1079 = vmatpush.bf16.xpose.msra.mxu0 0
        %1080 = vmatpush.bf16.xpose.msra.mxu0 0
        %1081 = vmatpush.bf16.xpose.msra.mxu0 %v1072
        %1082 = vmatmul.bf16.gmra.mxu0 %v1069
        %v1083 = vpop.f32.mrf.mxu0
        %v1084 = vadd.f32 0.0, %v1083
        %v1085 = vpop.f32.mrf.mxu0
        %v1086 = vadd.f32 0.0, %v1085
        %1087 = vdwg.mxu0
        %v1090 = vunpack.c.l.b16 %v1002
        %v1091 = vunpack.c.l.b16 %v1003
        %v1092 = vpack.c.b16 %v1091, %v1090
        %v1095 = vunpack.c.l.b16 %v1031
        %v1096 = vunpack.c.l.b16 %v1032
        %v1097 = vpack.c.b16 %v1096, %v1095
        %1098 = vrot.lane.b32.xlu0 %v1097, 96
        %v1099 = vpop.permute.xlu0 %1098
        %v1101 = vsel %vm312, %v1092, 0
        %v1104 = vsel %vm312, %v1099, 0
        %1106 = vmatpush.bf16.xpose.msra.mxu0 0
        %1107 = vmatpush.bf16.xpose.msra.mxu0 0
        %1108 = vmatpush.bf16.xpose.msra.mxu0 0
        %1109 = vmatpush.bf16.xpose.msra.mxu0 0
        %1110 = vmatpush.bf16.xpose.msra.mxu0 0
        %1111 = vmatpush.bf16.xpose.msra.mxu0 0
        %1112 = vmatpush.bf16.xpose.msra.mxu0 0
        %1113 = vmatpush.bf16.xpose.msra.mxu0 %v1104
        %1114 = vmatmul.bf16.gmra.mxu0 %v1101
        %v1115 = vpop.f32.mrf.mxu0
        %v1116 = vadd.f32 0.0, %v1115
        %v1117 = vpop.f32.mrf.mxu0
        %v1118 = vadd.f32 0.0, %v1117
        %1119 = vdwg.mxu0
        %v1120 = vmul.f32 %v1084, 0.35355338
        %v1121 = vmul.f32 %v1086, 0.35355338
        %v1122 = vmul.f32 %v1116, 0.35355338
        %v1123 = vmul.f32 %v1118, 0.35355338
        %v1124 = vsel %vm272, 1, 0
        %vm1125 = vcmp.eq.s32.totalorder %v1124, 1
        %v1126 = vsel %vm1125, %v1120, -1e+30
        %v1127 = vsel %vm1125, %v1121, -1e+30
        %v1128 = vsel %vm1125, %v1122, -1e+30
        %v1129 = vsel %vm1125, %v1123, -1e+30
        %vm1130 = vcmask 97280
        %v1131 = vsel %vm1130, %v1126, -inf
        %1132 = vmax.xlane.f32.xlu0 %v1131
        %v1133 = vpop.xlane.xlu0 %1132
        %vm1134 = vcmask 93184
        %v1135 = vsel %vm1134, %v1127, -inf
        %1136 = vmax.xlane.f32.xlu0 %v1135
        %v1137 = vpop.xlane.xlu0 %1136
        %v1138 = vsel %vm1130, %v1128, -inf
        %1139 = vmax.xlane.f32.xlu0 %v1138
        %v1140 = vpop.xlane.xlu0 %1139
        %v1141 = vsel %vm1134, %v1129, -inf
        %1142 = vmax.xlane.f32.xlu0 %v1141
        %v1143 = vpop.xlane.xlu0 %1142
        %v1144 = vsub.f32 %v1126, %v1133
        %v1145 = vsub.f32 %v1127, %v1137
        %v1146 = vsub.f32 %v1128, %v1140
        %v1147 = vsub.f32 %v1129, %v1143
        %v1148 = vmul.f32 %v1144, 1.442695
        %v1149 = vpow.pop %v1148
        %v1150 = vmul.f32 %v1145, 1.442695
        %v1151 = vpow.pop %v1150
        %v1152 = vmul.f32 %v1146, 1.442695
        %v1153 = vpow.pop %v1152
        %v1154 = vmul.f32 %v1147, 1.442695
        %v1155 = vpow.pop %v1154
        %v1156 = vsel %vm1130, %v1149, 0.0
        %1157 = vadd.xlane.f32.xlu0 %v1156
        %v1158 = vpop.xlane.xlu0 %1157
        %v1159 = vsel %vm1134, %v1151, 0.0
        %1160 = vadd.xlane.f32.xlu0 %v1159
        %v1161 = vpop.xlane.xlu0 %1160
        %v1162 = vsel %vm1130, %v1153, 0.0
        %1163 = vadd.xlane.f32.xlu0 %v1162
        %v1164 = vpop.xlane.xlu0 %1163
        %v1165 = vsel %vm1134, %v1155, 0.0
        %1166 = vadd.xlane.f32.xlu0 %v1165
        %v1167 = vpop.xlane.xlu0 %1166
        %v1168 = vrcp.pop %v1158
        %v1169 = vrcp.pop %v1161
        %v1170 = vrcp.pop %v1164
        %v1171 = vrcp.pop %v1167
        %v1172 = vmul.f32 %v1149, %v1168
        %v1173 = vmul.f32 %v1151, %v1169
        %v1174 = vmul.f32 %v1153, %v1170
        %v1175 = vmul.f32 %v1155, %v1171
        %v1176 = vpack.c.bf16 %v1172, %v1172
        %v1177 = vpack.c.bf16 %v1173, %v1173
        %v1178 = vpack.c.bf16 %v1174, %v1174
        %v1179 = vpack.c.bf16 %v1175, %v1175
        %v1182 = vunpack.c.l.b16 %v1176
        %v1183 = vunpack.c.l.b16 %v1177
        %v1184 = vpack.c.b16 %v1183, %v1182
        %v1187 = vunpack.c.l.b16 %v1052
        %v1188 = vunpack.c.l.b16 %v1053
        %v1189 = vpack.c.b16 %v1188, %v1187
        %1190 = vrot.lane.b32.xlu0 %v1189, 64
        %v1191 = vpop.permute.xlu0 %1190
        %v1193 = vsel %vm1130, %v1184, 0
        %vm1195 = vcmask 1045504
        %v1197 = vsel %vm1195, %v1191, 0
        %1199 = vmatpush.bf16.msra.mxu0 0
        %1200 = vmatpush.bf16.msra.mxu0 0
        %1201 = vmatpush.bf16.msra.mxu0 0
        %1202 = vmatpush.bf16.msra.mxu0 0
        %1203 = vmatpush.bf16.msra.mxu0 0
        %1204 = vmatpush.bf16.msra.mxu0 0
        %1205 = vmatpush.bf16.msra.mxu0 0
        %1206 = vmatpush.bf16.msra.mxu0 %v1197
        %1207 = vmatmul.bf16.gmra.mxu0 %v1193
        %v1208 = vpop.f32.mrf.mxu0
        %v1209 = vadd.f32 0.0, %v1208
        %v1210 = vpop.f32.mrf.mxu0
        %v1211 = vadd.f32 0.0, %v1210
        %1212 = vdwg.mxu0
        %v1215 = vunpack.c.l.b16 %v1178
        %v1216 = vunpack.c.l.b16 %v1179
        %v1217 = vpack.c.b16 %v1216, %v1215
        %v1220 = vunpack.c.l.b16 %v1054
        %v1221 = vunpack.c.l.b16 %v1055
        %v1222 = vpack.c.b16 %v1221, %v1220
        %1223 = vrot.lane.b32.xlu0 %v1222, 64
        %v1224 = vpop.permute.xlu0 %1223
        %v1226 = vsel %vm1130, %v1217, 0
        %v1229 = vsel %vm1195, %v1224, 0
        %1231 = vmatpush.bf16.msra.mxu0 0
        %1232 = vmatpush.bf16.msra.mxu0 0
        %1233 = vmatpush.bf16.msra.mxu0 0
        %1234 = vmatpush.bf16.msra.mxu0 0
        %1235 = vmatpush.bf16.msra.mxu0 0
        %1236 = vmatpush.bf16.msra.mxu0 0
        %1237 = vmatpush.bf16.msra.mxu0 0
        %1238 = vmatpush.bf16.msra.mxu0 %v1229
        %1239 = vmatmul.bf16.gmra.mxu0 %v1226
        %v1240 = vpop.f32.mrf.mxu0
        %v1241 = vadd.f32 0.0, %v1240
        %v1242 = vpop.f32.mrf.mxu0
        %v1243 = vadd.f32 0.0, %v1242
        %1244 = vdwg.mxu0
        %1245 = vrot.lane.b32.xlu0 %v1060, 120
        %v1246 = vpop.permute.xlu0 %1245
        %1247 = vrot.lane.b32.xlu0 %v1065, 88
        %v1248 = vpop.permute.xlu0 %1247
        %v1250 = vsel %vm312, %v1246, 0
        %v1253 = vsel %vm312, %v1248, 0
        %1255 = vmatpush.bf16.xpose.msra.mxu0 0
        %1256 = vmatpush.bf16.xpose.msra.mxu0 0
        %1257 = vmatpush.bf16.xpose.msra.mxu0 0
        %1258 = vmatpush.bf16.xpose.msra.mxu0 0
        %1259 = vmatpush.bf16.xpose.msra.mxu0 0
        %1260 = vmatpush.bf16.xpose.msra.mxu0 0
        %1261 = vmatpush.bf16.xpose.msra.mxu0 0
        %1262 = vmatpush.bf16.xpose.msra.mxu0 %v1253
        %1263 = vmatmul.bf16.gmra.mxu0 %v1250
        %v1264 = vpop.f32.mrf.mxu0
        %v1265 = vadd.f32 0.0, %v1264
        %v1266 = vpop.f32.mrf.mxu0
        %v1267 = vadd.f32 0.0, %v1266
        %1268 = vdwg.mxu0
        %1269 = vrot.lane.b32.xlu0 %v1092, 120
        %v1270 = vpop.permute.xlu0 %1269
        %1271 = vrot.lane.b32.xlu0 %v1097, 88
        %v1272 = vpop.permute.xlu0 %1271
        %v1274 = vsel %vm312, %v1270, 0
        %v1277 = vsel %vm312, %v1272, 0
        %1279 = vmatpush.bf16.xpose.msra.mxu0 0
        %1280 = vmatpush.bf16.xpose.msra.mxu0 0
        %1281 = vmatpush.bf16.xpose.msra.mxu0 0
        %1282 = vmatpush.bf16.xpose.msra.mxu0 0
        %1283 = vmatpush.bf16.xpose.msra.mxu0 0
        %1284 = vmatpush.bf16.xpose.msra.mxu0 0
        %1285 = vmatpush.bf16.xpose.msra.mxu0 0
        %1286 = vmatpush.bf16.xpose.msra.mxu0 %v1277
        %1287 = vmatmul.bf16.gmra.mxu0 %v1274
        %v1288 = vpop.f32.mrf.mxu0
        %v1289 = vadd.f32 0.0, %v1288
        %v1290 = vpop.f32.mrf.mxu0
        %v1291 = vadd.f32 0.0, %v1290
        %1292 = vdwg.mxu0
        %v1293 = vmul.f32 %v1265, 0.35355338
        %v1294 = vmul.f32 %v1267, 0.35355338
        %v1295 = vmul.f32 %v1289, 0.35355338
        %v1296 = vmul.f32 %v1291, 0.35355338
        %v1297 = vsel %vm1125, %v1293, -1e+30
        %v1298 = vsel %vm1125, %v1294, -1e+30
        %v1299 = vsel %vm1125, %v1295, -1e+30
        %v1300 = vsel %vm1125, %v1296, -1e+30
        %v1301 = vsel %vm1130, %v1297, -inf
        %1302 = vmax.xlane.f32.xlu0 %v1301
        %v1303 = vpop.xlane.xlu0 %1302
        %v1304 = vsel %vm1134, %v1298, -inf
        %1305 = vmax.xlane.f32.xlu0 %v1304
        %v1306 = vpop.xlane.xlu0 %1305
        %v1307 = vsel %vm1130, %v1299, -inf
        %1308 = vmax.xlane.f32.xlu0 %v1307
        %v1309 = vpop.xlane.xlu0 %1308
        %v1310 = vsel %vm1134, %v1300, -inf
        %1311 = vmax.xlane.f32.xlu0 %v1310
        %v1312 = vpop.xlane.xlu0 %1311
        %v1313 = vsub.f32 %v1297, %v1303
        %v1314 = vsub.f32 %v1298, %v1306
        %v1315 = vsub.f32 %v1299, %v1309
        %v1316 = vsub.f32 %v1300, %v1312
        %v1317 = vmul.f32 %v1313, 1.442695
        %v1318 = vpow.pop %v1317
        %v1319 = vmul.f32 %v1314, 1.442695
        %v1320 = vpow.pop %v1319
        %v1321 = vmul.f32 %v1315, 1.442695
        %v1322 = vpow.pop %v1321
        %v1323 = vmul.f32 %v1316, 1.442695
        %v1324 = vpow.pop %v1323
        %v1325 = vsel %vm1130, %v1318, 0.0
        %1326 = vadd.xlane.f32.xlu0 %v1325
        %v1327 = vpop.xlane.xlu0 %1326
        %v1328 = vsel %vm1134, %v1320, 0.0
        %1329 = vadd.xlane.f32.xlu0 %v1328
        %v1330 = vpop.xlane.xlu0 %1329
        %v1331 = vsel %vm1130, %v1322, 0.0
        %1332 = vadd.xlane.f32.xlu0 %v1331
        %v1333 = vpop.xlane.xlu0 %1332
        %v1334 = vsel %vm1134, %v1324, 0.0
        %1335 = vadd.xlane.f32.xlu0 %v1334
        %v1336 = vpop.xlane.xlu0 %1335
        %v1337 = vrcp.pop %v1327
        %v1338 = vrcp.pop %v1330
        %v1339 = vrcp.pop %v1333
        %v1340 = vrcp.pop %v1336
        %v1341 = vmul.f32 %v1318, %v1337
        %v1342 = vmul.f32 %v1320, %v1338
        %v1343 = vmul.f32 %v1322, %v1339
        %v1344 = vmul.f32 %v1324, %v1340
        %v1345 = vpack.c.bf16 %v1341, %v1341
        %v1346 = vpack.c.bf16 %v1342, %v1342
        %v1347 = vpack.c.bf16 %v1343, %v1343
        %v1348 = vpack.c.bf16 %v1344, %v1344
        %v1351 = vunpack.c.l.b16 %v1345
        %v1352 = vunpack.c.l.b16 %v1346
        %v1353 = vpack.c.b16 %v1352, %v1351
        %1354 = vrot.lane.b32.xlu0 %v1189, 56
        %v1355 = vpop.permute.xlu0 %1354
        %v1357 = vsel %vm1130, %v1353, 0
        %v1360 = vsel %vm1195, %v1355, 0
        %1362 = vmatpush.bf16.msra.mxu0 0
        %1363 = vmatpush.bf16.msra.mxu0 0
        %1364 = vmatpush.bf16.msra.mxu0 0
        %1365 = vmatpush.bf16.msra.mxu0 0
        %1366 = vmatpush.bf16.msra.mxu0 0
        %1367 = vmatpush.bf16.msra.mxu0 0
        %1368 = vmatpush.bf16.msra.mxu0 0
        %1369 = vmatpush.bf16.msra.mxu0 %v1360
        %1370 = vmatmul.bf16.gmra.mxu0 %v1357
        %v1371 = vpop.f32.mrf.mxu0
        %v1372 = vadd.f32 0.0, %v1371
        %v1373 = vpop.f32.mrf.mxu0
        %v1374 = vadd.f32 0.0, %v1373
        %1375 = vdwg.mxu0
        %v1378 = vunpack.c.l.b16 %v1347
        %v1379 = vunpack.c.l.b16 %v1348
        %v1380 = vpack.c.b16 %v1379, %v1378
        %1381 = vrot.lane.b32.xlu0 %v1222, 56
        %v1382 = vpop.permute.xlu0 %1381
        %v1384 = vsel %vm1130, %v1380, 0
        %v1387 = vsel %vm1195, %v1382, 0
        %1389 = vmatpush.bf16.msra.mxu0 0
        %1390 = vmatpush.bf16.msra.mxu0 0
        %1391 = vmatpush.bf16.msra.mxu0 0
        %1392 = vmatpush.bf16.msra.mxu0 0
        %1393 = vmatpush.bf16.msra.mxu0 0
        %1394 = vmatpush.bf16.msra.mxu0 0
        %1395 = vmatpush.bf16.msra.mxu0 0
        %1396 = vmatpush.bf16.msra.mxu0 %v1387
        %1397 = vmatmul.bf16.gmra.mxu0 %v1384
        %v1398 = vpop.f32.mrf.mxu0
        %v1399 = vadd.f32 0.0, %v1398
        %v1400 = vpop.f32.mrf.mxu0
        %v1401 = vadd.f32 0.0, %v1400
        %1402 = vdwg.mxu0
        %1403 = vrot.lane.b32.xlu0 %v1060, 112
        %v1404 = vpop.permute.xlu0 %1403
        %1405 = vrot.lane.b32.xlu0 %v1065, 80
        %v1406 = vpop.permute.xlu0 %1405
        %v1408 = vsel %vm312, %v1404, 0
        %v1411 = vsel %vm312, %v1406, 0
        %1413 = vmatpush.bf16.xpose.msra.mxu0 0
        %1414 = vmatpush.bf16.xpose.msra.mxu0 0
        %1415 = vmatpush.bf16.xpose.msra.mxu0 0
        %1416 = vmatpush.bf16.xpose.msra.mxu0 0
        %1417 = vmatpush.bf16.xpose.msra.mxu0 0
        %1418 = vmatpush.bf16.xpose.msra.mxu0 0
        %1419 = vmatpush.bf16.xpose.msra.mxu0 0
        %1420 = vmatpush.bf16.xpose.msra.mxu0 %v1411
        %1421 = vmatmul.bf16.gmra.mxu0 %v1408
        %v1422 = vpop.f32.mrf.mxu0
        %v1423 = vadd.f32 0.0, %v1422
        %v1424 = vpop.f32.mrf.mxu0
        %v1425 = vadd.f32 0.0, %v1424
        %1426 = vdwg.mxu0
        %1427 = vrot.lane.b32.xlu0 %v1092, 112
        %v1428 = vpop.permute.xlu0 %1427
        %1429 = vrot.lane.b32.xlu0 %v1097, 80
        %v1430 = vpop.permute.xlu0 %1429
        %v1432 = vsel %vm312, %v1428, 0
        %v1435 = vsel %vm312, %v1430, 0
        %1437 = vmatpush.bf16.xpose.msra.mxu0 0
        %1438 = vmatpush.bf16.xpose.msra.mxu0 0
        %1439 = vmatpush.bf16.xpose.msra.mxu0 0
        %1440 = vmatpush.bf16.xpose.msra.mxu0 0
        %1441 = vmatpush.bf16.xpose.msra.mxu0 0
        %1442 = vmatpush.bf16.xpose.msra.mxu0 0
        %1443 = vmatpush.bf16.xpose.msra.mxu0 0
        %1444 = vmatpush.bf16.xpose.msra.mxu0 %v1435
        %1445 = vmatmul.bf16.gmra.mxu0 %v1432
        %v1446 = vpop.f32.mrf.mxu0
        %v1447 = vadd.f32 0.0, %v1446
        %v1448 = vpop.f32.mrf.mxu0
        %v1449 = vadd.f32 0.0, %v1448
        %1450 = vdwg.mxu0
        %v1451 = vmul.f32 %v1423, 0.35355338
        %v1452 = vmul.f32 %v1425, 0.35355338
        %v1453 = vmul.f32 %v1447, 0.35355338
        %v1454 = vmul.f32 %v1449, 0.35355338
        %v1455 = vsel %vm1125, %v1451, -1e+30
        %v1456 = vsel %vm1125, %v1452, -1e+30
        %v1457 = vsel %vm1125, %v1453, -1e+30
        %v1458 = vsel %vm1125, %v1454, -1e+30
        %v1459 = vsel %vm1130, %v1455, -inf
        %1460 = vmax.xlane.f32.xlu0 %v1459
        %v1461 = vpop.xlane.xlu0 %1460
        %v1462 = vsel %vm1134, %v1456, -inf
        %1463 = vmax.xlane.f32.xlu0 %v1462
        %v1464 = vpop.xlane.xlu0 %1463
        %v1465 = vsel %vm1130, %v1457, -inf
        %1466 = vmax.xlane.f32.xlu0 %v1465
        %v1467 = vpop.xlane.xlu0 %1466
        %v1468 = vsel %vm1134, %v1458, -inf
        %1469 = vmax.xlane.f32.xlu0 %v1468
        %v1470 = vpop.xlane.xlu0 %1469
        %v1471 = vsub.f32 %v1455, %v1461
        %v1472 = vsub.f32 %v1456, %v1464
        %v1473 = vsub.f32 %v1457, %v1467
        %v1474 = vsub.f32 %v1458, %v1470
        %v1475 = vmul.f32 %v1471, 1.442695
        %v1476 = vpow.pop %v1475
        %v1477 = vmul.f32 %v1472, 1.442695
        %v1478 = vpow.pop %v1477
        %v1479 = vmul.f32 %v1473, 1.442695
        %v1480 = vpow.pop %v1479
        %v1481 = vmul.f32 %v1474, 1.442695
        %v1482 = vpow.pop %v1481
        %v1483 = vsel %vm1130, %v1476, 0.0
        %1484 = vadd.xlane.f32.xlu0 %v1483
        %v1485 = vpop.xlane.xlu0 %1484
        %v1486 = vsel %vm1134, %v1478, 0.0
        %1487 = vadd.xlane.f32.xlu0 %v1486
        %v1488 = vpop.xlane.xlu0 %1487
        %v1489 = vsel %vm1130, %v1480, 0.0
        %1490 = vadd.xlane.f32.xlu0 %v1489
        %v1491 = vpop.xlane.xlu0 %1490
        %v1492 = vsel %vm1134, %v1482, 0.0
        %1493 = vadd.xlane.f32.xlu0 %v1492
        %v1494 = vpop.xlane.xlu0 %1493
        %v1495 = vrcp.pop %v1485
        %v1496 = vrcp.pop %v1488
        %v1497 = vrcp.pop %v1491
        %v1498 = vrcp.pop %v1494
        %v1499 = vmul.f32 %v1476, %v1495
        %v1500 = vmul.f32 %v1478, %v1496
        %v1501 = vmul.f32 %v1480, %v1497
        %v1502 = vmul.f32 %v1482, %v1498
        %v1503 = vpack.c.bf16 %v1499, %v1499
        %v1504 = vpack.c.bf16 %v1500, %v1500
        %v1505 = vpack.c.bf16 %v1501, %v1501
        %v1506 = vpack.c.bf16 %v1502, %v1502
        %v1509 = vunpack.c.l.b16 %v1503
        %v1510 = vunpack.c.l.b16 %v1504
        %v1511 = vpack.c.b16 %v1510, %v1509
        %1512 = vrot.lane.b32.xlu0 %v1189, 48
        %v1513 = vpop.permute.xlu0 %1512
        %v1515 = vsel %vm1130, %v1511, 0
        %v1518 = vsel %vm1195, %v1513, 0
        %1520 = vmatpush.bf16.msra.mxu0 0
        %1521 = vmatpush.bf16.msra.mxu0 0
        %1522 = vmatpush.bf16.msra.mxu0 0
        %1523 = vmatpush.bf16.msra.mxu0 0
        %1524 = vmatpush.bf16.msra.mxu0 0
        %1525 = vmatpush.bf16.msra.mxu0 0
        %1526 = vmatpush.bf16.msra.mxu0 0
        %1527 = vmatpush.bf16.msra.mxu0 %v1518
        %1528 = vmatmul.bf16.gmra.mxu0 %v1515
        %v1529 = vpop.f32.mrf.mxu0
        %v1530 = vadd.f32 0.0, %v1529
        %v1531 = vpop.f32.mrf.mxu0
        %v1532 = vadd.f32 0.0, %v1531
        %1533 = vdwg.mxu0
        %v1536 = vunpack.c.l.b16 %v1505
        %v1537 = vunpack.c.l.b16 %v1506
        %v1538 = vpack.c.b16 %v1537, %v1536
        %1539 = vrot.lane.b32.xlu0 %v1222, 48
        %v1540 = vpop.permute.xlu0 %1539
        %v1542 = vsel %vm1130, %v1538, 0
        %v1545 = vsel %vm1195, %v1540, 0
        %1547 = vmatpush.bf16.msra.mxu0 0
        %1548 = vmatpush.bf16.msra.mxu0 0
        %1549 = vmatpush.bf16.msra.mxu0 0
        %1550 = vmatpush.bf16.msra.mxu0 0
        %1551 = vmatpush.bf16.msra.mxu0 0
        %1552 = vmatpush.bf16.msra.mxu0 0
        %1553 = vmatpush.bf16.msra.mxu0 0
        %1554 = vmatpush.bf16.msra.mxu0 %v1545
        %1555 = vmatmul.bf16.gmra.mxu0 %v1542
        %v1556 = vpop.f32.mrf.mxu0
        %v1557 = vadd.f32 0.0, %v1556
        %v1558 = vpop.f32.mrf.mxu0
        %v1559 = vadd.f32 0.0, %v1558
        %1560 = vdwg.mxu0
        %1561 = vrot.lane.b32.xlu0 %v1060, 104
        %v1562 = vpop.permute.xlu0 %1561
        %1563 = vrot.lane.b32.xlu0 %v1065, 72
        %v1564 = vpop.permute.xlu0 %1563
        %v1566 = vsel %vm312, %v1562, 0
        %v1569 = vsel %vm312, %v1564, 0
        %1571 = vmatpush.bf16.xpose.msra.mxu0 0
        %1572 = vmatpush.bf16.xpose.msra.mxu0 0
        %1573 = vmatpush.bf16.xpose.msra.mxu0 0
        %1574 = vmatpush.bf16.xpose.msra.mxu0 0
        %1575 = vmatpush.bf16.xpose.msra.mxu0 0
        %1576 = vmatpush.bf16.xpose.msra.mxu0 0
        %1577 = vmatpush.bf16.xpose.msra.mxu0 0
        %1578 = vmatpush.bf16.xpose.msra.mxu0 %v1569
        %1579 = vmatmul.bf16.gmra.mxu0 %v1566
        %v1580 = vpop.f32.mrf.mxu0
        %v1581 = vadd.f32 0.0, %v1580
        %v1582 = vpop.f32.mrf.mxu0
        %v1583 = vadd.f32 0.0, %v1582
        %1584 = vdwg.mxu0
        %1585 = vrot.lane.b32.xlu0 %v1092, 104
        %v1586 = vpop.permute.xlu0 %1585
        %1587 = vrot.lane.b32.xlu0 %v1097, 72
        %v1588 = vpop.permute.xlu0 %1587
        %v1590 = vsel %vm312, %v1586, 0
        %v1593 = vsel %vm312, %v1588, 0
        %1595 = vmatpush.bf16.xpose.msra.mxu0 0
        %1596 = vmatpush.bf16.xpose.msra.mxu0 0
        %1597 = vmatpush.bf16.xpose.msra.mxu0 0
        %1598 = vmatpush.bf16.xpose.msra.mxu0 0
        %1599 = vmatpush.bf16.xpose.msra.mxu0 0
        %1600 = vmatpush.bf16.xpose.msra.mxu0 0
        %1601 = vmatpush.bf16.xpose.msra.mxu0 0
        %1602 = vmatpush.bf16.xpose.msra.mxu0 %v1593
        %1603 = vmatmul.bf16.gmra.mxu0 %v1590
        %v1604 = vpop.f32.mrf.mxu0
        %v1605 = vadd.f32 0.0, %v1604
        %v1606 = vpop.f32.mrf.mxu0
        %v1607 = vadd.f32 0.0, %v1606
        %1608 = vdwg.mxu0
        %v1609 = vmul.f32 %v1581, 0.35355338
        %v1610 = vmul.f32 %v1583, 0.35355338
        %v1611 = vmul.f32 %v1605, 0.35355338
        %v1612 = vmul.f32 %v1607, 0.35355338
        %v1613 = vsel %vm1125, %v1609, -1e+30
        %v1614 = vsel %vm1125, %v1610, -1e+30
        %v1615 = vsel %vm1125, %v1611, -1e+30
        %v1616 = vsel %vm1125, %v1612, -1e+30
        %v1617 = vsel %vm1130, %v1613, -inf
        %1618 = vmax.xlane.f32.xlu0 %v1617
        %v1619 = vpop.xlane.xlu0 %1618
        %v1620 = vsel %vm1134, %v1614, -inf
        %1621 = vmax.xlane.f32.xlu0 %v1620
        %v1622 = vpop.xlane.xlu0 %1621
        %v1623 = vsel %vm1130, %v1615, -inf
        %1624 = vmax.xlane.f32.xlu0 %v1623
        %v1625 = vpop.xlane.xlu0 %1624
        %v1626 = vsel %vm1134, %v1616, -inf
        %1627 = vmax.xlane.f32.xlu0 %v1626
        %v1628 = vpop.xlane.xlu0 %1627
        %v1629 = vsub.f32 %v1613, %v1619
        %v1630 = vsub.f32 %v1614, %v1622
        %v1631 = vsub.f32 %v1615, %v1625
        %v1632 = vsub.f32 %v1616, %v1628
        %v1633 = vmul.f32 %v1629, 1.442695
        %v1634 = vpow.pop %v1633
        %v1635 = vmul.f32 %v1630, 1.442695
        %v1636 = vpow.pop %v1635
        %v1637 = vmul.f32 %v1631, 1.442695
        %v1638 = vpow.pop %v1637
        %v1639 = vmul.f32 %v1632, 1.442695
        %v1640 = vpow.pop %v1639
        %v1641 = vsel %vm1130, %v1634, 0.0
        %1642 = vadd.xlane.f32.xlu0 %v1641
        %v1643 = vpop.xlane.xlu0 %1642
        %v1644 = vsel %vm1134, %v1636, 0.0
        %1645 = vadd.xlane.f32.xlu0 %v1644
        %v1646 = vpop.xlane.xlu0 %1645
        %v1647 = vsel %vm1130, %v1638, 0.0
        %1648 = vadd.xlane.f32.xlu0 %v1647
        %v1649 = vpop.xlane.xlu0 %1648
        %v1650 = vsel %vm1134, %v1640, 0.0
        %1651 = vadd.xlane.f32.xlu0 %v1650
        %v1652 = vpop.xlane.xlu0 %1651
        %v1653 = vrcp.pop %v1643
        %v1654 = vrcp.pop %v1646
        %v1655 = vrcp.pop %v1649
        %v1656 = vrcp.pop %v1652
        %v1657 = vmul.f32 %v1634, %v1653
        %v1658 = vmul.f32 %v1636, %v1654
        %v1659 = vmul.f32 %v1638, %v1655
        %v1660 = vmul.f32 %v1640, %v1656
        %v1661 = vpack.c.bf16 %v1657, %v1657
        %v1662 = vpack.c.bf16 %v1658, %v1658
        %v1663 = vpack.c.bf16 %v1659, %v1659
        %v1664 = vpack.c.bf16 %v1660, %v1660
        %v1667 = vunpack.c.l.b16 %v1661
        %v1668 = vunpack.c.l.b16 %v1662
        %v1669 = vpack.c.b16 %v1668, %v1667
        %1670 = vrot.lane.b32.xlu0 %v1189, 40
        %v1671 = vpop.permute.xlu0 %1670
        %v1673 = vsel %vm1130, %v1669, 0
        %v1676 = vsel %vm1195, %v1671, 0
        %1678 = vmatpush.bf16.msra.mxu0 0
        %1679 = vmatpush.bf16.msra.mxu0 0
        %1680 = vmatpush.bf16.msra.mxu0 0
        %1681 = vmatpush.bf16.msra.mxu0 0
        %1682 = vmatpush.bf16.msra.mxu0 0
        %1683 = vmatpush.bf16.msra.mxu0 0
        %1684 = vmatpush.bf16.msra.mxu0 0
        %1685 = vmatpush.bf16.msra.mxu0 %v1676
        %1686 = vmatmul.bf16.gmra.mxu0 %v1673
        %v1687 = vpop.f32.mrf.mxu0
        %v1688 = vadd.f32 0.0, %v1687
        %v1689 = vpop.f32.mrf.mxu0
        %v1690 = vadd.f32 0.0, %v1689
        %1691 = vdwg.mxu0
        %v1694 = vunpack.c.l.b16 %v1663
        %v1695 = vunpack.c.l.b16 %v1664
        %v1696 = vpack.c.b16 %v1695, %v1694
        %1697 = vrot.lane.b32.xlu0 %v1222, 40
        %v1698 = vpop.permute.xlu0 %1697
        %v1700 = vsel %vm1130, %v1696, 0
        %v1703 = vsel %vm1195, %v1698, 0
        %1705 = vmatpush.bf16.msra.mxu0 0
        %1706 = vmatpush.bf16.msra.mxu0 0
        %1707 = vmatpush.bf16.msra.mxu0 0
        %1708 = vmatpush.bf16.msra.mxu0 0
        %1709 = vmatpush.bf16.msra.mxu0 0
        %1710 = vmatpush.bf16.msra.mxu0 0
        %1711 = vmatpush.bf16.msra.mxu0 0
        %1712 = vmatpush.bf16.msra.mxu0 %v1703
        %1713 = vmatmul.bf16.gmra.mxu0 %v1700
        %v1714 = vpop.f32.mrf.mxu0
        %v1715 = vadd.f32 0.0, %v1714
        %v1716 = vpop.f32.mrf.mxu0
        %v1717 = vadd.f32 0.0, %v1716
        %1718 = vdwg.mxu0
        %1723 = vrot.lane.b32.xlu0 %v1372, 8
        %v1724 = vpop.permute.xlu0 %1723
        %1725 = vrot.lane.b32.xlu0 %v1374, 8
        %v1726 = vpop.permute.xlu0 %1725
        %1727 = vrot.lane.b32.xlu0 %v1399, 8
        %v1728 = vpop.permute.xlu0 %1727
        %1729 = vrot.lane.b32.xlu0 %v1401, 8
        %v1730 = vpop.permute.xlu0 %1729
        %1739 = vrot.lane.b32.xlu0 %v1530, 16
        %v1740 = vpop.permute.xlu0 %1739
        %1741 = vrot.lane.b32.xlu0 %v1532, 16
        %v1742 = vpop.permute.xlu0 %1741
        %1743 = vrot.lane.b32.xlu0 %v1557, 16
        %v1744 = vpop.permute.xlu0 %1743
        %1745 = vrot.lane.b32.xlu0 %v1559, 16
        %v1746 = vpop.permute.xlu0 %1745
        %1755 = vrot.lane.b32.xlu0 %v1688, 24
        %v1756 = vpop.permute.xlu0 %1755
        %1757 = vrot.lane.b32.xlu0 %v1690, 24
        %v1758 = vpop.permute.xlu0 %1757
        %1759 = vrot.lane.b32.xlu0 %v1715, 24
        %v1760 = vpop.permute.xlu0 %1759
        %1761 = vrot.lane.b32.xlu0 %v1717, 24
        %v1762 = vpop.permute.xlu0 %1761
        %v1767 = vsel %vm312, %v1209, %v1724
        %v1768 = vsel %vm312, %v1211, %v1726
        %v1769 = vsel %vm312, %v1241, %v1728
        %v1770 = vsel %vm312, %v1243, %v1730
        %vm1771 = vcmask 130048
        %v1772 = vsel %vm1771, %v1767, %v1740
        %v1773 = vsel %vm1771, %v1768, %v1742
        %v1774 = vsel %vm1771, %v1769, %v1744
        %v1775 = vsel %vm1771, %v1770, %v1746
        %vm1776 = vcmask 195584
        %v1777 = vsel %vm1776, %v1772, %v1756
        %v1778 = vsel %vm1776, %v1773, %v1758
        %v1779 = vsel %vm1776, %v1774, %v1760
        %v1780 = vsel %vm1776, %v1775, %v1762
        %v1785 = vrot.slane %v1777, 4
        %v1786 = vrot.slane %v1779, 4
        %1787 = vst [vmem:[#allocation1] ss:$2 sm:$0xff] %v1777
        %s1788 = scalar_lea.vmem [#allocation1], 1
        %1789 = vst [vmem:[%s1788] ss:$2 sm:$0xff] %v1785
        %s1790 = scalar_lea.vmem [#allocation1], 16
        %1791 = vst [vmem:[%s1790] ss:$2 sm:$0xff] %v1778
        %s1792 = scalar_lea.vmem [#allocation1], 17
        %1793 = vst [vmem:[%s1792] ss:$2 sm:$0xff] %v1779
        %s1794 = scalar_lea.vmem [#allocation1], 32
        %1795 = vst [vmem:[%s1794] ss:$2 sm:$0xff] %v1786
        %s1796 = scalar_lea.vmem [#allocation1], 33
        %1797 = vst [vmem:[%s1796] ss:$2 sm:$0xff] %v1780
        %v1798 = vld.sshfl [vmem:[#allocation1] sm:$0xff pattern:$0x75316420]
        %v1799 = vld.sshfl [vmem:[#allocation1 + $0x10] sm:$0xff pattern:$0x75316420]
        %v1800 = vld.sshfl [vmem:[#allocation1 + $0x20] sm:$0xff pattern:$0x75316420]
        %v1804 = vpack.c.bf16 %v1799, %v1798
        %v1805 = vpack.c.bf16 %v1800, %v1800
        %v1806 = vpack.c.bf16 %v453, %v452
        %v1807 = vpack.c.bf16 %v455, %v454
        %v1808 = vperm.slane %v471, 0
        %v1810 = vsel %vm499, %v1804, 0
        %v1813 = vsel %vm499, %v1805, 0
        %1815 = vmatpush.bf16.msra.mxu0 0
        %1816 = vmatpush.bf16.msra.mxu0 0
        %1817 = vmatpush.bf16.msra.mxu0 0
        %1818 = vmatpush.bf16.msra.mxu0 0
        %1819 = vmatpush.bf16.msra.mxu0 0
        %1820 = vmatpush.bf16.msra.mxu0 0
        %1821 = vmatpush.bf16.msra.mxu0 %v1807
        %1822 = vmatpush.bf16.msra.mxu0 %v1806
        %1823 = vmatmul.bf16.gmra.mxu0 %v1810
        %v1824 = vpop.f32.mrf.mxu0
        %v1825 = vadd.f32 %v1808, %v1824
        %v1826 = vpop.f32.mrf.mxu0
        %v1827 = vadd.f32 %v1808, %v1826
        %1828 = vmatmul.bf16.gmra.mxu0 %v1813
        %v1829 = vpop.f32.mrf.mxu0
        %v1830 = vadd.f32 %v1808, %v1829
        %v1831 = vpop.f32.mrf.mxu0
        %1832 = vdwg.mxu0
        %v1836 = vrot.slane %v1825, 4
        %v1837 = vrot.slane %v1827, 4
        %v1838 = vrot.slane %v1830, 4
        %v1842 = vadd.f32 %v421, %v1825
        %v1843 = vadd.f32 %v422, %v1836
        %v1844 = vadd.f32 %v423, %v1827
        %v1845 = vadd.f32 %v424, %v1837
        %v1846 = vadd.f32 %v425, %v1830
        %v1847 = vadd.f32 %v426, %v1838
        %1854 = vst [vmem:[#allocation1] ss:$2 sm:$0xff] %v1842
        %s1855 = scalar_lea.vmem [#allocation1], 1
        %1856 = vst [vmem:[%s1855] ss:$2 sm:$0xff] %v1843
        %s1857 = scalar_lea.vmem [#allocation1], 16
        %1858 = vst [vmem:[%s1857] ss:$2 sm:$0xff] %v1844
        %s1859 = scalar_lea.vmem [#allocation1], 17
        %1860 = vst [vmem:[%s1859] ss:$2 sm:$0xff] %v1845
        %s1861 = scalar_lea.vmem [#allocation1], 32
        %1862 = vst [vmem:[%s1861] ss:$2 sm:$0xff] %v1846
        %s1863 = scalar_lea.vmem [#allocation1], 33
        %1864 = vst [vmem:[%s1863] ss:$2 sm:$0xff] %v1847
        %v1865 = vld.sshfl [vmem:[#allocation1] sm:$0xff pattern:$0x75316420]
        %v1866 = vld.sshfl [vmem:[#allocation1 + $0x10] sm:$0xff pattern:$0x75316420]
        %v1867 = vld.sshfl [vmem:[#allocation1 + $0x20] sm:$0xff pattern:$0x75316420]
        %v1871 = vsel %vm499, %v1865, 0.0
        %1872 = vadd.xlane.f32.xlu0 %v1871
        %v1873 = vpop.xlane.xlu0 %1872
        %v1874 = vsel %vm499, %v1866, 0.0
        %1875 = vadd.xlane.f32.xlu0 %v1874
        %v1876 = vpop.xlane.xlu0 %1875
        %v1877 = vsel %vm499, %v1867, 0.0
        %1878 = vadd.xlane.f32.xlu0 %v1877
        %v1879 = vpop.xlane.xlu0 %1878
        %v1880 = vmul.f32 %v1873, %v515
        %v1881 = vmul.f32 %v1876, %v515
        %v1882 = vmul.f32 %v1879, %v515
        %v1887 = vunpack.c.l.s4 839922192
        %v1888 = vunpack.c.0.s8 %v1887
        %v1889 = vperm.slane %v1880, %v1888
        %v1891 = vunpack.c.l.s4 1985246804
        %v1892 = vunpack.c.0.s8 %v1891
        %v1893 = vperm.slane %v1880, %v1892
        %v1895 = vunpack.c.l.s4 839922192
        %v1896 = vunpack.c.0.s8 %v1895
        %v1897 = vperm.slane %v1881, %v1896
        %v1899 = vunpack.c.l.s4 1985246804
        %v1900 = vunpack.c.0.s8 %v1899
        %v1901 = vperm.slane %v1881, %v1900
        %v1903 = vunpack.c.l.s4 839922192
        %v1904 = vunpack.c.0.s8 %v1903
        %v1905 = vperm.slane %v1882, %v1904
        %v1907 = vunpack.c.l.s4 1985246804
        %v1908 = vunpack.c.0.s8 %v1907
        %v1909 = vperm.slane %v1882, %v1908
        %v1916 = vsub.f32 %v1842, %v1889
        %v1917 = vsub.f32 %v1843, %v1893
        %v1918 = vsub.f32 %v1844, %v1897
        %v1919 = vsub.f32 %v1845, %v1901
        %v1920 = vsub.f32 %v1846, %v1905
        %v1921 = vsub.f32 %v1847, %v1909
        %v1922 = vmul.f32 %v1916, %v1916
        %v1923 = vmul.f32 %v1917, %v1917
        %v1924 = vmul.f32 %v1918, %v1918
        %v1925 = vmul.f32 %v1919, %v1919
        %v1926 = vmul.f32 %v1920, %v1920
        %v1927 = vmul.f32 %v1921, %v1921
        %1934 = vst [vmem:[#allocation1] ss:$2 sm:$0xff] %v1922
        %s1935 = scalar_lea.vmem [#allocation1], 1
        %1936 = vst [vmem:[%s1935] ss:$2 sm:$0xff] %v1923
        %s1937 = scalar_lea.vmem [#allocation1], 16
        %1938 = vst [vmem:[%s1937] ss:$2 sm:$0xff] %v1924
        %s1939 = scalar_lea.vmem [#allocation1], 17
        %1940 = vst [vmem:[%s1939] ss:$2 sm:$0xff] %v1925
        %s1941 = scalar_lea.vmem [#allocation1], 32
        %1942 = vst [vmem:[%s1941] ss:$2 sm:$0xff] %v1926
        %s1943 = scalar_lea.vmem [#allocation1], 33
        %1944 = vst [vmem:[%s1943] ss:$2 sm:$0xff] %v1927
        %v1945 = vld.sshfl [vmem:[#allocation1] sm:$0xff pattern:$0x75316420]
        %v1946 = vld.sshfl [vmem:[#allocation1 + $0x10] sm:$0xff pattern:$0x75316420]
        %v1947 = vld.sshfl [vmem:[#allocation1 + $0x20] sm:$0xff pattern:$0x75316420]
        %v1951 = vsel %vm499, %v1945, 0.0
        %1952 = vadd.xlane.f32.xlu0 %v1951
        %v1953 = vpop.xlane.xlu0 %1952
        %v1954 = vsel %vm499, %v1946, 0.0
        %1955 = vadd.xlane.f32.xlu0 %v1954
        %v1956 = vpop.xlane.xlu0 %1955
        %v1957 = vsel %vm499, %v1947, 0.0
        %1958 = vadd.xlane.f32.xlu0 %v1957
        %v1959 = vpop.xlane.xlu0 %1958
        %v1960 = vmul.f32 %v1953, %v515
        %v1961 = vmul.f32 %v1956, %v515
        %v1962 = vmul.f32 %v1959, %v515
        %v1963 = vadd.f32 %v1960, 1e-05
        %v1964 = vadd.f32 %v1961, 1e-05
        %v1965 = vadd.f32 %v1962, 1e-05
        %v1966 = vrsqrt.pop %v1963
        %v1967 = vmul.f32 %v1966, %v1963
        %v1968 = vmul.f32 %v1967, %v1966
        %v1969 = vmul.f32 0.5, %v1968
        %v1970 = vsub.f32 1.5, %v1969
        %v1971 = vmul.f32 %v1966, %v1970
        %vm1972 = vweird.f32 %v1963
        %vm1973 = vweird.f32 %v1966
        %vm1974 = vmor %vm1972, %vm1973
        %v1975 = vsel %vm1974, %v1966, %v1971
        %v1976 = vrsqrt.pop %v1964
        %v1977 = vmul.f32 %v1976, %v1964
        %v1978 = vmul.f32 %v1977, %v1976
        %v1979 = vmul.f32 0.5, %v1978
        %v1980 = vsub.f32 1.5, %v1979
        %v1981 = vmul.f32 %v1976, %v1980
        %vm1982 = vweird.f32 %v1964
        %vm1983 = vweird.f32 %v1976
        %vm1984 = vmor %vm1982, %vm1983
        %v1985 = vsel %vm1984, %v1976, %v1981
        %v1986 = vrsqrt.pop %v1965
        %v1987 = vmul.f32 %v1986, %v1965
        %v1988 = vmul.f32 %v1987, %v1986
        %v1989 = vmul.f32 0.5, %v1988
        %v1990 = vsub.f32 1.5, %v1989
        %v1991 = vmul.f32 %v1986, %v1990
        %vm1992 = vweird.f32 %v1965
        %vm1993 = vweird.f32 %v1986
        %vm1994 = vmor %vm1992, %vm1993
        %v1995 = vsel %vm1994, %v1986, %v1991
        %v2000 = vunpack.c.l.s4 839922192
        %v2001 = vunpack.c.0.s8 %v2000
        %v2002 = vperm.slane %v1975, %v2001
        %v2004 = vunpack.c.l.s4 1985246804
        %v2005 = vunpack.c.0.s8 %v2004
        %v2006 = vperm.slane %v1975, %v2005
        %v2008 = vunpack.c.l.s4 839922192
        %v2009 = vunpack.c.0.s8 %v2008
        %v2010 = vperm.slane %v1985, %v2009
        %v2012 = vunpack.c.l.s4 1985246804
        %v2013 = vunpack.c.0.s8 %v2012
        %v2014 = vperm.slane %v1985, %v2013
        %v2016 = vunpack.c.l.s4 839922192
        %v2017 = vunpack.c.0.s8 %v2016
        %v2018 = vperm.slane %v1995, %v2017
        %v2020 = vunpack.c.l.s4 1985246804
        %v2021 = vunpack.c.0.s8 %v2020
        %v2022 = vperm.slane %v1995, %v2021
        %v2029 = vmul.f32 %v1916, %v2002
        %v2030 = vmul.f32 %v1917, %v2006
        %v2031 = vmul.f32 %v1918, %v2010
        %v2032 = vmul.f32 %v1919, %v2014
        %v2033 = vmul.f32 %v1920, %v2018
        %v2034 = vmul.f32 %v1921, %v2022
        %v2035 = vperm.slane %v472, 0
        %v2037 = vrot.slane %v2035, 4
        %v2039 = vmul.f32 %v2029, %v2035
        %v2040 = vmul.f32 %v2030, %v2037
        %v2041 = vmul.f32 %v2031, %v2035
        %v2042 = vmul.f32 %v2032, %v2037
        %v2043 = vmul.f32 %v2033, %v2035
        %v2044 = vmul.f32 %v2034, %v2037
        %v2045 = vperm.slane %v473, 0
        %v2047 = vrot.slane %v2045, 4
        %v2049 = vadd.f32 %v2039, %v2045
        %v2050 = vadd.f32 %v2040, %v2047
        %v2051 = vadd.f32 %v2041, %v2045
        %v2052 = vadd.f32 %v2042, %v2047
        %v2053 = vadd.f32 %v2043, %v2045
        %v2054 = vadd.f32 %v2044, %v2047
        %2061 = vst [vmem:[#allocation1] ss:$2 sm:$0xff] %v2049
        %s2062 = scalar_lea.vmem [#allocation1], 1
        %2063 = vst [vmem:[%s2062] ss:$2 sm:$0xff] %v2050
        %s2064 = scalar_lea.vmem [#allocation1], 16
        %2065 = vst [vmem:[%s2064] ss:$2 sm:$0xff] %v2051
        %s2066 = scalar_lea.vmem [#allocation1], 17
        %2067 = vst [vmem:[%s2066] ss:$2 sm:$0xff] %v2052
        %s2068 = scalar_lea.vmem [#allocation1], 32
        %2069 = vst [vmem:[%s2068] ss:$2 sm:$0xff] %v2053
        %s2070 = scalar_lea.vmem [#allocation1], 33
        %2071 = vst [vmem:[%s2070] ss:$2 sm:$0xff] %v2054
        %v2072 = vld.sshfl [vmem:[#allocation1] sm:$0xff pattern:$0x75316420]
        %v2073 = vld.sshfl [vmem:[#allocation1 + $0x10] sm:$0xff pattern:$0x75316420]
        %v2074 = vld.sshfl [vmem:[#allocation1 + $0x20] sm:$0xff pattern:$0x75316420]
        %v2078 = vpack.c.bf16 %v2073, %v2072
        %v2079 = vpack.c.bf16 %v2074, %v2074
        %v2080 = vpack.c.bf16 %v457, %v456
        %v2081 = vpack.c.bf16 %v459, %v458
        %v2082 = vperm.slane %v474, 0
        %v2084 = vsel %vm499, %v2078, 0
        %v2087 = vsel %vm499, %v2079, 0
        %2089 = vmatpush.bf16.msra.mxu0 0
        %2090 = vmatpush.bf16.msra.mxu0 0
        %2091 = vmatpush.bf16.msra.mxu0 0
        %2092 = vmatpush.bf16.msra.mxu0 0
        %2093 = vmatpush.bf16.msra.mxu0 0
        %2094 = vmatpush.bf16.msra.mxu0 0
        %2095 = vmatpush.bf16.msra.mxu0 %v2081
        %2096 = vmatpush.bf16.msra.mxu0 %v2080
        %2097 = vmatmul.bf16.gmra.mxu0 %v2084
        %v2098 = vpop.f32.mrf.mxu0
        %v2099 = vadd.f32 %v2082, %v2098
        %v2100 = vpop.f32.mrf.mxu0
        %v2101 = vadd.f32 %v2082, %v2100
        %2102 = vmatmul.bf16.gmra.mxu0 %v2087
        %v2103 = vpop.f32.mrf.mxu0
        %v2104 = vadd.f32 %v2082, %v2103
        %v2105 = vpop.f32.mrf.mxu0
        %2106 = vdwg.mxu0
        %v2107 = vmax.f32 %v2099, 0.0
        %v2108 = vmax.f32 %v2101, 0.0
        %v2109 = vmax.f32 %v2104, 0.0
        %v2110 = vpack.c.bf16 %v2108, %v2107
        %v2111 = vpack.c.bf16 %v2109, %v2109
        %v2112 = vpack.c.bf16 %v461, %v460
        %v2113 = vpack.c.bf16 %v463, %v462
        %v2114 = vpack.c.bf16 %v465, %v464
        %v2115 = vpack.c.bf16 %v467, %v466
        %v2116 = vperm.slane %v475, 0
        %vm2117 = vcmask 523264
        %v2119 = vsel %vm2117, %v2110, 0
        %v2122 = vsel %vm2117, %v2111, 0
        %2124 = vmatpush.bf16.msra.mxu0 0
        %2125 = vmatpush.bf16.msra.mxu0 0
        %2126 = vmatpush.bf16.msra.mxu0 0
        %2127 = vmatpush.bf16.msra.mxu0 0
        %2128 = vmatpush.bf16.msra.mxu0 %v2115
        %2129 = vmatpush.bf16.msra.mxu0 %v2114
        %2130 = vmatpush.bf16.msra.mxu0 %v2113
        %2131 = vmatpush.bf16.msra.mxu0 %v2112
        %2132 = vmatmul.bf16.gmra.mxu0 %v2119
        %v2133 = vpop.f32.mrf.mxu0
        %v2134 = vadd.f32 %v2116, %v2133
        %v2135 = vpop.f32.mrf.mxu0
        %v2136 = vadd.f32 %v2116, %v2135
        %2137 = vmatmul.bf16.gmra.mxu0 %v2122
        %v2138 = vpop.f32.mrf.mxu0
        %v2139 = vadd.f32 %v2116, %v2138
        %v2140 = vpop.f32.mrf.mxu0
        %2141 = vdwg.mxu0
        %v2145 = vrot.slane %v2134, 4
        %v2146 = vrot.slane %v2136, 4
        %v2147 = vrot.slane %v2139, 4
        %v2151 = vadd.f32 %v1842, %v2134
        %v2152 = vadd.f32 %v1843, %v2145
        %v2153 = vadd.f32 %v1844, %v2136
        %v2154 = vadd.f32 %v1845, %v2146
        %v2155 = vadd.f32 %v1846, %v2139
        %v2156 = vadd.f32 %v1847, %v2147
        %v2157 = vld [vmem:[%s213 + $0xb8] sm:$0xff]
        %v2158 = vld [vmem:[%s213 + $0xc0] sm:$0xff]
        %v2159 = vld [vmem:[%s213 + $0xc8] sm:$0xff]
        %v2160 = vld [vmem:[%s213 + $0xd0] sm:$0xff]
        %v2161 = vld [vmem:[%s213 + $0xd8] sm:$0xff]
        %v2162 = vld [vmem:[%s213 + $0xe0] sm:$0xff]
        %v2163 = vld [vmem:[%s213 + $0xe8] sm:$0xff]
        %v2164 = vld [vmem:[%s213 + $0xf0] sm:$0xff]
        %v2165 = vld [vmem:[%s213 + $0xf8] sm:$0xff]
        %v2166 = vld [vmem:[%s213 + $0x100] sm:$0xff]
        %v2167 = vld [vmem:[%s213 + $0x108] sm:$0xff]
        %v2168 = vld [vmem:[%s213 + $0x110] sm:$0xff]
        %v2169 = vld [vmem:[%s213 + $0x118] sm:$0xff]
        %v2170 = vld [vmem:[%s213 + $0x120] sm:$0xff]
        %v2171 = vld [vmem:[%s213 + $0x128] sm:$0xff]
        %v2172 = vld [vmem:[%s213 + $0x130] sm:$0xff]
        %v2173 = vld [vmem:[%s213 + $0x138] sm:$0xff]
        %v2174 = vld [vmem:[%s213 + $0x140] sm:$0xff]
        %v2175 = vld [vmem:[%s213 + $0x148] sm:$0xff]
        %v2176 = vld [vmem:[%s213 + $0x150] sm:$0xff]
        %v2177 = vld [vmem:[%s213 + $0x158] sm:$0x1]
        %v2178 = vld [vmem:[%s213 + $0x159] sm:$0x1]
        %v2179 = vld [vmem:[%s213 + $0x15a] sm:$0x1]
        %v2180 = vld [vmem:[%s213 + $0x15b] sm:$0x1]
        %v2181 = vld [vmem:[%s213 + $0x15c] sm:$0x1]
        %v2182 = vld [vmem:[%s213 + $0x15d] sm:$0x1]
        %v2183 = vld [vmem:[%s213 + $0x15e] sm:$0x1]
        %v2184 = vld [vmem:[%s213 + $0x15f] sm:$0x1]
        %2191 = vst [vmem:[#allocation1] ss:$2 sm:$0xff] %v2151
        %s2192 = scalar_lea.vmem [#allocation1], 1
        %2193 = vst [vmem:[%s2192] ss:$2 sm:$0xff] %v2152
        %s2194 = scalar_lea.vmem [#allocation1], 16
        %2195 = vst [vmem:[%s2194] ss:$2 sm:$0xff] %v2153
        %s2196 = scalar_lea.vmem [#allocation1], 17
        %2197 = vst [vmem:[%s2196] ss:$2 sm:$0xff] %v2154
        %s2198 = scalar_lea.vmem [#allocation1], 32
        %2199 = vst [vmem:[%s2198] ss:$2 sm:$0xff] %v2155
        %s2200 = scalar_lea.vmem [#allocation1], 33
        %2201 = vst [vmem:[%s2200] ss:$2 sm:$0xff] %v2156
        %v2202 = vld.sshfl [vmem:[#allocation1] sm:$0xff pattern:$0x75316420]
        %v2203 = vld.sshfl [vmem:[#allocation1 + $0x10] sm:$0xff pattern:$0x75316420]
        %v2204 = vld.sshfl [vmem:[#allocation1 + $0x20] sm:$0xff pattern:$0x75316420]
        %v2208 = vsel %vm499, %v2202, 0.0
        %2209 = vadd.xlane.f32.xlu0 %v2208
        %v2210 = vpop.xlane.xlu0 %2209
        %v2211 = vsel %vm499, %v2203, 0.0
        %2212 = vadd.xlane.f32.xlu0 %v2211
        %v2213 = vpop.xlane.xlu0 %2212
        %v2214 = vsel %vm499, %v2204, 0.0
        %2215 = vadd.xlane.f32.xlu0 %v2214
        %v2216 = vpop.xlane.xlu0 %2215
        %v2217 = vmul.f32 %v2210, %v515
        %v2218 = vmul.f32 %v2213, %v515
        %v2219 = vmul.f32 %v2216, %v515
        %v2224 = vunpack.c.l.s4 839922192
        %v2225 = vunpack.c.0.s8 %v2224
        %v2226 = vperm.slane %v2217, %v2225
        %v2228 = vunpack.c.l.s4 1985246804
        %v2229 = vunpack.c.0.s8 %v2228
        %v2230 = vperm.slane %v2217, %v2229
        %v2232 = vunpack.c.l.s4 839922192
        %v2233 = vunpack.c.0.s8 %v2232
        %v2234 = vperm.slane %v2218, %v2233
        %v2236 = vunpack.c.l.s4 1985246804
        %v2237 = vunpack.c.0.s8 %v2236
        %v2238 = vperm.slane %v2218, %v2237
        %v2240 = vunpack.c.l.s4 839922192
        %v2241 = vunpack.c.0.s8 %v2240
        %v2242 = vperm.slane %v2219, %v2241
        %v2244 = vunpack.c.l.s4 1985246804
        %v2245 = vunpack.c.0.s8 %v2244
        %v2246 = vperm.slane %v2219, %v2245
        %v2253 = vsub.f32 %v2151, %v2226
        %v2254 = vsub.f32 %v2152, %v2230
        %v2255 = vsub.f32 %v2153, %v2234
        %v2256 = vsub.f32 %v2154, %v2238
        %v2257 = vsub.f32 %v2155, %v2242
        %v2258 = vsub.f32 %v2156, %v2246
        %v2259 = vmul.f32 %v2253, %v2253
        %v2260 = vmul.f32 %v2254, %v2254
        %v2261 = vmul.f32 %v2255, %v2255
        %v2262 = vmul.f32 %v2256, %v2256
        %v2263 = vmul.f32 %v2257, %v2257
        %v2264 = vmul.f32 %v2258, %v2258
        %2271 = vst [vmem:[#allocation1] ss:$2 sm:$0xff] %v2259
        %s2272 = scalar_lea.vmem [#allocation1], 1
        %2273 = vst [vmem:[%s2272] ss:$2 sm:$0xff] %v2260
        %s2274 = scalar_lea.vmem [#allocation1], 16
        %2275 = vst [vmem:[%s2274] ss:$2 sm:$0xff] %v2261
        %s2276 = scalar_lea.vmem [#allocation1], 17
        %2277 = vst [vmem:[%s2276] ss:$2 sm:$0xff] %v2262
        %s2278 = scalar_lea.vmem [#allocation1], 32
        %2279 = vst [vmem:[%s2278] ss:$2 sm:$0xff] %v2263
        %s2280 = scalar_lea.vmem [#allocation1], 33
        %2281 = vst [vmem:[%s2280] ss:$2 sm:$0xff] %v2264
        %v2282 = vld.sshfl [vmem:[#allocation1] sm:$0xff pattern:$0x75316420]
        %v2283 = vld.sshfl [vmem:[#allocation1 + $0x10] sm:$0xff pattern:$0x75316420]
        %v2284 = vld.sshfl [vmem:[#allocation1 + $0x20] sm:$0xff pattern:$0x75316420]
        %v2288 = vsel %vm499, %v2282, 0.0
        %2289 = vadd.xlane.f32.xlu0 %v2288
        %v2290 = vpop.xlane.xlu0 %2289
        %v2291 = vsel %vm499, %v2283, 0.0
        %2292 = vadd.xlane.f32.xlu0 %v2291
        %v2293 = vpop.xlane.xlu0 %2292
        %v2294 = vsel %vm499, %v2284, 0.0
        %2295 = vadd.xlane.f32.xlu0 %v2294
        %v2296 = vpop.xlane.xlu0 %2295
        %v2297 = vmul.f32 %v2290, %v515
        %v2298 = vmul.f32 %v2293, %v515
        %v2299 = vmul.f32 %v2296, %v515
        %v2300 = vadd.f32 %v2297, 1e-05
        %v2301 = vadd.f32 %v2298, 1e-05
        %v2302 = vadd.f32 %v2299, 1e-05
        %v2303 = vrsqrt.pop %v2300
        %v2304 = vmul.f32 %v2303, %v2300
        %v2305 = vmul.f32 %v2304, %v2303
        %v2306 = vmul.f32 0.5, %v2305
        %v2307 = vsub.f32 1.5, %v2306
        %v2308 = vmul.f32 %v2303, %v2307
        %vm2309 = vweird.f32 %v2300
        %vm2310 = vweird.f32 %v2303
        %vm2311 = vmor %vm2309, %vm2310
        %v2312 = vsel %vm2311, %v2303, %v2308
        %v2313 = vrsqrt.pop %v2301
        %v2314 = vmul.f32 %v2313, %v2301
        %v2315 = vmul.f32 %v2314, %v2313
        %v2316 = vmul.f32 0.5, %v2315
        %v2317 = vsub.f32 1.5, %v2316
        %v2318 = vmul.f32 %v2313, %v2317
        %vm2319 = vweird.f32 %v2301
        %vm2320 = vweird.f32 %v2313
        %vm2321 = vmor %vm2319, %vm2320
        %v2322 = vsel %vm2321, %v2313, %v2318
        %v2323 = vrsqrt.pop %v2302
        %v2324 = vmul.f32 %v2323, %v2302
        %v2325 = vmul.f32 %v2324, %v2323
        %v2326 = vmul.f32 0.5, %v2325
        %v2327 = vsub.f32 1.5, %v2326
        %v2328 = vmul.f32 %v2323, %v2327
        %vm2329 = vweird.f32 %v2302
        %vm2330 = vweird.f32 %v2323
        %vm2331 = vmor %vm2329, %vm2330
        %v2332 = vsel %vm2331, %v2323, %v2328
        %v2337 = vunpack.c.l.s4 839922192
        %v2338 = vunpack.c.0.s8 %v2337
        %v2339 = vperm.slane %v2312, %v2338
        %v2341 = vunpack.c.l.s4 1985246804
        %v2342 = vunpack.c.0.s8 %v2341
        %v2343 = vperm.slane %v2312, %v2342
        %v2345 = vunpack.c.l.s4 839922192
        %v2346 = vunpack.c.0.s8 %v2345
        %v2347 = vperm.slane %v2322, %v2346
        %v2349 = vunpack.c.l.s4 1985246804
        %v2350 = vunpack.c.0.s8 %v2349
        %v2351 = vperm.slane %v2322, %v2350
        %v2353 = vunpack.c.l.s4 839922192
        %v2354 = vunpack.c.0.s8 %v2353
        %v2355 = vperm.slane %v2332, %v2354
        %v2357 = vunpack.c.l.s4 1985246804
        %v2358 = vunpack.c.0.s8 %v2357
        %v2359 = vperm.slane %v2332, %v2358
        %v2366 = vmul.f32 %v2253, %v2339
        %v2367 = vmul.f32 %v2254, %v2343
        %v2368 = vmul.f32 %v2255, %v2347
        %v2369 = vmul.f32 %v2256, %v2351
        %v2370 = vmul.f32 %v2257, %v2355
        %v2371 = vmul.f32 %v2258, %v2359
        %v2372 = vperm.slane %v2177, 0
        %v2374 = vrot.slane %v2372, 4
        %v2376 = vmul.f32 %v2366, %v2372
        %v2377 = vmul.f32 %v2367, %v2374
        %v2378 = vmul.f32 %v2368, %v2372
        %v2379 = vmul.f32 %v2369, %v2374
        %v2380 = vmul.f32 %v2370, %v2372
        %v2381 = vmul.f32 %v2371, %v2374
        %v2382 = vperm.slane %v2178, 0
        %v2384 = vrot.slane %v2382, 4
        %v2386 = vadd.f32 %v2376, %v2382
        %v2387 = vadd.f32 %v2377, %v2384
        %v2388 = vadd.f32 %v2378, %v2382
        %v2389 = vadd.f32 %v2379, %v2384
        %v2390 = vadd.f32 %v2380, %v2382
        %v2391 = vadd.f32 %v2381, %v2384
        %v2392 = vmul.f32 %v872, %v2372
        %v2393 = vmul.f32 %v873, %v2374
        %v2394 = vmul.f32 %v874, %v2372
        %v2395 = vmul.f32 %v875, %v2374
        %v2396 = vmul.f32 %v876, %v2372
        %v2397 = vmul.f32 %v877, %v2374
        %v2398 = vadd.f32 %v2392, %v2382
        %v2399 = vadd.f32 %v2393, %v2384
        %v2400 = vadd.f32 %v2394, %v2382
        %v2401 = vadd.f32 %v2395, %v2384
        %v2402 = vadd.f32 %v2396, %v2382
        %v2403 = vadd.f32 %v2397, %v2384
        %2410 = vst [vmem:[#allocation1] ss:$2 sm:$0xff] %v2386
        %s2411 = scalar_lea.vmem [#allocation1], 1
        %2412 = vst [vmem:[%s2411] ss:$2 sm:$0xff] %v2387
        %s2413 = scalar_lea.vmem [#allocation1], 16
        %2414 = vst [vmem:[%s2413] ss:$2 sm:$0xff] %v2388
        %s2415 = scalar_lea.vmem [#allocation1], 17
        %2416 = vst [vmem:[%s2415] ss:$2 sm:$0xff] %v2389
        %s2417 = scalar_lea.vmem [#allocation1], 32
        %2418 = vst [vmem:[%s2417] ss:$2 sm:$0xff] %v2390
        %s2419 = scalar_lea.vmem [#allocation1], 33
        %2420 = vst [vmem:[%s2419] ss:$2 sm:$0xff] %v2391
        %v2421 = vld.sshfl [vmem:[#allocation1] sm:$0xff pattern:$0x75316420]
        %v2422 = vld.sshfl [vmem:[#allocation1 + $0x10] sm:$0xff pattern:$0x75316420]
        %v2423 = vld.sshfl [vmem:[#allocation1 + $0x20] sm:$0xff pattern:$0x75316420]
        %2433 = vst [vmem:[#allocation1] ss:$2 sm:$0xff] %v2398
        %s2434 = scalar_lea.vmem [#allocation1], 1
        %2435 = vst [vmem:[%s2434] ss:$2 sm:$0xff] %v2399
        %s2436 = scalar_lea.vmem [#allocation1], 16
        %2437 = vst [vmem:[%s2436] ss:$2 sm:$0xff] %v2400
        %s2438 = scalar_lea.vmem [#allocation1], 17
        %2439 = vst [vmem:[%s2438] ss:$2 sm:$0xff] %v2401
        %s2440 = scalar_lea.vmem [#allocation1], 32
        %2441 = vst [vmem:[%s2440] ss:$2 sm:$0xff] %v2402
        %s2442 = scalar_lea.vmem [#allocation1], 33
        %2443 = vst [vmem:[%s2442] ss:$2 sm:$0xff] %v2403
        %v2444 = vld.sshfl [vmem:[#allocation1] sm:$0xff pattern:$0x75316420]
        %v2445 = vld.sshfl [vmem:[#allocation1 + $0x10] sm:$0xff pattern:$0x75316420]
        %v2446 = vld.sshfl [vmem:[#allocation1 + $0x20] sm:$0xff pattern:$0x75316420]
        %v2450 = vpack.c.bf16 %v2422, %v2421
        %v2451 = vpack.c.bf16 %v2444, %v2423
        %v2452 = vpack.c.bf16 %v2446, %v2445
        %v2453 = vpack.c.bf16 %v2158, %v2157
        %v2454 = vpack.c.bf16 %v2160, %v2159
        %v2455 = vperm.slane %v2179, 0
        %v2457 = vsel %vm499, %v2450, 0
        %v2460 = vsel %vm499, %v2451, 0
        %v2463 = vsel %vm499, %v2452, 0
        %2465 = vmatpush.bf16.msra.mxu0 0
        %2466 = vmatpush.bf16.msra.mxu0 0
        %2467 = vmatpush.bf16.msra.mxu0 0
        %2468 = vmatpush.bf16.msra.mxu0 0
        %2469 = vmatpush.bf16.msra.mxu0 0
        %2470 = vmatpush.bf16.msra.mxu0 0
        %2471 = vmatpush.bf16.msra.mxu0 %v2454
        %2472 = vmatpush.bf16.msra.mxu0 %v2453
        %2473 = vmatmul.bf16.gmra.mxu0 %v2457
        %v2474 = vpop.f32.mrf.mxu0
        %v2475 = vadd.f32 %v2455, %v2474
        %v2476 = vpop.f32.mrf.mxu0
        %v2477 = vadd.f32 %v2455, %v2476
        %2478 = vmatmul.bf16.gmra.mxu0 %v2460
        %v2479 = vpop.f32.mrf.mxu0
        %v2480 = vadd.f32 %v2455, %v2479
        %v2481 = vpop.f32.mrf.mxu0
        %v2482 = vadd.f32 %v2455, %v2481
        %2483 = vmatmul.bf16.gmra.mxu0 %v2463
        %v2484 = vpop.f32.mrf.mxu0
        %v2485 = vadd.f32 %v2455, %v2484
        %v2486 = vpop.f32.mrf.mxu0
        %v2487 = vadd.f32 %v2455, %v2486
        %2488 = vdwg.mxu0
        %v2492 = vrot.slane %v2475, 4
        %v2493 = vrot.slane %v2477, 4
        %v2494 = vrot.slane %v2480, 4
        %2495 = vst [vmem:[#allocation1] ss:$2 sm:$0xff] %v2475
        %s2496 = scalar_lea.vmem [#allocation1], 1
        %2497 = vst [vmem:[%s2496] ss:$2 sm:$0xff] %v2492
        %s2498 = scalar_lea.vmem [#allocation1], 16
        %2499 = vst [vmem:[%s2498] ss:$2 sm:$0xff] %v2477
        %v2500 = vld.sshfl [vmem:[#allocation1] sm:$0xff pattern:$0x75316420]
        %v2501 = vld.sshfl [vmem:[#allocation1 + $0x10] sm:$0xff pattern:$0x75316420]
        %s2502 = scalar_lea.vmem [#allocation1], 32
        %2503 = vst [vmem:[%s2502] ss:$2 sm:$0xff] %v2493
        %s2504 = scalar_lea.vmem [#allocation1], 33
        %2505 = vst [vmem:[%s2504] ss:$2 sm:$0xff] %v2480
        %s2506 = scalar_lea.vmem [#allocation1], 48
        %2507 = vst [vmem:[%s2506] ss:$2 sm:$0xff] %v2494
        %v2508 = vld.sshfl [vmem:[#allocation1 + $0x20] sm:$0xff pattern:$0x75316420]
        %v2509 = vld.sshfl [vmem:[#allocation1 + $0x30] sm:$0xff pattern:$0x75316420]
        %v2514 = vpack.c.bf16 %v2500, %v2500
        %v2515 = vpack.c.bf16 %v2501, %v2501
        %v2516 = vpack.c.bf16 %v2508, %v2508
        %v2517 = vpack.c.bf16 %v2509, %v2509
        %v2521 = vrot.slane %v2482, 4
        %v2522 = vrot.slane %v2485, 4
        %v2523 = vrot.slane %v2487, 4
        %2524 = vst [vmem:[#allocation1] ss:$2 sm:$0xff] %v2482
        %s2525 = scalar_lea.vmem [#allocation1], 1
        %2526 = vst [vmem:[%s2525] ss:$2 sm:$0xff] %v2521
        %s2527 = scalar_lea.vmem [#allocation1], 16
        %2528 = vst [vmem:[%s2527] ss:$2 sm:$0xff] %v2485
        %v2529 = vld.sshfl [vmem:[#allocation1] sm:$0xff pattern:$0x75316420]
        %v2530 = vld.sshfl [vmem:[#allocation1 + $0x10] sm:$0xff pattern:$0x75316420]
        %s2531 = scalar_lea.vmem [#allocation1], 32
        %2532 = vst [vmem:[%s2531] ss:$2 sm:$0xff] %v2522
        %s2533 = scalar_lea.vmem [#allocation1], 33
        %2534 = vst [vmem:[%s2533] ss:$2 sm:$0xff] %v2487
        %s2535 = scalar_lea.vmem [#allocation1], 48
        %2536 = vst [vmem:[%s2535] ss:$2 sm:$0xff] %v2523
        %v2537 = vld.sshfl [vmem:[#allocation1 + $0x20] sm:$0xff pattern:$0x75316420]
        %v2538 = vld.sshfl [vmem:[#allocation1 + $0x30] sm:$0xff pattern:$0x75316420]
        %v2543 = vpack.c.bf16 %v2529, %v2529
        %v2544 = vpack.c.bf16 %v2530, %v2530
        %v2545 = vpack.c.bf16 %v2537, %v2537
        %v2546 = vpack.c.bf16 %v2538, %v2538
        %2547 = vst [vmem:[#allocation1] ss:$2 sm:$0xff] %v2482
        %s2548 = scalar_lea.vmem [#allocation1], 1
        %2549 = vst [vmem:[%s2548] ss:$2 sm:$0xff] %v2521
        %s2550 = scalar_lea.vmem [#allocation1], 16
        %2551 = vst [vmem:[%s2550] ss:$2 sm:$0xff] %v2485
        %v2552 = vld.sshfl [vmem:[#allocation1] sm:$0xff pattern:$0x75316420]
        %v2553 = vld.sshfl [vmem:[#allocation1 + $0x10] sm:$0xff pattern:$0x75316420]
        %s2554 = scalar_lea.vmem [#allocation1], 32
        %2555 = vst [vmem:[%s2554] ss:$2 sm:$0xff] %v2522
        %s2556 = scalar_lea.vmem [#allocation1], 33
        %2557 = vst [vmem:[%s2556] ss:$2 sm:$0xff] %v2487
        %s2558 = scalar_lea.vmem [#allocation1], 48
        %2559 = vst [vmem:[%s2558] ss:$2 sm:$0xff] %v2523
        %v2560 = vld.sshfl [vmem:[#allocation1 + $0x20] sm:$0xff pattern:$0x75316420]
        %v2561 = vld.sshfl [vmem:[#allocation1 + $0x30] sm:$0xff pattern:$0x75316420]
        %v2566 = vpack.c.bf16 %v2552, %v2552
        %v2567 = vpack.c.bf16 %v2553, %v2553
        %v2568 = vpack.c.bf16 %v2560, %v2560
        %v2569 = vpack.c.bf16 %v2561, %v2561
        %v2572 = vunpack.c.l.b16 %v2514
        %v2573 = vunpack.c.l.b16 %v2515
        %v2574 = vpack.c.b16 %v2573, %v2572
        %v2577 = vunpack.c.l.b16 %v2543
        %v2578 = vunpack.c.l.b16 %v2544
        %v2579 = vpack.c.b16 %v2578, %v2577
        %2580 = vrot.lane.b32.xlu0 %v2579, 96
        %v2581 = vpop.permute.xlu0 %2580
        %v2583 = vsel %vm312, %v2574, 0
        %v2586 = vsel %vm312, %v2581, 0
        %2588 = vmatpush.bf16.xpose.msra.mxu0 0
        %2589 = vmatpush.bf16.xpose.msra.mxu0 0
        %2590 = vmatpush.bf16.xpose.msra.mxu0 0
        %2591 = vmatpush.bf16.xpose.msra.mxu0 0
        %2592 = vmatpush.bf16.xpose.msra.mxu0 0
        %2593 = vmatpush.bf16.xpose.msra.mxu0 0
        %2594 = vmatpush.bf16.xpose.msra.mxu0 0
        %2595 = vmatpush.bf16.xpose.msra.mxu0 %v2586
        %2596 = vmatmul.bf16.gmra.mxu0 %v2583
        %v2597 = vpop.f32.mrf.mxu0
        %v2598 = vadd.f32 0.0, %v2597
        %v2599 = vpop.f32.mrf.mxu0
        %v2600 = vadd.f32 0.0, %v2599
        %2601 = vdwg.mxu0
        %v2604 = vunpack.c.l.b16 %v2516
        %v2605 = vunpack.c.l.b16 %v2517
        %v2606 = vpack.c.b16 %v2605, %v2604
        %v2609 = vunpack.c.l.b16 %v2545
        %v2610 = vunpack.c.l.b16 %v2546
        %v2611 = vpack.c.b16 %v2610, %v2609
        %2612 = vrot.lane.b32.xlu0 %v2611, 96
        %v2613 = vpop.permute.xlu0 %2612
        %v2615 = vsel %vm312, %v2606, 0
        %v2618 = vsel %vm312, %v2613, 0
        %2620 = vmatpush.bf16.xpose.msra.mxu0 0
        %2621 = vmatpush.bf16.xpose.msra.mxu0 0
        %2622 = vmatpush.bf16.xpose.msra.mxu0 0
        %2623 = vmatpush.bf16.xpose.msra.mxu0 0
        %2624 = vmatpush.bf16.xpose.msra.mxu0 0
        %2625 = vmatpush.bf16.xpose.msra.mxu0 0
        %2626 = vmatpush.bf16.xpose.msra.mxu0 0
        %2627 = vmatpush.bf16.xpose.msra.mxu0 %v2618
        %2628 = vmatmul.bf16.gmra.mxu0 %v2615
        %v2629 = vpop.f32.mrf.mxu0
        %v2630 = vadd.f32 0.0, %v2629
        %v2631 = vpop.f32.mrf.mxu0
        %v2632 = vadd.f32 0.0, %v2631
        %2633 = vdwg.mxu0
        %v2634 = vmul.f32 %v2598, 0.35355338
        %v2635 = vmul.f32 %v2600, 0.35355338
        %v2636 = vmul.f32 %v2630, 0.35355338
        %v2637 = vmul.f32 %v2632, 0.35355338
        %v2638 = vsel %vm1125, %v2634, -1e+30
        %v2639 = vsel %vm1125, %v2635, -1e+30
        %v2640 = vsel %vm1125, %v2636, -1e+30
        %v2641 = vsel %vm1125, %v2637, -1e+30
        %v2642 = vsel %vm1130, %v2638, -inf
        %2643 = vmax.xlane.f32.xlu0 %v2642
        %v2644 = vpop.xlane.xlu0 %2643
        %v2645 = vsel %vm1134, %v2639, -inf
        %2646 = vmax.xlane.f32.xlu0 %v2645
        %v2647 = vpop.xlane.xlu0 %2646
        %v2648 = vsel %vm1130, %v2640, -inf
        %2649 = vmax.xlane.f32.xlu0 %v2648
        %v2650 = vpop.xlane.xlu0 %2649
        %v2651 = vsel %vm1134, %v2641, -inf
        %2652 = vmax.xlane.f32.xlu0 %v2651
        %v2653 = vpop.xlane.xlu0 %2652
        %v2654 = vsub.f32 %v2638, %v2644
        %v2655 = vsub.f32 %v2639, %v2647
        %v2656 = vsub.f32 %v2640, %v2650
        %v2657 = vsub.f32 %v2641, %v2653
        %v2658 = vmul.f32 %v2654, 1.442695
        %v2659 = vpow.pop %v2658
        %v2660 = vmul.f32 %v2655, 1.442695
        %v2661 = vpow.pop %v2660
        %v2662 = vmul.f32 %v2656, 1.442695
        %v2663 = vpow.pop %v2662
        %v2664 = vmul.f32 %v2657, 1.442695
        %v2665 = vpow.pop %v2664
        %v2666 = vsel %vm1130, %v2659, 0.0
        %2667 = vadd.xlane.f32.xlu0 %v2666
        %v2668 = vpop.xlane.xlu0 %2667
        %v2669 = vsel %vm1134, %v2661, 0.0
        %2670 = vadd.xlane.f32.xlu0 %v2669
        %v2671 = vpop.xlane.xlu0 %2670
        %v2672 = vsel %vm1130, %v2663, 0.0
        %2673 = vadd.xlane.f32.xlu0 %v2672
        %v2674 = vpop.xlane.xlu0 %2673
        %v2675 = vsel %vm1134, %v2665, 0.0
        %2676 = vadd.xlane.f32.xlu0 %v2675
        %v2677 = vpop.xlane.xlu0 %2676
        %v2678 = vrcp.pop %v2668
        %v2679 = vrcp.pop %v2671
        %v2680 = vrcp.pop %v2674
        %v2681 = vrcp.pop %v2677
        %v2682 = vmul.f32 %v2659, %v2678
        %v2683 = vmul.f32 %v2661, %v2679
        %v2684 = vmul.f32 %v2663, %v2680
        %v2685 = vmul.f32 %v2665, %v2681
        %v2686 = vpack.c.bf16 %v2682, %v2682
        %v2687 = vpack.c.bf16 %v2683, %v2683
        %v2688 = vpack.c.bf16 %v2684, %v2684
        %v2689 = vpack.c.bf16 %v2685, %v2685
        %v2692 = vunpack.c.l.b16 %v2686
        %v2693 = vunpack.c.l.b16 %v2687
        %v2694 = vpack.c.b16 %v2693, %v2692
        %v2697 = vunpack.c.l.b16 %v2566
        %v2698 = vunpack.c.l.b16 %v2567
        %v2699 = vpack.c.b16 %v2698, %v2697
        %2700 = vrot.lane.b32.xlu0 %v2699, 64
        %v2701 = vpop.permute.xlu0 %2700
        %v2703 = vsel %vm1130, %v2694, 0
        %v2706 = vsel %vm1195, %v2701, 0
        %2708 = vmatpush.bf16.msra.mxu0 0
        %2709 = vmatpush.bf16.msra.mxu0 0
        %2710 = vmatpush.bf16.msra.mxu0 0
        %2711 = vmatpush.bf16.msra.mxu0 0
        %2712 = vmatpush.bf16.msra.mxu0 0
        %2713 = vmatpush.bf16.msra.mxu0 0
        %2714 = vmatpush.bf16.msra.mxu0 0
        %2715 = vmatpush.bf16.msra.mxu0 %v2706
        %2716 = vmatmul.bf16.gmra.mxu0 %v2703
        %v2717 = vpop.f32.mrf.mxu0
        %v2718 = vadd.f32 0.0, %v2717
        %v2719 = vpop.f32.mrf.mxu0
        %v2720 = vadd.f32 0.0, %v2719
        %2721 = vdwg.mxu0
        %v2724 = vunpack.c.l.b16 %v2688
        %v2725 = vunpack.c.l.b16 %v2689
        %v2726 = vpack.c.b16 %v2725, %v2724
        %v2729 = vunpack.c.l.b16 %v2568
        %v2730 = vunpack.c.l.b16 %v2569
        %v2731 = vpack.c.b16 %v2730, %v2729
        %2732 = vrot.lane.b32.xlu0 %v2731, 64
        %v2733 = vpop.permute.xlu0 %2732
        %v2735 = vsel %vm1130, %v2726, 0
        %v2738 = vsel %vm1195, %v2733, 0
        %2740 = vmatpush.bf16.msra.mxu0 0
        %2741 = vmatpush.bf16.msra.mxu0 0
        %2742 = vmatpush.bf16.msra.mxu0 0
        %2743 = vmatpush.bf16.msra.mxu0 0
        %2744 = vmatpush.bf16.msra.mxu0 0
        %2745 = vmatpush.bf16.msra.mxu0 0
        %2746 = vmatpush.bf16.msra.mxu0 0
        %2747 = vmatpush.bf16.msra.mxu0 %v2738
        %2748 = vmatmul.bf16.gmra.mxu0 %v2735
        %v2749 = vpop.f32.mrf.mxu0
        %v2750 = vadd.f32 0.0, %v2749
        %v2751 = vpop.f32.mrf.mxu0
        %v2752 = vadd.f32 0.0, %v2751
        %2753 = vdwg.mxu0
        %2754 = vrot.lane.b32.xlu0 %v2574, 120
        %v2755 = vpop.permute.xlu0 %2754
        %2756 = vrot.lane.b32.xlu0 %v2579, 88
        %v2757 = vpop.permute.xlu0 %2756
        %v2759 = vsel %vm312, %v2755, 0
        %v2762 = vsel %vm312, %v2757, 0
        %2764 = vmatpush.bf16.xpose.msra.mxu0 0
        %2765 = vmatpush.bf16.xpose.msra.mxu0 0
        %2766 = vmatpush.bf16.xpose.msra.mxu0 0
        %2767 = vmatpush.bf16.xpose.msra.mxu0 0
        %2768 = vmatpush.bf16.xpose.msra.mxu0 0
        %2769 = vmatpush.bf16.xpose.msra.mxu0 0
        %2770 = vmatpush.bf16.xpose.msra.mxu0 0
        %2771 = vmatpush.bf16.xpose.msra.mxu0 %v2762
        %2772 = vmatmul.bf16.gmra.mxu0 %v2759
        %v2773 = vpop.f32.mrf.mxu0
        %v2774 = vadd.f32 0.0, %v2773
        %v2775 = vpop.f32.mrf.mxu0
        %v2776 = vadd.f32 0.0, %v2775
        %2777 = vdwg.mxu0
        %2778 = vrot.lane.b32.xlu0 %v2606, 120
        %v2779 = vpop.permute.xlu0 %2778
        %2780 = vrot.lane.b32.xlu0 %v2611, 88
        %v2781 = vpop.permute.xlu0 %2780
        %v2783 = vsel %vm312, %v2779, 0
        %v2786 = vsel %vm312, %v2781, 0
        %2788 = vmatpush.bf16.xpose.msra.mxu0 0
        %2789 = vmatpush.bf16.xpose.msra.mxu0 0
        %2790 = vmatpush.bf16.xpose.msra.mxu0 0
        %2791 = vmatpush.bf16.xpose.msra.mxu0 0
        %2792 = vmatpush.bf16.xpose.msra.mxu0 0
        %2793 = vmatpush.bf16.xpose.msra.mxu0 0
        %2794 = vmatpush.bf16.xpose.msra.mxu0 0
        %2795 = vmatpush.bf16.xpose.msra.mxu0 %v2786
        %2796 = vmatmul.bf16.gmra.mxu0 %v2783
        %v2797 = vpop.f32.mrf.mxu0
        %v2798 = vadd.f32 0.0, %v2797
        %v2799 = vpop.f32.mrf.mxu0
        %v2800 = vadd.f32 0.0, %v2799
        %2801 = vdwg.mxu0
        %v2802 = vmul.f32 %v2774, 0.35355338
        %v2803 = vmul.f32 %v2776, 0.35355338
        %v2804 = vmul.f32 %v2798, 0.35355338
        %v2805 = vmul.f32 %v2800, 0.35355338
        %v2806 = vsel %vm1125, %v2802, -1e+30
        %v2807 = vsel %vm1125, %v2803, -1e+30
        %v2808 = vsel %vm1125, %v2804, -1e+30
        %v2809 = vsel %vm1125, %v2805, -1e+30
        %v2810 = vsel %vm1130, %v2806, -inf
        %2811 = vmax.xlane.f32.xlu0 %v2810
        %v2812 = vpop.xlane.xlu0 %2811
        %v2813 = vsel %vm1134, %v2807, -inf
        %2814 = vmax.xlane.f32.xlu0 %v2813
        %v2815 = vpop.xlane.xlu0 %2814
        %v2816 = vsel %vm1130, %v2808, -inf
        %2817 = vmax.xlane.f32.xlu0 %v2816
        %v2818 = vpop.xlane.xlu0 %2817
        %v2819 = vsel %vm1134, %v2809, -inf
        %2820 = vmax.xlane.f32.xlu0 %v2819
        %v2821 = vpop.xlane.xlu0 %2820
        %v2822 = vsub.f32 %v2806, %v2812
        %v2823 = vsub.f32 %v2807, %v2815
        %v2824 = vsub.f32 %v2808, %v2818
        %v2825 = vsub.f32 %v2809, %v2821
        %v2826 = vmul.f32 %v2822, 1.442695
        %v2827 = vpow.pop %v2826
        %v2828 = vmul.f32 %v2823, 1.442695
        %v2829 = vpow.pop %v2828
        %v2830 = vmul.f32 %v2824, 1.442695
        %v2831 = vpow.pop %v2830
        %v2832 = vmul.f32 %v2825, 1.442695
        %v2833 = vpow.pop %v2832
        %v2834 = vsel %vm1130, %v2827, 0.0
        %2835 = vadd.xlane.f32.xlu0 %v2834
        %v2836 = vpop.xlane.xlu0 %2835
        %v2837 = vsel %vm1134, %v2829, 0.0
        %2838 = vadd.xlane.f32.xlu0 %v2837
        %v2839 = vpop.xlane.xlu0 %2838
        %v2840 = vsel %vm1130, %v2831, 0.0
        %2841 = vadd.xlane.f32.xlu0 %v2840
        %v2842 = vpop.xlane.xlu0 %2841
        %v2843 = vsel %vm1134, %v2833, 0.0
        %2844 = vadd.xlane.f32.xlu0 %v2843
        %v2845 = vpop.xlane.xlu0 %2844
        %v2846 = vrcp.pop %v2836
        %v2847 = vrcp.pop %v2839
        %v2848 = vrcp.pop %v2842
        %v2849 = vrcp.pop %v2845
        %v2850 = vmul.f32 %v2827, %v2846
        %v2851 = vmul.f32 %v2829, %v2847
        %v2852 = vmul.f32 %v2831, %v2848
        %v2853 = vmul.f32 %v2833, %v2849
        %v2854 = vpack.c.bf16 %v2850, %v2850
        %v2855 = vpack.c.bf16 %v2851, %v2851
        %v2856 = vpack.c.bf16 %v2852, %v2852
        %v2857 = vpack.c.bf16 %v2853, %v2853
        %v2860 = vunpack.c.l.b16 %v2854
        %v2861 = vunpack.c.l.b16 %v2855
        %v2862 = vpack.c.b16 %v2861, %v2860
        %2863 = vrot.lane.b32.xlu0 %v2699, 56
        %v2864 = vpop.permute.xlu0 %2863
        %v2866 = vsel %vm1130, %v2862, 0
        %v2869 = vsel %vm1195, %v2864, 0
        %2871 = vmatpush.bf16.msra.mxu0 0
        %2872 = vmatpush.bf16.msra.mxu0 0
        %2873 = vmatpush.bf16.msra.mxu0 0
        %2874 = vmatpush.bf16.msra.mxu0 0
        %2875 = vmatpush.bf16.msra.mxu0 0
        %2876 = vmatpush.bf16.msra.mxu0 0
        %2877 = vmatpush.bf16.msra.mxu0 0
        %2878 = vmatpush.bf16.msra.mxu0 %v2869
        %2879 = vmatmul.bf16.gmra.mxu0 %v2866
        %v2880 = vpop.f32.mrf.mxu0
        %v2881 = vadd.f32 0.0, %v2880
        %v2882 = vpop.f32.mrf.mxu0
        %v2883 = vadd.f32 0.0, %v2882
        %2884 = vdwg.mxu0
        %v2887 = vunpack.c.l.b16 %v2856
        %v2888 = vunpack.c.l.b16 %v2857
        %v2889 = vpack.c.b16 %v2888, %v2887
        %2890 = vrot.lane.b32.xlu0 %v2731, 56
        %v2891 = vpop.permute.xlu0 %2890
        %v2893 = vsel %vm1130, %v2889, 0
        %v2896 = vsel %vm1195, %v2891, 0
        %2898 = vmatpush.bf16.msra.mxu0 0
        %2899 = vmatpush.bf16.msra.mxu0 0
        %2900 = vmatpush.bf16.msra.mxu0 0
        %2901 = vmatpush.bf16.msra.mxu0 0
        %2902 = vmatpush.bf16.msra.mxu0 0
        %2903 = vmatpush.bf16.msra.mxu0 0
        %2904 = vmatpush.bf16.msra.mxu0 0
        %2905 = vmatpush.bf16.msra.mxu0 %v2896
        %2906 = vmatmul.bf16.gmra.mxu0 %v2893
        %v2907 = vpop.f32.mrf.mxu0
        %v2908 = vadd.f32 0.0, %v2907
        %v2909 = vpop.f32.mrf.mxu0
        %v2910 = vadd.f32 0.0, %v2909
        %2911 = vdwg.mxu0
        %2912 = vrot.lane.b32.xlu0 %v2574, 112
        %v2913 = vpop.permute.xlu0 %2912
        %2914 = vrot.lane.b32.xlu0 %v2579, 80
        %v2915 = vpop.permute.xlu0 %2914
        %v2917 = vsel %vm312, %v2913, 0
        %v2920 = vsel %vm312, %v2915, 0
        %2922 = vmatpush.bf16.xpose.msra.mxu0 0
        %2923 = vmatpush.bf16.xpose.msra.mxu0 0
        %2924 = vmatpush.bf16.xpose.msra.mxu0 0
        %2925 = vmatpush.bf16.xpose.msra.mxu0 0
        %2926 = vmatpush.bf16.xpose.msra.mxu0 0
        %2927 = vmatpush.bf16.xpose.msra.mxu0 0
        %2928 = vmatpush.bf16.xpose.msra.mxu0 0
        %2929 = vmatpush.bf16.xpose.msra.mxu0 %v2920
        %2930 = vmatmul.bf16.gmra.mxu0 %v2917
        %v2931 = vpop.f32.mrf.mxu0
        %v2932 = vadd.f32 0.0, %v2931
        %v2933 = vpop.f32.mrf.mxu0
        %v2934 = vadd.f32 0.0, %v2933
        %2935 = vdwg.mxu0
        %2936 = vrot.lane.b32.xlu0 %v2606, 112
        %v2937 = vpop.permute.xlu0 %2936
        %2938 = vrot.lane.b32.xlu0 %v2611, 80
        %v2939 = vpop.permute.xlu0 %2938
        %v2941 = vsel %vm312, %v2937, 0
        %v2944 = vsel %vm312, %v2939, 0
        %2946 = vmatpush.bf16.xpose.msra.mxu0 0
        %2947 = vmatpush.bf16.xpose.msra.mxu0 0
        %2948 = vmatpush.bf16.xpose.msra.mxu0 0
        %2949 = vmatpush.bf16.xpose.msra.mxu0 0
        %2950 = vmatpush.bf16.xpose.msra.mxu0 0
        %2951 = vmatpush.bf16.xpose.msra.mxu0 0
        %2952 = vmatpush.bf16.xpose.msra.mxu0 0
        %2953 = vmatpush.bf16.xpose.msra.mxu0 %v2944
        %2954 = vmatmul.bf16.gmra.mxu0 %v2941
        %v2955 = vpop.f32.mrf.mxu0
        %v2956 = vadd.f32 0.0, %v2955
        %v2957 = vpop.f32.mrf.mxu0
        %v2958 = vadd.f32 0.0, %v2957
        %2959 = vdwg.mxu0
        %v2960 = vmul.f32 %v2932, 0.35355338
        %v2961 = vmul.f32 %v2934, 0.35355338
        %v2962 = vmul.f32 %v2956, 0.35355338
        %v2963 = vmul.f32 %v2958, 0.35355338
        %v2964 = vsel %vm1125, %v2960, -1e+30
        %v2965 = vsel %vm1125, %v2961, -1e+30
        %v2966 = vsel %vm1125, %v2962, -1e+30
        %v2967 = vsel %vm1125, %v2963, -1e+30
        %v2968 = vsel %vm1130, %v2964, -inf
        %2969 = vmax.xlane.f32.xlu0 %v2968
        %v2970 = vpop.xlane.xlu0 %2969
        %v2971 = vsel %vm1134, %v2965, -inf
        %2972 = vmax.xlane.f32.xlu0 %v2971
        %v2973 = vpop.xlane.xlu0 %2972
        %v2974 = vsel %vm1130, %v2966, -inf
        %2975 = vmax.xlane.f32.xlu0 %v2974
        %v2976 = vpop.xlane.xlu0 %2975
        %v2977 = vsel %vm1134, %v2967, -inf
        %2978 = vmax.xlane.f32.xlu0 %v2977
        %v2979 = vpop.xlane.xlu0 %2978
        %v2980 = vsub.f32 %v2964, %v2970
        %v2981 = vsub.f32 %v2965, %v2973
        %v2982 = vsub.f32 %v2966, %v2976
        %v2983 = vsub.f32 %v2967, %v2979
        %v2984 = vmul.f32 %v2980, 1.442695
        %v2985 = vpow.pop %v2984
        %v2986 = vmul.f32 %v2981, 1.442695
        %v2987 = vpow.pop %v2986
        %v2988 = vmul.f32 %v2982, 1.442695
        %v2989 = vpow.pop %v2988
        %v2990 = vmul.f32 %v2983, 1.442695
        %v2991 = vpow.pop %v2990
        %v2992 = vsel %vm1130, %v2985, 0.0
        %2993 = vadd.xlane.f32.xlu0 %v2992
        %v2994 = vpop.xlane.xlu0 %2993
        %v2995 = vsel %vm1134, %v2987, 0.0
        %2996 = vadd.xlane.f32.xlu0 %v2995
        %v2997 = vpop.xlane.xlu0 %2996
        %v2998 = vsel %vm1130, %v2989, 0.0
        %2999 = vadd.xlane.f32.xlu0 %v2998
        %v3000 = vpop.xlane.xlu0 %2999
        %v3001 = vsel %vm1134, %v2991, 0.0
        %3002 = vadd.xlane.f32.xlu0 %v3001
        %v3003 = vpop.xlane.xlu0 %3002
        %v3004 = vrcp.pop %v2994
        %v3005 = vrcp.pop %v2997
        %v3006 = vrcp.pop %v3000
        %v3007 = vrcp.pop %v3003
        %v3008 = vmul.f32 %v2985, %v3004
        %v3009 = vmul.f32 %v2987, %v3005
        %v3010 = vmul.f32 %v2989, %v3006
        %v3011 = vmul.f32 %v2991, %v3007
        %v3012 = vpack.c.bf16 %v3008, %v3008
        %v3013 = vpack.c.bf16 %v3009, %v3009
        %v3014 = vpack.c.bf16 %v3010, %v3010
        %v3015 = vpack.c.bf16 %v3011, %v3011
        %v3018 = vunpack.c.l.b16 %v3012
        %v3019 = vunpack.c.l.b16 %v3013
        %v3020 = vpack.c.b16 %v3019, %v3018
        %3021 = vrot.lane.b32.xlu0 %v2699, 48
        %v3022 = vpop.permute.xlu0 %3021
        %v3024 = vsel %vm1130, %v3020, 0
        %v3027 = vsel %vm1195, %v3022, 0
        %3029 = vmatpush.bf16.msra.mxu0 0
        %3030 = vmatpush.bf16.msra.mxu0 0
        %3031 = vmatpush.bf16.msra.mxu0 0
        %3032 = vmatpush.bf16.msra.mxu0 0
        %3033 = vmatpush.bf16.msra.mxu0 0
        %3034 = vmatpush.bf16.msra.mxu0 0
        %3035 = vmatpush.bf16.msra.mxu0 0
        %3036 = vmatpush.bf16.msra.mxu0 %v3027
        %3037 = vmatmul.bf16.gmra.mxu0 %v3024
        %v3038 = vpop.f32.mrf.mxu0
        %v3039 = vadd.f32 0.0, %v3038
        %v3040 = vpop.f32.mrf.mxu0
        %v3041 = vadd.f32 0.0, %v3040
        %3042 = vdwg.mxu0
        %v3045 = vunpack.c.l.b16 %v3014
        %v3046 = vunpack.c.l.b16 %v3015
        %v3047 = vpack.c.b16 %v3046, %v3045
        %3048 = vrot.lane.b32.xlu0 %v2731, 48
        %v3049 = vpop.permute.xlu0 %3048
        %v3051 = vsel %vm1130, %v3047, 0
        %v3054 = vsel %vm1195, %v3049, 0
        %3056 = vmatpush.bf16.msra.mxu0 0
        %3057 = vmatpush.bf16.msra.mxu0 0
        %3058 = vmatpush.bf16.msra.mxu0 0
        %3059 = vmatpush.bf16.msra.mxu0 0
        %3060 = vmatpush.bf16.msra.mxu0 0
        %3061 = vmatpush.bf16.msra.mxu0 0
        %3062 = vmatpush.bf16.msra.mxu0 0
        %3063 = vmatpush.bf16.msra.mxu0 %v3054
        %3064 = vmatmul.bf16.gmra.mxu0 %v3051
        %v3065 = vpop.f32.mrf.mxu0
        %v3066 = vadd.f32 0.0, %v3065
        %v3067 = vpop.f32.mrf.mxu0
        %v3068 = vadd.f32 0.0, %v3067
        %3069 = vdwg.mxu0
        %3070 = vrot.lane.b32.xlu0 %v2574, 104
        %v3071 = vpop.permute.xlu0 %3070
        %3072 = vrot.lane.b32.xlu0 %v2579, 72
        %v3073 = vpop.permute.xlu0 %3072
        %v3075 = vsel %vm312, %v3071, 0
        %v3078 = vsel %vm312, %v3073, 0
        %3080 = vmatpush.bf16.xpose.msra.mxu0 0
        %3081 = vmatpush.bf16.xpose.msra.mxu0 0
        %3082 = vmatpush.bf16.xpose.msra.mxu0 0
        %3083 = vmatpush.bf16.xpose.msra.mxu0 0
        %3084 = vmatpush.bf16.xpose.msra.mxu0 0
        %3085 = vmatpush.bf16.xpose.msra.mxu0 0
        %3086 = vmatpush.bf16.xpose.msra.mxu0 0
        %3087 = vmatpush.bf16.xpose.msra.mxu0 %v3078
        %3088 = vmatmul.bf16.gmra.mxu0 %v3075
        %v3089 = vpop.f32.mrf.mxu0
        %v3090 = vadd.f32 0.0, %v3089
        %v3091 = vpop.f32.mrf.mxu0
        %v3092 = vadd.f32 0.0, %v3091
        %3093 = vdwg.mxu0
        %3094 = vrot.lane.b32.xlu0 %v2606, 104
        %v3095 = vpop.permute.xlu0 %3094
        %3096 = vrot.lane.b32.xlu0 %v2611, 72
        %v3097 = vpop.permute.xlu0 %3096
        %v3099 = vsel %vm312, %v3095, 0
        %v3102 = vsel %vm312, %v3097, 0
        %3104 = vmatpush.bf16.xpose.msra.mxu0 0
        %3105 = vmatpush.bf16.xpose.msra.mxu0 0
        %3106 = vmatpush.bf16.xpose.msra.mxu0 0
        %3107 = vmatpush.bf16.xpose.msra.mxu0 0
        %3108 = vmatpush.bf16.xpose.msra.mxu0 0
        %3109 = vmatpush.bf16.xpose.msra.mxu0 0
        %3110 = vmatpush.bf16.xpose.msra.mxu0 0
        %3111 = vmatpush.bf16.xpose.msra.mxu0 %v3102
        %3112 = vmatmul.bf16.gmra.mxu0 %v3099
        %v3113 = vpop.f32.mrf.mxu0
        %v3114 = vadd.f32 0.0, %v3113
        %v3115 = vpop.f32.mrf.mxu0
        %v3116 = vadd.f32 0.0, %v3115
        %3117 = vdwg.mxu0
        %v3118 = vmul.f32 %v3090, 0.35355338
        %v3119 = vmul.f32 %v3092, 0.35355338
        %v3120 = vmul.f32 %v3114, 0.35355338
        %v3121 = vmul.f32 %v3116, 0.35355338
        %v3122 = vsel %vm1125, %v3118, -1e+30
        %v3123 = vsel %vm1125, %v3119, -1e+30
        %v3124 = vsel %vm1125, %v3120, -1e+30
        %v3125 = vsel %vm1125, %v3121, -1e+30
        %v3126 = vsel %vm1130, %v3122, -inf
        %3127 = vmax.xlane.f32.xlu0 %v3126
        %v3128 = vpop.xlane.xlu0 %3127
        %v3129 = vsel %vm1134, %v3123, -inf
        %3130 = vmax.xlane.f32.xlu0 %v3129
        %v3131 = vpop.xlane.xlu0 %3130
        %v3132 = vsel %vm1130, %v3124, -inf
        %3133 = vmax.xlane.f32.xlu0 %v3132
        %v3134 = vpop.xlane.xlu0 %3133
        %v3135 = vsel %vm1134, %v3125, -inf
        %3136 = vmax.xlane.f32.xlu0 %v3135
        %v3137 = vpop.xlane.xlu0 %3136
        %v3138 = vsub.f32 %v3122, %v3128
        %v3139 = vsub.f32 %v3123, %v3131
        %v3140 = vsub.f32 %v3124, %v3134
        %v3141 = vsub.f32 %v3125, %v3137
        %v3142 = vmul.f32 %v3138, 1.442695
        %v3143 = vpow.pop %v3142
        %v3144 = vmul.f32 %v3139, 1.442695
        %v3145 = vpow.pop %v3144
        %v3146 = vmul.f32 %v3140, 1.442695
        %v3147 = vpow.pop %v3146
        %v3148 = vmul.f32 %v3141, 1.442695
        %v3149 = vpow.pop %v3148
        %v3150 = vsel %vm1130, %v3143, 0.0
        %3151 = vadd.xlane.f32.xlu0 %v3150
        %v3152 = vpop.xlane.xlu0 %3151
        %v3153 = vsel %vm1134, %v3145, 0.0
        %3154 = vadd.xlane.f32.xlu0 %v3153
        %v3155 = vpop.xlane.xlu0 %3154
        %v3156 = vsel %vm1130, %v3147, 0.0
        %3157 = vadd.xlane.f32.xlu0 %v3156
        %v3158 = vpop.xlane.xlu0 %3157
        %v3159 = vsel %vm1134, %v3149, 0.0
        %3160 = vadd.xlane.f32.xlu0 %v3159
        %v3161 = vpop.xlane.xlu0 %3160
        %v3162 = vrcp.pop %v3152
        %v3163 = vrcp.pop %v3155
        %v3164 = vrcp.pop %v3158
        %v3165 = vrcp.pop %v3161
        %v3166 = vmul.f32 %v3143, %v3162
        %v3167 = vmul.f32 %v3145, %v3163
        %v3168 = vmul.f32 %v3147, %v3164
        %v3169 = vmul.f32 %v3149, %v3165
        %v3170 = vpack.c.bf16 %v3166, %v3166
        %v3171 = vpack.c.bf16 %v3167, %v3167
        %v3172 = vpack.c.bf16 %v3168, %v3168
        %v3173 = vpack.c.bf16 %v3169, %v3169
        %v3176 = vunpack.c.l.b16 %v3170
        %v3177 = vunpack.c.l.b16 %v3171
        %v3178 = vpack.c.b16 %v3177, %v3176
        %3179 = vrot.lane.b32.xlu0 %v2699, 40
        %v3180 = vpop.permute.xlu0 %3179
        %v3182 = vsel %vm1130, %v3178, 0
        %v3185 = vsel %vm1195, %v3180, 0
        %3187 = vmatpush.bf16.msra.mxu0 0
        %3188 = vmatpush.bf16.msra.mxu0 0
        %3189 = vmatpush.bf16.msra.mxu0 0
        %3190 = vmatpush.bf16.msra.mxu0 0
        %3191 = vmatpush.bf16.msra.mxu0 0
        %3192 = vmatpush.bf16.msra.mxu0 0
        %3193 = vmatpush.bf16.msra.mxu0 0
        %3194 = vmatpush.bf16.msra.mxu0 %v3185
        %3195 = vmatmul.bf16.gmra.mxu0 %v3182
        %v3196 = vpop.f32.mrf.mxu0
        %v3197 = vadd.f32 0.0, %v3196
        %v3198 = vpop.f32.mrf.mxu0
        %v3199 = vadd.f32 0.0, %v3198
        %3200 = vdwg.mxu0
        %v3203 = vunpack.c.l.b16 %v3172
        %v3204 = vunpack.c.l.b16 %v3173
        %v3205 = vpack.c.b16 %v3204, %v3203
        %3206 = vrot.lane.b32.xlu0 %v2731, 40
        %v3207 = vpop.permute.xlu0 %3206
        %v3209 = vsel %vm1130, %v3205, 0
        %v3212 = vsel %vm1195, %v3207, 0
        %3214 = vmatpush.bf16.msra.mxu0 0
        %3215 = vmatpush.bf16.msra.mxu0 0
        %3216 = vmatpush.bf16.msra.mxu0 0
        %3217 = vmatpush.bf16.msra.mxu0 0
        %3218 = vmatpush.bf16.msra.mxu0 0
        %3219 = vmatpush.bf16.msra.mxu0 0
        %3220 = vmatpush.bf16.msra.mxu0 0
        %3221 = vmatpush.bf16.msra.mxu0 %v3212
        %3222 = vmatmul.bf16.gmra.mxu0 %v3209
        %v3223 = vpop.f32.mrf.mxu0
        %v3224 = vadd.f32 0.0, %v3223
        %v3225 = vpop.f32.mrf.mxu0
        %v3226 = vadd.f32 0.0, %v3225
        %3227 = vdwg.mxu0
        %3232 = vrot.lane.b32.xlu0 %v2881, 8
        %v3233 = vpop.permute.xlu0 %3232
        %3234 = vrot.lane.b32.xlu0 %v2883, 8
        %v3235 = vpop.permute.xlu0 %3234
        %3236 = vrot.lane.b32.xlu0 %v2908, 8
        %v3237 = vpop.permute.xlu0 %3236
        %3238 = vrot.lane.b32.xlu0 %v2910, 8
        %v3239 = vpop.permute.xlu0 %3238
        %3248 = vrot.lane.b32.xlu0 %v3039, 16
        %v3249 = vpop.permute.xlu0 %3248
        %3250 = vrot.lane.b32.xlu0 %v3041, 16
        %v3251 = vpop.permute.xlu0 %3250
        %3252 = vrot.lane.b32.xlu0 %v3066, 16
        %v3253 = vpop.permute.xlu0 %3252
        %3254 = vrot.lane.b32.xlu0 %v3068, 16
        %v3255 = vpop.permute.xlu0 %3254
        %3264 = vrot.lane.b32.xlu0 %v3197, 24
        %v3265 = vpop.permute.xlu0 %3264
        %3266 = vrot.lane.b32.xlu0 %v3199, 24
        %v3267 = vpop.permute.xlu0 %3266
        %3268 = vrot.lane.b32.xlu0 %v3224, 24
        %v3269 = vpop.permute.xlu0 %3268
        %3270 = vrot.lane.b32.xlu0 %v3226, 24
        %v3271 = vpop.permute.xlu0 %3270
        %v3276 = vsel %vm312, %v2718, %v3233
        %v3277 = vsel %vm312, %v2720, %v3235
        %v3278 = vsel %vm312, %v2750, %v3237
        %v3279 = vsel %vm312, %v2752, %v3239
        %v3280 = vsel %vm1771, %v3276, %v3249
        %v3281 = vsel %vm1771, %v3277, %v3251
        %v3282 = vsel %vm1771, %v3278, %v3253
        %v3283 = vsel %vm1771, %v3279, %v3255
        %v3284 = vsel %vm1776, %v3280, %v3265
        %v3285 = vsel %vm1776, %v3281, %v3267
        %v3286 = vsel %vm1776, %v3282, %v3269
        %v3287 = vsel %vm1776, %v3283, %v3271
        %v3292 = vrot.slane %v3284, 4
        %v3293 = vrot.slane %v3286, 4
        %3294 = vst [vmem:[#allocation1] ss:$2 sm:$0xff] %v3284
        %s3295 = scalar_lea.vmem [#allocation1], 1
        %3296 = vst [vmem:[%s3295] ss:$2 sm:$0xff] %v3292
        %s3297 = scalar_lea.vmem [#allocation1], 16
        %3298 = vst [vmem:[%s3297] ss:$2 sm:$0xff] %v3285
        %s3299 = scalar_lea.vmem [#allocation1], 17
        %3300 = vst [vmem:[%s3299] ss:$2 sm:$0xff] %v3286
        %s3301 = scalar_lea.vmem [#allocation1], 32
        %3302 = vst [vmem:[%s3301] ss:$2 sm:$0xff] %v3293
        %s3303 = scalar_lea.vmem [#allocation1], 33
        %3304 = vst [vmem:[%s3303] ss:$2 sm:$0xff] %v3287
        %v3305 = vld.sshfl [vmem:[#allocation1] sm:$0xff pattern:$0x75316420]
        %v3306 = vld.sshfl [vmem:[#allocation1 + $0x10] sm:$0xff pattern:$0x75316420]
        %v3307 = vld.sshfl [vmem:[#allocation1 + $0x20] sm:$0xff pattern:$0x75316420]
        %v3311 = vpack.c.bf16 %v3306, %v3305
        %v3312 = vpack.c.bf16 %v3307, %v3307
        %v3313 = vpack.c.bf16 %v2162, %v2161
        %v3314 = vpack.c.bf16 %v2164, %v2163
        %v3315 = vperm.slane %v2180, 0
        %v3317 = vsel %vm499, %v3311, 0
        %v3320 = vsel %vm499, %v3312, 0
        %3322 = vmatpush.bf16.msra.mxu0 0
        %3323 = vmatpush.bf16.msra.mxu0 0
        %3324 = vmatpush.bf16.msra.mxu0 0
        %3325 = vmatpush.bf16.msra.mxu0 0
        %3326 = vmatpush.bf16.msra.mxu0 0
        %3327 = vmatpush.bf16.msra.mxu0 0
        %3328 = vmatpush.bf16.msra.mxu0 %v3314
        %3329 = vmatpush.bf16.msra.mxu0 %v3313
        %3330 = vmatmul.bf16.gmra.mxu0 %v3317
        %v3331 = vpop.f32.mrf.mxu0
        %v3332 = vadd.f32 %v3315, %v3331
        %v3333 = vpop.f32.mrf.mxu0
        %v3334 = vadd.f32 %v3315, %v3333
        %3335 = vmatmul.bf16.gmra.mxu0 %v3320
        %v3336 = vpop.f32.mrf.mxu0
        %v3337 = vadd.f32 %v3315, %v3336
        %v3338 = vpop.f32.mrf.mxu0
        %3339 = vdwg.mxu0
        %v3343 = vrot.slane %v3332, 4
        %v3344 = vrot.slane %v3334, 4
        %v3345 = vrot.slane %v3337, 4
        %v3349 = vadd.f32 %v2151, %v3332
        %v3350 = vadd.f32 %v2152, %v3343
        %v3351 = vadd.f32 %v2153, %v3334
        %v3352 = vadd.f32 %v2154, %v3344
        %v3353 = vadd.f32 %v2155, %v3337
        %v3354 = vadd.f32 %v2156, %v3345
        %3361 = vst [vmem:[#allocation1] ss:$2 sm:$0xff] %v3349
        %s3362 = scalar_lea.vmem [#allocation1], 1
        %3363 = vst [vmem:[%s3362] ss:$2 sm:$0xff] %v3350
        %s3364 = scalar_lea.vmem [#allocation1], 16
        %3365 = vst [vmem:[%s3364] ss:$2 sm:$0xff] %v3351
        %s3366 = scalar_lea.vmem [#allocation1], 17
        %3367 = vst [vmem:[%s3366] ss:$2 sm:$0xff] %v3352
        %s3368 = scalar_lea.vmem [#allocation1], 32
        %3369 = vst [vmem:[%s3368] ss:$2 sm:$0xff] %v3353
        %s3370 = scalar_lea.vmem [#allocation1], 33
        %3371 = vst [vmem:[%s3370] ss:$2 sm:$0xff] %v3354
        %v3372 = vld.sshfl [vmem:[#allocation1] sm:$0xff pattern:$0x75316420]
        %v3373 = vld.sshfl [vmem:[#allocation1 + $0x10] sm:$0xff pattern:$0x75316420]
        %v3374 = vld.sshfl [vmem:[#allocation1 + $0x20] sm:$0xff pattern:$0x75316420]
        %v3378 = vsel %vm499, %v3372, 0.0
        %3379 = vadd.xlane.f32.xlu0 %v3378
        %v3380 = vpop.xlane.xlu0 %3379
        %v3381 = vsel %vm499, %v3373, 0.0
        %3382 = vadd.xlane.f32.xlu0 %v3381
        %v3383 = vpop.xlane.xlu0 %3382
        %v3384 = vsel %vm499, %v3374, 0.0
        %3385 = vadd.xlane.f32.xlu0 %v3384
        %v3386 = vpop.xlane.xlu0 %3385
        %v3387 = vmul.f32 %v3380, %v515
        %v3388 = vmul.f32 %v3383, %v515
        %v3389 = vmul.f32 %v3386, %v515
        %v3394 = vunpack.c.l.s4 839922192
        %v3395 = vunpack.c.0.s8 %v3394
        %v3396 = vperm.slane %v3387, %v3395
        %v3398 = vunpack.c.l.s4 1985246804
        %v3399 = vunpack.c.0.s8 %v3398
        %v3400 = vperm.slane %v3387, %v3399
        %v3402 = vunpack.c.l.s4 839922192
        %v3403 = vunpack.c.0.s8 %v3402
        %v3404 = vperm.slane %v3388, %v3403
        %v3406 = vunpack.c.l.s4 1985246804
        %v3407 = vunpack.c.0.s8 %v3406
        %v3408 = vperm.slane %v3388, %v3407
        %v3410 = vunpack.c.l.s4 839922192
        %v3411 = vunpack.c.0.s8 %v3410
        %v3412 = vperm.slane %v3389, %v3411
        %v3414 = vunpack.c.l.s4 1985246804
        %v3415 = vunpack.c.0.s8 %v3414
        %v3416 = vperm.slane %v3389, %v3415
        %v3423 = vsub.f32 %v3349, %v3396
        %v3424 = vsub.f32 %v3350, %v3400
        %v3425 = vsub.f32 %v3351, %v3404
        %v3426 = vsub.f32 %v3352, %v3408
        %v3427 = vsub.f32 %v3353, %v3412
        %v3428 = vsub.f32 %v3354, %v3416
        %v3429 = vmul.f32 %v3423, %v3423
        %v3430 = vmul.f32 %v3424, %v3424
        %v3431 = vmul.f32 %v3425, %v3425
        %v3432 = vmul.f32 %v3426, %v3426
        %v3433 = vmul.f32 %v3427, %v3427
        %v3434 = vmul.f32 %v3428, %v3428
        %3441 = vst [vmem:[#allocation1] ss:$2 sm:$0xff] %v3429
        %s3442 = scalar_lea.vmem [#allocation1], 1
        %3443 = vst [vmem:[%s3442] ss:$2 sm:$0xff] %v3430
        %s3444 = scalar_lea.vmem [#allocation1], 16
        %3445 = vst [vmem:[%s3444] ss:$2 sm:$0xff] %v3431
        %s3446 = scalar_lea.vmem [#allocation1], 17
        %3447 = vst [vmem:[%s3446] ss:$2 sm:$0xff] %v3432
        %s3448 = scalar_lea.vmem [#allocation1], 32
        %3449 = vst [vmem:[%s3448] ss:$2 sm:$0xff] %v3433
        %s3450 = scalar_lea.vmem [#allocation1], 33
        %3451 = vst [vmem:[%s3450] ss:$2 sm:$0xff] %v3434
        %v3452 = vld.sshfl [vmem:[#allocation1] sm:$0xff pattern:$0x75316420]
        %v3453 = vld.sshfl [vmem:[#allocation1 + $0x10] sm:$0xff pattern:$0x75316420]
        %v3454 = vld.sshfl [vmem:[#allocation1 + $0x20] sm:$0xff pattern:$0x75316420]
        %v3458 = vsel %vm499, %v3452, 0.0
        %3459 = vadd.xlane.f32.xlu0 %v3458
        %v3460 = vpop.xlane.xlu0 %3459
        %v3461 = vsel %vm499, %v3453, 0.0
        %3462 = vadd.xlane.f32.xlu0 %v3461
        %v3463 = vpop.xlane.xlu0 %3462
        %v3464 = vsel %vm499, %v3454, 0.0
        %3465 = vadd.xlane.f32.xlu0 %v3464
        %v3466 = vpop.xlane.xlu0 %3465
        %v3467 = vmul.f32 %v3460, %v515
        %v3468 = vmul.f32 %v3463, %v515
        %v3469 = vmul.f32 %v3466, %v515
        %v3470 = vadd.f32 %v3467, 1e-05
        %v3471 = vadd.f32 %v3468, 1e-05
        %v3472 = vadd.f32 %v3469, 1e-05
        %v3473 = vrsqrt.pop %v3470
        %v3474 = vmul.f32 %v3473, %v3470
        %v3475 = vmul.f32 %v3474, %v3473
        %v3476 = vmul.f32 0.5, %v3475
        %v3477 = vsub.f32 1.5, %v3476
        %v3478 = vmul.f32 %v3473, %v3477
        %vm3479 = vweird.f32 %v3470
        %vm3480 = vweird.f32 %v3473
        %vm3481 = vmor %vm3479, %vm3480
        %v3482 = vsel %vm3481, %v3473, %v3478
        %v3483 = vrsqrt.pop %v3471
        %v3484 = vmul.f32 %v3483, %v3471
        %v3485 = vmul.f32 %v3484, %v3483
        %v3486 = vmul.f32 0.5, %v3485
        %v3487 = vsub.f32 1.5, %v3486
        %v3488 = vmul.f32 %v3483, %v3487
        %vm3489 = vweird.f32 %v3471
        %vm3490 = vweird.f32 %v3483
        %vm3491 = vmor %vm3489, %vm3490
        %v3492 = vsel %vm3491, %v3483, %v3488
        %v3493 = vrsqrt.pop %v3472
        %v3494 = vmul.f32 %v3493, %v3472
        %v3495 = vmul.f32 %v3494, %v3493
        %v3496 = vmul.f32 0.5, %v3495
        %v3497 = vsub.f32 1.5, %v3496
        %v3498 = vmul.f32 %v3493, %v3497
        %vm3499 = vweird.f32 %v3472
        %vm3500 = vweird.f32 %v3493
        %vm3501 = vmor %vm3499, %vm3500
        %v3502 = vsel %vm3501, %v3493, %v3498
        %v3507 = vunpack.c.l.s4 839922192
        %v3508 = vunpack.c.0.s8 %v3507
        %v3509 = vperm.slane %v3482, %v3508
        %v3511 = vunpack.c.l.s4 1985246804
        %v3512 = vunpack.c.0.s8 %v3511
        %v3513 = vperm.slane %v3482, %v3512
        %v3515 = vunpack.c.l.s4 839922192
        %v3516 = vunpack.c.0.s8 %v3515
        %v3517 = vperm.slane %v3492, %v3516
        %v3519 = vunpack.c.l.s4 1985246804
        %v3520 = vunpack.c.0.s8 %v3519
        %v3521 = vperm.slane %v3492, %v3520
        %v3523 = vunpack.c.l.s4 839922192
        %v3524 = vunpack.c.0.s8 %v3523
        %v3525 = vperm.slane %v3502, %v3524
        %v3527 = vunpack.c.l.s4 1985246804
        %v3528 = vunpack.c.0.s8 %v3527
        %v3529 = vperm.slane %v3502, %v3528
        %v3536 = vmul.f32 %v3423, %v3509
        %v3537 = vmul.f32 %v3424, %v3513
        %v3538 = vmul.f32 %v3425, %v3517
        %v3539 = vmul.f32 %v3426, %v3521
        %v3540 = vmul.f32 %v3427, %v3525
        %v3541 = vmul.f32 %v3428, %v3529
        %v3542 = vperm.slane %v2181, 0
        %v3544 = vrot.slane %v3542, 4
        %v3546 = vmul.f32 %v3536, %v3542
        %v3547 = vmul.f32 %v3537, %v3544
        %v3548 = vmul.f32 %v3538, %v3542
        %v3549 = vmul.f32 %v3539, %v3544
        %v3550 = vmul.f32 %v3540, %v3542
        %v3551 = vmul.f32 %v3541, %v3544
        %v3552 = vperm.slane %v2182, 0
        %v3554 = vrot.slane %v3552, 4
        %v3556 = vadd.f32 %v3546, %v3552
        %v3557 = vadd.f32 %v3547, %v3554
        %v3558 = vadd.f32 %v3548, %v3552
        %v3559 = vadd.f32 %v3549, %v3554
        %v3560 = vadd.f32 %v3550, %v3552
        %v3561 = vadd.f32 %v3551, %v3554
        %3568 = vst [vmem:[#allocation1] ss:$2 sm:$0xff] %v3556
        %s3569 = scalar_lea.vmem [#allocation1], 1
        %3570 = vst [vmem:[%s3569] ss:$2 sm:$0xff] %v3557
        %s3571 = scalar_lea.vmem [#allocation1], 16
        %3572 = vst [vmem:[%s3571] ss:$2 sm:$0xff] %v3558
        %s3573 = scalar_lea.vmem [#allocation1], 17
        %3574 = vst [vmem:[%s3573] ss:$2 sm:$0xff] %v3559
        %s3575 = scalar_lea.vmem [#allocation1], 32
        %3576 = vst [vmem:[%s3575] ss:$2 sm:$0xff] %v3560
        %s3577 = scalar_lea.vmem [#allocation1], 33
        %3578 = vst [vmem:[%s3577] ss:$2 sm:$0xff] %v3561
        %v3579 = vld.sshfl [vmem:[#allocation1] sm:$0xff pattern:$0x75316420]
        %v3580 = vld.sshfl [vmem:[#allocation1 + $0x10] sm:$0xff pattern:$0x75316420]
        %v3581 = vld.sshfl [vmem:[#allocation1 + $0x20] sm:$0xff pattern:$0x75316420]
        %v3585 = vpack.c.bf16 %v3580, %v3579
        %v3586 = vpack.c.bf16 %v3581, %v3581
        %v3587 = vpack.c.bf16 %v2166, %v2165
        %v3588 = vpack.c.bf16 %v2168, %v2167
        %v3589 = vperm.slane %v2183, 0
        %v3591 = vsel %vm499, %v3585, 0
        %v3594 = vsel %vm499, %v3586, 0
        %3596 = vmatpush.bf16.msra.mxu0 0
        %3597 = vmatpush.bf16.msra.mxu0 0
        %3598 = vmatpush.bf16.msra.mxu0 0
        %3599 = vmatpush.bf16.msra.mxu0 0
        %3600 = vmatpush.bf16.msra.mxu0 0
        %3601 = vmatpush.bf16.msra.mxu0 0
        %3602 = vmatpush.bf16.msra.mxu0 %v3588
        %3603 = vmatpush.bf16.msra.mxu0 %v3587
        %3604 = vmatmul.bf16.gmra.mxu0 %v3591
        %v3605 = vpop.f32.mrf.mxu0
        %v3606 = vadd.f32 %v3589, %v3605
        %v3607 = vpop.f32.mrf.mxu0
        %v3608 = vadd.f32 %v3589, %v3607
        %3609 = vmatmul.bf16.gmra.mxu0 %v3594
        %v3610 = vpop.f32.mrf.mxu0
        %v3611 = vadd.f32 %v3589, %v3610
        %v3612 = vpop.f32.mrf.mxu0
        %3613 = vdwg.mxu0
        %v3614 = vmax.f32 %v3606, 0.0
        %v3615 = vmax.f32 %v3608, 0.0
        %v3616 = vmax.f32 %v3611, 0.0
        %v3617 = vpack.c.bf16 %v3615, %v3614
        %v3618 = vpack.c.bf16 %v3616, %v3616
        %v3619 = vpack.c.bf16 %v2170, %v2169
        %v3620 = vpack.c.bf16 %v2172, %v2171
        %v3621 = vpack.c.bf16 %v2174, %v2173
        %v3622 = vpack.c.bf16 %v2176, %v2175
        %v3623 = vperm.slane %v2184, 0
        %v3625 = vsel %vm2117, %v3617, 0
        %v3628 = vsel %vm2117, %v3618, 0
        %3630 = vmatpush.bf16.msra.mxu0 0
        %3631 = vmatpush.bf16.msra.mxu0 0
        %3632 = vmatpush.bf16.msra.mxu0 0
        %3633 = vmatpush.bf16.msra.mxu0 0
        %3634 = vmatpush.bf16.msra.mxu0 %v3622
        %3635 = vmatpush.bf16.msra.mxu0 %v3621
        %3636 = vmatpush.bf16.msra.mxu0 %v3620
        %3637 = vmatpush.bf16.msra.mxu0 %v3619
        %3638 = vmatmul.bf16.gmra.mxu0 %v3625
        %v3639 = vpop.f32.mrf.mxu0
        %v3640 = vadd.f32 %v3623, %v3639
        %v3641 = vpop.f32.mrf.mxu0
        %v3642 = vadd.f32 %v3623, %v3641
        %3643 = vmatmul.bf16.gmra.mxu0 %v3628
        %v3644 = vpop.f32.mrf.mxu0
        %v3645 = vadd.f32 %v3623, %v3644
        %v3646 = vpop.f32.mrf.mxu0
        %3647 = vdwg.mxu0
        %v3651 = vrot.slane %v3640, 4
        %v3652 = vrot.slane %v3642, 4
        %v3653 = vrot.slane %v3645, 4
        %v3657 = vadd.f32 %v3349, %v3640
        %v3658 = vadd.f32 %v3350, %v3651
        %v3659 = vadd.f32 %v3351, %v3642
        %v3660 = vadd.f32 %v3352, %v3652
        %v3661 = vadd.f32 %v3353, %v3645
        %v3662 = vadd.f32 %v3354, %v3653
        %v3663 = vld [vmem:[%s213 + $0x160] sm:$0x1]
        %v3664 = vld [vmem:[%s213 + $0x161] sm:$0x1]
        %3671 = vst [vmem:[#allocation1] ss:$2 sm:$0xff] %v3657
        %s3672 = scalar_lea.vmem [#allocation1], 1
        %3673 = vst [vmem:[%s3672] ss:$2 sm:$0xff] %v3658
        %s3674 = scalar_lea.vmem [#allocation1], 16
        %3675 = vst [vmem:[%s3674] ss:$2 sm:$0xff] %v3659
        %s3676 = scalar_lea.vmem [#allocation1], 17
        %3677 = vst [vmem:[%s3676] ss:$2 sm:$0xff] %v3660
        %s3678 = scalar_lea.vmem [#allocation1], 32
        %3679 = vst [vmem:[%s3678] ss:$2 sm:$0xff] %v3661
        %s3680 = scalar_lea.vmem [#allocation1], 33
        %3681 = vst [vmem:[%s3680] ss:$2 sm:$0xff] %v3662
        %v3682 = vld.sshfl [vmem:[#allocation1] sm:$0xff pattern:$0x75316420]
        %v3683 = vld.sshfl [vmem:[#allocation1 + $0x10] sm:$0xff pattern:$0x75316420]
        %v3684 = vld.sshfl [vmem:[#allocation1 + $0x20] sm:$0xff pattern:$0x75316420]
        %v3688 = vsel %vm499, %v3682, 0.0
        %3689 = vadd.xlane.f32.xlu0 %v3688
        %v3690 = vpop.xlane.xlu0 %3689
        %v3691 = vsel %vm499, %v3683, 0.0
        %3692 = vadd.xlane.f32.xlu0 %v3691
        %v3693 = vpop.xlane.xlu0 %3692
        %v3694 = vsel %vm499, %v3684, 0.0
        %3695 = vadd.xlane.f32.xlu0 %v3694
        %v3696 = vpop.xlane.xlu0 %3695
        %v3697 = vmul.f32 %v3690, %v515
        %v3698 = vmul.f32 %v3693, %v515
        %v3699 = vmul.f32 %v3696, %v515
        %v3704 = vunpack.c.l.s4 839922192
        %v3705 = vunpack.c.0.s8 %v3704
        %v3706 = vperm.slane %v3697, %v3705
        %v3708 = vunpack.c.l.s4 1985246804
        %v3709 = vunpack.c.0.s8 %v3708
        %v3710 = vperm.slane %v3697, %v3709
        %v3712 = vunpack.c.l.s4 839922192
        %v3713 = vunpack.c.0.s8 %v3712
        %v3714 = vperm.slane %v3698, %v3713
        %v3716 = vunpack.c.l.s4 1985246804
        %v3717 = vunpack.c.0.s8 %v3716
        %v3718 = vperm.slane %v3698, %v3717
        %v3720 = vunpack.c.l.s4 839922192
        %v3721 = vunpack.c.0.s8 %v3720
        %v3722 = vperm.slane %v3699, %v3721
        %v3724 = vunpack.c.l.s4 1985246804
        %v3725 = vunpack.c.0.s8 %v3724
        %v3726 = vperm.slane %v3699, %v3725
        %v3733 = vsub.f32 %v3657, %v3706
        %v3734 = vsub.f32 %v3658, %v3710
        %v3735 = vsub.f32 %v3659, %v3714
        %v3736 = vsub.f32 %v3660, %v3718
        %v3737 = vsub.f32 %v3661, %v3722
        %v3738 = vsub.f32 %v3662, %v3726
        %v3739 = vmul.f32 %v3733, %v3733
        %v3740 = vmul.f32 %v3734, %v3734
        %v3741 = vmul.f32 %v3735, %v3735
        %v3742 = vmul.f32 %v3736, %v3736
        %v3743 = vmul.f32 %v3737, %v3737
        %v3744 = vmul.f32 %v3738, %v3738
        %3751 = vst [vmem:[#allocation1] ss:$2 sm:$0xff] %v3739
        %s3752 = scalar_lea.vmem [#allocation1], 1
        %3753 = vst [vmem:[%s3752] ss:$2 sm:$0xff] %v3740
        %s3754 = scalar_lea.vmem [#allocation1], 16
        %3755 = vst [vmem:[%s3754] ss:$2 sm:$0xff] %v3741
        %s3756 = scalar_lea.vmem [#allocation1], 17
        %3757 = vst [vmem:[%s3756] ss:$2 sm:$0xff] %v3742
        %s3758 = scalar_lea.vmem [#allocation1], 32
        %3759 = vst [vmem:[%s3758] ss:$2 sm:$0xff] %v3743
        %s3760 = scalar_lea.vmem [#allocation1], 33
        %3761 = vst [vmem:[%s3760] ss:$2 sm:$0xff] %v3744
        %v3762 = vld.sshfl [vmem:[#allocation1] sm:$0xff pattern:$0x75316420]
        %v3763 = vld.sshfl [vmem:[#allocation1 + $0x10] sm:$0xff pattern:$0x75316420]
        %v3764 = vld.sshfl [vmem:[#allocation1 + $0x20] sm:$0xff pattern:$0x75316420]
        %v3768 = vsel %vm499, %v3762, 0.0
        %3769 = vadd.xlane.f32.xlu0 %v3768
        %v3770 = vpop.xlane.xlu0 %3769
        %v3771 = vsel %vm499, %v3763, 0.0
        %3772 = vadd.xlane.f32.xlu0 %v3771
        %v3773 = vpop.xlane.xlu0 %3772
        %v3774 = vsel %vm499, %v3764, 0.0
        %3775 = vadd.xlane.f32.xlu0 %v3774
        %v3776 = vpop.xlane.xlu0 %3775
        %v3777 = vmul.f32 %v3770, %v515
        %v3778 = vmul.f32 %v3773, %v515
        %v3779 = vmul.f32 %v3776, %v515
        %v3780 = vadd.f32 %v3777, 1e-05
        %v3781 = vadd.f32 %v3778, 1e-05
        %v3782 = vadd.f32 %v3779, 1e-05
        %v3783 = vrsqrt.pop %v3780
        %v3784 = vmul.f32 %v3783, %v3780
        %v3785 = vmul.f32 %v3784, %v3783
        %v3786 = vmul.f32 0.5, %v3785
        %v3787 = vsub.f32 1.5, %v3786
        %v3788 = vmul.f32 %v3783, %v3787
        %vm3789 = vweird.f32 %v3780
        %vm3790 = vweird.f32 %v3783
        %vm3791 = vmor %vm3789, %vm3790
        %v3792 = vsel %vm3791, %v3783, %v3788
        %v3793 = vrsqrt.pop %v3781
        %v3794 = vmul.f32 %v3793, %v3781
        %v3795 = vmul.f32 %v3794, %v3793
        %v3796 = vmul.f32 0.5, %v3795
        %v3797 = vsub.f32 1.5, %v3796
        %v3798 = vmul.f32 %v3793, %v3797
        %vm3799 = vweird.f32 %v3781
        %vm3800 = vweird.f32 %v3793
        %vm3801 = vmor %vm3799, %vm3800
        %v3802 = vsel %vm3801, %v3793, %v3798
        %v3803 = vrsqrt.pop %v3782
        %v3804 = vmul.f32 %v3803, %v3782
        %v3805 = vmul.f32 %v3804, %v3803
        %v3806 = vmul.f32 0.5, %v3805
        %v3807 = vsub.f32 1.5, %v3806
        %v3808 = vmul.f32 %v3803, %v3807
        %vm3809 = vweird.f32 %v3782
        %vm3810 = vweird.f32 %v3803
        %vm3811 = vmor %vm3809, %vm3810
        %v3812 = vsel %vm3811, %v3803, %v3808
        %v3817 = vunpack.c.l.s4 839922192
        %v3818 = vunpack.c.0.s8 %v3817
        %v3819 = vperm.slane %v3792, %v3818
        %v3821 = vunpack.c.l.s4 1985246804
        %v3822 = vunpack.c.0.s8 %v3821
        %v3823 = vperm.slane %v3792, %v3822
        %v3825 = vunpack.c.l.s4 839922192
        %v3826 = vunpack.c.0.s8 %v3825
        %v3827 = vperm.slane %v3802, %v3826
        %v3829 = vunpack.c.l.s4 1985246804
        %v3830 = vunpack.c.0.s8 %v3829
        %v3831 = vperm.slane %v3802, %v3830
        %v3833 = vunpack.c.l.s4 839922192
        %v3834 = vunpack.c.0.s8 %v3833
        %v3835 = vperm.slane %v3812, %v3834
        %v3837 = vunpack.c.l.s4 1985246804
        %v3838 = vunpack.c.0.s8 %v3837
        %v3839 = vperm.slane %v3812, %v3838
        %v3846 = vmul.f32 %v3733, %v3819
        %v3847 = vmul.f32 %v3734, %v3823
        %v3848 = vmul.f32 %v3735, %v3827
        %v3849 = vmul.f32 %v3736, %v3831
        %v3850 = vmul.f32 %v3737, %v3835
        %v3851 = vmul.f32 %v3738, %v3839
        %v3852 = vperm.slane %v3663, 0
        %v3854 = vrot.slane %v3852, 4
        %v3856 = vmul.f32 %v3846, %v3852
        %v3857 = vmul.f32 %v3847, %v3854
        %v3858 = vmul.f32 %v3848, %v3852
        %v3859 = vmul.f32 %v3849, %v3854
        %v3860 = vmul.f32 %v3850, %v3852
        %v3861 = vmul.f32 %v3851, %v3854
        %v3862 = vperm.slane %v3664, 0
        %v3864 = vrot.slane %v3862, 4
        %v3866 = vadd.f32 %v3856, %v3862
        %v3867 = vadd.f32 %v3857, %v3864
        %v3868 = vadd.f32 %v3858, %v3862
        %v3869 = vadd.f32 %v3859, %v3864
        %v3870 = vadd.f32 %v3860, %v3862
        %v3871 = vadd.f32 %v3861, %v3864
        %v3872 = vmul.f32 %v3866, 5.656854
        %v3873 = vmul.f32 %v3867, 5.656854
        %v3874 = vmul.f32 %v3868, 5.656854
        %v3875 = vmul.f32 %v3869, 5.656854
        %v3876 = vmul.f32 %v3870, 5.656854
        %v3877 = vmul.f32 %v3871, 5.656854
        %v3878 = vadd.f32 %v3872, %v401
        %v3879 = vadd.f32 %v3873, %v419
        %v3880 = vadd.f32 %v3874, %v402
        %v3881 = vadd.f32 %v3875, %v401
        %v3882 = vadd.f32 %v3876, %v419
        %v3883 = vadd.f32 %v3877, %v402
        %v3884 = vld [vmem:[%s213 + $0x168] sm:$0xff]
        %v3885 = vld [vmem:[%s213 + $0x170] sm:$0xff]
        %v3886 = vld [vmem:[%s213 + $0x178] sm:$0xff]
        %v3887 = vld [vmem:[%s213 + $0x180] sm:$0xff]
        %v3888 = vld [vmem:[%s213 + $0x188] sm:$0xff]
        %v3889 = vld [vmem:[%s213 + $0x190] sm:$0xff]
        %v3890 = vld [vmem:[%s213 + $0x198] sm:$0xff]
        %v3891 = vld [vmem:[%s213 + $0x1a0] sm:$0xff]
        %v3892 = vld [vmem:[%s213 + $0x1a8] sm:$0xff]
        %v3893 = vld [vmem:[%s213 + $0x1b0] sm:$0xff]
        %v3894 = vld [vmem:[%s213 + $0x1b8] sm:$0xff]
        %v3895 = vld [vmem:[%s213 + $0x1c0] sm:$0xff]
        %v3896 = vld [vmem:[%s213 + $0x1c8] sm:$0xff]
        %v3897 = vld [vmem:[%s213 + $0x1d0] sm:$0xff]
        %v3898 = vld [vmem:[%s213 + $0x1d8] sm:$0xff]
        %v3899 = vld [vmem:[%s213 + $0x1e0] sm:$0xff]
        %v3900 = vld [vmem:[%s213 + $0x1e8] sm:$0xff]
        %v3901 = vld [vmem:[%s213 + $0x1f0] sm:$0xff]
        %v3902 = vld [vmem:[%s213 + $0x1f8] sm:$0xff]
        %v3903 = vld [vmem:[%s213 + $0x200] sm:$0xff]
        %v3904 = vld [vmem:[%s213 + $0x208] sm:$0x1]
        %v3905 = vld [vmem:[%s213 + $0x209] sm:$0x1]
        %v3906 = vld [vmem:[%s213 + $0x20a] sm:$0x1]
        %v3907 = vld [vmem:[%s213 + $0x20b] sm:$0x1]
        %v3908 = vld [vmem:[%s213 + $0x20c] sm:$0x1]
        %v3909 = vld [vmem:[%s213 + $0x20d] sm:$0x1]
        %v3910 = vld [vmem:[%s213 + $0x20e] sm:$0x1]
        %v3911 = vld [vmem:[%s213 + $0x20f] sm:$0x1]
        %3918 = vst [vmem:[#allocation1] ss:$2 sm:$0xff] %v3878
        %s3919 = scalar_lea.vmem [#allocation1], 1
        %3920 = vst [vmem:[%s3919] ss:$2 sm:$0xff] %v3879
        %s3921 = scalar_lea.vmem [#allocation1], 16
        %3922 = vst [vmem:[%s3921] ss:$2 sm:$0xff] %v3880
        %s3923 = scalar_lea.vmem [#allocation1], 17
        %3924 = vst [vmem:[%s3923] ss:$2 sm:$0xff] %v3881
        %s3925 = scalar_lea.vmem [#allocation1], 32
        %3926 = vst [vmem:[%s3925] ss:$2 sm:$0xff] %v3882
        %s3927 = scalar_lea.vmem [#allocation1], 33
        %3928 = vst [vmem:[%s3927] ss:$2 sm:$0xff] %v3883
        %v3929 = vld.sshfl [vmem:[#allocation1] sm:$0xff pattern:$0x75316420]
        %v3930 = vld.sshfl [vmem:[#allocation1 + $0x10] sm:$0xff pattern:$0x75316420]
        %v3931 = vld.sshfl [vmem:[#allocation1 + $0x20] sm:$0xff pattern:$0x75316420]
        %v3935 = vsel %vm499, %v3929, 0.0
        %3936 = vadd.xlane.f32.xlu0 %v3935
        %v3937 = vpop.xlane.xlu0 %3936
        %v3938 = vsel %vm499, %v3930, 0.0
        %3939 = vadd.xlane.f32.xlu0 %v3938
        %v3940 = vpop.xlane.xlu0 %3939
        %v3941 = vsel %vm499, %v3931, 0.0
        %3942 = vadd.xlane.f32.xlu0 %v3941
        %v3943 = vpop.xlane.xlu0 %3942
        %v3944 = vmul.f32 %v3937, %v515
        %v3945 = vmul.f32 %v3940, %v515
        %v3946 = vmul.f32 %v3943, %v515
        %v3951 = vunpack.c.l.s4 839922192
        %v3952 = vunpack.c.0.s8 %v3951
        %v3953 = vperm.slane %v3944, %v3952
        %v3955 = vunpack.c.l.s4 1985246804
        %v3956 = vunpack.c.0.s8 %v3955
        %v3957 = vperm.slane %v3944, %v3956
        %v3959 = vunpack.c.l.s4 839922192
        %v3960 = vunpack.c.0.s8 %v3959
        %v3961 = vperm.slane %v3945, %v3960
        %v3963 = vunpack.c.l.s4 1985246804
        %v3964 = vunpack.c.0.s8 %v3963
        %v3965 = vperm.slane %v3945, %v3964
        %v3967 = vunpack.c.l.s4 839922192
        %v3968 = vunpack.c.0.s8 %v3967
        %v3969 = vperm.slane %v3946, %v3968
        %v3971 = vunpack.c.l.s4 1985246804
        %v3972 = vunpack.c.0.s8 %v3971
        %v3973 = vperm.slane %v3946, %v3972
        %v3980 = vsub.f32 %v3878, %v3953
        %v3981 = vsub.f32 %v3879, %v3957
        %v3982 = vsub.f32 %v3880, %v3961
        %v3983 = vsub.f32 %v3881, %v3965
        %v3984 = vsub.f32 %v3882, %v3969
        %v3985 = vsub.f32 %v3883, %v3973
        %v3986 = vmul.f32 %v3980, %v3980
        %v3987 = vmul.f32 %v3981, %v3981
        %v3988 = vmul.f32 %v3982, %v3982
        %v3989 = vmul.f32 %v3983, %v3983
        %v3990 = vmul.f32 %v3984, %v3984
        %v3991 = vmul.f32 %v3985, %v3985
        %3998 = vst [vmem:[#allocation1] ss:$2 sm:$0xff] %v3986
        %s3999 = scalar_lea.vmem [#allocation1], 1
        %4000 = vst [vmem:[%s3999] ss:$2 sm:$0xff] %v3987
        %s4001 = scalar_lea.vmem [#allocation1], 16
        %4002 = vst [vmem:[%s4001] ss:$2 sm:$0xff] %v3988
        %s4003 = scalar_lea.vmem [#allocation1], 17
        %4004 = vst [vmem:[%s4003] ss:$2 sm:$0xff] %v3989
        %s4005 = scalar_lea.vmem [#allocation1], 32
        %4006 = vst [vmem:[%s4005] ss:$2 sm:$0xff] %v3990
        %s4007 = scalar_lea.vmem [#allocation1], 33
        %4008 = vst [vmem:[%s4007] ss:$2 sm:$0xff] %v3991
        %v4009 = vld.sshfl [vmem:[#allocation1] sm:$0xff pattern:$0x75316420]
        %v4010 = vld.sshfl [vmem:[#allocation1 + $0x10] sm:$0xff pattern:$0x75316420]
        %v4011 = vld.sshfl [vmem:[#allocation1 + $0x20] sm:$0xff pattern:$0x75316420]
        %v4015 = vsel %vm499, %v4009, 0.0
        %4016 = vadd.xlane.f32.xlu0 %v4015
        %v4017 = vpop.xlane.xlu0 %4016
        %v4018 = vsel %vm499, %v4010, 0.0
        %4019 = vadd.xlane.f32.xlu0 %v4018
        %v4020 = vpop.xlane.xlu0 %4019
        %v4021 = vsel %vm499, %v4011, 0.0
        %4022 = vadd.xlane.f32.xlu0 %v4021
        %v4023 = vpop.xlane.xlu0 %4022
        %v4024 = vmul.f32 %v4017, %v515
        %v4025 = vmul.f32 %v4020, %v515
        %v4026 = vmul.f32 %v4023, %v515
        %v4027 = vadd.f32 %v4024, 1e-05
        %v4028 = vadd.f32 %v4025, 1e-05
        %v4029 = vadd.f32 %v4026, 1e-05
        %v4030 = vrsqrt.pop %v4027
        %v4031 = vmul.f32 %v4030, %v4027
        %v4032 = vmul.f32 %v4031, %v4030
        %v4033 = vmul.f32 0.5, %v4032
        %v4034 = vsub.f32 1.5, %v4033
        %v4035 = vmul.f32 %v4030, %v4034
        %vm4036 = vweird.f32 %v4027
        %vm4037 = vweird.f32 %v4030
        %vm4038 = vmor %vm4036, %vm4037
        %v4039 = vsel %vm4038, %v4030, %v4035
        %v4040 = vrsqrt.pop %v4028
        %v4041 = vmul.f32 %v4040, %v4028
        %v4042 = vmul.f32 %v4041, %v4040
        %v4043 = vmul.f32 0.5, %v4042
        %v4044 = vsub.f32 1.5, %v4043
        %v4045 = vmul.f32 %v4040, %v4044
        %vm4046 = vweird.f32 %v4028
        %vm4047 = vweird.f32 %v4040
        %vm4048 = vmor %vm4046, %vm4047
        %v4049 = vsel %vm4048, %v4040, %v4045
        %v4050 = vrsqrt.pop %v4029
        %v4051 = vmul.f32 %v4050, %v4029
        %v4052 = vmul.f32 %v4051, %v4050
        %v4053 = vmul.f32 0.5, %v4052
        %v4054 = vsub.f32 1.5, %v4053
        %v4055 = vmul.f32 %v4050, %v4054
        %vm4056 = vweird.f32 %v4029
        %vm4057 = vweird.f32 %v4050
        %vm4058 = vmor %vm4056, %vm4057
        %v4059 = vsel %vm4058, %v4050, %v4055
        %v4064 = vunpack.c.l.s4 839922192
        %v4065 = vunpack.c.0.s8 %v4064
        %v4066 = vperm.slane %v4039, %v4065
        %v4068 = vunpack.c.l.s4 1985246804
        %v4069 = vunpack.c.0.s8 %v4068
        %v4070 = vperm.slane %v4039, %v4069
        %v4072 = vunpack.c.l.s4 839922192
        %v4073 = vunpack.c.0.s8 %v4072
        %v4074 = vperm.slane %v4049, %v4073
        %v4076 = vunpack.c.l.s4 1985246804
        %v4077 = vunpack.c.0.s8 %v4076
        %v4078 = vperm.slane %v4049, %v4077
        %v4080 = vunpack.c.l.s4 839922192
        %v4081 = vunpack.c.0.s8 %v4080
        %v4082 = vperm.slane %v4059, %v4081
        %v4084 = vunpack.c.l.s4 1985246804
        %v4085 = vunpack.c.0.s8 %v4084
        %v4086 = vperm.slane %v4059, %v4085
        %v4093 = vmul.f32 %v3980, %v4066
        %v4094 = vmul.f32 %v3981, %v4070
        %v4095 = vmul.f32 %v3982, %v4074
        %v4096 = vmul.f32 %v3983, %v4078
        %v4097 = vmul.f32 %v3984, %v4082
        %v4098 = vmul.f32 %v3985, %v4086
        %v4099 = vperm.slane %v3904, 0
        %v4101 = vrot.slane %v4099, 4
        %v4103 = vmul.f32 %v4093, %v4099
        %v4104 = vmul.f32 %v4094, %v4101
        %v4105 = vmul.f32 %v4095, %v4099
        %v4106 = vmul.f32 %v4096, %v4101
        %v4107 = vmul.f32 %v4097, %v4099
        %v4108 = vmul.f32 %v4098, %v4101
        %v4109 = vperm.slane %v3905, 0
        %v4111 = vrot.slane %v4109, 4
        %v4113 = vadd.f32 %v4103, %v4109
        %v4114 = vadd.f32 %v4104, %v4111
        %v4115 = vadd.f32 %v4105, %v4109
        %v4116 = vadd.f32 %v4106, %v4111
        %v4117 = vadd.f32 %v4107, %v4109
        %v4118 = vadd.f32 %v4108, %v4111
        %4125 = vst [vmem:[#allocation1] ss:$2 sm:$0xff] %v4113
        %s4126 = scalar_lea.vmem [#allocation1], 1
        %4127 = vst [vmem:[%s4126] ss:$2 sm:$0xff] %v4114
        %s4128 = scalar_lea.vmem [#allocation1], 16
        %4129 = vst [vmem:[%s4128] ss:$2 sm:$0xff] %v4115
        %s4130 = scalar_lea.vmem [#allocation1], 17
        %4131 = vst [vmem:[%s4130] ss:$2 sm:$0xff] %v4116
        %s4132 = scalar_lea.vmem [#allocation1], 32
        %4133 = vst [vmem:[%s4132] ss:$2 sm:$0xff] %v4117
        %s4134 = scalar_lea.vmem [#allocation1], 33
        %4135 = vst [vmem:[%s4134] ss:$2 sm:$0xff] %v4118
        %v4136 = vld.sshfl [vmem:[#allocation1] sm:$0xff pattern:$0x75316420]
        %v4137 = vld.sshfl [vmem:[#allocation1 + $0x10] sm:$0xff pattern:$0x75316420]
        %v4138 = vld.sshfl [vmem:[#allocation1 + $0x20] sm:$0xff pattern:$0x75316420]
        %v4142 = vpack.c.bf16 %v4137, %v4136
        %v4143 = vpack.c.bf16 %v4138, %v4138
        %v4144 = vpack.c.bf16 %v3885, %v3884
        %v4145 = vpack.c.bf16 %v3887, %v3886
        %v4146 = vperm.slane %v3906, 0
        %v4148 = vsel %vm499, %v4142, 0
        %v4151 = vsel %vm499, %v4143, 0
        %4153 = vmatpush.bf16.msra.mxu0 0
        %4154 = vmatpush.bf16.msra.mxu0 0
        %4155 = vmatpush.bf16.msra.mxu0 0
        %4156 = vmatpush.bf16.msra.mxu0 0
        %4157 = vmatpush.bf16.msra.mxu0 0
        %4158 = vmatpush.bf16.msra.mxu0 0
        %4159 = vmatpush.bf16.msra.mxu0 %v4145
        %4160 = vmatpush.bf16.msra.mxu0 %v4144
        %4161 = vmatmul.bf16.gmra.mxu0 %v4148
        %v4162 = vpop.f32.mrf.mxu0
        %v4163 = vadd.f32 %v4146, %v4162
        %v4164 = vpop.f32.mrf.mxu0
        %v4165 = vadd.f32 %v4146, %v4164
        %4166 = vmatmul.bf16.gmra.mxu0 %v4151
        %v4167 = vpop.f32.mrf.mxu0
        %v4168 = vadd.f32 %v4146, %v4167
        %v4169 = vpop.f32.mrf.mxu0
        %4170 = vdwg.mxu0
        %v4174 = vrot.slane %v4163, 4
        %v4175 = vrot.slane %v4165, 4
        %v4176 = vrot.slane %v4168, 4
        %4177 = vst [vmem:[#allocation1] ss:$2 sm:$0xff] %v4163
        %s4178 = scalar_lea.vmem [#allocation1], 1
        %4179 = vst [vmem:[%s4178] ss:$2 sm:$0xff] %v4174
        %s4180 = scalar_lea.vmem [#allocation1], 16
        %4181 = vst [vmem:[%s4180] ss:$2 sm:$0xff] %v4165
        %v4182 = vld.sshfl [vmem:[#allocation1] sm:$0xff pattern:$0x75316420]
        %v4183 = vld.sshfl [vmem:[#allocation1 + $0x10] sm:$0xff pattern:$0x75316420]
        %s4184 = scalar_lea.vmem [#allocation1], 32
        %4185 = vst [vmem:[%s4184] ss:$2 sm:$0xff] %v4175
        %s4186 = scalar_lea.vmem [#allocation1], 33
        %4187 = vst [vmem:[%s4186] ss:$2 sm:$0xff] %v4168
        %s4188 = scalar_lea.vmem [#allocation1], 48
        %4189 = vst [vmem:[%s4188] ss:$2 sm:$0xff] %v4176
        %v4190 = vld.sshfl [vmem:[#allocation1 + $0x20] sm:$0xff pattern:$0x75316420]
        %v4191 = vld.sshfl [vmem:[#allocation1 + $0x30] sm:$0xff pattern:$0x75316420]
        %v4196 = vpack.c.bf16 %v4182, %v4182
        %v4197 = vpack.c.bf16 %v4183, %v4183
        %v4198 = vpack.c.bf16 %v4190, %v4190
        %v4199 = vpack.c.bf16 %v4191, %v4191
        %4200 = vst [vmem:[#allocation1] ss:$2 sm:$0xff] %v4163
        %s4201 = scalar_lea.vmem [#allocation1], 1
        %4202 = vst [vmem:[%s4201] ss:$2 sm:$0xff] %v4174
        %s4203 = scalar_lea.vmem [#allocation1], 16
        %4204 = vst [vmem:[%s4203] ss:$2 sm:$0xff] %v4165
        %v4205 = vld.sshfl [vmem:[#allocation1] sm:$0xff pattern:$0x75316420]
        %v4206 = vld.sshfl [vmem:[#allocation1 + $0x10] sm:$0xff pattern:$0x75316420]
        %s4207 = scalar_lea.vmem [#allocation1], 32
        %4208 = vst [vmem:[%s4207] ss:$2 sm:$0xff] %v4175
        %s4209 = scalar_lea.vmem [#allocation1], 33
        %4210 = vst [vmem:[%s4209] ss:$2 sm:$0xff] %v4168
        %s4211 = scalar_lea.vmem [#allocation1], 48
        %4212 = vst [vmem:[%s4211] ss:$2 sm:$0xff] %v4176
        %v4213 = vld.sshfl [vmem:[#allocation1 + $0x20] sm:$0xff pattern:$0x75316420]
        %v4214 = vld.sshfl [vmem:[#allocation1 + $0x30] sm:$0xff pattern:$0x75316420]
        %v4219 = vpack.c.bf16 %v4205, %v4205
        %v4220 = vpack.c.bf16 %v4206, %v4206
        %v4221 = vpack.c.bf16 %v4213, %v4213
        %v4222 = vpack.c.bf16 %v4214, %v4214
        %4223 = vst [vmem:[#allocation1] ss:$2 sm:$0xff] %v4163
        %s4224 = scalar_lea.vmem [#allocation1], 1
        %4225 = vst [vmem:[%s4224] ss:$2 sm:$0xff] %v4174
        %s4226 = scalar_lea.vmem [#allocation1], 16
        %4227 = vst [vmem:[%s4226] ss:$2 sm:$0xff] %v4165
        %v4228 = vld.sshfl [vmem:[#allocation1] sm:$0xff pattern:$0x75316420]
        %v4229 = vld.sshfl [vmem:[#allocation1 + $0x10] sm:$0xff pattern:$0x75316420]
        %s4230 = scalar_lea.vmem [#allocation1], 32
        %4231 = vst [vmem:[%s4230] ss:$2 sm:$0xff] %v4175
        %s4232 = scalar_lea.vmem [#allocation1], 33
        %4233 = vst [vmem:[%s4232] ss:$2 sm:$0xff] %v4168
        %s4234 = scalar_lea.vmem [#allocation1], 48
        %4235 = vst [vmem:[%s4234] ss:$2 sm:$0xff] %v4176
        %v4236 = vld.sshfl [vmem:[#allocation1 + $0x20] sm:$0xff pattern:$0x75316420]
        %v4237 = vld.sshfl [vmem:[#allocation1 + $0x30] sm:$0xff pattern:$0x75316420]
        %v4242 = vpack.c.bf16 %v4228, %v4228
        %v4243 = vpack.c.bf16 %v4229, %v4229
        %v4244 = vpack.c.bf16 %v4236, %v4236
        %v4245 = vpack.c.bf16 %v4237, %v4237
        %v4248 = vunpack.c.l.b16 %v4196
        %v4249 = vunpack.c.l.b16 %v4197
        %v4250 = vpack.c.b16 %v4249, %v4248
        %v4253 = vunpack.c.l.b16 %v4219
        %v4254 = vunpack.c.l.b16 %v4220
        %v4255 = vpack.c.b16 %v4254, %v4253
        %4256 = vrot.lane.b32.xlu0 %v4255, 96
        %v4257 = vpop.permute.xlu0 %4256
        %v4259 = vsel %vm312, %v4250, 0
        %v4262 = vsel %vm312, %v4257, 0
        %4264 = vmatpush.bf16.xpose.msra.mxu0 0
        %4265 = vmatpush.bf16.xpose.msra.mxu0 0
        %4266 = vmatpush.bf16.xpose.msra.mxu0 0
        %4267 = vmatpush.bf16.xpose.msra.mxu0 0
        %4268 = vmatpush.bf16.xpose.msra.mxu0 0
        %4269 = vmatpush.bf16.xpose.msra.mxu0 0
        %4270 = vmatpush.bf16.xpose.msra.mxu0 0
        %4271 = vmatpush.bf16.xpose.msra.mxu0 %v4262
        %4272 = vmatmul.bf16.gmra.mxu0 %v4259
        %v4273 = vpop.f32.mrf.mxu0
        %v4274 = vadd.f32 0.0, %v4273
        %v4275 = vpop.f32.mrf.mxu0
        %v4276 = vadd.f32 0.0, %v4275
        %4277 = vdwg.mxu0
        %v4280 = vunpack.c.l.b16 %v4198
        %v4281 = vunpack.c.l.b16 %v4199
        %v4282 = vpack.c.b16 %v4281, %v4280
        %v4285 = vunpack.c.l.b16 %v4221
        %v4286 = vunpack.c.l.b16 %v4222
        %v4287 = vpack.c.b16 %v4286, %v4285
        %4288 = vrot.lane.b32.xlu0 %v4287, 96
        %v4289 = vpop.permute.xlu0 %4288
        %v4291 = vsel %vm312, %v4282, 0
        %v4294 = vsel %vm312, %v4289, 0
        %4296 = vmatpush.bf16.xpose.msra.mxu0 0
        %4297 = vmatpush.bf16.xpose.msra.mxu0 0
        %4298 = vmatpush.bf16.xpose.msra.mxu0 0
        %4299 = vmatpush.bf16.xpose.msra.mxu0 0
        %4300 = vmatpush.bf16.xpose.msra.mxu0 0
        %4301 = vmatpush.bf16.xpose.msra.mxu0 0
        %4302 = vmatpush.bf16.xpose.msra.mxu0 0
        %4303 = vmatpush.bf16.xpose.msra.mxu0 %v4294
        %4304 = vmatmul.bf16.gmra.mxu0 %v4291
        %v4305 = vpop.f32.mrf.mxu0
        %v4306 = vadd.f32 0.0, %v4305
        %v4307 = vpop.f32.mrf.mxu0
        %v4308 = vadd.f32 0.0, %v4307
        %4309 = vdwg.mxu0
        %v4310 = vmul.f32 %v4274, 0.35355338
        %v4311 = vmul.f32 %v4276, 0.35355338
        %v4312 = vmul.f32 %v4306, 0.35355338
        %v4313 = vmul.f32 %v4308, 0.35355338
        %v4314 = vsel %vm274, 1, 0
        %vm4315 = vcmp.eq.s32.totalorder %v4314, 1
        %v4316 = vsel %vm4315, %v4310, -1e+30
        %v4317 = vsel %vm4315, %v4311, -1e+30
        %v4318 = vsel %vm4315, %v4312, -1e+30
        %v4319 = vsel %vm4315, %v4313, -1e+30
        %v4320 = vsel %vm1130, %v4316, -inf
        %4321 = vmax.xlane.f32.xlu0 %v4320
        %v4322 = vpop.xlane.xlu0 %4321
        %v4323 = vsel %vm1134, %v4317, -inf
        %4324 = vmax.xlane.f32.xlu0 %v4323
        %v4325 = vpop.xlane.xlu0 %4324
        %v4326 = vsel %vm1130, %v4318, -inf
        %4327 = vmax.xlane.f32.xlu0 %v4326
        %v4328 = vpop.xlane.xlu0 %4327
        %v4329 = vsel %vm1134, %v4319, -inf
        %4330 = vmax.xlane.f32.xlu0 %v4329
        %v4331 = vpop.xlane.xlu0 %4330
        %v4332 = vsub.f32 %v4316, %v4322
        %v4333 = vsub.f32 %v4317, %v4325
        %v4334 = vsub.f32 %v4318, %v4328
        %v4335 = vsub.f32 %v4319, %v4331
        %v4336 = vmul.f32 %v4332, 1.442695
        %v4337 = vpow.pop %v4336
        %v4338 = vmul.f32 %v4333, 1.442695
        %v4339 = vpow.pop %v4338
        %v4340 = vmul.f32 %v4334, 1.442695
        %v4341 = vpow.pop %v4340
        %v4342 = vmul.f32 %v4335, 1.442695
        %v4343 = vpow.pop %v4342
        %v4344 = vsel %vm1130, %v4337, 0.0
        %4345 = vadd.xlane.f32.xlu0 %v4344
        %v4346 = vpop.xlane.xlu0 %4345
        %v4347 = vsel %vm1134, %v4339, 0.0
        %4348 = vadd.xlane.f32.xlu0 %v4347
        %v4349 = vpop.xlane.xlu0 %4348
        %v4350 = vsel %vm1130, %v4341, 0.0
        %4351 = vadd.xlane.f32.xlu0 %v4350
        %v4352 = vpop.xlane.xlu0 %4351
        %v4353 = vsel %vm1134, %v4343, 0.0
        %4354 = vadd.xlane.f32.xlu0 %v4353
        %v4355 = vpop.xlane.xlu0 %4354
        %v4356 = vrcp.pop %v4346
        %v4357 = vrcp.pop %v4349
        %v4358 = vrcp.pop %v4352
        %v4359 = vrcp.pop %v4355
        %v4360 = vmul.f32 %v4337, %v4356
        %v4361 = vmul.f32 %v4339, %v4357
        %v4362 = vmul.f32 %v4341, %v4358
        %v4363 = vmul.f32 %v4343, %v4359
        %v4364 = vpack.c.bf16 %v4360, %v4360
        %v4365 = vpack.c.bf16 %v4361, %v4361
        %v4366 = vpack.c.bf16 %v4362, %v4362
        %v4367 = vpack.c.bf16 %v4363, %v4363
        %v4370 = vunpack.c.l.b16 %v4364
        %v4371 = vunpack.c.l.b16 %v4365
        %v4372 = vpack.c.b16 %v4371, %v4370
        %v4375 = vunpack.c.l.b16 %v4242
        %v4376 = vunpack.c.l.b16 %v4243
        %v4377 = vpack.c.b16 %v4376, %v4375
        %4378 = vrot.lane.b32.xlu0 %v4377, 64
        %v4379 = vpop.permute.xlu0 %4378
        %v4381 = vsel %vm1130, %v4372, 0
        %v4384 = vsel %vm1195, %v4379, 0
        %4386 = vmatpush.bf16.msra.mxu0 0
        %4387 = vmatpush.bf16.msra.mxu0 0
        %4388 = vmatpush.bf16.msra.mxu0 0
        %4389 = vmatpush.bf16.msra.mxu0 0
        %4390 = vmatpush.bf16.msra.mxu0 0
        %4391 = vmatpush.bf16.msra.mxu0 0
        %4392 = vmatpush.bf16.msra.mxu0 0
        %4393 = vmatpush.bf16.msra.mxu0 %v4384
        %4394 = vmatmul.bf16.gmra.mxu0 %v4381
        %v4395 = vpop.f32.mrf.mxu0
        %v4396 = vadd.f32 0.0, %v4395
        %v4397 = vpop.f32.mrf.mxu0
        %v4398 = vadd.f32 0.0, %v4397
        %4399 = vdwg.mxu0
        %v4402 = vunpack.c.l.b16 %v4366
        %v4403 = vunpack.c.l.b16 %v4367
        %v4404 = vpack.c.b16 %v4403, %v4402
        %v4407 = vunpack.c.l.b16 %v4244
        %v4408 = vunpack.c.l.b16 %v4245
        %v4409 = vpack.c.b16 %v4408, %v4407
        %4410 = vrot.lane.b32.xlu0 %v4409, 64
        %v4411 = vpop.permute.xlu0 %4410
        %v4413 = vsel %vm1130, %v4404, 0
        %v4416 = vsel %vm1195, %v4411, 0
        %4418 = vmatpush.bf16.msra.mxu0 0
        %4419 = vmatpush.bf16.msra.mxu0 0
        %4420 = vmatpush.bf16.msra.mxu0 0
        %4421 = vmatpush.bf16.msra.mxu0 0
        %4422 = vmatpush.bf16.msra.mxu0 0
        %4423 = vmatpush.bf16.msra.mxu0 0
        %4424 = vmatpush.bf16.msra.mxu0 0
        %4425 = vmatpush.bf16.msra.mxu0 %v4416
        %4426 = vmatmul.bf16.gmra.mxu0 %v4413
        %v4427 = vpop.f32.mrf.mxu0
        %v4428 = vadd.f32 0.0, %v4427
        %v4429 = vpop.f32.mrf.mxu0
        %v4430 = vadd.f32 0.0, %v4429
        %4431 = vdwg.mxu0
        %4432 = vrot.lane.b32.xlu0 %v4250, 120
        %v4433 = vpop.permute.xlu0 %4432
        %4434 = vrot.lane.b32.xlu0 %v4255, 88
        %v4435 = vpop.permute.xlu0 %4434
        %v4437 = vsel %vm312, %v4433, 0
        %v4440 = vsel %vm312, %v4435, 0
        %4442 = vmatpush.bf16.xpose.msra.mxu0 0
        %4443 = vmatpush.bf16.xpose.msra.mxu0 0
        %4444 = vmatpush.bf16.xpose.msra.mxu0 0
        %4445 = vmatpush.bf16.xpose.msra.mxu0 0
        %4446 = vmatpush.bf16.xpose.msra.mxu0 0
        %4447 = vmatpush.bf16.xpose.msra.mxu0 0
        %4448 = vmatpush.bf16.xpose.msra.mxu0 0
        %4449 = vmatpush.bf16.xpose.msra.mxu0 %v4440
        %4450 = vmatmul.bf16.gmra.mxu0 %v4437
        %v4451 = vpop.f32.mrf.mxu0
        %v4452 = vadd.f32 0.0, %v4451
        %v4453 = vpop.f32.mrf.mxu0
        %v4454 = vadd.f32 0.0, %v4453
        %4455 = vdwg.mxu0
        %4456 = vrot.lane.b32.xlu0 %v4282, 120
        %v4457 = vpop.permute.xlu0 %4456
        %4458 = vrot.lane.b32.xlu0 %v4287, 88
        %v4459 = vpop.permute.xlu0 %4458
        %v4461 = vsel %vm312, %v4457, 0
        %v4464 = vsel %vm312, %v4459, 0
        %4466 = vmatpush.bf16.xpose.msra.mxu0 0
        %4467 = vmatpush.bf16.xpose.msra.mxu0 0
        %4468 = vmatpush.bf16.xpose.msra.mxu0 0
        %4469 = vmatpush.bf16.xpose.msra.mxu0 0
        %4470 = vmatpush.bf16.xpose.msra.mxu0 0
        %4471 = vmatpush.bf16.xpose.msra.mxu0 0
        %4472 = vmatpush.bf16.xpose.msra.mxu0 0
        %4473 = vmatpush.bf16.xpose.msra.mxu0 %v4464
        %4474 = vmatmul.bf16.gmra.mxu0 %v4461
        %v4475 = vpop.f32.mrf.mxu0
        %v4476 = vadd.f32 0.0, %v4475
        %v4477 = vpop.f32.mrf.mxu0
        %v4478 = vadd.f32 0.0, %v4477
        %4479 = vdwg.mxu0
        %v4480 = vmul.f32 %v4452, 0.35355338
        %v4481 = vmul.f32 %v4454, 0.35355338
        %v4482 = vmul.f32 %v4476, 0.35355338
        %v4483 = vmul.f32 %v4478, 0.35355338
        %v4484 = vsel %vm4315, %v4480, -1e+30
        %v4485 = vsel %vm4315, %v4481, -1e+30
        %v4486 = vsel %vm4315, %v4482, -1e+30
        %v4487 = vsel %vm4315, %v4483, -1e+30
        %v4488 = vsel %vm1130, %v4484, -inf
        %4489 = vmax.xlane.f32.xlu0 %v4488
        %v4490 = vpop.xlane.xlu0 %4489
        %v4491 = vsel %vm1134, %v4485, -inf
        %4492 = vmax.xlane.f32.xlu0 %v4491
        %v4493 = vpop.xlane.xlu0 %4492
        %v4494 = vsel %vm1130, %v4486, -inf
        %4495 = vmax.xlane.f32.xlu0 %v4494
        %v4496 = vpop.xlane.xlu0 %4495
        %v4497 = vsel %vm1134, %v4487, -inf
        %4498 = vmax.xlane.f32.xlu0 %v4497
        %v4499 = vpop.xlane.xlu0 %4498
        %v4500 = vsub.f32 %v4484, %v4490
        %v4501 = vsub.f32 %v4485, %v4493
        %v4502 = vsub.f32 %v4486, %v4496
        %v4503 = vsub.f32 %v4487, %v4499
        %v4504 = vmul.f32 %v4500, 1.442695
        %v4505 = vpow.pop %v4504
        %v4506 = vmul.f32 %v4501, 1.442695
        %v4507 = vpow.pop %v4506
        %v4508 = vmul.f32 %v4502, 1.442695
        %v4509 = vpow.pop %v4508
        %v4510 = vmul.f32 %v4503, 1.442695
        %v4511 = vpow.pop %v4510
        %v4512 = vsel %vm1130, %v4505, 0.0
        %4513 = vadd.xlane.f32.xlu0 %v4512
        %v4514 = vpop.xlane.xlu0 %4513
        %v4515 = vsel %vm1134, %v4507, 0.0
        %4516 = vadd.xlane.f32.xlu0 %v4515
        %v4517 = vpop.xlane.xlu0 %4516
        %v4518 = vsel %vm1130, %v4509, 0.0
        %4519 = vadd.xlane.f32.xlu0 %v4518
        %v4520 = vpop.xlane.xlu0 %4519
        %v4521 = vsel %vm1134, %v4511, 0.0
        %4522 = vadd.xlane.f32.xlu0 %v4521
        %v4523 = vpop.xlane.xlu0 %4522
        %v4524 = vrcp.pop %v4514
        %v4525 = vrcp.pop %v4517
        %v4526 = vrcp.pop %v4520
        %v4527 = vrcp.pop %v4523
        %v4528 = vmul.f32 %v4505, %v4524
        %v4529 = vmul.f32 %v4507, %v4525
        %v4530 = vmul.f32 %v4509, %v4526
        %v4531 = vmul.f32 %v4511, %v4527
        %v4532 = vpack.c.bf16 %v4528, %v4528
        %v4533 = vpack.c.bf16 %v4529, %v4529
        %v4534 = vpack.c.bf16 %v4530, %v4530
        %v4535 = vpack.c.bf16 %v4531, %v4531
        %v4538 = vunpack.c.l.b16 %v4532
        %v4539 = vunpack.c.l.b16 %v4533
        %v4540 = vpack.c.b16 %v4539, %v4538
        %4541 = vrot.lane.b32.xlu0 %v4377, 56
        %v4542 = vpop.permute.xlu0 %4541
        %v4544 = vsel %vm1130, %v4540, 0
        %v4547 = vsel %vm1195, %v4542, 0
        %4549 = vmatpush.bf16.msra.mxu0 0
        %4550 = vmatpush.bf16.msra.mxu0 0
        %4551 = vmatpush.bf16.msra.mxu0 0
        %4552 = vmatpush.bf16.msra.mxu0 0
        %4553 = vmatpush.bf16.msra.mxu0 0
        %4554 = vmatpush.bf16.msra.mxu0 0
        %4555 = vmatpush.bf16.msra.mxu0 0
        %4556 = vmatpush.bf16.msra.mxu0 %v4547
        %4557 = vmatmul.bf16.gmra.mxu0 %v4544
        %v4558 = vpop.f32.mrf.mxu0
        %v4559 = vadd.f32 0.0, %v4558
        %v4560 = vpop.f32.mrf.mxu0
        %v4561 = vadd.f32 0.0, %v4560
        %4562 = vdwg.mxu0
        %v4565 = vunpack.c.l.b16 %v4534
        %v4566 = vunpack.c.l.b16 %v4535
        %v4567 = vpack.c.b16 %v4566, %v4565
        %4568 = vrot.lane.b32.xlu0 %v4409, 56
        %v4569 = vpop.permute.xlu0 %4568
        %v4571 = vsel %vm1130, %v4567, 0
        %v4574 = vsel %vm1195, %v4569, 0
        %4576 = vmatpush.bf16.msra.mxu0 0
        %4577 = vmatpush.bf16.msra.mxu0 0
        %4578 = vmatpush.bf16.msra.mxu0 0
        %4579 = vmatpush.bf16.msra.mxu0 0
        %4580 = vmatpush.bf16.msra.mxu0 0
        %4581 = vmatpush.bf16.msra.mxu0 0
        %4582 = vmatpush.bf16.msra.mxu0 0
        %4583 = vmatpush.bf16.msra.mxu0 %v4574
        %4584 = vmatmul.bf16.gmra.mxu0 %v4571
        %v4585 = vpop.f32.mrf.mxu0
        %v4586 = vadd.f32 0.0, %v4585
        %v4587 = vpop.f32.mrf.mxu0
        %v4588 = vadd.f32 0.0, %v4587
        %4589 = vdwg.mxu0
        %4590 = vrot.lane.b32.xlu0 %v4250, 112
        %v4591 = vpop.permute.xlu0 %4590
        %4592 = vrot.lane.b32.xlu0 %v4255, 80
        %v4593 = vpop.permute.xlu0 %4592
        %v4595 = vsel %vm312, %v4591, 0
        %v4598 = vsel %vm312, %v4593, 0
        %4600 = vmatpush.bf16.xpose.msra.mxu0 0
        %4601 = vmatpush.bf16.xpose.msra.mxu0 0
        %4602 = vmatpush.bf16.xpose.msra.mxu0 0
        %4603 = vmatpush.bf16.xpose.msra.mxu0 0
        %4604 = vmatpush.bf16.xpose.msra.mxu0 0
        %4605 = vmatpush.bf16.xpose.msra.mxu0 0
        %4606 = vmatpush.bf16.xpose.msra.mxu0 0
        %4607 = vmatpush.bf16.xpose.msra.mxu0 %v4598
        %4608 = vmatmul.bf16.gmra.mxu0 %v4595
        %v4609 = vpop.f32.mrf.mxu0
        %v4610 = vadd.f32 0.0, %v4609
        %v4611 = vpop.f32.mrf.mxu0
        %v4612 = vadd.f32 0.0, %v4611
        %4613 = vdwg.mxu0
        %4614 = vrot.lane.b32.xlu0 %v4282, 112
        %v4615 = vpop.permute.xlu0 %4614
        %4616 = vrot.lane.b32.xlu0 %v4287, 80
        %v4617 = vpop.permute.xlu0 %4616
        %v4619 = vsel %vm312, %v4615, 0
        %v4622 = vsel %vm312, %v4617, 0
        %4624 = vmatpush.bf16.xpose.msra.mxu0 0
        %4625 = vmatpush.bf16.xpose.msra.mxu0 0
        %4626 = vmatpush.bf16.xpose.msra.mxu0 0
        %4627 = vmatpush.bf16.xpose.msra.mxu0 0
        %4628 = vmatpush.bf16.xpose.msra.mxu0 0
        %4629 = vmatpush.bf16.xpose.msra.mxu0 0
        %4630 = vmatpush.bf16.xpose.msra.mxu0 0
        %4631 = vmatpush.bf16.xpose.msra.mxu0 %v4622
        %4632 = vmatmul.bf16.gmra.mxu0 %v4619
        %v4633 = vpop.f32.mrf.mxu0
        %v4634 = vadd.f32 0.0, %v4633
        %v4635 = vpop.f32.mrf.mxu0
        %v4636 = vadd.f32 0.0, %v4635
        %4637 = vdwg.mxu0
        %v4638 = vmul.f32 %v4610, 0.35355338
        %v4639 = vmul.f32 %v4612, 0.35355338
        %v4640 = vmul.f32 %v4634, 0.35355338
        %v4641 = vmul.f32 %v4636, 0.35355338
        %v4642 = vsel %vm4315, %v4638, -1e+30
        %v4643 = vsel %vm4315, %v4639, -1e+30
        %v4644 = vsel %vm4315, %v4640, -1e+30
        %v4645 = vsel %vm4315, %v4641, -1e+30
        %v4646 = vsel %vm1130, %v4642, -inf
        %4647 = vmax.xlane.f32.xlu0 %v4646
        %v4648 = vpop.xlane.xlu0 %4647
        %v4649 = vsel %vm1134, %v4643, -inf
        %4650 = vmax.xlane.f32.xlu0 %v4649
        %v4651 = vpop.xlane.xlu0 %4650
        %v4652 = vsel %vm1130, %v4644, -inf
        %4653 = vmax.xlane.f32.xlu0 %v4652
        %v4654 = vpop.xlane.xlu0 %4653
        %v4655 = vsel %vm1134, %v4645, -inf
        %4656 = vmax.xlane.f32.xlu0 %v4655
        %v4657 = vpop.xlane.xlu0 %4656
        %v4658 = vsub.f32 %v4642, %v4648
        %v4659 = vsub.f32 %v4643, %v4651
        %v4660 = vsub.f32 %v4644, %v4654
        %v4661 = vsub.f32 %v4645, %v4657
        %v4662 = vmul.f32 %v4658, 1.442695
        %v4663 = vpow.pop %v4662
        %v4664 = vmul.f32 %v4659, 1.442695
        %v4665 = vpow.pop %v4664
        %v4666 = vmul.f32 %v4660, 1.442695
        %v4667 = vpow.pop %v4666
        %v4668 = vmul.f32 %v4661, 1.442695
        %v4669 = vpow.pop %v4668
        %v4670 = vsel %vm1130, %v4663, 0.0
        %4671 = vadd.xlane.f32.xlu0 %v4670
        %v4672 = vpop.xlane.xlu0 %4671
        %v4673 = vsel %vm1134, %v4665, 0.0
        %4674 = vadd.xlane.f32.xlu0 %v4673
        %v4675 = vpop.xlane.xlu0 %4674
        %v4676 = vsel %vm1130, %v4667, 0.0
        %4677 = vadd.xlane.f32.xlu0 %v4676
        %v4678 = vpop.xlane.xlu0 %4677
        %v4679 = vsel %vm1134, %v4669, 0.0
        %4680 = vadd.xlane.f32.xlu0 %v4679
        %v4681 = vpop.xlane.xlu0 %4680
        %v4682 = vrcp.pop %v4672
        %v4683 = vrcp.pop %v4675
        %v4684 = vrcp.pop %v4678
        %v4685 = vrcp.pop %v4681
        %v4686 = vmul.f32 %v4663, %v4682
        %v4687 = vmul.f32 %v4665, %v4683
        %v4688 = vmul.f32 %v4667, %v4684
        %v4689 = vmul.f32 %v4669, %v4685
        %v4690 = vpack.c.bf16 %v4686, %v4686
        %v4691 = vpack.c.bf16 %v4687, %v4687
        %v4692 = vpack.c.bf16 %v4688, %v4688
        %v4693 = vpack.c.bf16 %v4689, %v4689
        %v4696 = vunpack.c.l.b16 %v4690
        %v4697 = vunpack.c.l.b16 %v4691
        %v4698 = vpack.c.b16 %v4697, %v4696
        %4699 = vrot.lane.b32.xlu0 %v4377, 48
        %v4700 = vpop.permute.xlu0 %4699
        %v4702 = vsel %vm1130, %v4698, 0
        %v4705 = vsel %vm1195, %v4700, 0
        %4707 = vmatpush.bf16.msra.mxu0 0
        %4708 = vmatpush.bf16.msra.mxu0 0
        %4709 = vmatpush.bf16.msra.mxu0 0
        %4710 = vmatpush.bf16.msra.mxu0 0
        %4711 = vmatpush.bf16.msra.mxu0 0
        %4712 = vmatpush.bf16.msra.mxu0 0
        %4713 = vmatpush.bf16.msra.mxu0 0
        %4714 = vmatpush.bf16.msra.mxu0 %v4705
        %4715 = vmatmul.bf16.gmra.mxu0 %v4702
        %v4716 = vpop.f32.mrf.mxu0
        %v4717 = vadd.f32 0.0, %v4716
        %v4718 = vpop.f32.mrf.mxu0
        %v4719 = vadd.f32 0.0, %v4718
        %4720 = vdwg.mxu0
        %v4723 = vunpack.c.l.b16 %v4692
        %v4724 = vunpack.c.l.b16 %v4693
        %v4725 = vpack.c.b16 %v4724, %v4723
        %4726 = vrot.lane.b32.xlu0 %v4409, 48
        %v4727 = vpop.permute.xlu0 %4726
        %v4729 = vsel %vm1130, %v4725, 0
        %v4732 = vsel %vm1195, %v4727, 0
        %4734 = vmatpush.bf16.msra.mxu0 0
        %4735 = vmatpush.bf16.msra.mxu0 0
        %4736 = vmatpush.bf16.msra.mxu0 0
        %4737 = vmatpush.bf16.msra.mxu0 0
        %4738 = vmatpush.bf16.msra.mxu0 0
        %4739 = vmatpush.bf16.msra.mxu0 0
        %4740 = vmatpush.bf16.msra.mxu0 0
        %4741 = vmatpush.bf16.msra.mxu0 %v4732
        %4742 = vmatmul.bf16.gmra.mxu0 %v4729
        %v4743 = vpop.f32.mrf.mxu0
        %v4744 = vadd.f32 0.0, %v4743
        %v4745 = vpop.f32.mrf.mxu0
        %v4746 = vadd.f32 0.0, %v4745
        %4747 = vdwg.mxu0
        %4748 = vrot.lane.b32.xlu0 %v4250, 104
        %v4749 = vpop.permute.xlu0 %4748
        %4750 = vrot.lane.b32.xlu0 %v4255, 72
        %v4751 = vpop.permute.xlu0 %4750
        %v4753 = vsel %vm312, %v4749, 0
        %v4756 = vsel %vm312, %v4751, 0
        %4758 = vmatpush.bf16.xpose.msra.mxu0 0
        %4759 = vmatpush.bf16.xpose.msra.mxu0 0
        %4760 = vmatpush.bf16.xpose.msra.mxu0 0
        %4761 = vmatpush.bf16.xpose.msra.mxu0 0
        %4762 = vmatpush.bf16.xpose.msra.mxu0 0
        %4763 = vmatpush.bf16.xpose.msra.mxu0 0
        %4764 = vmatpush.bf16.xpose.msra.mxu0 0
        %4765 = vmatpush.bf16.xpose.msra.mxu0 %v4756
        %4766 = vmatmul.bf16.gmra.mxu0 %v4753
        %v4767 = vpop.f32.mrf.mxu0
        %v4768 = vadd.f32 0.0, %v4767
        %v4769 = vpop.f32.mrf.mxu0
        %v4770 = vadd.f32 0.0, %v4769
        %4771 = vdwg.mxu0
        %4772 = vrot.lane.b32.xlu0 %v4282, 104
        %v4773 = vpop.permute.xlu0 %4772
        %4774 = vrot.lane.b32.xlu0 %v4287, 72
        %v4775 = vpop.permute.xlu0 %4774
        %v4777 = vsel %vm312, %v4773, 0
        %v4780 = vsel %vm312, %v4775, 0
        %4782 = vmatpush.bf16.xpose.msra.mxu0 0
        %4783 = vmatpush.bf16.xpose.msra.mxu0 0
        %4784 = vmatpush.bf16.xpose.msra.mxu0 0
        %4785 = vmatpush.bf16.xpose.msra.mxu0 0
        %4786 = vmatpush.bf16.xpose.msra.mxu0 0
        %4787 = vmatpush.bf16.xpose.msra.mxu0 0
        %4788 = vmatpush.bf16.xpose.msra.mxu0 0
        %4789 = vmatpush.bf16.xpose.msra.mxu0 %v4780
        %4790 = vmatmul.bf16.gmra.mxu0 %v4777
        %v4791 = vpop.f32.mrf.mxu0
        %v4792 = vadd.f32 0.0, %v4791
        %v4793 = vpop.f32.mrf.mxu0
        %v4794 = vadd.f32 0.0, %v4793
        %4795 = vdwg.mxu0
        %v4796 = vmul.f32 %v4768, 0.35355338
        %v4797 = vmul.f32 %v4770, 0.35355338
        %v4798 = vmul.f32 %v4792, 0.35355338
        %v4799 = vmul.f32 %v4794, 0.35355338
        %v4800 = vsel %vm4315, %v4796, -1e+30
        %v4801 = vsel %vm4315, %v4797, -1e+30
        %v4802 = vsel %vm4315, %v4798, -1e+30
        %v4803 = vsel %vm4315, %v4799, -1e+30
        %v4804 = vsel %vm1130, %v4800, -inf
        %4805 = vmax.xlane.f32.xlu0 %v4804
        %v4806 = vpop.xlane.xlu0 %4805
        %v4807 = vsel %vm1134, %v4801, -inf
        %4808 = vmax.xlane.f32.xlu0 %v4807
        %v4809 = vpop.xlane.xlu0 %4808
        %v4810 = vsel %vm1130, %v4802, -inf
        %4811 = vmax.xlane.f32.xlu0 %v4810
        %v4812 = vpop.xlane.xlu0 %4811
        %v4813 = vsel %vm1134, %v4803, -inf
        %4814 = vmax.xlane.f32.xlu0 %v4813
        %v4815 = vpop.xlane.xlu0 %4814
        %v4816 = vsub.f32 %v4800, %v4806
        %v4817 = vsub.f32 %v4801, %v4809
        %v4818 = vsub.f32 %v4802, %v4812
        %v4819 = vsub.f32 %v4803, %v4815
        %v4820 = vmul.f32 %v4816, 1.442695
        %v4821 = vpow.pop %v4820
        %v4822 = vmul.f32 %v4817, 1.442695
        %v4823 = vpow.pop %v4822
        %v4824 = vmul.f32 %v4818, 1.442695
        %v4825 = vpow.pop %v4824
        %v4826 = vmul.f32 %v4819, 1.442695
        %v4827 = vpow.pop %v4826
        %v4828 = vsel %vm1130, %v4821, 0.0
        %4829 = vadd.xlane.f32.xlu0 %v4828
        %v4830 = vpop.xlane.xlu0 %4829
        %v4831 = vsel %vm1134, %v4823, 0.0
        %4832 = vadd.xlane.f32.xlu0 %v4831
        %v4833 = vpop.xlane.xlu0 %4832
        %v4834 = vsel %vm1130, %v4825, 0.0
        %4835 = vadd.xlane.f32.xlu0 %v4834
        %v4836 = vpop.xlane.xlu0 %4835
        %v4837 = vsel %vm1134, %v4827, 0.0
        %4838 = vadd.xlane.f32.xlu0 %v4837
        %v4839 = vpop.xlane.xlu0 %4838
        %v4840 = vrcp.pop %v4830
        %v4841 = vrcp.pop %v4833
        %v4842 = vrcp.pop %v4836
        %v4843 = vrcp.pop %v4839
        %v4844 = vmul.f32 %v4821, %v4840
        %v4845 = vmul.f32 %v4823, %v4841
        %v4846 = vmul.f32 %v4825, %v4842
        %v4847 = vmul.f32 %v4827, %v4843
        %v4848 = vpack.c.bf16 %v4844, %v4844
        %v4849 = vpack.c.bf16 %v4845, %v4845
        %v4850 = vpack.c.bf16 %v4846, %v4846
        %v4851 = vpack.c.bf16 %v4847, %v4847
        %v4854 = vunpack.c.l.b16 %v4848
        %v4855 = vunpack.c.l.b16 %v4849
        %v4856 = vpack.c.b16 %v4855, %v4854
        %4857 = vrot.lane.b32.xlu0 %v4377, 40
        %v4858 = vpop.permute.xlu0 %4857
        %v4860 = vsel %vm1130, %v4856, 0
        %v4863 = vsel %vm1195, %v4858, 0
        %4865 = vmatpush.bf16.msra.mxu0 0
        %4866 = vmatpush.bf16.msra.mxu0 0
        %4867 = vmatpush.bf16.msra.mxu0 0
        %4868 = vmatpush.bf16.msra.mxu0 0
        %4869 = vmatpush.bf16.msra.mxu0 0
        %4870 = vmatpush.bf16.msra.mxu0 0
        %4871 = vmatpush.bf16.msra.mxu0 0
        %4872 = vmatpush.bf16.msra.mxu0 %v4863
        %4873 = vmatmul.bf16.gmra.mxu0 %v4860
        %v4874 = vpop.f32.mrf.mxu0
        %v4875 = vadd.f32 0.0, %v4874
        %v4876 = vpop.f32.mrf.mxu0
        %v4877 = vadd.f32 0.0, %v4876
        %4878 = vdwg.mxu0
        %v4881 = vunpack.c.l.b16 %v4850
        %v4882 = vunpack.c.l.b16 %v4851
        %v4883 = vpack.c.b16 %v4882, %v4881
        %4884 = vrot.lane.b32.xlu0 %v4409, 40
        %v4885 = vpop.permute.xlu0 %4884
        %v4887 = vsel %vm1130, %v4883, 0
        %v4890 = vsel %vm1195, %v4885, 0
        %4892 = vmatpush.bf16.msra.mxu0 0
        %4893 = vmatpush.bf16.msra.mxu0 0
        %4894 = vmatpush.bf16.msra.mxu0 0
        %4895 = vmatpush.bf16.msra.mxu0 0
        %4896 = vmatpush.bf16.msra.mxu0 0
        %4897 = vmatpush.bf16.msra.mxu0 0
        %4898 = vmatpush.bf16.msra.mxu0 0
        %4899 = vmatpush.bf16.msra.mxu0 %v4890
        %4900 = vmatmul.bf16.gmra.mxu0 %v4887
        %v4901 = vpop.f32.mrf.mxu0
        %v4902 = vadd.f32 0.0, %v4901
        %v4903 = vpop.f32.mrf.mxu0
        %v4904 = vadd.f32 0.0, %v4903
        %4905 = vdwg.mxu0
        %4910 = vrot.lane.b32.xlu0 %v4559, 8
        %v4911 = vpop.permute.xlu0 %4910
        %4912 = vrot.lane.b32.xlu0 %v4561, 8
        %v4913 = vpop.permute.xlu0 %4912
        %4914 = vrot.lane.b32.xlu0 %v4586, 8
        %v4915 = vpop.permute.xlu0 %4914
        %4916 = vrot.lane.b32.xlu0 %v4588, 8
        %v4917 = vpop.permute.xlu0 %4916
        %4926 = vrot.lane.b32.xlu0 %v4717, 16
        %v4927 = vpop.permute.xlu0 %4926
        %4928 = vrot.lane.b32.xlu0 %v4719, 16
        %v4929 = vpop.permute.xlu0 %4928
        %4930 = vrot.lane.b32.xlu0 %v4744, 16
        %v4931 = vpop.permute.xlu0 %4930
        %4932 = vrot.lane.b32.xlu0 %v4746, 16
        %v4933 = vpop.permute.xlu0 %4932
        %4942 = vrot.lane.b32.xlu0 %v4875, 24
        %v4943 = vpop.permute.xlu0 %4942
        %4944 = vrot.lane.b32.xlu0 %v4877, 24
        %v4945 = vpop.permute.xlu0 %4944
        %4946 = vrot.lane.b32.xlu0 %v4902, 24
        %v4947 = vpop.permute.xlu0 %4946
        %4948 = vrot.lane.b32.xlu0 %v4904, 24
        %v4949 = vpop.permute.xlu0 %4948
        %v4954 = vsel %vm312, %v4396, %v4911
        %v4955 = vsel %vm312, %v4398, %v4913
        %v4956 = vsel %vm312, %v4428, %v4915
        %v4957 = vsel %vm312, %v4430, %v4917
        %v4958 = vsel %vm1771, %v4954, %v4927
        %v4959 = vsel %vm1771, %v4955, %v4929
        %v4960 = vsel %vm1771, %v4956, %v4931
        %v4961 = vsel %vm1771, %v4957, %v4933
        %v4962 = vsel %vm1776, %v4958, %v4943
        %v4963 = vsel %vm1776, %v4959, %v4945
        %v4964 = vsel %vm1776, %v4960, %v4947
        %v4965 = vsel %vm1776, %v4961, %v4949
        %v4970 = vrot.slane %v4962, 4
        %v4971 = vrot.slane %v4964, 4
        %4972 = vst [vmem:[#allocation1] ss:$2 sm:$0xff] %v4962
        %s4973 = scalar_lea.vmem [#allocation1], 1
        %4974 = vst [vmem:[%s4973] ss:$2 sm:$0xff] %v4970
        %s4975 = scalar_lea.vmem [#allocation1], 16
        %4976 = vst [vmem:[%s4975] ss:$2 sm:$0xff] %v4963
        %s4977 = scalar_lea.vmem [#allocation1], 17
        %4978 = vst [vmem:[%s4977] ss:$2 sm:$0xff] %v4964
        %s4979 = scalar_lea.vmem [#allocation1], 32
        %4980 = vst [vmem:[%s4979] ss:$2 sm:$0xff] %v4971
        %s4981 = scalar_lea.vmem [#allocation1], 33
        %4982 = vst [vmem:[%s4981] ss:$2 sm:$0xff] %v4965
        %v4983 = vld.sshfl [vmem:[#allocation1] sm:$0xff pattern:$0x75316420]
        %v4984 = vld.sshfl [vmem:[#allocation1 + $0x10] sm:$0xff pattern:$0x75316420]
        %v4985 = vld.sshfl [vmem:[#allocation1 + $0x20] sm:$0xff pattern:$0x75316420]
        %v4989 = vpack.c.bf16 %v4984, %v4983
        %v4990 = vpack.c.bf16 %v4985, %v4985
        %v4991 = vpack.c.bf16 %v3889, %v3888
        %v4992 = vpack.c.bf16 %v3891, %v3890
        %v4993 = vperm.slane %v3907, 0
        %v4995 = vsel %vm499, %v4989, 0
        %v4998 = vsel %vm499, %v4990, 0
        %5000 = vmatpush.bf16.msra.mxu0 0
        %5001 = vmatpush.bf16.msra.mxu0 0
        %5002 = vmatpush.bf16.msra.mxu0 0
        %5003 = vmatpush.bf16.msra.mxu0 0
        %5004 = vmatpush.bf16.msra.mxu0 0
        %5005 = vmatpush.bf16.msra.mxu0 0
        %5006 = vmatpush.bf16.msra.mxu0 %v4992
        %5007 = vmatpush.bf16.msra.mxu0 %v4991
        %5008 = vmatmul.bf16.gmra.mxu0 %v4995
        %v5009 = vpop.f32.mrf.mxu0
        %v5010 = vadd.f32 %v4993, %v5009
        %v5011 = vpop.f32.mrf.mxu0
        %v5012 = vadd.f32 %v4993, %v5011
        %5013 = vmatmul.bf16.gmra.mxu0 %v4998
        %v5014 = vpop.f32.mrf.mxu0
        %v5015 = vadd.f32 %v4993, %v5014
        %v5016 = vpop.f32.mrf.mxu0
        %5017 = vdwg.mxu0
        %v5021 = vrot.slane %v5010, 4
        %v5022 = vrot.slane %v5012, 4
        %v5023 = vrot.slane %v5015, 4
        %v5027 = vadd.f32 %v3878, %v5010
        %v5028 = vadd.f32 %v3879, %v5021
        %v5029 = vadd.f32 %v3880, %v5012
        %v5030 = vadd.f32 %v3881, %v5022
        %v5031 = vadd.f32 %v3882, %v5015
        %v5032 = vadd.f32 %v3883, %v5023
        %5039 = vst [vmem:[#allocation1] ss:$2 sm:$0xff] %v5027
        %s5040 = scalar_lea.vmem [#allocation1], 1
        %5041 = vst [vmem:[%s5040] ss:$2 sm:$0xff] %v5028
        %s5042 = scalar_lea.vmem [#allocation1], 16
        %5043 = vst [vmem:[%s5042] ss:$2 sm:$0xff] %v5029
        %s5044 = scalar_lea.vmem [#allocation1], 17
        %5045 = vst [vmem:[%s5044] ss:$2 sm:$0xff] %v5030
        %s5046 = scalar_lea.vmem [#allocation1], 32
        %5047 = vst [vmem:[%s5046] ss:$2 sm:$0xff] %v5031
        %s5048 = scalar_lea.vmem [#allocation1], 33
        %5049 = vst [vmem:[%s5048] ss:$2 sm:$0xff] %v5032
        %v5050 = vld.sshfl [vmem:[#allocation1] sm:$0xff pattern:$0x75316420]
        %v5051 = vld.sshfl [vmem:[#allocation1 + $0x10] sm:$0xff pattern:$0x75316420]
        %v5052 = vld.sshfl [vmem:[#allocation1 + $0x20] sm:$0xff pattern:$0x75316420]
        %v5056 = vsel %vm499, %v5050, 0.0
        %5057 = vadd.xlane.f32.xlu0 %v5056
        %v5058 = vpop.xlane.xlu0 %5057
        %v5059 = vsel %vm499, %v5051, 0.0
        %5060 = vadd.xlane.f32.xlu0 %v5059
        %v5061 = vpop.xlane.xlu0 %5060
        %v5062 = vsel %vm499, %v5052, 0.0
        %5063 = vadd.xlane.f32.xlu0 %v5062
        %v5064 = vpop.xlane.xlu0 %5063
        %v5065 = vmul.f32 %v5058, %v515
        %v5066 = vmul.f32 %v5061, %v515
        %v5067 = vmul.f32 %v5064, %v515
        %v5072 = vunpack.c.l.s4 839922192
        %v5073 = vunpack.c.0.s8 %v5072
        %v5074 = vperm.slane %v5065, %v5073
        %v5076 = vunpack.c.l.s4 1985246804
        %v5077 = vunpack.c.0.s8 %v5076
        %v5078 = vperm.slane %v5065, %v5077
        %v5080 = vunpack.c.l.s4 839922192
        %v5081 = vunpack.c.0.s8 %v5080
        %v5082 = vperm.slane %v5066, %v5081
        %v5084 = vunpack.c.l.s4 1985246804
        %v5085 = vunpack.c.0.s8 %v5084
        %v5086 = vperm.slane %v5066, %v5085
        %v5088 = vunpack.c.l.s4 839922192
        %v5089 = vunpack.c.0.s8 %v5088
        %v5090 = vperm.slane %v5067, %v5089
        %v5092 = vunpack.c.l.s4 1985246804
        %v5093 = vunpack.c.0.s8 %v5092
        %v5094 = vperm.slane %v5067, %v5093
        %v5101 = vsub.f32 %v5027, %v5074
        %v5102 = vsub.f32 %v5028, %v5078
        %v5103 = vsub.f32 %v5029, %v5082
        %v5104 = vsub.f32 %v5030, %v5086
        %v5105 = vsub.f32 %v5031, %v5090
        %v5106 = vsub.f32 %v5032, %v5094
        %v5107 = vmul.f32 %v5101, %v5101
        %v5108 = vmul.f32 %v5102, %v5102
        %v5109 = vmul.f32 %v5103, %v5103
        %v5110 = vmul.f32 %v5104, %v5104
        %v5111 = vmul.f32 %v5105, %v5105
        %v5112 = vmul.f32 %v5106, %v5106
        %5119 = vst [vmem:[#allocation1] ss:$2 sm:$0xff] %v5107
        %s5120 = scalar_lea.vmem [#allocation1], 1
        %5121 = vst [vmem:[%s5120] ss:$2 sm:$0xff] %v5108
        %s5122 = scalar_lea.vmem [#allocation1], 16
        %5123 = vst [vmem:[%s5122] ss:$2 sm:$0xff] %v5109
        %s5124 = scalar_lea.vmem [#allocation1], 17
        %5125 = vst [vmem:[%s5124] ss:$2 sm:$0xff] %v5110
        %s5126 = scalar_lea.vmem [#allocation1], 32
        %5127 = vst [vmem:[%s5126] ss:$2 sm:$0xff] %v5111
        %s5128 = scalar_lea.vmem [#allocation1], 33
        %5129 = vst [vmem:[%s5128] ss:$2 sm:$0xff] %v5112
        %v5130 = vld.sshfl [vmem:[#allocation1] sm:$0xff pattern:$0x75316420]
        %v5131 = vld.sshfl [vmem:[#allocation1 + $0x10] sm:$0xff pattern:$0x75316420]
        %v5132 = vld.sshfl [vmem:[#allocation1 + $0x20] sm:$0xff pattern:$0x75316420]
        %v5136 = vsel %vm499, %v5130, 0.0
        %5137 = vadd.xlane.f32.xlu0 %v5136
        %v5138 = vpop.xlane.xlu0 %5137
        %v5139 = vsel %vm499, %v5131, 0.0
        %5140 = vadd.xlane.f32.xlu0 %v5139
        %v5141 = vpop.xlane.xlu0 %5140
        %v5142 = vsel %vm499, %v5132, 0.0
        %5143 = vadd.xlane.f32.xlu0 %v5142
        %v5144 = vpop.xlane.xlu0 %5143
        %v5145 = vmul.f32 %v5138, %v515
        %v5146 = vmul.f32 %v5141, %v515
        %v5147 = vmul.f32 %v5144, %v515
        %v5148 = vadd.f32 %v5145, 1e-05
        %v5149 = vadd.f32 %v5146, 1e-05
        %v5150 = vadd.f32 %v5147, 1e-05
        %v5151 = vrsqrt.pop %v5148
        %v5152 = vmul.f32 %v5151, %v5148
        %v5153 = vmul.f32 %v5152, %v5151
        %v5154 = vmul.f32 0.5, %v5153
        %v5155 = vsub.f32 1.5, %v5154
        %v5156 = vmul.f32 %v5151, %v5155
        %vm5157 = vweird.f32 %v5148
        %vm5158 = vweird.f32 %v5151
        %vm5159 = vmor %vm5157, %vm5158
        %v5160 = vsel %vm5159, %v5151, %v5156
        %v5161 = vrsqrt.pop %v5149
        %v5162 = vmul.f32 %v5161, %v5149
        %v5163 = vmul.f32 %v5162, %v5161
        %v5164 = vmul.f32 0.5, %v5163
        %v5165 = vsub.f32 1.5, %v5164
        %v5166 = vmul.f32 %v5161, %v5165
        %vm5167 = vweird.f32 %v5149
        %vm5168 = vweird.f32 %v5161
        %vm5169 = vmor %vm5167, %vm5168
        %v5170 = vsel %vm5169, %v5161, %v5166
        %v5171 = vrsqrt.pop %v5150
        %v5172 = vmul.f32 %v5171, %v5150
        %v5173 = vmul.f32 %v5172, %v5171
        %v5174 = vmul.f32 0.5, %v5173
        %v5175 = vsub.f32 1.5, %v5174
        %v5176 = vmul.f32 %v5171, %v5175
        %vm5177 = vweird.f32 %v5150
        %vm5178 = vweird.f32 %v5171
        %vm5179 = vmor %vm5177, %vm5178
        %v5180 = vsel %vm5179, %v5171, %v5176
        %v5185 = vunpack.c.l.s4 839922192
        %v5186 = vunpack.c.0.s8 %v5185
        %v5187 = vperm.slane %v5160, %v5186
        %v5189 = vunpack.c.l.s4 1985246804
        %v5190 = vunpack.c.0.s8 %v5189
        %v5191 = vperm.slane %v5160, %v5190
        %v5193 = vunpack.c.l.s4 839922192
        %v5194 = vunpack.c.0.s8 %v5193
        %v5195 = vperm.slane %v5170, %v5194
        %v5197 = vunpack.c.l.s4 1985246804
        %v5198 = vunpack.c.0.s8 %v5197
        %v5199 = vperm.slane %v5170, %v5198
        %v5201 = vunpack.c.l.s4 839922192
        %v5202 = vunpack.c.0.s8 %v5201
        %v5203 = vperm.slane %v5180, %v5202
        %v5205 = vunpack.c.l.s4 1985246804
        %v5206 = vunpack.c.0.s8 %v5205
        %v5207 = vperm.slane %v5180, %v5206
        %v5214 = vmul.f32 %v5101, %v5187
        %v5215 = vmul.f32 %v5102, %v5191
        %v5216 = vmul.f32 %v5103, %v5195
        %v5217 = vmul.f32 %v5104, %v5199
        %v5218 = vmul.f32 %v5105, %v5203
        %v5219 = vmul.f32 %v5106, %v5207
        %v5220 = vperm.slane %v3908, 0
        %v5222 = vrot.slane %v5220, 4
        %v5224 = vmul.f32 %v5214, %v5220
        %v5225 = vmul.f32 %v5215, %v5222
        %v5226 = vmul.f32 %v5216, %v5220
        %v5227 = vmul.f32 %v5217, %v5222
        %v5228 = vmul.f32 %v5218, %v5220
        %v5229 = vmul.f32 %v5219, %v5222
        %v5230 = vperm.slane %v3909, 0
        %v5232 = vrot.slane %v5230, 4
        %v5234 = vadd.f32 %v5224, %v5230
        %v5235 = vadd.f32 %v5225, %v5232
        %v5236 = vadd.f32 %v5226, %v5230
        %v5237 = vadd.f32 %v5227, %v5232
        %v5238 = vadd.f32 %v5228, %v5230
        %v5239 = vadd.f32 %v5229, %v5232
        %5246 = vst [vmem:[#allocation1] ss:$2 sm:$0xff] %v5234
        %s5247 = scalar_lea.vmem [#allocation1], 1
        %5248 = vst [vmem:[%s5247] ss:$2 sm:$0xff] %v5235
        %s5249 = scalar_lea.vmem [#allocation1], 16
        %5250 = vst [vmem:[%s5249] ss:$2 sm:$0xff] %v5236
        %s5251 = scalar_lea.vmem [#allocation1], 17
        %5252 = vst [vmem:[%s5251] ss:$2 sm:$0xff] %v5237
        %s5253 = scalar_lea.vmem [#allocation1], 32
        %5254 = vst [vmem:[%s5253] ss:$2 sm:$0xff] %v5238
        %s5255 = scalar_lea.vmem [#allocation1], 33
        %5256 = vst [vmem:[%s5255] ss:$2 sm:$0xff] %v5239
        %v5257 = vld.sshfl [vmem:[#allocation1] sm:$0xff pattern:$0x75316420]
        %v5258 = vld.sshfl [vmem:[#allocation1 + $0x10] sm:$0xff pattern:$0x75316420]
        %v5259 = vld.sshfl [vmem:[#allocation1 + $0x20] sm:$0xff pattern:$0x75316420]
        %v5263 = vpack.c.bf16 %v5258, %v5257
        %v5264 = vpack.c.bf16 %v5259, %v5259
        %v5265 = vpack.c.bf16 %v3893, %v3892
        %v5266 = vpack.c.bf16 %v3895, %v3894
        %v5267 = vperm.slane %v3910, 0
        %v5269 = vsel %vm499, %v5263, 0
        %v5272 = vsel %vm499, %v5264, 0
        %5274 = vmatpush.bf16.msra.mxu0 0
        %5275 = vmatpush.bf16.msra.mxu0 0
        %5276 = vmatpush.bf16.msra.mxu0 0
        %5277 = vmatpush.bf16.msra.mxu0 0
        %5278 = vmatpush.bf16.msra.mxu0 0
        %5279 = vmatpush.bf16.msra.mxu0 0
        %5280 = vmatpush.bf16.msra.mxu0 %v5266
        %5281 = vmatpush.bf16.msra.mxu0 %v5265
        %5282 = vmatmul.bf16.gmra.mxu0 %v5269
        %v5283 = vpop.f32.mrf.mxu0
        %v5284 = vadd.f32 %v5267, %v5283
        %v5285 = vpop.f32.mrf.mxu0
        %v5286 = vadd.f32 %v5267, %v5285
        %5287 = vmatmul.bf16.gmra.mxu0 %v5272
        %v5288 = vpop.f32.mrf.mxu0
        %v5289 = vadd.f32 %v5267, %v5288
        %v5290 = vpop.f32.mrf.mxu0
        %5291 = vdwg.mxu0
        %v5292 = vmax.f32 %v5284, 0.0
        %v5293 = vmax.f32 %v5286, 0.0
        %v5294 = vmax.f32 %v5289, 0.0
        %v5295 = vpack.c.bf16 %v5293, %v5292
        %v5296 = vpack.c.bf16 %v5294, %v5294
        %v5297 = vpack.c.bf16 %v3897, %v3896
        %v5298 = vpack.c.bf16 %v3899, %v3898
        %v5299 = vpack.c.bf16 %v3901, %v3900
        %v5300 = vpack.c.bf16 %v3903, %v3902
        %v5301 = vperm.slane %v3911, 0
        %v5303 = vsel %vm2117, %v5295, 0
        %v5306 = vsel %vm2117, %v5296, 0
        %5308 = vmatpush.bf16.msra.mxu0 0
        %5309 = vmatpush.bf16.msra.mxu0 0
        %5310 = vmatpush.bf16.msra.mxu0 0
        %5311 = vmatpush.bf16.msra.mxu0 0
        %5312 = vmatpush.bf16.msra.mxu0 %v5300
        %5313 = vmatpush.bf16.msra.mxu0 %v5299
        %5314 = vmatpush.bf16.msra.mxu0 %v5298
        %5315 = vmatpush.bf16.msra.mxu0 %v5297
        %5316 = vmatmul.bf16.gmra.mxu0 %v5303
        %v5317 = vpop.f32.mrf.mxu0
        %v5318 = vadd.f32 %v5301, %v5317
        %v5319 = vpop.f32.mrf.mxu0
        %v5320 = vadd.f32 %v5301, %v5319
        %5321 = vmatmul.bf16.gmra.mxu0 %v5306
        %v5322 = vpop.f32.mrf.mxu0
        %v5323 = vadd.f32 %v5301, %v5322
        %v5324 = vpop.f32.mrf.mxu0
        %5325 = vdwg.mxu0
        %v5329 = vrot.slane %v5318, 4
        %v5330 = vrot.slane %v5320, 4
        %v5331 = vrot.slane %v5323, 4
        %v5335 = vadd.f32 %v5027, %v5318
        %v5336 = vadd.f32 %v5028, %v5329
        %v5337 = vadd.f32 %v5029, %v5320
        %v5338 = vadd.f32 %v5030, %v5330
        %v5339 = vadd.f32 %v5031, %v5323
        %v5340 = vadd.f32 %v5032, %v5331
        %v5341 = vld [vmem:[%s213 + $0x210] sm:$0xff]
        %v5342 = vld [vmem:[%s213 + $0x218] sm:$0xff]
        %v5343 = vld [vmem:[%s213 + $0x220] sm:$0xff]
        %v5344 = vld [vmem:[%s213 + $0x228] sm:$0xff]
        %v5345 = vld [vmem:[%s213 + $0x230] sm:$0xff]
        %v5346 = vld [vmem:[%s213 + $0x238] sm:$0xff]
        %v5347 = vld [vmem:[%s213 + $0x240] sm:$0xff]
        %v5348 = vld [vmem:[%s213 + $0x248] sm:$0xff]
        %v5349 = vld [vmem:[%s213 + $0x250] sm:$0xff]
        %v5350 = vld [vmem:[%s213 + $0x258] sm:$0xff]
        %v5351 = vld [vmem:[%s213 + $0x260] sm:$0xff]
        %v5352 = vld [vmem:[%s213 + $0x268] sm:$0xff]
        %v5353 = vld [vmem:[%s213 + $0x270] sm:$0xff]
        %v5354 = vld [vmem:[%s213 + $0x278] sm:$0xff]
        %v5355 = vld [vmem:[%s213 + $0x280] sm:$0xff]
        %v5356 = vld [vmem:[%s213 + $0x288] sm:$0xff]
        %v5357 = vld [vmem:[%s213 + $0x290] sm:$0xff]
        %v5358 = vld [vmem:[%s213 + $0x298] sm:$0xff]
        %v5359 = vld [vmem:[%s213 + $0x2a0] sm:$0xff]
        %v5360 = vld [vmem:[%s213 + $0x2a8] sm:$0xff]
        %v5361 = vld [vmem:[%s213 + $0x2b0] sm:$0x1]
        %v5362 = vld [vmem:[%s213 + $0x2b1] sm:$0x1]
        %v5363 = vld [vmem:[%s213 + $0x2b2] sm:$0x1]
        %v5364 = vld [vmem:[%s213 + $0x2b3] sm:$0x1]
        %v5365 = vld [vmem:[%s213 + $0x2b4] sm:$0x1]
        %v5366 = vld [vmem:[%s213 + $0x2b5] sm:$0x1]
        %v5367 = vld [vmem:[%s213 + $0x2b6] sm:$0x1]
        %v5368 = vld [vmem:[%s213 + $0x2b7] sm:$0x1]
        %5375 = vst [vmem:[#allocation1] ss:$2 sm:$0xff] %v5335
        %s5376 = scalar_lea.vmem [#allocation1], 1
        %5377 = vst [vmem:[%s5376] ss:$2 sm:$0xff] %v5336
        %s5378 = scalar_lea.vmem [#allocation1], 16
        %5379 = vst [vmem:[%s5378] ss:$2 sm:$0xff] %v5337
        %s5380 = scalar_lea.vmem [#allocation1], 17
        %5381 = vst [vmem:[%s5380] ss:$2 sm:$0xff] %v5338
        %s5382 = scalar_lea.vmem [#allocation1], 32
        %5383 = vst [vmem:[%s5382] ss:$2 sm:$0xff] %v5339
        %s5384 = scalar_lea.vmem [#allocation1], 33
        %5385 = vst [vmem:[%s5384] ss:$2 sm:$0xff] %v5340
        %v5386 = vld.sshfl [vmem:[#allocation1] sm:$0xff pattern:$0x75316420]
        %v5387 = vld.sshfl [vmem:[#allocation1 + $0x10] sm:$0xff pattern:$0x75316420]
        %v5388 = vld.sshfl [vmem:[#allocation1 + $0x20] sm:$0xff pattern:$0x75316420]
        %v5392 = vsel %vm499, %v5386, 0.0
        %5393 = vadd.xlane.f32.xlu0 %v5392
        %v5394 = vpop.xlane.xlu0 %5393
        %v5395 = vsel %vm499, %v5387, 0.0
        %5396 = vadd.xlane.f32.xlu0 %v5395
        %v5397 = vpop.xlane.xlu0 %5396
        %v5398 = vsel %vm499, %v5388, 0.0
        %5399 = vadd.xlane.f32.xlu0 %v5398
        %v5400 = vpop.xlane.xlu0 %5399
        %v5401 = vmul.f32 %v5394, %v515
        %v5402 = vmul.f32 %v5397, %v515
        %v5403 = vmul.f32 %v5400, %v515
        %v5408 = vunpack.c.l.s4 839922192
        %v5409 = vunpack.c.0.s8 %v5408
        %v5410 = vperm.slane %v5401, %v5409
        %v5412 = vunpack.c.l.s4 1985246804
        %v5413 = vunpack.c.0.s8 %v5412
        %v5414 = vperm.slane %v5401, %v5413
        %v5416 = vunpack.c.l.s4 839922192
        %v5417 = vunpack.c.0.s8 %v5416
        %v5418 = vperm.slane %v5402, %v5417
        %v5420 = vunpack.c.l.s4 1985246804
        %v5421 = vunpack.c.0.s8 %v5420
        %v5422 = vperm.slane %v5402, %v5421
        %v5424 = vunpack.c.l.s4 839922192
        %v5425 = vunpack.c.0.s8 %v5424
        %v5426 = vperm.slane %v5403, %v5425
        %v5428 = vunpack.c.l.s4 1985246804
        %v5429 = vunpack.c.0.s8 %v5428
        %v5430 = vperm.slane %v5403, %v5429
        %v5437 = vsub.f32 %v5335, %v5410
        %v5438 = vsub.f32 %v5336, %v5414
        %v5439 = vsub.f32 %v5337, %v5418
        %v5440 = vsub.f32 %v5338, %v5422
        %v5441 = vsub.f32 %v5339, %v5426
        %v5442 = vsub.f32 %v5340, %v5430
        %v5443 = vmul.f32 %v5437, %v5437
        %v5444 = vmul.f32 %v5438, %v5438
        %v5445 = vmul.f32 %v5439, %v5439
        %v5446 = vmul.f32 %v5440, %v5440
        %v5447 = vmul.f32 %v5441, %v5441
        %v5448 = vmul.f32 %v5442, %v5442
        %5455 = vst [vmem:[#allocation1] ss:$2 sm:$0xff] %v5443
        %s5456 = scalar_lea.vmem [#allocation1], 1
        %5457 = vst [vmem:[%s5456] ss:$2 sm:$0xff] %v5444
        %s5458 = scalar_lea.vmem [#allocation1], 16
        %5459 = vst [vmem:[%s5458] ss:$2 sm:$0xff] %v5445
        %s5460 = scalar_lea.vmem [#allocation1], 17
        %5461 = vst [vmem:[%s5460] ss:$2 sm:$0xff] %v5446
        %s5462 = scalar_lea.vmem [#allocation1], 32
        %5463 = vst [vmem:[%s5462] ss:$2 sm:$0xff] %v5447
        %s5464 = scalar_lea.vmem [#allocation1], 33
        %5465 = vst [vmem:[%s5464] ss:$2 sm:$0xff] %v5448
        %v5466 = vld.sshfl [vmem:[#allocation1] sm:$0xff pattern:$0x75316420]
        %v5467 = vld.sshfl [vmem:[#allocation1 + $0x10] sm:$0xff pattern:$0x75316420]
        %v5468 = vld.sshfl [vmem:[#allocation1 + $0x20] sm:$0xff pattern:$0x75316420]
        %v5472 = vsel %vm499, %v5466, 0.0
        %5473 = vadd.xlane.f32.xlu0 %v5472
        %v5474 = vpop.xlane.xlu0 %5473
        %v5475 = vsel %vm499, %v5467, 0.0
        %5476 = vadd.xlane.f32.xlu0 %v5475
        %v5477 = vpop.xlane.xlu0 %5476
        %v5478 = vsel %vm499, %v5468, 0.0
        %5479 = vadd.xlane.f32.xlu0 %v5478
        %v5480 = vpop.xlane.xlu0 %5479
        %v5481 = vmul.f32 %v5474, %v515
        %v5482 = vmul.f32 %v5477, %v515
        %v5483 = vmul.f32 %v5480, %v515
        %v5484 = vadd.f32 %v5481, 1e-05
        %v5485 = vadd.f32 %v5482, 1e-05
        %v5486 = vadd.f32 %v5483, 1e-05
        %v5487 = vrsqrt.pop %v5484
        %v5488 = vmul.f32 %v5487, %v5484
        %v5489 = vmul.f32 %v5488, %v5487
        %v5490 = vmul.f32 0.5, %v5489
        %v5491 = vsub.f32 1.5, %v5490
        %v5492 = vmul.f32 %v5487, %v5491
        %vm5493 = vweird.f32 %v5484
        %vm5494 = vweird.f32 %v5487
        %vm5495 = vmor %vm5493, %vm5494
        %v5496 = vsel %vm5495, %v5487, %v5492
        %v5497 = vrsqrt.pop %v5485
        %v5498 = vmul.f32 %v5497, %v5485
        %v5499 = vmul.f32 %v5498, %v5497
        %v5500 = vmul.f32 0.5, %v5499
        %v5501 = vsub.f32 1.5, %v5500
        %v5502 = vmul.f32 %v5497, %v5501
        %vm5503 = vweird.f32 %v5485
        %vm5504 = vweird.f32 %v5497
        %vm5505 = vmor %vm5503, %vm5504
        %v5506 = vsel %vm5505, %v5497, %v5502
        %v5507 = vrsqrt.pop %v5486
        %v5508 = vmul.f32 %v5507, %v5486
        %v5509 = vmul.f32 %v5508, %v5507
        %v5510 = vmul.f32 0.5, %v5509
        %v5511 = vsub.f32 1.5, %v5510
        %v5512 = vmul.f32 %v5507, %v5511
        %vm5513 = vweird.f32 %v5486
        %vm5514 = vweird.f32 %v5507
        %vm5515 = vmor %vm5513, %vm5514
        %v5516 = vsel %vm5515, %v5507, %v5512
        %v5521 = vunpack.c.l.s4 839922192
        %v5522 = vunpack.c.0.s8 %v5521
        %v5523 = vperm.slane %v5496, %v5522
        %v5525 = vunpack.c.l.s4 1985246804
        %v5526 = vunpack.c.0.s8 %v5525
        %v5527 = vperm.slane %v5496, %v5526
        %v5529 = vunpack.c.l.s4 839922192
        %v5530 = vunpack.c.0.s8 %v5529
        %v5531 = vperm.slane %v5506, %v5530
        %v5533 = vunpack.c.l.s4 1985246804
        %v5534 = vunpack.c.0.s8 %v5533
        %v5535 = vperm.slane %v5506, %v5534
        %v5537 = vunpack.c.l.s4 839922192
        %v5538 = vunpack.c.0.s8 %v5537
        %v5539 = vperm.slane %v5516, %v5538
        %v5541 = vunpack.c.l.s4 1985246804
        %v5542 = vunpack.c.0.s8 %v5541
        %v5543 = vperm.slane %v5516, %v5542
        %v5550 = vmul.f32 %v5437, %v5523
        %v5551 = vmul.f32 %v5438, %v5527
        %v5552 = vmul.f32 %v5439, %v5531
        %v5553 = vmul.f32 %v5440, %v5535
        %v5554 = vmul.f32 %v5441, %v5539
        %v5555 = vmul.f32 %v5442, %v5543
        %v5556 = vperm.slane %v5361, 0
        %v5558 = vrot.slane %v5556, 4
        %v5560 = vmul.f32 %v5550, %v5556
        %v5561 = vmul.f32 %v5551, %v5558
        %v5562 = vmul.f32 %v5552, %v5556
        %v5563 = vmul.f32 %v5553, %v5558
        %v5564 = vmul.f32 %v5554, %v5556
        %v5565 = vmul.f32 %v5555, %v5558
        %v5566 = vperm.slane %v5362, 0
        %v5568 = vrot.slane %v5566, 4
        %v5570 = vadd.f32 %v5560, %v5566
        %v5571 = vadd.f32 %v5561, %v5568
        %v5572 = vadd.f32 %v5562, %v5566
        %v5573 = vadd.f32 %v5563, %v5568
        %v5574 = vadd.f32 %v5564, %v5566
        %v5575 = vadd.f32 %v5565, %v5568
        %5582 = vst [vmem:[#allocation1] ss:$2 sm:$0xff] %v5570
        %s5583 = scalar_lea.vmem [#allocation1], 1
        %5584 = vst [vmem:[%s5583] ss:$2 sm:$0xff] %v5571
        %s5585 = scalar_lea.vmem [#allocation1], 16
        %5586 = vst [vmem:[%s5585] ss:$2 sm:$0xff] %v5572
        %s5587 = scalar_lea.vmem [#allocation1], 17
        %5588 = vst [vmem:[%s5587] ss:$2 sm:$0xff] %v5573
        %s5589 = scalar_lea.vmem [#allocation1], 32
        %5590 = vst [vmem:[%s5589] ss:$2 sm:$0xff] %v5574
        %s5591 = scalar_lea.vmem [#allocation1], 33
        %5592 = vst [vmem:[%s5591] ss:$2 sm:$0xff] %v5575
        %v5593 = vld.sshfl [vmem:[#allocation1] sm:$0xff pattern:$0x75316420]
        %v5594 = vld.sshfl [vmem:[#allocation1 + $0x10] sm:$0xff pattern:$0x75316420]
        %v5595 = vld.sshfl [vmem:[#allocation1 + $0x20] sm:$0xff pattern:$0x75316420]
        %v5599 = vpack.c.bf16 %v5594, %v5593
        %v5600 = vpack.c.bf16 %v5595, %v5595
        %v5601 = vpack.c.bf16 %v5342, %v5341
        %v5602 = vpack.c.bf16 %v5344, %v5343
        %v5603 = vperm.slane %v5363, 0
        %v5605 = vsel %vm499, %v5599, 0
        %v5608 = vsel %vm499, %v5600, 0
        %5610 = vmatpush.bf16.msra.mxu0 0
        %5611 = vmatpush.bf16.msra.mxu0 0
        %5612 = vmatpush.bf16.msra.mxu0 0
        %5613 = vmatpush.bf16.msra.mxu0 0
        %5614 = vmatpush.bf16.msra.mxu0 0
        %5615 = vmatpush.bf16.msra.mxu0 0
        %5616 = vmatpush.bf16.msra.mxu0 %v5602
        %5617 = vmatpush.bf16.msra.mxu0 %v5601
        %5618 = vmatmul.bf16.gmra.mxu0 %v5605
        %v5619 = vpop.f32.mrf.mxu0
        %v5620 = vadd.f32 %v5603, %v5619
        %v5621 = vpop.f32.mrf.mxu0
        %v5622 = vadd.f32 %v5603, %v5621
        %5623 = vmatmul.bf16.gmra.mxu0 %v5608
        %v5624 = vpop.f32.mrf.mxu0
        %v5625 = vadd.f32 %v5603, %v5624
        %v5626 = vpop.f32.mrf.mxu0
        %5627 = vdwg.mxu0
        %v5631 = vrot.slane %v5620, 4
        %v5632 = vrot.slane %v5622, 4
        %v5633 = vrot.slane %v5625, 4
        %5634 = vst [vmem:[#allocation1] ss:$2 sm:$0xff] %v5620
        %s5635 = scalar_lea.vmem [#allocation1], 1
        %5636 = vst [vmem:[%s5635] ss:$2 sm:$0xff] %v5631
        %s5637 = scalar_lea.vmem [#allocation1], 16
        %5638 = vst [vmem:[%s5637] ss:$2 sm:$0xff] %v5622
        %v5639 = vld.sshfl [vmem:[#allocation1] sm:$0xff pattern:$0x75316420]
        %v5640 = vld.sshfl [vmem:[#allocation1 + $0x10] sm:$0xff pattern:$0x75316420]
        %s5641 = scalar_lea.vmem [#allocation1], 32
        %5642 = vst [vmem:[%s5641] ss:$2 sm:$0xff] %v5632
        %s5643 = scalar_lea.vmem [#allocation1], 33
        %5644 = vst [vmem:[%s5643] ss:$2 sm:$0xff] %v5625
        %s5645 = scalar_lea.vmem [#allocation1], 48
        %5646 = vst [vmem:[%s5645] ss:$2 sm:$0xff] %v5633
        %v5647 = vld.sshfl [vmem:[#allocation1 + $0x20] sm:$0xff pattern:$0x75316420]
        %v5648 = vld.sshfl [vmem:[#allocation1 + $0x30] sm:$0xff pattern:$0x75316420]
        %v5653 = vpack.c.bf16 %v5639, %v5639
        %v5654 = vpack.c.bf16 %v5640, %v5640
        %v5655 = vpack.c.bf16 %v5647, %v5647
        %v5656 = vpack.c.bf16 %v5648, %v5648
        %5657 = vst [vmem:[#allocation1] ss:$2 sm:$0xff] %v5620
        %s5658 = scalar_lea.vmem [#allocation1], 1
        %5659 = vst [vmem:[%s5658] ss:$2 sm:$0xff] %v5631
        %s5660 = scalar_lea.vmem [#allocation1], 16
        %5661 = vst [vmem:[%s5660] ss:$2 sm:$0xff] %v5622
        %v5662 = vld.sshfl [vmem:[#allocation1] sm:$0xff pattern:$0x75316420]
        %v5663 = vld.sshfl [vmem:[#allocation1 + $0x10] sm:$0xff pattern:$0x75316420]
        %s5664 = scalar_lea.vmem [#allocation1], 32
        %5665 = vst [vmem:[%s5664] ss:$2 sm:$0xff] %v5632
        %s5666 = scalar_lea.vmem [#allocation1], 33
        %5667 = vst [vmem:[%s5666] ss:$2 sm:$0xff] %v5625
        %s5668 = scalar_lea.vmem [#allocation1], 48
        %5669 = vst [vmem:[%s5668] ss:$2 sm:$0xff] %v5633
        %v5670 = vld.sshfl [vmem:[#allocation1 + $0x20] sm:$0xff pattern:$0x75316420]
        %v5671 = vld.sshfl [vmem:[#allocation1 + $0x30] sm:$0xff pattern:$0x75316420]
        %v5676 = vpack.c.bf16 %v5662, %v5662
        %v5677 = vpack.c.bf16 %v5663, %v5663
        %v5678 = vpack.c.bf16 %v5670, %v5670
        %v5679 = vpack.c.bf16 %v5671, %v5671
        %5680 = vst [vmem:[#allocation1] ss:$2 sm:$0xff] %v5620
        %s5681 = scalar_lea.vmem [#allocation1], 1
        %5682 = vst [vmem:[%s5681] ss:$2 sm:$0xff] %v5631
        %s5683 = scalar_lea.vmem [#allocation1], 16
        %5684 = vst [vmem:[%s5683] ss:$2 sm:$0xff] %v5622
        %v5685 = vld.sshfl [vmem:[#allocation1] sm:$0xff pattern:$0x75316420]
        %v5686 = vld.sshfl [vmem:[#allocation1 + $0x10] sm:$0xff pattern:$0x75316420]
        %s5687 = scalar_lea.vmem [#allocation1], 32
        %5688 = vst [vmem:[%s5687] ss:$2 sm:$0xff] %v5632
        %s5689 = scalar_lea.vmem [#allocation1], 33
        %5690 = vst [vmem:[%s5689] ss:$2 sm:$0xff] %v5625
        %s5691 = scalar_lea.vmem [#allocation1], 48
        %5692 = vst [vmem:[%s5691] ss:$2 sm:$0xff] %v5633
        %v5693 = vld.sshfl [vmem:[#allocation1 + $0x20] sm:$0xff pattern:$0x75316420]
        %v5694 = vld.sshfl [vmem:[#allocation1 + $0x30] sm:$0xff pattern:$0x75316420]
        %v5699 = vpack.c.bf16 %v5685, %v5685
        %v5700 = vpack.c.bf16 %v5686, %v5686
        %v5701 = vpack.c.bf16 %v5693, %v5693
        %v5702 = vpack.c.bf16 %v5694, %v5694
        %v5705 = vunpack.c.l.b16 %v5653
        %v5706 = vunpack.c.l.b16 %v5654
        %v5707 = vpack.c.b16 %v5706, %v5705
        %v5710 = vunpack.c.l.b16 %v5676
        %v5711 = vunpack.c.l.b16 %v5677
        %v5712 = vpack.c.b16 %v5711, %v5710
        %5713 = vrot.lane.b32.xlu0 %v5712, 96
        %v5714 = vpop.permute.xlu0 %5713
        %v5716 = vsel %vm312, %v5707, 0
        %v5719 = vsel %vm312, %v5714, 0
        %5721 = vmatpush.bf16.xpose.msra.mxu0 0
        %5722 = vmatpush.bf16.xpose.msra.mxu0 0
        %5723 = vmatpush.bf16.xpose.msra.mxu0 0
        %5724 = vmatpush.bf16.xpose.msra.mxu0 0
        %5725 = vmatpush.bf16.xpose.msra.mxu0 0
        %5726 = vmatpush.bf16.xpose.msra.mxu0 0
        %5727 = vmatpush.bf16.xpose.msra.mxu0 0
        %5728 = vmatpush.bf16.xpose.msra.mxu0 %v5719
        %5729 = vmatmul.bf16.gmra.mxu0 %v5716
        %v5730 = vpop.f32.mrf.mxu0
        %v5731 = vadd.f32 0.0, %v5730
        %v5732 = vpop.f32.mrf.mxu0
        %v5733 = vadd.f32 0.0, %v5732
        %5734 = vdwg.mxu0
        %v5737 = vunpack.c.l.b16 %v5655
        %v5738 = vunpack.c.l.b16 %v5656
        %v5739 = vpack.c.b16 %v5738, %v5737
        %v5742 = vunpack.c.l.b16 %v5678
        %v5743 = vunpack.c.l.b16 %v5679
        %v5744 = vpack.c.b16 %v5743, %v5742
        %5745 = vrot.lane.b32.xlu0 %v5744, 96
        %v5746 = vpop.permute.xlu0 %5745
        %v5748 = vsel %vm312, %v5739, 0
        %v5751 = vsel %vm312, %v5746, 0
        %5753 = vmatpush.bf16.xpose.msra.mxu0 0
        %5754 = vmatpush.bf16.xpose.msra.mxu0 0
        %5755 = vmatpush.bf16.xpose.msra.mxu0 0
        %5756 = vmatpush.bf16.xpose.msra.mxu0 0
        %5757 = vmatpush.bf16.xpose.msra.mxu0 0
        %5758 = vmatpush.bf16.xpose.msra.mxu0 0
        %5759 = vmatpush.bf16.xpose.msra.mxu0 0
        %5760 = vmatpush.bf16.xpose.msra.mxu0 %v5751
        %5761 = vmatmul.bf16.gmra.mxu0 %v5748
        %v5762 = vpop.f32.mrf.mxu0
        %v5763 = vadd.f32 0.0, %v5762
        %v5764 = vpop.f32.mrf.mxu0
        %v5765 = vadd.f32 0.0, %v5764
        %5766 = vdwg.mxu0
        %v5767 = vmul.f32 %v5731, 0.35355338
        %v5768 = vmul.f32 %v5733, 0.35355338
        %v5769 = vmul.f32 %v5763, 0.35355338
        %v5770 = vmul.f32 %v5765, 0.35355338
        %v5771 = vsel %vm4315, %v5767, -1e+30
        %v5772 = vsel %vm4315, %v5768, -1e+30
        %v5773 = vsel %vm4315, %v5769, -1e+30
        %v5774 = vsel %vm4315, %v5770, -1e+30
        %v5775 = vsel %vm1130, %v5771, -inf
        %5776 = vmax.xlane.f32.xlu0 %v5775
        %v5777 = vpop.xlane.xlu0 %5776
        %v5778 = vsel %vm1134, %v5772, -inf
        %5779 = vmax.xlane.f32.xlu0 %v5778
        %v5780 = vpop.xlane.xlu0 %5779
        %v5781 = vsel %vm1130, %v5773, -inf
        %5782 = vmax.xlane.f32.xlu0 %v5781
        %v5783 = vpop.xlane.xlu0 %5782
        %v5784 = vsel %vm1134, %v5774, -inf
        %5785 = vmax.xlane.f32.xlu0 %v5784
        %v5786 = vpop.xlane.xlu0 %5785
        %v5787 = vsub.f32 %v5771, %v5777
        %v5788 = vsub.f32 %v5772, %v5780
        %v5789 = vsub.f32 %v5773, %v5783
        %v5790 = vsub.f32 %v5774, %v5786
        %v5791 = vmul.f32 %v5787, 1.442695
        %v5792 = vpow.pop %v5791
        %v5793 = vmul.f32 %v5788, 1.442695
        %v5794 = vpow.pop %v5793
        %v5795 = vmul.f32 %v5789, 1.442695
        %v5796 = vpow.pop %v5795
        %v5797 = vmul.f32 %v5790, 1.442695
        %v5798 = vpow.pop %v5797
        %v5799 = vsel %vm1130, %v5792, 0.0
        %5800 = vadd.xlane.f32.xlu0 %v5799
        %v5801 = vpop.xlane.xlu0 %5800
        %v5802 = vsel %vm1134, %v5794, 0.0
        %5803 = vadd.xlane.f32.xlu0 %v5802
        %v5804 = vpop.xlane.xlu0 %5803
        %v5805 = vsel %vm1130, %v5796, 0.0
        %5806 = vadd.xlane.f32.xlu0 %v5805
        %v5807 = vpop.xlane.xlu0 %5806
        %v5808 = vsel %vm1134, %v5798, 0.0
        %5809 = vadd.xlane.f32.xlu0 %v5808
        %v5810 = vpop.xlane.xlu0 %5809
        %v5811 = vrcp.pop %v5801
        %v5812 = vrcp.pop %v5804
        %v5813 = vrcp.pop %v5807
        %v5814 = vrcp.pop %v5810
        %v5815 = vmul.f32 %v5792, %v5811
        %v5816 = vmul.f32 %v5794, %v5812
        %v5817 = vmul.f32 %v5796, %v5813
        %v5818 = vmul.f32 %v5798, %v5814
        %v5819 = vpack.c.bf16 %v5815, %v5815
        %v5820 = vpack.c.bf16 %v5816, %v5816
        %v5821 = vpack.c.bf16 %v5817, %v5817
        %v5822 = vpack.c.bf16 %v5818, %v5818
        %v5825 = vunpack.c.l.b16 %v5819
        %v5826 = vunpack.c.l.b16 %v5820
        %v5827 = vpack.c.b16 %v5826, %v5825
        %v5830 = vunpack.c.l.b16 %v5699
        %v5831 = vunpack.c.l.b16 %v5700
        %v5832 = vpack.c.b16 %v5831, %v5830
        %5833 = vrot.lane.b32.xlu0 %v5832, 64
        %v5834 = vpop.permute.xlu0 %5833
        %v5836 = vsel %vm1130, %v5827, 0
        %v5839 = vsel %vm1195, %v5834, 0
        %5841 = vmatpush.bf16.msra.mxu0 0
        %5842 = vmatpush.bf16.msra.mxu0 0
        %5843 = vmatpush.bf16.msra.mxu0 0
        %5844 = vmatpush.bf16.msra.mxu0 0
        %5845 = vmatpush.bf16.msra.mxu0 0
        %5846 = vmatpush.bf16.msra.mxu0 0
        %5847 = vmatpush.bf16.msra.mxu0 0
        %5848 = vmatpush.bf16.msra.mxu0 %v5839
        %5849 = vmatmul.bf16.gmra.mxu0 %v5836
        %v5850 = vpop.f32.mrf.mxu0
        %v5851 = vadd.f32 0.0, %v5850
        %v5852 = vpop.f32.mrf.mxu0
        %v5853 = vadd.f32 0.0, %v5852
        %5854 = vdwg.mxu0
        %v5857 = vunpack.c.l.b16 %v5821
        %v5858 = vunpack.c.l.b16 %v5822
        %v5859 = vpack.c.b16 %v5858, %v5857
        %v5862 = vunpack.c.l.b16 %v5701
        %v5863 = vunpack.c.l.b16 %v5702
        %v5864 = vpack.c.b16 %v5863, %v5862
        %5865 = vrot.lane.b32.xlu0 %v5864, 64
        %v5866 = vpop.permute.xlu0 %5865
        %v5868 = vsel %vm1130, %v5859, 0
        %v5871 = vsel %vm1195, %v5866, 0
        %5873 = vmatpush.bf16.msra.mxu0 0
        %5874 = vmatpush.bf16.msra.mxu0 0
        %5875 = vmatpush.bf16.msra.mxu0 0
        %5876 = vmatpush.bf16.msra.mxu0 0
        %5877 = vmatpush.bf16.msra.mxu0 0
        %5878 = vmatpush.bf16.msra.mxu0 0
        %5879 = vmatpush.bf16.msra.mxu0 0
        %5880 = vmatpush.bf16.msra.mxu0 %v5871
        %5881 = vmatmul.bf16.gmra.mxu0 %v5868
        %v5882 = vpop.f32.mrf.mxu0
        %v5883 = vadd.f32 0.0, %v5882
        %v5884 = vpop.f32.mrf.mxu0
        %v5885 = vadd.f32 0.0, %v5884
        %5886 = vdwg.mxu0
        %5887 = vrot.lane.b32.xlu0 %v5707, 120
        %v5888 = vpop.permute.xlu0 %5887
        %5889 = vrot.lane.b32.xlu0 %v5712, 88
        %v5890 = vpop.permute.xlu0 %5889
        %v5892 = vsel %vm312, %v5888, 0
        %v5895 = vsel %vm312, %v5890, 0
        %5897 = vmatpush.bf16.xpose.msra.mxu0 0
        %5898 = vmatpush.bf16.xpose.msra.mxu0 0
        %5899 = vmatpush.bf16.xpose.msra.mxu0 0
        %5900 = vmatpush.bf16.xpose.msra.mxu0 0
        %5901 = vmatpush.bf16.xpose.msra.mxu0 0
        %5902 = vmatpush.bf16.xpose.msra.mxu0 0
        %5903 = vmatpush.bf16.xpose.msra.mxu0 0
        %5904 = vmatpush.bf16.xpose.msra.mxu0 %v5895
        %5905 = vmatmul.bf16.gmra.mxu0 %v5892
        %v5906 = vpop.f32.mrf.mxu0
        %v5907 = vadd.f32 0.0, %v5906
        %v5908 = vpop.f32.mrf.mxu0
        %v5909 = vadd.f32 0.0, %v5908
        %5910 = vdwg.mxu0
        %5911 = vrot.lane.b32.xlu0 %v5739, 120
        %v5912 = vpop.permute.xlu0 %5911
        %5913 = vrot.lane.b32.xlu0 %v5744, 88
        %v5914 = vpop.permute.xlu0 %5913
        %v5916 = vsel %vm312, %v5912, 0
        %v5919 = vsel %vm312, %v5914, 0
        %5921 = vmatpush.bf16.xpose.msra.mxu0 0
        %5922 = vmatpush.bf16.xpose.msra.mxu0 0
        %5923 = vmatpush.bf16.xpose.msra.mxu0 0
        %5924 = vmatpush.bf16.xpose.msra.mxu0 0
        %5925 = vmatpush.bf16.xpose.msra.mxu0 0
        %5926 = vmatpush.bf16.xpose.msra.mxu0 0
        %5927 = vmatpush.bf16.xpose.msra.mxu0 0
        %5928 = vmatpush.bf16.xpose.msra.mxu0 %v5919
        %5929 = vmatmul.bf16.gmra.mxu0 %v5916
        %v5930 = vpop.f32.mrf.mxu0
        %v5931 = vadd.f32 0.0, %v5930
        %v5932 = vpop.f32.mrf.mxu0
        %v5933 = vadd.f32 0.0, %v5932
        %5934 = vdwg.mxu0
        %v5935 = vmul.f32 %v5907, 0.35355338
        %v5936 = vmul.f32 %v5909, 0.35355338
        %v5937 = vmul.f32 %v5931, 0.35355338
        %v5938 = vmul.f32 %v5933, 0.35355338
        %v5939 = vsel %vm4315, %v5935, -1e+30
        %v5940 = vsel %vm4315, %v5936, -1e+30
        %v5941 = vsel %vm4315, %v5937, -1e+30
        %v5942 = vsel %vm4315, %v5938, -1e+30
        %v5943 = vsel %vm1130, %v5939, -inf
        %5944 = vmax.xlane.f32.xlu0 %v5943
        %v5945 = vpop.xlane.xlu0 %5944
        %v5946 = vsel %vm1134, %v5940, -inf
        %5947 = vmax.xlane.f32.xlu0 %v5946
        %v5948 = vpop.xlane.xlu0 %5947
        %v5949 = vsel %vm1130, %v5941, -inf
        %5950 = vmax.xlane.f32.xlu0 %v5949
        %v5951 = vpop.xlane.xlu0 %5950
        %v5952 = vsel %vm1134, %v5942, -inf
        %5953 = vmax.xlane.f32.xlu0 %v5952
        %v5954 = vpop.xlane.xlu0 %5953
        %v5955 = vsub.f32 %v5939, %v5945
        %v5956 = vsub.f32 %v5940, %v5948
        %v5957 = vsub.f32 %v5941, %v5951
        %v5958 = vsub.f32 %v5942, %v5954
        %v5959 = vmul.f32 %v5955, 1.442695
        %v5960 = vpow.pop %v5959
        %v5961 = vmul.f32 %v5956, 1.442695
        %v5962 = vpow.pop %v5961
        %v5963 = vmul.f32 %v5957, 1.442695
        %v5964 = vpow.pop %v5963
        %v5965 = vmul.f32 %v5958, 1.442695
        %v5966 = vpow.pop %v5965
        %v5967 = vsel %vm1130, %v5960, 0.0
        %5968 = vadd.xlane.f32.xlu0 %v5967
        %v5969 = vpop.xlane.xlu0 %5968
        %v5970 = vsel %vm1134, %v5962, 0.0
        %5971 = vadd.xlane.f32.xlu0 %v5970
        %v5972 = vpop.xlane.xlu0 %5971
        %v5973 = vsel %vm1130, %v5964, 0.0
        %5974 = vadd.xlane.f32.xlu0 %v5973
        %v5975 = vpop.xlane.xlu0 %5974
        %v5976 = vsel %vm1134, %v5966, 0.0
        %5977 = vadd.xlane.f32.xlu0 %v5976
        %v5978 = vpop.xlane.xlu0 %5977
        %v5979 = vrcp.pop %v5969
        %v5980 = vrcp.pop %v5972
        %v5981 = vrcp.pop %v5975
        %v5982 = vrcp.pop %v5978
        %v5983 = vmul.f32 %v5960, %v5979
        %v5984 = vmul.f32 %v5962, %v5980
        %v5985 = vmul.f32 %v5964, %v5981
        %v5986 = vmul.f32 %v5966, %v5982
        %v5987 = vpack.c.bf16 %v5983, %v5983
        %v5988 = vpack.c.bf16 %v5984, %v5984
        %v5989 = vpack.c.bf16 %v5985, %v5985
        %v5990 = vpack.c.bf16 %v5986, %v5986
        %v5993 = vunpack.c.l.b16 %v5987
        %v5994 = vunpack.c.l.b16 %v5988
        %v5995 = vpack.c.b16 %v5994, %v5993
        %5996 = vrot.lane.b32.xlu0 %v5832, 56
        %v5997 = vpop.permute.xlu0 %5996
        %v5999 = vsel %vm1130, %v5995, 0
        %v6002 = vsel %vm1195, %v5997, 0
        %6004 = vmatpush.bf16.msra.mxu0 0
        %6005 = vmatpush.bf16.msra.mxu0 0
        %6006 = vmatpush.bf16.msra.mxu0 0
        %6007 = vmatpush.bf16.msra.mxu0 0
        %6008 = vmatpush.bf16.msra.mxu0 0
        %6009 = vmatpush.bf16.msra.mxu0 0
        %6010 = vmatpush.bf16.msra.mxu0 0
        %6011 = vmatpush.bf16.msra.mxu0 %v6002
        %6012 = vmatmul.bf16.gmra.mxu0 %v5999
        %v6013 = vpop.f32.mrf.mxu0
        %v6014 = vadd.f32 0.0, %v6013
        %v6015 = vpop.f32.mrf.mxu0
        %v6016 = vadd.f32 0.0, %v6015
        %6017 = vdwg.mxu0
        %v6020 = vunpack.c.l.b16 %v5989
        %v6021 = vunpack.c.l.b16 %v5990
        %v6022 = vpack.c.b16 %v6021, %v6020
        %6023 = vrot.lane.b32.xlu0 %v5864, 56
        %v6024 = vpop.permute.xlu0 %6023
        %v6026 = vsel %vm1130, %v6022, 0
        %v6029 = vsel %vm1195, %v6024, 0
        %6031 = vmatpush.bf16.msra.mxu0 0
        %6032 = vmatpush.bf16.msra.mxu0 0
        %6033 = vmatpush.bf16.msra.mxu0 0
        %6034 = vmatpush.bf16.msra.mxu0 0
        %6035 = vmatpush.bf16.msra.mxu0 0
        %6036 = vmatpush.bf16.msra.mxu0 0
        %6037 = vmatpush.bf16.msra.mxu0 0
        %6038 = vmatpush.bf16.msra.mxu0 %v6029
        %6039 = vmatmul.bf16.gmra.mxu0 %v6026
        %v6040 = vpop.f32.mrf.mxu0
        %v6041 = vadd.f32 0.0, %v6040
        %v6042 = vpop.f32.mrf.mxu0
        %v6043 = vadd.f32 0.0, %v6042
        %6044 = vdwg.mxu0
        %6045 = vrot.lane.b32.xlu0 %v5707, 112
        %v6046 = vpop.permute.xlu0 %6045
        %6047 = vrot.lane.b32.xlu0 %v5712, 80
        %v6048 = vpop.permute.xlu0 %6047
        %v6050 = vsel %vm312, %v6046, 0
        %v6053 = vsel %vm312, %v6048, 0
        %6055 = vmatpush.bf16.xpose.msra.mxu0 0
        %6056 = vmatpush.bf16.xpose.msra.mxu0 0
        %6057 = vmatpush.bf16.xpose.msra.mxu0 0
        %6058 = vmatpush.bf16.xpose.msra.mxu0 0
        %6059 = vmatpush.bf16.xpose.msra.mxu0 0
        %6060 = vmatpush.bf16.xpose.msra.mxu0 0
        %6061 = vmatpush.bf16.xpose.msra.mxu0 0
        %6062 = vmatpush.bf16.xpose.msra.mxu0 %v6053
        %6063 = vmatmul.bf16.gmra.mxu0 %v6050
        %v6064 = vpop.f32.mrf.mxu0
        %v6065 = vadd.f32 0.0, %v6064
        %v6066 = vpop.f32.mrf.mxu0
        %v6067 = vadd.f32 0.0, %v6066
        %6068 = vdwg.mxu0
        %6069 = vrot.lane.b32.xlu0 %v5739, 112
        %v6070 = vpop.permute.xlu0 %6069
        %6071 = vrot.lane.b32.xlu0 %v5744, 80
        %v6072 = vpop.permute.xlu0 %6071
        %v6074 = vsel %vm312, %v6070, 0
        %v6077 = vsel %vm312, %v6072, 0
        %6079 = vmatpush.bf16.xpose.msra.mxu0 0
        %6080 = vmatpush.bf16.xpose.msra.mxu0 0
        %6081 = vmatpush.bf16.xpose.msra.mxu0 0
        %6082 = vmatpush.bf16.xpose.msra.mxu0 0
        %6083 = vmatpush.bf16.xpose.msra.mxu0 0
        %6084 = vmatpush.bf16.xpose.msra.mxu0 0
        %6085 = vmatpush.bf16.xpose.msra.mxu0 0
        %6086 = vmatpush.bf16.xpose.msra.mxu0 %v6077
        %6087 = vmatmul.bf16.gmra.mxu0 %v6074
        %v6088 = vpop.f32.mrf.mxu0
        %v6089 = vadd.f32 0.0, %v6088
        %v6090 = vpop.f32.mrf.mxu0
        %v6091 = vadd.f32 0.0, %v6090
        %6092 = vdwg.mxu0
        %v6093 = vmul.f32 %v6065, 0.35355338
        %v6094 = vmul.f32 %v6067, 0.35355338
        %v6095 = vmul.f32 %v6089, 0.35355338
        %v6096 = vmul.f32 %v6091, 0.35355338
        %v6097 = vsel %vm4315, %v6093, -1e+30
        %v6098 = vsel %vm4315, %v6094, -1e+30
        %v6099 = vsel %vm4315, %v6095, -1e+30
        %v6100 = vsel %vm4315, %v6096, -1e+30
        %v6101 = vsel %vm1130, %v6097, -inf
        %6102 = vmax.xlane.f32.xlu0 %v6101
        %v6103 = vpop.xlane.xlu0 %6102
        %v6104 = vsel %vm1134, %v6098, -inf
        %6105 = vmax.xlane.f32.xlu0 %v6104
        %v6106 = vpop.xlane.xlu0 %6105
        %v6107 = vsel %vm1130, %v6099, -inf
        %6108 = vmax.xlane.f32.xlu0 %v6107
        %v6109 = vpop.xlane.xlu0 %6108
        %v6110 = vsel %vm1134, %v6100, -inf
        %6111 = vmax.xlane.f32.xlu0 %v6110
        %v6112 = vpop.xlane.xlu0 %6111
        %v6113 = vsub.f32 %v6097, %v6103
        %v6114 = vsub.f32 %v6098, %v6106
        %v6115 = vsub.f32 %v6099, %v6109
        %v6116 = vsub.f32 %v6100, %v6112
        %v6117 = vmul.f32 %v6113, 1.442695
        %v6118 = vpow.pop %v6117
        %v6119 = vmul.f32 %v6114, 1.442695
        %v6120 = vpow.pop %v6119
        %v6121 = vmul.f32 %v6115, 1.442695
        %v6122 = vpow.pop %v6121
        %v6123 = vmul.f32 %v6116, 1.442695
        %v6124 = vpow.pop %v6123
        %v6125 = vsel %vm1130, %v6118, 0.0
        %6126 = vadd.xlane.f32.xlu0 %v6125
        %v6127 = vpop.xlane.xlu0 %6126
        %v6128 = vsel %vm1134, %v6120, 0.0
        %6129 = vadd.xlane.f32.xlu0 %v6128
        %v6130 = vpop.xlane.xlu0 %6129
        %v6131 = vsel %vm1130, %v6122, 0.0
        %6132 = vadd.xlane.f32.xlu0 %v6131
        %v6133 = vpop.xlane.xlu0 %6132
        %v6134 = vsel %vm1134, %v6124, 0.0
        %6135 = vadd.xlane.f32.xlu0 %v6134
        %v6136 = vpop.xlane.xlu0 %6135
        %v6137 = vrcp.pop %v6127
        %v6138 = vrcp.pop %v6130
        %v6139 = vrcp.pop %v6133
        %v6140 = vrcp.pop %v6136
        %v6141 = vmul.f32 %v6118, %v6137
        %v6142 = vmul.f32 %v6120, %v6138
        %v6143 = vmul.f32 %v6122, %v6139
        %v6144 = vmul.f32 %v6124, %v6140
        %v6145 = vpack.c.bf16 %v6141, %v6141
        %v6146 = vpack.c.bf16 %v6142, %v6142
        %v6147 = vpack.c.bf16 %v6143, %v6143
        %v6148 = vpack.c.bf16 %v6144, %v6144
        %v6151 = vunpack.c.l.b16 %v6145
        %v6152 = vunpack.c.l.b16 %v6146
        %v6153 = vpack.c.b16 %v6152, %v6151
        %6154 = vrot.lane.b32.xlu0 %v5832, 48
        %v6155 = vpop.permute.xlu0 %6154
        %v6157 = vsel %vm1130, %v6153, 0
        %v6160 = vsel %vm1195, %v6155, 0
        %6162 = vmatpush.bf16.msra.mxu0 0
        %6163 = vmatpush.bf16.msra.mxu0 0
        %6164 = vmatpush.bf16.msra.mxu0 0
        %6165 = vmatpush.bf16.msra.mxu0 0
        %6166 = vmatpush.bf16.msra.mxu0 0
        %6167 = vmatpush.bf16.msra.mxu0 0
        %6168 = vmatpush.bf16.msra.mxu0 0
        %6169 = vmatpush.bf16.msra.mxu0 %v6160
        %6170 = vmatmul.bf16.gmra.mxu0 %v6157
        %v6171 = vpop.f32.mrf.mxu0
        %v6172 = vadd.f32 0.0, %v6171
        %v6173 = vpop.f32.mrf.mxu0
        %v6174 = vadd.f32 0.0, %v6173
        %6175 = vdwg.mxu0
        %v6178 = vunpack.c.l.b16 %v6147
        %v6179 = vunpack.c.l.b16 %v6148
        %v6180 = vpack.c.b16 %v6179, %v6178
        %6181 = vrot.lane.b32.xlu0 %v5864, 48
        %v6182 = vpop.permute.xlu0 %6181
        %v6184 = vsel %vm1130, %v6180, 0
        %v6187 = vsel %vm1195, %v6182, 0
        %6189 = vmatpush.bf16.msra.mxu0 0
        %6190 = vmatpush.bf16.msra.mxu0 0
        %6191 = vmatpush.bf16.msra.mxu0 0
        %6192 = vmatpush.bf16.msra.mxu0 0
        %6193 = vmatpush.bf16.msra.mxu0 0
        %6194 = vmatpush.bf16.msra.mxu0 0
        %6195 = vmatpush.bf16.msra.mxu0 0
        %6196 = vmatpush.bf16.msra.mxu0 %v6187
        %6197 = vmatmul.bf16.gmra.mxu0 %v6184
        %v6198 = vpop.f32.mrf.mxu0
        %v6199 = vadd.f32 0.0, %v6198
        %v6200 = vpop.f32.mrf.mxu0
        %v6201 = vadd.f32 0.0, %v6200
        %6202 = vdwg.mxu0
        %6203 = vrot.lane.b32.xlu0 %v5707, 104
        %v6204 = vpop.permute.xlu0 %6203
        %6205 = vrot.lane.b32.xlu0 %v5712, 72
        %v6206 = vpop.permute.xlu0 %6205
        %v6208 = vsel %vm312, %v6204, 0
        %v6211 = vsel %vm312, %v6206, 0
        %6213 = vmatpush.bf16.xpose.msra.mxu0 0
        %6214 = vmatpush.bf16.xpose.msra.mxu0 0
        %6215 = vmatpush.bf16.xpose.msra.mxu0 0
        %6216 = vmatpush.bf16.xpose.msra.mxu0 0
        %6217 = vmatpush.bf16.xpose.msra.mxu0 0
        %6218 = vmatpush.bf16.xpose.msra.mxu0 0
        %6219 = vmatpush.bf16.xpose.msra.mxu0 0
        %6220 = vmatpush.bf16.xpose.msra.mxu0 %v6211
        %6221 = vmatmul.bf16.gmra.mxu0 %v6208
        %v6222 = vpop.f32.mrf.mxu0
        %v6223 = vadd.f32 0.0, %v6222
        %v6224 = vpop.f32.mrf.mxu0
        %v6225 = vadd.f32 0.0, %v6224
        %6226 = vdwg.mxu0
        %6227 = vrot.lane.b32.xlu0 %v5739, 104
        %v6228 = vpop.permute.xlu0 %6227
        %6229 = vrot.lane.b32.xlu0 %v5744, 72
        %v6230 = vpop.permute.xlu0 %6229
        %v6232 = vsel %vm312, %v6228, 0
        %v6235 = vsel %vm312, %v6230, 0
        %6237 = vmatpush.bf16.xpose.msra.mxu0 0
        %6238 = vmatpush.bf16.xpose.msra.mxu0 0
        %6239 = vmatpush.bf16.xpose.msra.mxu0 0
        %6240 = vmatpush.bf16.xpose.msra.mxu0 0
        %6241 = vmatpush.bf16.xpose.msra.mxu0 0
        %6242 = vmatpush.bf16.xpose.msra.mxu0 0
        %6243 = vmatpush.bf16.xpose.msra.mxu0 0
        %6244 = vmatpush.bf16.xpose.msra.mxu0 %v6235
        %6245 = vmatmul.bf16.gmra.mxu0 %v6232
        %v6246 = vpop.f32.mrf.mxu0
        %v6247 = vadd.f32 0.0, %v6246
        %v6248 = vpop.f32.mrf.mxu0
        %v6249 = vadd.f32 0.0, %v6248
        %6250 = vdwg.mxu0
        %v6251 = vmul.f32 %v6223, 0.35355338
        %v6252 = vmul.f32 %v6225, 0.35355338
        %v6253 = vmul.f32 %v6247, 0.35355338
        %v6254 = vmul.f32 %v6249, 0.35355338
        %v6255 = vsel %vm4315, %v6251, -1e+30
        %v6256 = vsel %vm4315, %v6252, -1e+30
        %v6257 = vsel %vm4315, %v6253, -1e+30
        %v6258 = vsel %vm4315, %v6254, -1e+30
        %v6259 = vsel %vm1130, %v6255, -inf
        %6260 = vmax.xlane.f32.xlu0 %v6259
        %v6261 = vpop.xlane.xlu0 %6260
        %v6262 = vsel %vm1134, %v6256, -inf
        %6263 = vmax.xlane.f32.xlu0 %v6262
        %v6264 = vpop.xlane.xlu0 %6263
        %v6265 = vsel %vm1130, %v6257, -inf
        %6266 = vmax.xlane.f32.xlu0 %v6265
        %v6267 = vpop.xlane.xlu0 %6266
        %v6268 = vsel %vm1134, %v6258, -inf
        %6269 = vmax.xlane.f32.xlu0 %v6268
        %v6270 = vpop.xlane.xlu0 %6269
        %v6271 = vsub.f32 %v6255, %v6261
        %v6272 = vsub.f32 %v6256, %v6264
        %v6273 = vsub.f32 %v6257, %v6267
        %v6274 = vsub.f32 %v6258, %v6270
        %v6275 = vmul.f32 %v6271, 1.442695
        %v6276 = vpow.pop %v6275
        %v6277 = vmul.f32 %v6272, 1.442695
        %v6278 = vpow.pop %v6277
        %v6279 = vmul.f32 %v6273, 1.442695
        %v6280 = vpow.pop %v6279
        %v6281 = vmul.f32 %v6274, 1.442695
        %v6282 = vpow.pop %v6281
        %v6283 = vsel %vm1130, %v6276, 0.0
        %6284 = vadd.xlane.f32.xlu0 %v6283
        %v6285 = vpop.xlane.xlu0 %6284
        %v6286 = vsel %vm1134, %v6278, 0.0
        %6287 = vadd.xlane.f32.xlu0 %v6286
        %v6288 = vpop.xlane.xlu0 %6287
        %v6289 = vsel %vm1130, %v6280, 0.0
        %6290 = vadd.xlane.f32.xlu0 %v6289
        %v6291 = vpop.xlane.xlu0 %6290
        %v6292 = vsel %vm1134, %v6282, 0.0
        %6293 = vadd.xlane.f32.xlu0 %v6292
        %v6294 = vpop.xlane.xlu0 %6293
        %v6295 = vrcp.pop %v6285
        %v6296 = vrcp.pop %v6288
        %v6297 = vrcp.pop %v6291
        %v6298 = vrcp.pop %v6294
        %v6299 = vmul.f32 %v6276, %v6295
        %v6300 = vmul.f32 %v6278, %v6296
        %v6301 = vmul.f32 %v6280, %v6297
        %v6302 = vmul.f32 %v6282, %v6298
        %v6303 = vpack.c.bf16 %v6299, %v6299
        %v6304 = vpack.c.bf16 %v6300, %v6300
        %v6305 = vpack.c.bf16 %v6301, %v6301
        %v6306 = vpack.c.bf16 %v6302, %v6302
        %v6309 = vunpack.c.l.b16 %v6303
        %v6310 = vunpack.c.l.b16 %v6304
        %v6311 = vpack.c.b16 %v6310, %v6309
        %6312 = vrot.lane.b32.xlu0 %v5832, 40
        %v6313 = vpop.permute.xlu0 %6312
        %v6315 = vsel %vm1130, %v6311, 0
        %v6318 = vsel %vm1195, %v6313, 0
        %6320 = vmatpush.bf16.msra.mxu0 0
        %6321 = vmatpush.bf16.msra.mxu0 0
        %6322 = vmatpush.bf16.msra.mxu0 0
        %6323 = vmatpush.bf16.msra.mxu0 0
        %6324 = vmatpush.bf16.msra.mxu0 0
        %6325 = vmatpush.bf16.msra.mxu0 0
        %6326 = vmatpush.bf16.msra.mxu0 0
        %6327 = vmatpush.bf16.msra.mxu0 %v6318
        %6328 = vmatmul.bf16.gmra.mxu0 %v6315
        %v6329 = vpop.f32.mrf.mxu0
        %v6330 = vadd.f32 0.0, %v6329
        %v6331 = vpop.f32.mrf.mxu0
        %v6332 = vadd.f32 0.0, %v6331
        %6333 = vdwg.mxu0
        %v6336 = vunpack.c.l.b16 %v6305
        %v6337 = vunpack.c.l.b16 %v6306
        %v6338 = vpack.c.b16 %v6337, %v6336
        %6339 = vrot.lane.b32.xlu0 %v5864, 40
        %v6340 = vpop.permute.xlu0 %6339
        %v6342 = vsel %vm1130, %v6338, 0
        %v6345 = vsel %vm1195, %v6340, 0
        %6347 = vmatpush.bf16.msra.mxu0 0
        %6348 = vmatpush.bf16.msra.mxu0 0
        %6349 = vmatpush.bf16.msra.mxu0 0
        %6350 = vmatpush.bf16.msra.mxu0 0
        %6351 = vmatpush.bf16.msra.mxu0 0
        %6352 = vmatpush.bf16.msra.mxu0 0
        %6353 = vmatpush.bf16.msra.mxu0 0
        %6354 = vmatpush.bf16.msra.mxu0 %v6345
        %6355 = vmatmul.bf16.gmra.mxu0 %v6342
        %v6356 = vpop.f32.mrf.mxu0
        %v6357 = vadd.f32 0.0, %v6356
        %v6358 = vpop.f32.mrf.mxu0
        %v6359 = vadd.f32 0.0, %v6358
        %6360 = vdwg.mxu0
        %6365 = vrot.lane.b32.xlu0 %v6014, 8
        %v6366 = vpop.permute.xlu0 %6365
        %6367 = vrot.lane.b32.xlu0 %v6016, 8
        %v6368 = vpop.permute.xlu0 %6367
        %6369 = vrot.lane.b32.xlu0 %v6041, 8
        %v6370 = vpop.permute.xlu0 %6369
        %6371 = vrot.lane.b32.xlu0 %v6043, 8
        %v6372 = vpop.permute.xlu0 %6371
        %6381 = vrot.lane.b32.xlu0 %v6172, 16
        %v6382 = vpop.permute.xlu0 %6381
        %6383 = vrot.lane.b32.xlu0 %v6174, 16
        %v6384 = vpop.permute.xlu0 %6383
        %6385 = vrot.lane.b32.xlu0 %v6199, 16
        %v6386 = vpop.permute.xlu0 %6385
        %6387 = vrot.lane.b32.xlu0 %v6201, 16
        %v6388 = vpop.permute.xlu0 %6387
        %6397 = vrot.lane.b32.xlu0 %v6330, 24
        %v6398 = vpop.permute.xlu0 %6397
        %6399 = vrot.lane.b32.xlu0 %v6332, 24
        %v6400 = vpop.permute.xlu0 %6399
        %6401 = vrot.lane.b32.xlu0 %v6357, 24
        %v6402 = vpop.permute.xlu0 %6401
        %6403 = vrot.lane.b32.xlu0 %v6359, 24
        %v6404 = vpop.permute.xlu0 %6403
        %v6409 = vsel %vm312, %v5851, %v6366
        %v6410 = vsel %vm312, %v5853, %v6368
        %v6411 = vsel %vm312, %v5883, %v6370
        %v6412 = vsel %vm312, %v5885, %v6372
        %v6413 = vsel %vm1771, %v6409, %v6382
        %v6414 = vsel %vm1771, %v6410, %v6384
        %v6415 = vsel %vm1771, %v6411, %v6386
        %v6416 = vsel %vm1771, %v6412, %v6388
        %v6417 = vsel %vm1776, %v6413, %v6398
        %v6418 = vsel %vm1776, %v6414, %v6400
        %v6419 = vsel %vm1776, %v6415, %v6402
        %v6420 = vsel %vm1776, %v6416, %v6404
        %v6425 = vrot.slane %v6417, 4
        %v6426 = vrot.slane %v6419, 4
        %6427 = vst [vmem:[#allocation1] ss:$2 sm:$0xff] %v6417
        %s6428 = scalar_lea.vmem [#allocation1], 1
        %6429 = vst [vmem:[%s6428] ss:$2 sm:$0xff] %v6425
        %s6430 = scalar_lea.vmem [#allocation1], 16
        %6431 = vst [vmem:[%s6430] ss:$2 sm:$0xff] %v6418
        %s6432 = scalar_lea.vmem [#allocation1], 17
        %6433 = vst [vmem:[%s6432] ss:$2 sm:$0xff] %v6419
        %s6434 = scalar_lea.vmem [#allocation1], 32
        %6435 = vst [vmem:[%s6434] ss:$2 sm:$0xff] %v6426
        %s6436 = scalar_lea.vmem [#allocation1], 33
        %6437 = vst [vmem:[%s6436] ss:$2 sm:$0xff] %v6420
        %v6438 = vld.sshfl [vmem:[#allocation1] sm:$0xff pattern:$0x75316420]
        %v6439 = vld.sshfl [vmem:[#allocation1 + $0x10] sm:$0xff pattern:$0x75316420]
        %v6440 = vld.sshfl [vmem:[#allocation1 + $0x20] sm:$0xff pattern:$0x75316420]
        %v6444 = vpack.c.bf16 %v6439, %v6438
        %v6445 = vpack.c.bf16 %v6440, %v6440
        %v6446 = vpack.c.bf16 %v5346, %v5345
        %v6447 = vpack.c.bf16 %v5348, %v5347
        %v6448 = vperm.slane %v5364, 0
        %v6450 = vsel %vm499, %v6444, 0
        %v6453 = vsel %vm499, %v6445, 0
        %6455 = vmatpush.bf16.msra.mxu0 0
        %6456 = vmatpush.bf16.msra.mxu0 0
        %6457 = vmatpush.bf16.msra.mxu0 0
        %6458 = vmatpush.bf16.msra.mxu0 0
        %6459 = vmatpush.bf16.msra.mxu0 0
        %6460 = vmatpush.bf16.msra.mxu0 0
        %6461 = vmatpush.bf16.msra.mxu0 %v6447
        %6462 = vmatpush.bf16.msra.mxu0 %v6446
        %6463 = vmatmul.bf16.gmra.mxu0 %v6450
        %v6464 = vpop.f32.mrf.mxu0
        %v6465 = vadd.f32 %v6448, %v6464
        %v6466 = vpop.f32.mrf.mxu0
        %v6467 = vadd.f32 %v6448, %v6466
        %6468 = vmatmul.bf16.gmra.mxu0 %v6453
        %v6469 = vpop.f32.mrf.mxu0
        %v6470 = vadd.f32 %v6448, %v6469
        %v6471 = vpop.f32.mrf.mxu0
        %6472 = vdwg.mxu0
        %v6476 = vrot.slane %v6465, 4
        %v6477 = vrot.slane %v6467, 4
        %v6478 = vrot.slane %v6470, 4
        %v6482 = vadd.f32 %v5335, %v6465
        %v6483 = vadd.f32 %v5336, %v6476
        %v6484 = vadd.f32 %v5337, %v6467
        %v6485 = vadd.f32 %v5338, %v6477
        %v6486 = vadd.f32 %v5339, %v6470
        %v6487 = vadd.f32 %v5340, %v6478
        %6494 = vst [vmem:[#allocation1] ss:$2 sm:$0xff] %v6482
        %s6495 = scalar_lea.vmem [#allocation1], 1
        %6496 = vst [vmem:[%s6495] ss:$2 sm:$0xff] %v6483
        %s6497 = scalar_lea.vmem [#allocation1], 16
        %6498 = vst [vmem:[%s6497] ss:$2 sm:$0xff] %v6484
        %s6499 = scalar_lea.vmem [#allocation1], 17
        %6500 = vst [vmem:[%s6499] ss:$2 sm:$0xff] %v6485
        %s6501 = scalar_lea.vmem [#allocation1], 32
        %6502 = vst [vmem:[%s6501] ss:$2 sm:$0xff] %v6486
        %s6503 = scalar_lea.vmem [#allocation1], 33
        %6504 = vst [vmem:[%s6503] ss:$2 sm:$0xff] %v6487
        %v6505 = vld.sshfl [vmem:[#allocation1] sm:$0xff pattern:$0x75316420]
        %v6506 = vld.sshfl [vmem:[#allocation1 + $0x10] sm:$0xff pattern:$0x75316420]
        %v6507 = vld.sshfl [vmem:[#allocation1 + $0x20] sm:$0xff pattern:$0x75316420]
        %v6511 = vsel %vm499, %v6505, 0.0
        %6512 = vadd.xlane.f32.xlu0 %v6511
        %v6513 = vpop.xlane.xlu0 %6512
        %v6514 = vsel %vm499, %v6506, 0.0
        %6515 = vadd.xlane.f32.xlu0 %v6514
        %v6516 = vpop.xlane.xlu0 %6515
        %v6517 = vsel %vm499, %v6507, 0.0
        %6518 = vadd.xlane.f32.xlu0 %v6517
        %v6519 = vpop.xlane.xlu0 %6518
        %v6520 = vmul.f32 %v6513, %v515
        %v6521 = vmul.f32 %v6516, %v515
        %v6522 = vmul.f32 %v6519, %v515
        %v6527 = vunpack.c.l.s4 839922192
        %v6528 = vunpack.c.0.s8 %v6527
        %v6529 = vperm.slane %v6520, %v6528
        %v6531 = vunpack.c.l.s4 1985246804
        %v6532 = vunpack.c.0.s8 %v6531
        %v6533 = vperm.slane %v6520, %v6532
        %v6535 = vunpack.c.l.s4 839922192
        %v6536 = vunpack.c.0.s8 %v6535
        %v6537 = vperm.slane %v6521, %v6536
        %v6539 = vunpack.c.l.s4 1985246804
        %v6540 = vunpack.c.0.s8 %v6539
        %v6541 = vperm.slane %v6521, %v6540
        %v6543 = vunpack.c.l.s4 839922192
        %v6544 = vunpack.c.0.s8 %v6543
        %v6545 = vperm.slane %v6522, %v6544
        %v6547 = vunpack.c.l.s4 1985246804
        %v6548 = vunpack.c.0.s8 %v6547
        %v6549 = vperm.slane %v6522, %v6548
        %v6556 = vsub.f32 %v6482, %v6529
        %v6557 = vsub.f32 %v6483, %v6533
        %v6558 = vsub.f32 %v6484, %v6537
        %v6559 = vsub.f32 %v6485, %v6541
        %v6560 = vsub.f32 %v6486, %v6545
        %v6561 = vsub.f32 %v6487, %v6549
        %v6562 = vmul.f32 %v6556, %v6556
        %v6563 = vmul.f32 %v6557, %v6557
        %v6564 = vmul.f32 %v6558, %v6558
        %v6565 = vmul.f32 %v6559, %v6559
        %v6566 = vmul.f32 %v6560, %v6560
        %v6567 = vmul.f32 %v6561, %v6561
        %6574 = vst [vmem:[#allocation1] ss:$2 sm:$0xff] %v6562
        %s6575 = scalar_lea.vmem [#allocation1], 1
        %6576 = vst [vmem:[%s6575] ss:$2 sm:$0xff] %v6563
        %s6577 = scalar_lea.vmem [#allocation1], 16
        %6578 = vst [vmem:[%s6577] ss:$2 sm:$0xff] %v6564
        %s6579 = scalar_lea.vmem [#allocation1], 17
        %6580 = vst [vmem:[%s6579] ss:$2 sm:$0xff] %v6565
        %s6581 = scalar_lea.vmem [#allocation1], 32
        %6582 = vst [vmem:[%s6581] ss:$2 sm:$0xff] %v6566
        %s6583 = scalar_lea.vmem [#allocation1], 33
        %6584 = vst [vmem:[%s6583] ss:$2 sm:$0xff] %v6567
        %v6585 = vld.sshfl [vmem:[#allocation1] sm:$0xff pattern:$0x75316420]
        %v6586 = vld.sshfl [vmem:[#allocation1 + $0x10] sm:$0xff pattern:$0x75316420]
        %v6587 = vld.sshfl [vmem:[#allocation1 + $0x20] sm:$0xff pattern:$0x75316420]
        %v6591 = vsel %vm499, %v6585, 0.0
        %6592 = vadd.xlane.f32.xlu0 %v6591
        %v6593 = vpop.xlane.xlu0 %6592
        %v6594 = vsel %vm499, %v6586, 0.0
        %6595 = vadd.xlane.f32.xlu0 %v6594
        %v6596 = vpop.xlane.xlu0 %6595
        %v6597 = vsel %vm499, %v6587, 0.0
        %6598 = vadd.xlane.f32.xlu0 %v6597
        %v6599 = vpop.xlane.xlu0 %6598
        %v6600 = vmul.f32 %v6593, %v515
        %v6601 = vmul.f32 %v6596, %v515
        %v6602 = vmul.f32 %v6599, %v515
        %v6603 = vadd.f32 %v6600, 1e-05
        %v6604 = vadd.f32 %v6601, 1e-05
        %v6605 = vadd.f32 %v6602, 1e-05
        %v6606 = vrsqrt.pop %v6603
        %v6607 = vmul.f32 %v6606, %v6603
        %v6608 = vmul.f32 %v6607, %v6606
        %v6609 = vmul.f32 0.5, %v6608
        %v6610 = vsub.f32 1.5, %v6609
        %v6611 = vmul.f32 %v6606, %v6610
        %vm6612 = vweird.f32 %v6603
        %vm6613 = vweird.f32 %v6606
        %vm6614 = vmor %vm6612, %vm6613
        %v6615 = vsel %vm6614, %v6606, %v6611
        %v6616 = vrsqrt.pop %v6604
        %v6617 = vmul.f32 %v6616, %v6604
        %v6618 = vmul.f32 %v6617, %v6616
        %v6619 = vmul.f32 0.5, %v6618
        %v6620 = vsub.f32 1.5, %v6619
        %v6621 = vmul.f32 %v6616, %v6620
        %vm6622 = vweird.f32 %v6604
        %vm6623 = vweird.f32 %v6616
        %vm6624 = vmor %vm6622, %vm6623
        %v6625 = vsel %vm6624, %v6616, %v6621
        %v6626 = vrsqrt.pop %v6605
        %v6627 = vmul.f32 %v6626, %v6605
        %v6628 = vmul.f32 %v6627, %v6626
        %v6629 = vmul.f32 0.5, %v6628
        %v6630 = vsub.f32 1.5, %v6629
        %v6631 = vmul.f32 %v6626, %v6630
        %vm6632 = vweird.f32 %v6605
        %vm6633 = vweird.f32 %v6626
        %vm6634 = vmor %vm6632, %vm6633
        %v6635 = vsel %vm6634, %v6626, %v6631
        %v6640 = vunpack.c.l.s4 839922192
        %v6641 = vunpack.c.0.s8 %v6640
        %v6642 = vperm.slane %v6615, %v6641
        %v6644 = vunpack.c.l.s4 1985246804
        %v6645 = vunpack.c.0.s8 %v6644
        %v6646 = vperm.slane %v6615, %v6645
        %v6648 = vunpack.c.l.s4 839922192
        %v6649 = vunpack.c.0.s8 %v6648
        %v6650 = vperm.slane %v6625, %v6649
        %v6652 = vunpack.c.l.s4 1985246804
        %v6653 = vunpack.c.0.s8 %v6652
        %v6654 = vperm.slane %v6625, %v6653
        %v6656 = vunpack.c.l.s4 839922192
        %v6657 = vunpack.c.0.s8 %v6656
        %v6658 = vperm.slane %v6635, %v6657
        %v6660 = vunpack.c.l.s4 1985246804
        %v6661 = vunpack.c.0.s8 %v6660
        %v6662 = vperm.slane %v6635, %v6661
        %v6669 = vmul.f32 %v6556, %v6642
        %v6670 = vmul.f32 %v6557, %v6646
        %v6671 = vmul.f32 %v6558, %v6650
        %v6672 = vmul.f32 %v6559, %v6654
        %v6673 = vmul.f32 %v6560, %v6658
        %v6674 = vmul.f32 %v6561, %v6662
        %v6675 = vperm.slane %v5365, 0
        %v6677 = vrot.slane %v6675, 4
        %v6679 = vmul.f32 %v6669, %v6675
        %v6680 = vmul.f32 %v6670, %v6677
        %v6681 = vmul.f32 %v6671, %v6675
        %v6682 = vmul.f32 %v6672, %v6677
        %v6683 = vmul.f32 %v6673, %v6675
        %v6684 = vmul.f32 %v6674, %v6677
        %v6685 = vperm.slane %v5366, 0
        %v6687 = vrot.slane %v6685, 4
        %v6689 = vadd.f32 %v6679, %v6685
        %v6690 = vadd.f32 %v6680, %v6687
        %v6691 = vadd.f32 %v6681, %v6685
        %v6692 = vadd.f32 %v6682, %v6687
        %v6693 = vadd.f32 %v6683, %v6685
        %v6694 = vadd.f32 %v6684, %v6687
        %6701 = vst [vmem:[#allocation1] ss:$2 sm:$0xff] %v6689
        %s6702 = scalar_lea.vmem [#allocation1], 1
        %6703 = vst [vmem:[%s6702] ss:$2 sm:$0xff] %v6690
        %s6704 = scalar_lea.vmem [#allocation1], 16
        %6705 = vst [vmem:[%s6704] ss:$2 sm:$0xff] %v6691
        %s6706 = scalar_lea.vmem [#allocation1], 17
        %6707 = vst [vmem:[%s6706] ss:$2 sm:$0xff] %v6692
        %s6708 = scalar_lea.vmem [#allocation1], 32
        %6709 = vst [vmem:[%s6708] ss:$2 sm:$0xff] %v6693
        %s6710 = scalar_lea.vmem [#allocation1], 33
        %6711 = vst [vmem:[%s6710] ss:$2 sm:$0xff] %v6694
        %v6712 = vld.sshfl [vmem:[#allocation1] sm:$0xff pattern:$0x75316420]
        %v6713 = vld.sshfl [vmem:[#allocation1 + $0x10] sm:$0xff pattern:$0x75316420]
        %v6714 = vld.sshfl [vmem:[#allocation1 + $0x20] sm:$0xff pattern:$0x75316420]
        %v6718 = vpack.c.bf16 %v6713, %v6712
        %v6719 = vpack.c.bf16 %v6714, %v6714
        %v6720 = vpack.c.bf16 %v5350, %v5349
        %v6721 = vpack.c.bf16 %v5352, %v5351
        %v6722 = vperm.slane %v5367, 0
        %v6724 = vsel %vm499, %v6718, 0
        %v6727 = vsel %vm499, %v6719, 0
        %6729 = vmatpush.bf16.msra.mxu0 0
        %6730 = vmatpush.bf16.msra.mxu0 0
        %6731 = vmatpush.bf16.msra.mxu0 0
        %6732 = vmatpush.bf16.msra.mxu0 0
        %6733 = vmatpush.bf16.msra.mxu0 0
        %6734 = vmatpush.bf16.msra.mxu0 0
        %6735 = vmatpush.bf16.msra.mxu0 %v6721
        %6736 = vmatpush.bf16.msra.mxu0 %v6720
        %6737 = vmatmul.bf16.gmra.mxu0 %v6724
        %v6738 = vpop.f32.mrf.mxu0
        %v6739 = vadd.f32 %v6722, %v6738
        %v6740 = vpop.f32.mrf.mxu0
        %v6741 = vadd.f32 %v6722, %v6740
        %6742 = vmatmul.bf16.gmra.mxu0 %v6727
        %v6743 = vpop.f32.mrf.mxu0
        %v6744 = vadd.f32 %v6722, %v6743
        %v6745 = vpop.f32.mrf.mxu0
        %6746 = vdwg.mxu0
        %v6747 = vmax.f32 %v6739, 0.0
        %v6748 = vmax.f32 %v6741, 0.0
        %v6749 = vmax.f32 %v6744, 0.0
        %v6750 = vpack.c.bf16 %v6748, %v6747
        %v6751 = vpack.c.bf16 %v6749, %v6749
        %v6752 = vpack.c.bf16 %v5354, %v5353
        %v6753 = vpack.c.bf16 %v5356, %v5355
        %v6754 = vpack.c.bf16 %v5358, %v5357
        %v6755 = vpack.c.bf16 %v5360, %v5359
        %v6756 = vperm.slane %v5368, 0
        %v6758 = vsel %vm2117, %v6750, 0
        %v6761 = vsel %vm2117, %v6751, 0
        %6763 = vmatpush.bf16.msra.mxu0 0
        %6764 = vmatpush.bf16.msra.mxu0 0
        %6765 = vmatpush.bf16.msra.mxu0 0
        %6766 = vmatpush.bf16.msra.mxu0 0
        %6767 = vmatpush.bf16.msra.mxu0 %v6755
        %6768 = vmatpush.bf16.msra.mxu0 %v6754
        %6769 = vmatpush.bf16.msra.mxu0 %v6753
        %6770 = vmatpush.bf16.msra.mxu0 %v6752
        %6771 = vmatmul.bf16.gmra.mxu0 %v6758
        %v6772 = vpop.f32.mrf.mxu0
        %v6773 = vadd.f32 %v6756, %v6772
        %v6774 = vpop.f32.mrf.mxu0
        %v6775 = vadd.f32 %v6756, %v6774
        %6776 = vmatmul.bf16.gmra.mxu0 %v6761
        %v6777 = vpop.f32.mrf.mxu0
        %v6778 = vadd.f32 %v6756, %v6777
        %v6779 = vpop.f32.mrf.mxu0
        %6780 = vdwg.mxu0
        %v6784 = vrot.slane %v6773, 4
        %v6785 = vrot.slane %v6775, 4
        %v6786 = vrot.slane %v6778, 4
        %v6790 = vadd.f32 %v6482, %v6773
        %v6791 = vadd.f32 %v6483, %v6784
        %v6792 = vadd.f32 %v6484, %v6775
        %v6793 = vadd.f32 %v6485, %v6785
        %v6794 = vadd.f32 %v6486, %v6778
        %v6795 = vadd.f32 %v6487, %v6786
        %v6796 = vld [vmem:[%s213 + $0x2b8] sm:$0x1]
        %v6797 = vld [vmem:[%s213 + $0x2b9] sm:$0x1]
        %6804 = vst [vmem:[#allocation1] ss:$2 sm:$0xff] %v6790
        %s6805 = scalar_lea.vmem [#allocation1], 1
        %6806 = vst [vmem:[%s6805] ss:$2 sm:$0xff] %v6791
        %s6807 = scalar_lea.vmem [#allocation1], 16
        %6808 = vst [vmem:[%s6807] ss:$2 sm:$0xff] %v6792
        %s6809 = scalar_lea.vmem [#allocation1], 17
        %6810 = vst [vmem:[%s6809] ss:$2 sm:$0xff] %v6793
        %s6811 = scalar_lea.vmem [#allocation1], 32
        %6812 = vst [vmem:[%s6811] ss:$2 sm:$0xff] %v6794
        %s6813 = scalar_lea.vmem [#allocation1], 33
        %6814 = vst [vmem:[%s6813] ss:$2 sm:$0xff] %v6795
        %v6815 = vld.sshfl [vmem:[#allocation1] sm:$0xff pattern:$0x75316420]
        %v6816 = vld.sshfl [vmem:[#allocation1 + $0x10] sm:$0xff pattern:$0x75316420]
        %v6817 = vld.sshfl [vmem:[#allocation1 + $0x20] sm:$0xff pattern:$0x75316420]
        %v6821 = vsel %vm499, %v6815, 0.0
        %6822 = vadd.xlane.f32.xlu0 %v6821
        %v6823 = vpop.xlane.xlu0 %6822
        %v6824 = vsel %vm499, %v6816, 0.0
        %6825 = vadd.xlane.f32.xlu0 %v6824
        %v6826 = vpop.xlane.xlu0 %6825
        %v6827 = vsel %vm499, %v6817, 0.0
        %6828 = vadd.xlane.f32.xlu0 %v6827
        %v6829 = vpop.xlane.xlu0 %6828
        %v6830 = vmul.f32 %v6823, %v515
        %v6831 = vmul.f32 %v6826, %v515
        %v6832 = vmul.f32 %v6829, %v515
        %v6837 = vunpack.c.l.s4 839922192
        %v6838 = vunpack.c.0.s8 %v6837
        %v6839 = vperm.slane %v6830, %v6838
        %v6841 = vunpack.c.l.s4 1985246804
        %v6842 = vunpack.c.0.s8 %v6841
        %v6843 = vperm.slane %v6830, %v6842
        %v6845 = vunpack.c.l.s4 839922192
        %v6846 = vunpack.c.0.s8 %v6845
        %v6847 = vperm.slane %v6831, %v6846
        %v6849 = vunpack.c.l.s4 1985246804
        %v6850 = vunpack.c.0.s8 %v6849
        %v6851 = vperm.slane %v6831, %v6850
        %v6853 = vunpack.c.l.s4 839922192
        %v6854 = vunpack.c.0.s8 %v6853
        %v6855 = vperm.slane %v6832, %v6854
        %v6857 = vunpack.c.l.s4 1985246804
        %v6858 = vunpack.c.0.s8 %v6857
        %v6859 = vperm.slane %v6832, %v6858
        %v6866 = vsub.f32 %v6790, %v6839
        %v6867 = vsub.f32 %v6791, %v6843
        %v6868 = vsub.f32 %v6792, %v6847
        %v6869 = vsub.f32 %v6793, %v6851
        %v6870 = vsub.f32 %v6794, %v6855
        %v6871 = vsub.f32 %v6795, %v6859
        %v6872 = vmul.f32 %v6866, %v6866
        %v6873 = vmul.f32 %v6867, %v6867
        %v6874 = vmul.f32 %v6868, %v6868
        %v6875 = vmul.f32 %v6869, %v6869
        %v6876 = vmul.f32 %v6870, %v6870
        %v6877 = vmul.f32 %v6871, %v6871
        %6884 = vst [vmem:[#allocation1] ss:$2 sm:$0xff] %v6872
        %s6885 = scalar_lea.vmem [#allocation1], 1
        %6886 = vst [vmem:[%s6885] ss:$2 sm:$0xff] %v6873
        %s6887 = scalar_lea.vmem [#allocation1], 16
        %6888 = vst [vmem:[%s6887] ss:$2 sm:$0xff] %v6874
        %s6889 = scalar_lea.vmem [#allocation1], 17
        %6890 = vst [vmem:[%s6889] ss:$2 sm:$0xff] %v6875
        %s6891 = scalar_lea.vmem [#allocation1], 32
        %6892 = vst [vmem:[%s6891] ss:$2 sm:$0xff] %v6876
        %s6893 = scalar_lea.vmem [#allocation1], 33
        %6894 = vst [vmem:[%s6893] ss:$2 sm:$0xff] %v6877
        %v6895 = vld.sshfl [vmem:[#allocation1] sm:$0xff pattern:$0x75316420]
        %v6896 = vld.sshfl [vmem:[#allocation1 + $0x10] sm:$0xff pattern:$0x75316420]
        %v6897 = vld.sshfl [vmem:[#allocation1 + $0x20] sm:$0xff pattern:$0x75316420]
        %v6901 = vsel %vm499, %v6895, 0.0
        %6902 = vadd.xlane.f32.xlu0 %v6901
        %v6903 = vpop.xlane.xlu0 %6902
        %v6904 = vsel %vm499, %v6896, 0.0
        %6905 = vadd.xlane.f32.xlu0 %v6904
        %v6906 = vpop.xlane.xlu0 %6905
        %v6907 = vsel %vm499, %v6897, 0.0
        %6908 = vadd.xlane.f32.xlu0 %v6907
        %v6909 = vpop.xlane.xlu0 %6908
        %v6910 = vmul.f32 %v6903, %v515
        %v6911 = vmul.f32 %v6906, %v515
        %v6912 = vmul.f32 %v6909, %v515
        %v6913 = vadd.f32 %v6910, 1e-05
        %v6914 = vadd.f32 %v6911, 1e-05
        %v6915 = vadd.f32 %v6912, 1e-05
        %v6916 = vrsqrt.pop %v6913
        %v6917 = vmul.f32 %v6916, %v6913
        %v6918 = vmul.f32 %v6917, %v6916
        %v6919 = vmul.f32 0.5, %v6918
        %v6920 = vsub.f32 1.5, %v6919
        %v6921 = vmul.f32 %v6916, %v6920
        %vm6922 = vweird.f32 %v6913
        %vm6923 = vweird.f32 %v6916
        %vm6924 = vmor %vm6922, %vm6923
        %v6925 = vsel %vm6924, %v6916, %v6921
        %v6926 = vrsqrt.pop %v6914
        %v6927 = vmul.f32 %v6926, %v6914
        %v6928 = vmul.f32 %v6927, %v6926
        %v6929 = vmul.f32 0.5, %v6928
        %v6930 = vsub.f32 1.5, %v6929
        %v6931 = vmul.f32 %v6926, %v6930
        %vm6932 = vweird.f32 %v6914
        %vm6933 = vweird.f32 %v6926
        %vm6934 = vmor %vm6932, %vm6933
        %v6935 = vsel %vm6934, %v6926, %v6931
        %v6936 = vrsqrt.pop %v6915
        %v6937 = vmul.f32 %v6936, %v6915
        %v6938 = vmul.f32 %v6937, %v6936
        %v6939 = vmul.f32 0.5, %v6938
        %v6940 = vsub.f32 1.5, %v6939
        %v6941 = vmul.f32 %v6936, %v6940
        %vm6942 = vweird.f32 %v6915
        %vm6943 = vweird.f32 %v6936
        %vm6944 = vmor %vm6942, %vm6943
        %v6945 = vsel %vm6944, %v6936, %v6941
        %v6950 = vunpack.c.l.s4 839922192
        %v6951 = vunpack.c.0.s8 %v6950
        %v6952 = vperm.slane %v6925, %v6951
        %v6954 = vunpack.c.l.s4 1985246804
        %v6955 = vunpack.c.0.s8 %v6954
        %v6956 = vperm.slane %v6925, %v6955
        %v6958 = vunpack.c.l.s4 839922192
        %v6959 = vunpack.c.0.s8 %v6958
        %v6960 = vperm.slane %v6935, %v6959
        %v6962 = vunpack.c.l.s4 1985246804
        %v6963 = vunpack.c.0.s8 %v6962
        %v6964 = vperm.slane %v6935, %v6963
        %v6966 = vunpack.c.l.s4 839922192
        %v6967 = vunpack.c.0.s8 %v6966
        %v6968 = vperm.slane %v6945, %v6967
        %v6970 = vunpack.c.l.s4 1985246804
        %v6971 = vunpack.c.0.s8 %v6970
        %v6972 = vperm.slane %v6945, %v6971
        %v6979 = vmul.f32 %v6866, %v6952
        %v6980 = vmul.f32 %v6867, %v6956
        %v6981 = vmul.f32 %v6868, %v6960
        %v6982 = vmul.f32 %v6869, %v6964
        %v6983 = vmul.f32 %v6870, %v6968
        %v6984 = vmul.f32 %v6871, %v6972
        %v6985 = vperm.slane %v6796, 0
        %v6987 = vrot.slane %v6985, 4
        %v6989 = vmul.f32 %v6979, %v6985
        %v6990 = vmul.f32 %v6980, %v6987
        %v6991 = vmul.f32 %v6981, %v6985
        %v6992 = vmul.f32 %v6982, %v6987
        %v6993 = vmul.f32 %v6983, %v6985
        %v6994 = vmul.f32 %v6984, %v6987
        %v6995 = vperm.slane %v6797, 0
        %v6997 = vrot.slane %v6995, 4
        %v6999 = vadd.f32 %v6989, %v6995
        %v7000 = vadd.f32 %v6990, %v6997
        %v7001 = vadd.f32 %v6991, %v6995
        %v7002 = vadd.f32 %v6992, %v6997
        %v7003 = vadd.f32 %v6993, %v6995
        %v7004 = vadd.f32 %v6994, %v6997
        %v7008 = vunpack.c.l.s4 839922192
        %v7009 = vunpack.c.0.s8 %v7008
        %v7010 = vperm.slane %v284, %v7009
        %v7012 = vunpack.c.l.s4 1985246804
        %v7013 = vunpack.c.0.s8 %v7012
        %v7014 = vperm.slane %v284, %v7013
        %v7016 = vunpack.c.l.s4 839922192
        %v7017 = vunpack.c.0.s8 %v7016
        %v7018 = vperm.slane %v285, %v7017
        %v7022 = vmul.f32 %v6999, %v7010
        %v7023 = vmul.f32 %v7000, %v7014
        %v7024 = vmul.f32 %v7001, %v7018
        %v7025 = vmul.f32 %v7002, %v7010
        %v7026 = vmul.f32 %v7003, %v7014
        %v7027 = vmul.f32 %v7004, %v7018
        %7034 = vst [vmem:[#allocation1] ss:$2 sm:$0xff] %v7022
        %s7035 = scalar_lea.vmem [#allocation1], 1
        %7036 = vst [vmem:[%s7035] ss:$2 sm:$0xff] %v7023
        %s7037 = scalar_lea.vmem [#allocation1], 16
        %7038 = vst [vmem:[%s7037] ss:$2 sm:$0xff] %v7024
        %v7039 = vld.sshfl [vmem:[#allocation1] sm:$0xff pattern:$0x75316420]
        %v7040 = vld.sshfl [vmem:[#allocation1 + $0x10] sm:$0xff pattern:$0x75316420]
        %s7041 = scalar_lea.vmem [#allocation1], 32
        %7042 = vst [vmem:[%s7041] ss:$2 sm:$0xff] %v7025
        %s7043 = scalar_lea.vmem [#allocation1], 33
        %7044 = vst [vmem:[%s7043] ss:$2 sm:$0xff] %v7026
        %s7045 = scalar_lea.vmem [#allocation1], 48
        %7046 = vst [vmem:[%s7045] ss:$2 sm:$0xff] %v7027
        %v7047 = vld.sshfl [vmem:[#allocation1 + $0x20] sm:$0xff pattern:$0x75316420]
        %v7048 = vld.sshfl [vmem:[#allocation1 + $0x30] sm:$0xff pattern:$0x75316420]
        %v7053 = vsel %vm499, %v7039, 0.0
        %vm7054 = vcmask 257024
        %v7055 = vsel %vm7054, %v7040, 0.0
        %v7056 = vadd.f32 %v7053, %v7055
        %v7057 = vrot.slane %v7056, 4
        %v7058 = vadd.f32 %v7056, %v7057
        %v7059 = vrot.slane %v7058, 2
        %v7060 = vadd.f32 %v7058, %v7059
        %v7061 = vrot.slane %v7060, 1
        %v7062 = vadd.f32 %v7060, %v7061
        %v7063 = vsel %vm499, %v7047, 0.0
        %v7064 = vsel %vm7054, %v7048, 0.0
        %v7065 = vadd.f32 %v7063, %v7064
        %v7066 = vrot.slane %v7065, 4
        %v7067 = vadd.f32 %v7065, %v7066
        %v7068 = vrot.slane %v7067, 2
        %v7069 = vadd.f32 %v7067, %v7068
        %v7070 = vrot.slane %v7069, 1
        %v7071 = vadd.f32 %v7069, %v7070
        %vm7074 = vcmask 1041409
        %v7075 = vsel %vm7074, %v7071, %v7062
        %vm7077 = vcmask 254976
        %7078 = vst.msk [vmem:[%s264] sm:$0x3] %vm7077, %v7075
        %p7079 = scmp.lt.s32.totalorder %s18, 1
        %s7080 = scalar_select %p7079, %s18, 1
        %s7081 = smul.addr %s7080, 2
        %s7082 = scalar_lea.vmem %s4, %s7081
        // Predicated region
        $region41: #{unaligned_transformer_forward.2} parent=35 // pred_check
          %p7083 = pneg %p137
        $region42: #{unaligned_transformer_forward.2} parent=35 // pred_check_branch
          %7085 = sbr.rel (%p7083) target = $region44
        $region43: #{unaligned_transformer_forward.2} parent=35 // pred_region
          _
        $region44: #{unaligned_transformer_forward.2} parent=35 // pred_fallthru
          _
      $region36: #{unaligned_transformer_forward.2} parent=5 // pred_fallthru
        _
      %p7086 = scmp.le.s32.totalorder 2, %s13
      // Predicated region
      $region45: #{unaligned_transformer_forward.2} parent=5 // pred_check
        %p7087 = pneg %p7086
      $region46: #{unaligned_transformer_forward.2} parent=5 // pred_check_branch
        %7089 = sbr.rel (%p7087) target = $region48
      $region47: #{unaligned_transformer_forward.2} parent=5 // pred_region
        %s7090 = ssub.s32 %s13, 2
        // Predicated region
        $region49: #{unaligned_transformer_forward.2} parent=47 // pred_check
          %p7091 = pneg %p143
        $region50: #{unaligned_transformer_forward.2} parent=47 // pred_check_branch
          %7093 = sbr.rel (%p7091) target = $region52
        $region51: #{unaligned_transformer_forward.2} parent=47 // pred_region
          %p7094 = scmp.lt.s32.totalorder %s19, 1
          %s7095 = scalar_select %p7094, %s19, 1
          %s7096 = smul.addr %s7095, 2
          %s7097 = scalar_lea.vmem %s4, %s7096
        $region52: #{unaligned_transformer_forward.2} parent=47 // pred_fallthru
          _
      $region48: #{unaligned_transformer_forward.2} parent=5 // pred_fallthru
        _
    $region6: #{unaligned_transformer_forward.2} parent=1 // loop_footer
      %s17 = sadd.s32 1, %s13
    $region7: #{unaligned_transformer_forward.2} parent=1 // loop_footer_branch
      %12 = sbr.rel target = $region3
    $region8: #{unaligned_transformer_forward.2} parent=1 // loop_exit
      _
    %7098 = vsyncpa [#allocation3], 1
    %s7099 = scalar_lea.sflag [#allocation3], 1
    %7100 = vsyncpa %s7099, 1

</llo_original>
